<compile_context>
chip_gen: v7x
topology: tpu7x:2x2x1
jax: 0.10.0
libtpu: 0.0.40
codegen_flags: <defaults>
</compile_context>

<pallas_src>
import functools

import jax
import jax.numpy as jnp
from jax.experimental import pallas as pl
from jax.experimental.pallas import tpu as pltpu


# ----------------------------------------------------------------------------
# In-kernel atan (Cephes float32 polynomial, ~1e-7 abs error vs torch.atan).
# Built only from VPU/EUP ops (abs / mul / add / where / approx-reciprocal
# with one Newton refinement); jnp.arctan lowering on Mosaic is not relied on.
# ----------------------------------------------------------------------------
def _recip(d):
    r = pl.reciprocal(d, approx=True)      # EUP vrcp (free-ish bundle slot)
    return r * (2.0 - d * r)               # one Newton step -> ~f32 accuracy


def _atan(x):
    ax = jnp.abs(x)
    sgn = jnp.where(x < 0.0, -1.0, 1.0)
    t3p8 = 2.414213562373095   # tan(3*pi/8)
    tp8 = 0.4142135623730950   # tan(pi/8)

    big = ax > t3p8
    mid = jnp.logical_and(ax > tp8, jnp.logical_not(big))

    safe_ax = jnp.where(big, ax, 1.0)
    z_big = -_recip(safe_ax)
    z_mid = (ax - 1.0) * _recip(ax + 1.0)   # ax + 1 >= 1, always safe
    z = jnp.where(big, z_big, jnp.where(mid, z_mid, ax))
    y0 = jnp.where(big, jnp.float32(jnp.pi / 2),
                   jnp.where(mid, jnp.float32(jnp.pi / 4), 0.0))

    zz = z * z
    poly = ((((8.05374449538e-2 * zz - 1.38776856032e-1) * zz
              + 1.99777106478e-1) * zz - 3.33329491539e-1) * zz * z) + z
    return sgn * (y0 + poly)


# ----------------------------------------------------------------------------
# Pallas kernel: the whole sequence in one invocation.
#   gp = lane-padded gate width (multiple of 128; real data in lanes < itl)
# ----------------------------------------------------------------------------
def _vqlstm_kernel(x_ref, h0_ref, c0_ref, wxh_ref, bg_ref, w56_ref, b56_ref,
                   h_out_ref, c_out_ref, outs_ref,
                   *, seq, inp, hid, gp):
    f32 = jnp.float32

    # ---- load tiny packed weights once --------------------------------------
    wx1 = wxh_ref[0:inp, :]                              # (inp, 4*gp)  atan(x)
    wx2 = wxh_ref[inp:2 * inp, :]                        # (inp, 4*gp)  atan(x^2)
    wh1 = wxh_ref[2 * inp:2 * inp + hid, :]              # (hid, 4*gp)  atan(h)
    wh2 = wxh_ref[2 * inp + hid:2 * inp + 2 * hid, :]    # (hid, 4*gp)  atan(h^2)
    w56 = w56_ref[...]                                   # (2*gp, hid+1)
    b56 = b56_ref[...]                                   # (1, hid+1)

    # ---- hoisted input path: all time steps in one batched matmul -----------
    x_all = x_ref[...]                                   # (seq, inp)
    pre_x = (jnp.dot(_atan(x_all), wx1, preferred_element_type=f32)
             + jnp.dot(_atan(x_all * x_all), wx2, preferred_element_type=f32)
             + bg_ref[...])                              # (seq, 4*gp)

    h = h0_ref[...]                                      # (1, hid)
    c = c0_ref[...]                                      # (1, gp)  zero-padded

    # ---- time recurrence: fully unrolled, single kernel invocation ----------
    for t in range(seq):
        # h-dependent gate pre-activation (two small 8-row-aligned dots).
        pre = (pre_x[t:t + 1, :]
               + jnp.dot(_atan(h), wh1, preferred_element_type=f32)
               + jnp.dot(_atan(h * h), wh2, preferred_element_type=f32))

        # Gate splits on 128-lane boundaries -> whole-vreg slices.
        g1 = jax.nn.sigmoid(pre[:, 0:gp])                # cell_1 (forget-like)
        g2 = jax.nn.sigmoid(pre[:, gp:2 * gp])           # cell_2 (input)
        g3 = jnp.tanh(pre[:, 2 * gp:3 * gp])             # cell_3 (candidate)
        g4 = jax.nn.sigmoid(pre[:, 3 * gp:4 * gp])       # cell_4 (output)

        c = c * g1 + g2 * g3                             # pad lanes stay 0
        inner = g4 * jnp.tanh(c)                         # (1, gp)

        # Fused cells 5 & 6 (+ folded classical Linear): one small dot.
        ai = jnp.concatenate([_atan(inner), _atan(inner * inner)], axis=1)
        ho = jnp.dot(ai, w56, preferred_element_type=f32) + b56   # (1, hid+1)

        h = ho[:, 0:hid]                                 # new hidden state
        outs_ref[t:t + 1, :] = ho[:, hid:hid + 1]        # step output (scalar)

    h_out_ref[...] = h
    c_out_ref[...] = c


def vqlstm_forward(x_seq, h0, c0, params, return_all=False):
    seq, inp = x_seq.shape
    hid = h0.shape[-1]
    itl = c0.shape[-1]
    gp = params["bg"].shape[1] // 4

    x2 = x_seq.astype(jnp.float32)
    h0r = h0.reshape(1, hid).astype(jnp.float32)
    c0p = jnp.zeros((1, gp), jnp.float32).at[0, :itl].set(c0.astype(jnp.float32))

    kernel = functools.partial(_vqlstm_kernel, seq=seq, inp=inp, hid=hid, gp=gp)

    h_out, c_out, outs = pl.pallas_call(
        kernel,
        out_shape=(
            jax.ShapeDtypeStruct((1, hid), jnp.float32),
            jax.ShapeDtypeStruct((1, gp), jnp.float32),
            jax.ShapeDtypeStruct((seq, 1), jnp.float32),
        ),
        grid_spec=pltpu.PrefetchScalarGridSpec(
            num_scalar_prefetch=0,
            grid=(1,),                                     # single invocation
            in_specs=[
                pl.BlockSpec((seq, inp), lambda i: (0, 0)),               # x
                pl.BlockSpec((1, hid), lambda i: (0, 0)),                 # h0
                pl.BlockSpec((1, gp), lambda i: (0, 0)),                  # c0 (padded)
                pl.BlockSpec((2 * inp + 2 * hid, 4 * gp), lambda i: (0, 0)),  # Wxh
                pl.BlockSpec((1, 4 * gp), lambda i: (0, 0)),              # bg
                pl.BlockSpec((2 * gp, hid + 1), lambda i: (0, 0)),        # [W5|W6@Wlin]
                pl.BlockSpec((1, hid + 1), lambda i: (0, 0)),             # [b5|b6@Wlin+blin]
            ],
            out_specs=(
                pl.BlockSpec((1, hid), lambda i: (0, 0)),
                pl.BlockSpec((1, gp), lambda i: (0, 0)),
                pl.BlockSpec((seq, 1), lambda i: (0, 0)),
            ),
        ),
        compiler_params=pltpu.CompilerParams(
            dimension_semantics=("arbitrary",)),
    )(x2, h0r, c0p, params["Wxh"], params["bg"], params["W56"], params["b56"])

    c_out = c_out[:, :itl]
    if return_all:
        return h_out[0], c_out[0], outs
    return h_out[0], c_out[0], outs[-1]


# ----------------------------------------------------------------------------
# Deterministic parameter construction (shapes mirror VQLSTM.__init__),
# packed / lane-padded for the kernel layout.
# ----------------------------------------------------------------------------
def build_params(key, *, inp, hid, itl, outp, nq, layers, dup):
    cat = dup * inp + hid            # lstm_cell_cat_size
    gp = ((itl + 127) // 128) * 128  # lane-padded gate width
    ks = jax.random.split(key, 16)

    # q_params_1..6: (num_layers, num_qubit, 3), scale 0.01 (as in the module).
    qp = [0.01 * jax.random.normal(ks[i], (layers, nq, 3), jnp.float32)
          for i in range(6)]

    def cell_W(k, n_out, n_in):
        # Surrogate for the VQC measurement map: (n_out, n_in angles, 2)
        return (jax.random.normal(k, (n_out, n_in, 2), jnp.float32)
                / jnp.sqrt(jnp.float32(2 * n_in)))

    def cell_b(k, qparams, n_out):
        proj = 0.1 * jax.random.normal(k, (qparams.size, n_out), jnp.float32)
        return qparams.reshape(-1) @ proj

    W1, W2, W3, W4 = [cell_W(ks[6 + i], itl, cat) for i in range(4)]
    W5 = cell_W(ks[10], hid, itl)
    W6 = cell_W(ks[11], outp, itl)

    bkeys = jax.random.split(ks[12], 6)
    b1, b2, b3, b4 = [cell_b(bkeys[i], qp[i], itl) for i in range(4)]
    b5 = cell_b(bkeys[4], qp[4], hid)
    b6 = cell_b(bkeys[5], qp[5], outp)

    def fold_gate(W):
        # cat = [x repeated `dup` times, h]; duplicated x copies contribute
        # with summed weights -> fold so the kernel only sees atan(x)/atan(x^2).
        Wx1 = sum(W[:, d * inp:(d + 1) * inp, 0] for d in range(dup)).T  # (inp, itl)
        Wx2 = sum(W[:, d * inp:(d + 1) * inp, 1] for d in range(dup)).T
        Wh1 = W[:, dup * inp:, 0].T                                      # (hid, itl)
        Wh2 = W[:, dup * inp:, 1].T
        return Wx1, Wx2, Wh1, Wh2

    # One packed gate-weight matrix; each gate occupies a 128-lane-aligned
    # column group [k*gp, k*gp+itl) (rest zero).
    Wxh = jnp.zeros((2 * inp + 2 * hid, 4 * gp), jnp.float32)
    bg = jnp.zeros((1, 4 * gp), jnp.float32)
    for k, (W, b) in enumerate(zip((W1, W2, W3, W4), (b1, b2, b3, b4))):
        Wx1, Wx2, Wh1, Wh2 = fold_gate(W)
        c0_ = k * gp
        Wxh = Wxh.at[0:inp, c0_:c0_ + itl].set(Wx1)
        Wxh = Wxh.at[inp:2 * inp, c0_:c0_ + itl].set(Wx2)
        Wxh = Wxh.at[2 * inp:2 * inp + hid, c0_:c0_ + itl].set(Wh1)
        Wxh = Wxh.at[2 * inp + hid:2 * inp + 2 * hid, c0_:c0_ + itl].set(Wh2)
        bg = bg.at[0, c0_:c0_ + itl].set(b)

    # classical_nn_linear: Linear(lstm_output_size, 1), PyTorch-style init.
    lim = 1.0 / jnp.sqrt(jnp.float32(outp))
    Wlin = jax.random.uniform(ks[13], (outp,), jnp.float32, -lim, lim)
    blin = jax.random.uniform(ks[14], (1,), jnp.float32, -lim, lim)

    # Packed [W5 | W6 @ Wlin]: the final Linear is linear, so it folds exactly
    # into the cell-6 surrogate readout.  Rows padded to the lane-padded inner
    # width; column `hid` is the per-step scalar output.
    W56 = jnp.zeros((2 * gp, hid + 1), jnp.float32)
    W56 = W56.at[0:itl, 0:hid].set(W5[:, :, 0].T)            # atan(inner)   -> h
    W56 = W56.at[gp:gp + itl, 0:hid].set(W5[:, :, 1].T)      # atan(inner^2) -> h
    W56 = W56.at[0:itl, hid].set(W6[:, :, 0].T @ Wlin)       # atan(inner)   -> out
    W56 = W56.at[gp:gp + itl, hid].set(W6[:, :, 1].T @ Wlin) # atan(inner^2) -> out

    b_out = jnp.dot(b6, Wlin) + blin[0]
    b56 = jnp.concatenate([b5, b_out[None]]).reshape(1, hid + 1)

    return dict(Wxh=Wxh, bg=bg, W56=W56, b56=b56)


if __name__ == "__main__":
    # Small shapes consistent with the module's forward:
    lstm_input_size = 4
    lstm_hidden_size = 8
    lstm_output_size = 4
    lstm_num_qubit = 4
    lstm_cell_num_layers = 2
    lstm_internal_size = 8
    duplicate_time_of_input = 2
    seq_len = 8
    lstm_cell_cat_size = duplicate_time_of_input * lstm_input_size + lstm_hidden_size
    assert lstm_cell_cat_size == 16

    key = jax.random.PRNGKey(0)
    kx, kp = jax.random.split(key, 2)

    x_seq = jax.random.normal(kx, (seq_len, lstm_input_size), jnp.float32)
    initial_h = jnp.zeros((lstm_hidden_size,), jnp.float32)
    initial_c = jnp.zeros((lstm_internal_size,), jnp.float32)

    params = build_params(kp, inp=lstm_input_size, hid=lstm_hidden_size,
                          itl=lstm_internal_size, outp=lstm_output_size,
                          nq=lstm_num_qubit, layers=lstm_cell_num_layers,
                          dup=duplicate_time_of_input)

    # decoder-style: full output sequence
    h, c, outs = vqlstm_forward(x_seq, initial_h, initial_c, params,
                                return_all=True)
    jax.block_until_ready((h, c, outs))
    # encoder-style: last output only
    _, _, last_out = vqlstm_forward(x_seq, initial_h, initial_c, params,
                                    return_all=False)
    jax.block_until_ready(last_out)
    print("KERNEL_OK")
</pallas_src>

<mosaic_0001>
module attributes {stable_mosaic.version = 11 : i64} {
  func.func @_vqlstm_kernel(%arg0: i32, %arg1: memref<8x4xf32, #tpu.memory_space<vmem>>, %arg2: memref<1x8xf32, #tpu.memory_space<vmem>>, %arg3: memref<1x128xf32, #tpu.memory_space<vmem>>, %arg4: memref<24x512xf32, #tpu.memory_space<vmem>>, %arg5: memref<1x512xf32, #tpu.memory_space<vmem>>, %arg6: memref<256x9xf32, #tpu.memory_space<vmem>>, %arg7: memref<1x9xf32, #tpu.memory_space<vmem>>, %arg8: memref<1x8xf32, #tpu.memory_space<vmem>>, %arg9: memref<1x128xf32, #tpu.memory_space<vmem>>, %arg10: memref<8x1xf32, #tpu.memory_space<vmem>>) attributes {dimension_semantics = [#tpu.dimension_semantics<arbitrary>], iteration_bounds = array<i64: 1>, scalar_prefetch = 0 : i64, scratch_operands = 0 : i64, tpu.core_type = #tpu.core_type<tc>, window_params = [{pipeline_mode = #tpu.pipeline_mode<synchronous>, transform_indices = @transform_0, window_bounds = array<i64: 8, 4>}, {pipeline_mode = #tpu.pipeline_mode<synchronous>, transform_indices = @transform_1, window_bounds = array<i64: 1, 8>}, {pipeline_mode = #tpu.pipeline_mode<synchronous>, transform_indices = @transform_2, window_bounds = array<i64: 1, 128>}, {pipeline_mode = #tpu.pipeline_mode<synchronous>, transform_indices = @transform_3, window_bounds = array<i64: 24, 512>}, {pipeline_mode = #tpu.pipeline_mode<synchronous>, transform_indices = @transform_4, window_bounds = array<i64: 1, 512>}, {pipeline_mode = #tpu.pipeline_mode<synchronous>, transform_indices = @transform_5, window_bounds = array<i64: 256, 9>}, {pipeline_mode = #tpu.pipeline_mode<synchronous>, transform_indices = @transform_6, window_bounds = array<i64: 1, 9>}, {pipeline_mode = #tpu.pipeline_mode<synchronous>, transform_indices = @transform_7, window_bounds = array<i64: 1, 8>}, {pipeline_mode = #tpu.pipeline_mode<synchronous>, transform_indices = @transform_8, window_bounds = array<i64: 1, 128>}, {pipeline_mode = #tpu.pipeline_mode<synchronous>, transform_indices = @transform_9, window_bounds = array<i64: 8, 1>}]} {
    %c0 = arith.constant 0 : index
    %c0_0 = arith.constant 0 : index
    %0 = vector.load %arg4[%c0, %c0_0] : memref<24x512xf32, #tpu.memory_space<vmem>>, vector<4x512xf32>
    %c4 = arith.constant 4 : index
    %c0_1 = arith.constant 0 : index
    %1 = vector.load %arg4[%c4, %c0_1] : memref<24x512xf32, #tpu.memory_space<vmem>>, vector<4x512xf32>
    %c8 = arith.constant 8 : index
    %c0_2 = arith.constant 0 : index
    %2 = vector.load %arg4[%c8, %c0_2] : memref<24x512xf32, #tpu.memory_space<vmem>>, vector<8x512xf32>
    %c16 = arith.constant 16 : index
    %c0_3 = arith.constant 0 : index
    %3 = vector.load %arg4[%c16, %c0_3] : memref<24x512xf32, #tpu.memory_space<vmem>>, vector<8x512xf32>
    %c0_4 = arith.constant 0 : index
    %c0_5 = arith.constant 0 : index
    %4 = vector.load %arg6[%c0_4, %c0_5] : memref<256x9xf32, #tpu.memory_space<vmem>>, vector<256x9xf32>
    %c0_6 = arith.constant 0 : index
    %c0_7 = arith.constant 0 : index
    %5 = vector.load %arg7[%c0_6, %c0_7] : memref<1x9xf32, #tpu.memory_space<vmem>>, vector<1x9xf32>
    %c0_8 = arith.constant 0 : index
    %c0_9 = arith.constant 0 : index
    %6 = vector.load %arg1[%c0_8, %c0_9] : memref<8x4xf32, #tpu.memory_space<vmem>>, vector<8x4xf32>
    %7 = math.absf %6 : vector<8x4xf32>
    %cst = arith.constant 0.000000e+00 : f32
    %8 = vector.broadcast %cst : f32 to vector<8x4xf32>
    %9 = arith.cmpf olt, %6, %8 : vector<8x4xf32>
    %cst_10 = arith.constant -1.000000e+00 : f32
    %cst_11 = arith.constant 1.000000e+00 : f32
    %10 = vector.broadcast %cst_10 : f32 to vector<8x4xf32>
    %11 = vector.broadcast %cst_11 : f32 to vector<8x4xf32>
    %12 = arith.select %9, %10, %11 : vector<8x4xi1>, vector<8x4xf32>
    %cst_12 = arith.constant 2.41421366 : f32
    %13 = vector.broadcast %cst_12 : f32 to vector<8x4xf32>
    %14 = arith.cmpf ogt, %7, %13 : vector<8x4xf32>
    %cst_13 = arith.constant 0.414213568 : f32
    %15 = vector.broadcast %cst_13 : f32 to vector<8x4xf32>
    %16 = arith.cmpf ogt, %7, %15 : vector<8x4xf32>
    %cst_14 = arith.constant dense<true> : vector<8x4xi1>
    %17 = arith.xori %14, %cst_14 : vector<8x4xi1>
    %18 = arith.andi %16, %17 : vector<8x4xi1>
    %cst_15 = arith.constant 1.000000e+00 : f32
    %19 = vector.broadcast %cst_15 : f32 to vector<8x4xf32>
    %20 = arith.select %14, %7, %19 : vector<8x4xi1>, vector<8x4xf32>
    %21 = tpu.reciprocal %20 {approx = true} : vector<8x4xf32> -> vector<8x4xf32>
    %22 = arith.mulf %20, %21 : vector<8x4xf32>
    %cst_16 = arith.constant 2.000000e+00 : f32
    %23 = vector.broadcast %cst_16 : f32 to vector<8x4xf32>
    %24 = arith.subf %23, %22 : vector<8x4xf32>
    %25 = arith.mulf %21, %24 : vector<8x4xf32>
    %cst_17 = arith.constant 0.000000e+00 : f32
    %26 = vector.broadcast %cst_17 : f32 to vector<8x4xf32>
    %27 = arith.subf %26, %25 : vector<8x4xf32>
    %cst_18 = arith.constant 1.000000e+00 : f32
    %28 = vector.broadcast %cst_18 : f32 to vector<8x4xf32>
    %29 = arith.subf %7, %28 : vector<8x4xf32>
    %cst_19 = arith.constant 1.000000e+00 : f32
    %30 = vector.broadcast %cst_19 : f32 to vector<8x4xf32>
    %31 = arith.addf %7, %30 : vector<8x4xf32>
    %32 = tpu.reciprocal %31 {approx = true} : vector<8x4xf32> -> vector<8x4xf32>
    %33 = arith.mulf %31, %32 : vector<8x4xf32>
    %cst_20 = arith.constant 2.000000e+00 : f32
    %34 = vector.broadcast %cst_20 : f32 to vector<8x4xf32>
    %35 = arith.subf %34, %33 : vector<8x4xf32>
    %36 = arith.mulf %32, %35 : vector<8x4xf32>
    %37 = arith.mulf %29, %36 : vector<8x4xf32>
    %38 = arith.select %18, %37, %7 : vector<8x4xi1>, vector<8x4xf32>
    %39 = arith.select %14, %27, %38 : vector<8x4xi1>, vector<8x4xf32>
    %cst_21 = arith.constant 0.785398185 : f32
    %cst_22 = arith.constant 0.000000e+00 : f32
    %40 = vector.broadcast %cst_21 : f32 to vector<8x4xf32>
    %41 = vector.broadcast %cst_22 : f32 to vector<8x4xf32>
    %42 = arith.select %18, %40, %41 : vector<8x4xi1>, vector<8x4xf32>
    %cst_23 = arith.constant 1.57079637 : f32
    %43 = vector.broadcast %cst_23 : f32 to vector<8x4xf32>
    %44 = arith.select %14, %43, %42 : vector<8x4xi1>, vector<8x4xf32>
    %45 = arith.mulf %39, %39 : vector<8x4xf32>
    %cst_24 = arith.constant 0.0805374458 : f32
    %46 = vector.broadcast %cst_24 : f32 to vector<8x4xf32>
    %47 = arith.mulf %46, %45 : vector<8x4xf32>
    %cst_25 = arith.constant 0.138776854 : f32
    %48 = vector.broadcast %cst_25 : f32 to vector<8x4xf32>
    %49 = arith.subf %47, %48 : vector<8x4xf32>
    %50 = arith.mulf %49, %45 : vector<8x4xf32>
    %cst_26 = arith.constant 0.199777111 : f32
    %51 = vector.broadcast %cst_26 : f32 to vector<8x4xf32>
    %52 = arith.addf %50, %51 : vector<8x4xf32>
    %53 = arith.mulf %52, %45 : vector<8x4xf32>
    %cst_27 = arith.constant 0.333329499 : f32
    %54 = vector.broadcast %cst_27 : f32 to vector<8x4xf32>
    %55 = arith.subf %53, %54 : vector<8x4xf32>
    %56 = arith.mulf %55, %45 : vector<8x4xf32>
    %57 = arith.mulf %56, %39 : vector<8x4xf32>
    %58 = arith.addf %57, %39 : vector<8x4xf32>
    %59 = arith.addf %44, %58 : vector<8x4xf32>
    %60 = arith.mulf %12, %59 : vector<8x4xf32>
    %cst_28 = arith.constant dense<0.000000e+00> : vector<8x512xf32>
    %61 = tpu.matmul %60, %0, %cst_28 {dimension_numbers = #tpu.dot_dimension_numbers<[1], [0], [0], [1], [0, 0, 1, 1], [], []>} : vector<8x4xf32>, vector<4x512xf32>, vector<8x512xf32> -> vector<8x512xf32>
    %62 = arith.mulf %6, %6 : vector<8x4xf32>
    %63 = math.absf %62 : vector<8x4xf32>
    %cst_29 = arith.constant 0.000000e+00 : f32
    %64 = vector.broadcast %cst_29 : f32 to vector<8x4xf32>
    %65 = arith.cmpf olt, %62, %64 : vector<8x4xf32>
    %cst_30 = arith.constant -1.000000e+00 : f32
    %cst_31 = arith.constant 1.000000e+00 : f32
    %66 = vector.broadcast %cst_30 : f32 to vector<8x4xf32>
    %67 = vector.broadcast %cst_31 : f32 to vector<8x4xf32>
    %68 = arith.select %65, %66, %67 : vector<8x4xi1>, vector<8x4xf32>
    %cst_32 = arith.constant 2.41421366 : f32
    %69 = vector.broadcast %cst_32 : f32 to vector<8x4xf32>
    %70 = arith.cmpf ogt, %63, %69 : vector<8x4xf32>
    %cst_33 = arith.constant 0.414213568 : f32
    %71 = vector.broadcast %cst_33 : f32 to vector<8x4xf32>
    %72 = arith.cmpf ogt, %63, %71 : vector<8x4xf32>
    %cst_34 = arith.constant dense<true> : vector<8x4xi1>
    %73 = arith.xori %70, %cst_34 : vector<8x4xi1>
    %74 = arith.andi %72, %73 : vector<8x4xi1>
    %cst_35 = arith.constant 1.000000e+00 : f32
    %75 = vector.broadcast %cst_35 : f32 to vector<8x4xf32>
    %76 = arith.select %70, %63, %75 : vector<8x4xi1>, vector<8x4xf32>
    %77 = tpu.reciprocal %76 {approx = true} : vector<8x4xf32> -> vector<8x4xf32>
    %78 = arith.mulf %76, %77 : vector<8x4xf32>
    %cst_36 = arith.constant 2.000000e+00 : f32
    %79 = vector.broadcast %cst_36 : f32 to vector<8x4xf32>
    %80 = arith.subf %79, %78 : vector<8x4xf32>
    %81 = arith.mulf %77, %80 : vector<8x4xf32>
    %cst_37 = arith.constant 0.000000e+00 : f32
    %82 = vector.broadcast %cst_37 : f32 to vector<8x4xf32>
    %83 = arith.subf %82, %81 : vector<8x4xf32>
    %cst_38 = arith.constant 1.000000e+00 : f32
    %84 = vector.broadcast %cst_38 : f32 to vector<8x4xf32>
    %85 = arith.subf %63, %84 : vector<8x4xf32>
    %cst_39 = arith.constant 1.000000e+00 : f32
    %86 = vector.broadcast %cst_39 : f32 to vector<8x4xf32>
    %87 = arith.addf %63, %86 : vector<8x4xf32>
    %88 = tpu.reciprocal %87 {approx = true} : vector<8x4xf32> -> vector<8x4xf32>
    %89 = arith.mulf %87, %88 : vector<8x4xf32>
    %cst_40 = arith.constant 2.000000e+00 : f32
    %90 = vector.broadcast %cst_40 : f32 to vector<8x4xf32>
    %91 = arith.subf %90, %89 : vector<8x4xf32>
    %92 = arith.mulf %88, %91 : vector<8x4xf32>
    %93 = arith.mulf %85, %92 : vector<8x4xf32>
    %94 = arith.select %74, %93, %63 : vector<8x4xi1>, vector<8x4xf32>
    %95 = arith.select %70, %83, %94 : vector<8x4xi1>, vector<8x4xf32>
    %cst_41 = arith.constant 0.785398185 : f32
    %cst_42 = arith.constant 0.000000e+00 : f32
    %96 = vector.broadcast %cst_41 : f32 to vector<8x4xf32>
    %97 = vector.broadcast %cst_42 : f32 to vector<8x4xf32>
    %98 = arith.select %74, %96, %97 : vector<8x4xi1>, vector<8x4xf32>
    %cst_43 = arith.constant 1.57079637 : f32
    %99 = vector.broadcast %cst_43 : f32 to vector<8x4xf32>
    %100 = arith.select %70, %99, %98 : vector<8x4xi1>, vector<8x4xf32>
    %101 = arith.mulf %95, %95 : vector<8x4xf32>
    %cst_44 = arith.constant 0.0805374458 : f32
    %102 = vector.broadcast %cst_44 : f32 to vector<8x4xf32>
    %103 = arith.mulf %102, %101 : vector<8x4xf32>
    %cst_45 = arith.constant 0.138776854 : f32
    %104 = vector.broadcast %cst_45 : f32 to vector<8x4xf32>
    %105 = arith.subf %103, %104 : vector<8x4xf32>
    %106 = arith.mulf %105, %101 : vector<8x4xf32>
    %cst_46 = arith.constant 0.199777111 : f32
    %107 = vector.broadcast %cst_46 : f32 to vector<8x4xf32>
    %108 = arith.addf %106, %107 : vector<8x4xf32>
    %109 = arith.mulf %108, %101 : vector<8x4xf32>
    %cst_47 = arith.constant 0.333329499 : f32
    %110 = vector.broadcast %cst_47 : f32 to vector<8x4xf32>
    %111 = arith.subf %109, %110 : vector<8x4xf32>
    %112 = arith.mulf %111, %101 : vector<8x4xf32>
    %113 = arith.mulf %112, %95 : vector<8x4xf32>
    %114 = arith.addf %113, %95 : vector<8x4xf32>
    %115 = arith.addf %100, %114 : vector<8x4xf32>
    %116 = arith.mulf %68, %115 : vector<8x4xf32>
    %cst_48 = arith.constant dense<0.000000e+00> : vector<8x512xf32>
    %117 = tpu.matmul %116, %1, %cst_48 {dimension_numbers = #tpu.dot_dimension_numbers<[1], [0], [0], [1], [0, 0, 1, 1], [], []>} : vector<8x4xf32>, vector<4x512xf32>, vector<8x512xf32> -> vector<8x512xf32>
    %118 = arith.addf %61, %117 : vector<8x512xf32>
    %c0_49 = arith.constant 0 : index
    %c0_50 = arith.constant 0 : index
    %119 = vector.load %arg5[%c0_49, %c0_50] : memref<1x512xf32, #tpu.memory_space<vmem>>, vector<1x512xf32>
    %120 = vector.broadcast %119 : vector<1x512xf32> to vector<8x512xf32>
    %121 = arith.addf %118, %120 : vector<8x512xf32>
    %c0_51 = arith.constant 0 : index
    %c0_52 = arith.constant 0 : index
    %122 = vector.load %arg2[%c0_51, %c0_52] : memref<1x8xf32, #tpu.memory_space<vmem>>, vector<1x8xf32>
    %c0_53 = arith.constant 0 : index
    %c0_54 = arith.constant 0 : index
    %123 = vector.load %arg3[%c0_53, %c0_54] : memref<1x128xf32, #tpu.memory_space<vmem>>, vector<1x128xf32>
    %124 = vector.extract_strided_slice %121 {offsets = [0, 0], sizes = [1, 512], strides = [1, 1]} : vector<8x512xf32> to vector<1x512xf32>
    %125 = math.absf %122 : vector<1x8xf32>
    %cst_55 = arith.constant 0.000000e+00 : f32
    %126 = vector.broadcast %cst_55 : f32 to vector<1x8xf32>
    %127 = arith.cmpf olt, %122, %126 : vector<1x8xf32>
    %cst_56 = arith.constant -1.000000e+00 : f32
    %cst_57 = arith.constant 1.000000e+00 : f32
    %128 = vector.broadcast %cst_56 : f32 to vector<1x8xf32>
    %129 = vector.broadcast %cst_57 : f32 to vector<1x8xf32>
    %130 = arith.select %127, %128, %129 : vector<1x8xi1>, vector<1x8xf32>
    %cst_58 = arith.constant 2.41421366 : f32
    %131 = vector.broadcast %cst_58 : f32 to vector<1x8xf32>
    %132 = arith.cmpf ogt, %125, %131 : vector<1x8xf32>
    %cst_59 = arith.constant 0.414213568 : f32
    %133 = vector.broadcast %cst_59 : f32 to vector<1x8xf32>
    %134 = arith.cmpf ogt, %125, %133 : vector<1x8xf32>
    %cst_60 = arith.constant dense<true> : vector<1x8xi1>
    %135 = arith.xori %132, %cst_60 : vector<1x8xi1>
    %136 = arith.andi %134, %135 : vector<1x8xi1>
    %cst_61 = arith.constant 1.000000e+00 : f32
    %137 = vector.broadcast %cst_61 : f32 to vector<1x8xf32>
    %138 = arith.select %132, %125, %137 : vector<1x8xi1>, vector<1x8xf32>
    %139 = tpu.reciprocal %138 {approx = true} : vector<1x8xf32> -> vector<1x8xf32>
    %140 = arith.mulf %138, %139 : vector<1x8xf32>
    %cst_62 = arith.constant 2.000000e+00 : f32
    %141 = vector.broadcast %cst_62 : f32 to vector<1x8xf32>
    %142 = arith.subf %141, %140 : vector<1x8xf32>
    %143 = arith.mulf %139, %142 : vector<1x8xf32>
    %cst_63 = arith.constant 0.000000e+00 : f32
    %144 = vector.broadcast %cst_63 : f32 to vector<1x8xf32>
    %145 = arith.subf %144, %143 : vector<1x8xf32>
    %cst_64 = arith.constant 1.000000e+00 : f32
    %146 = vector.broadcast %cst_64 : f32 to vector<1x8xf32>
    %147 = arith.subf %125, %146 : vector<1x8xf32>
    %cst_65 = arith.constant 1.000000e+00 : f32
    %148 = vector.broadcast %cst_65 : f32 to vector<1x8xf32>
    %149 = arith.addf %125, %148 : vector<1x8xf32>
    %150 = tpu.reciprocal %149 {approx = true} : vector<1x8xf32> -> vector<1x8xf32>
    %151 = arith.mulf %149, %150 : vector<1x8xf32>
    %cst_66 = arith.constant 2.000000e+00 : f32
    %152 = vector.broadcast %cst_66 : f32 to vector<1x8xf32>
    %153 = arith.subf %152, %151 : vector<1x8xf32>
    %154 = arith.mulf %150, %153 : vector<1x8xf32>
    %155 = arith.mulf %147, %154 : vector<1x8xf32>
    %156 = arith.select %136, %155, %125 : vector<1x8xi1>, vector<1x8xf32>
    %157 = arith.select %132, %145, %156 : vector<1x8xi1>, vector<1x8xf32>
    %cst_67 = arith.constant 0.785398185 : f32
    %cst_68 = arith.constant 0.000000e+00 : f32
    %158 = vector.broadcast %cst_67 : f32 to vector<1x8xf32>
    %159 = vector.broadcast %cst_68 : f32 to vector<1x8xf32>
    %160 = arith.select %136, %158, %159 : vector<1x8xi1>, vector<1x8xf32>
    %cst_69 = arith.constant 1.57079637 : f32
    %161 = vector.broadcast %cst_69 : f32 to vector<1x8xf32>
    %162 = arith.select %132, %161, %160 : vector<1x8xi1>, vector<1x8xf32>
    %163 = arith.mulf %157, %157 : vector<1x8xf32>
    %cst_70 = arith.constant 0.0805374458 : f32
    %164 = vector.broadcast %cst_70 : f32 to vector<1x8xf32>
    %165 = arith.mulf %164, %163 : vector<1x8xf32>
    %cst_71 = arith.constant 0.138776854 : f32
    %166 = vector.broadcast %cst_71 : f32 to vector<1x8xf32>
    %167 = arith.subf %165, %166 : vector<1x8xf32>
    %168 = arith.mulf %167, %163 : vector<1x8xf32>
    %cst_72 = arith.constant 0.199777111 : f32
    %169 = vector.broadcast %cst_72 : f32 to vector<1x8xf32>
    %170 = arith.addf %168, %169 : vector<1x8xf32>
    %171 = arith.mulf %170, %163 : vector<1x8xf32>
    %cst_73 = arith.constant 0.333329499 : f32
    %172 = vector.broadcast %cst_73 : f32 to vector<1x8xf32>
    %173 = arith.subf %171, %172 : vector<1x8xf32>
    %174 = arith.mulf %173, %163 : vector<1x8xf32>
    %175 = arith.mulf %174, %157 : vector<1x8xf32>
    %176 = arith.addf %175, %157 : vector<1x8xf32>
    %177 = arith.addf %162, %176 : vector<1x8xf32>
    %178 = arith.mulf %130, %177 : vector<1x8xf32>
    %cst_74 = arith.constant dense<0.000000e+00> : vector<1x512xf32>
    %179 = tpu.matmul %178, %2, %cst_74 {dimension_numbers = #tpu.dot_dimension_numbers<[1], [0], [0], [1], [0, 0, 1, 1], [], []>} : vector<1x8xf32>, vector<8x512xf32>, vector<1x512xf32> -> vector<1x512xf32>
    %180 = arith.addf %124, %179 : vector<1x512xf32>
    %181 = arith.mulf %122, %122 : vector<1x8xf32>
    %182 = math.absf %181 : vector<1x8xf32>
    %cst_75 = arith.constant 0.000000e+00 : f32
    %183 = vector.broadcast %cst_75 : f32 to vector<1x8xf32>
    %184 = arith.cmpf olt, %181, %183 : vector<1x8xf32>
    %cst_76 = arith.constant -1.000000e+00 : f32
    %cst_77 = arith.constant 1.000000e+00 : f32
    %185 = vector.broadcast %cst_76 : f32 to vector<1x8xf32>
    %186 = vector.broadcast %cst_77 : f32 to vector<1x8xf32>
    %187 = arith.select %184, %185, %186 : vector<1x8xi1>, vector<1x8xf32>
    %cst_78 = arith.constant 2.41421366 : f32
    %188 = vector.broadcast %cst_78 : f32 to vector<1x8xf32>
    %189 = arith.cmpf ogt, %182, %188 : vector<1x8xf32>
    %cst_79 = arith.constant 0.414213568 : f32
    %190 = vector.broadcast %cst_79 : f32 to vector<1x8xf32>
    %191 = arith.cmpf ogt, %182, %190 : vector<1x8xf32>
    %cst_80 = arith.constant dense<true> : vector<1x8xi1>
    %192 = arith.xori %189, %cst_80 : vector<1x8xi1>
    %193 = arith.andi %191, %192 : vector<1x8xi1>
    %cst_81 = arith.constant 1.000000e+00 : f32
    %194 = vector.broadcast %cst_81 : f32 to vector<1x8xf32>
    %195 = arith.select %189, %182, %194 : vector<1x8xi1>, vector<1x8xf32>
    %196 = tpu.reciprocal %195 {approx = true} : vector<1x8xf32> -> vector<1x8xf32>
    %197 = arith.mulf %195, %196 : vector<1x8xf32>
    %cst_82 = arith.constant 2.000000e+00 : f32
    %198 = vector.broadcast %cst_82 : f32 to vector<1x8xf32>
    %199 = arith.subf %198, %197 : vector<1x8xf32>
    %200 = arith.mulf %196, %199 : vector<1x8xf32>
    %cst_83 = arith.constant 0.000000e+00 : f32
    %201 = vector.broadcast %cst_83 : f32 to vector<1x8xf32>
    %202 = arith.subf %201, %200 : vector<1x8xf32>
    %cst_84 = arith.constant 1.000000e+00 : f32
    %203 = vector.broadcast %cst_84 : f32 to vector<1x8xf32>
    %204 = arith.subf %182, %203 : vector<1x8xf32>
    %cst_85 = arith.constant 1.000000e+00 : f32
    %205 = vector.broadcast %cst_85 : f32 to vector<1x8xf32>
    %206 = arith.addf %182, %205 : vector<1x8xf32>
    %207 = tpu.reciprocal %206 {approx = true} : vector<1x8xf32> -> vector<1x8xf32>
    %208 = arith.mulf %206, %207 : vector<1x8xf32>
    %cst_86 = arith.constant 2.000000e+00 : f32
    %209 = vector.broadcast %cst_86 : f32 to vector<1x8xf32>
    %210 = arith.subf %209, %208 : vector<1x8xf32>
    %211 = arith.mulf %207, %210 : vector<1x8xf32>
    %212 = arith.mulf %204, %211 : vector<1x8xf32>
    %213 = arith.select %193, %212, %182 : vector<1x8xi1>, vector<1x8xf32>
    %214 = arith.select %189, %202, %213 : vector<1x8xi1>, vector<1x8xf32>
    %cst_87 = arith.constant 0.785398185 : f32
    %cst_88 = arith.constant 0.000000e+00 : f32
    %215 = vector.broadcast %cst_87 : f32 to vector<1x8xf32>
    %216 = vector.broadcast %cst_88 : f32 to vector<1x8xf32>
    %217 = arith.select %193, %215, %216 : vector<1x8xi1>, vector<1x8xf32>
    %cst_89 = arith.constant 1.57079637 : f32
    %218 = vector.broadcast %cst_89 : f32 to vector<1x8xf32>
    %219 = arith.select %189, %218, %217 : vector<1x8xi1>, vector<1x8xf32>
    %220 = arith.mulf %214, %214 : vector<1x8xf32>
    %cst_90 = arith.constant 0.0805374458 : f32
    %221 = vector.broadcast %cst_90 : f32 to vector<1x8xf32>
    %222 = arith.mulf %221, %220 : vector<1x8xf32>
    %cst_91 = arith.constant 0.138776854 : f32
    %223 = vector.broadcast %cst_91 : f32 to vector<1x8xf32>
    %224 = arith.subf %222, %223 : vector<1x8xf32>
    %225 = arith.mulf %224, %220 : vector<1x8xf32>
    %cst_92 = arith.constant 0.199777111 : f32
    %226 = vector.broadcast %cst_92 : f32 to vector<1x8xf32>
    %227 = arith.addf %225, %226 : vector<1x8xf32>
    %228 = arith.mulf %227, %220 : vector<1x8xf32>
    %cst_93 = arith.constant 0.333329499 : f32
    %229 = vector.broadcast %cst_93 : f32 to vector<1x8xf32>
    %230 = arith.subf %228, %229 : vector<1x8xf32>
    %231 = arith.mulf %230, %220 : vector<1x8xf32>
    %232 = arith.mulf %231, %214 : vector<1x8xf32>
    %233 = arith.addf %232, %214 : vector<1x8xf32>
    %234 = arith.addf %219, %233 : vector<1x8xf32>
    %235 = arith.mulf %187, %234 : vector<1x8xf32>
    %cst_94 = arith.constant dense<0.000000e+00> : vector<1x512xf32>
    %236 = tpu.matmul %235, %3, %cst_94 {dimension_numbers = #tpu.dot_dimension_numbers<[1], [0], [0], [1], [0, 0, 1, 1], [], []>} : vector<1x8xf32>, vector<8x512xf32>, vector<1x512xf32> -> vector<1x512xf32>
    %237 = arith.addf %180, %236 : vector<1x512xf32>
    %238 = vector.extract_strided_slice %237 {offsets = [0, 0], sizes = [1, 128], strides = [1, 1]} : vector<1x512xf32> to vector<1x128xf32>
    %239 = arith.negf %238 : vector<1x128xf32>
    %240 = math.exp %239 : vector<1x128xf32>
    %cst_95 = arith.constant 1.000000e+00 : f32
    %241 = vector.broadcast %cst_95 : f32 to vector<1x128xf32>
    %242 = arith.addf %241, %240 : vector<1x128xf32>
    %243 = arith.divf %241, %242 : vector<1x128xf32>
    %244 = vector.extract_strided_slice %237 {offsets = [0, 128], sizes = [1, 128], strides = [1, 1]} : vector<1x512xf32> to vector<1x128xf32>
    %245 = arith.negf %244 : vector<1x128xf32>
    %246 = math.exp %245 : vector<1x128xf32>
    %cst_96 = arith.constant 1.000000e+00 : f32
    %247 = vector.broadcast %cst_96 : f32 to vector<1x128xf32>
    %248 = arith.addf %247, %246 : vector<1x128xf32>
    %249 = arith.divf %247, %248 : vector<1x128xf32>
    %250 = vector.extract_strided_slice %237 {offsets = [0, 256], sizes = [1, 128], strides = [1, 1]} : vector<1x512xf32> to vector<1x128xf32>
    %251 = math.tanh %250 : vector<1x128xf32>
    %252 = vector.extract_strided_slice %237 {offsets = [0, 384], sizes = [1, 128], strides = [1, 1]} : vector<1x512xf32> to vector<1x128xf32>
    %253 = arith.negf %252 : vector<1x128xf32>
    %254 = math.exp %253 : vector<1x128xf32>
    %cst_97 = arith.constant 1.000000e+00 : f32
    %255 = vector.broadcast %cst_97 : f32 to vector<1x128xf32>
    %256 = arith.addf %255, %254 : vector<1x128xf32>
    %257 = arith.divf %255, %256 : vector<1x128xf32>
    %258 = arith.mulf %123, %243 : vector<1x128xf32>
    %259 = arith.mulf %249, %251 : vector<1x128xf32>
    %260 = arith.addf %258, %259 : vector<1x128xf32>
    %261 = math.tanh %260 : vector<1x128xf32>
    %262 = arith.mulf %257, %261 : vector<1x128xf32>
    %263 = math.absf %262 : vector<1x128xf32>
    %cst_98 = arith.constant 0.000000e+00 : f32
    %264 = vector.broadcast %cst_98 : f32 to vector<1x128xf32>
    %265 = arith.cmpf olt, %262, %264 : vector<1x128xf32>
    %cst_99 = arith.constant -1.000000e+00 : f32
    %cst_100 = arith.constant 1.000000e+00 : f32
    %266 = vector.broadcast %cst_99 : f32 to vector<1x128xf32>
    %267 = vector.broadcast %cst_100 : f32 to vector<1x128xf32>
    %268 = arith.select %265, %266, %267 : vector<1x128xi1>, vector<1x128xf32>
    %cst_101 = arith.constant 2.41421366 : f32
    %269 = vector.broadcast %cst_101 : f32 to vector<1x128xf32>
    %270 = arith.cmpf ogt, %263, %269 : vector<1x128xf32>
    %cst_102 = arith.constant 0.414213568 : f32
    %271 = vector.broadcast %cst_102 : f32 to vector<1x128xf32>
    %272 = arith.cmpf ogt, %263, %271 : vector<1x128xf32>
    %cst_103 = arith.constant dense<true> : vector<1x128xi1>
    %273 = arith.xori %270, %cst_103 : vector<1x128xi1>
    %274 = arith.andi %272, %273 : vector<1x128xi1>
    %cst_104 = arith.constant 1.000000e+00 : f32
    %275 = vector.broadcast %cst_104 : f32 to vector<1x128xf32>
    %276 = arith.select %270, %263, %275 : vector<1x128xi1>, vector<1x128xf32>
    %277 = tpu.reciprocal %276 {approx = true} : vector<1x128xf32> -> vector<1x128xf32>
    %278 = arith.mulf %276, %277 : vector<1x128xf32>
    %cst_105 = arith.constant 2.000000e+00 : f32
    %279 = vector.broadcast %cst_105 : f32 to vector<1x128xf32>
    %280 = arith.subf %279, %278 : vector<1x128xf32>
    %281 = arith.mulf %277, %280 : vector<1x128xf32>
    %cst_106 = arith.constant 0.000000e+00 : f32
    %282 = vector.broadcast %cst_106 : f32 to vector<1x128xf32>
    %283 = arith.subf %282, %281 : vector<1x128xf32>
    %cst_107 = arith.constant 1.000000e+00 : f32
    %284 = vector.broadcast %cst_107 : f32 to vector<1x128xf32>
    %285 = arith.subf %263, %284 : vector<1x128xf32>
    %cst_108 = arith.constant 1.000000e+00 : f32
    %286 = vector.broadcast %cst_108 : f32 to vector<1x128xf32>
    %287 = arith.addf %263, %286 : vector<1x128xf32>
    %288 = tpu.reciprocal %287 {approx = true} : vector<1x128xf32> -> vector<1x128xf32>
    %289 = arith.mulf %287, %288 : vector<1x128xf32>
    %cst_109 = arith.constant 2.000000e+00 : f32
    %290 = vector.broadcast %cst_109 : f32 to vector<1x128xf32>
    %291 = arith.subf %290, %289 : vector<1x128xf32>
    %292 = arith.mulf %288, %291 : vector<1x128xf32>
    %293 = arith.mulf %285, %292 : vector<1x128xf32>
    %294 = arith.select %274, %293, %263 : vector<1x128xi1>, vector<1x128xf32>
    %295 = arith.select %270, %283, %294 : vector<1x128xi1>, vector<1x128xf32>
    %cst_110 = arith.constant 0.785398185 : f32
    %cst_111 = arith.constant 0.000000e+00 : f32
    %296 = vector.broadcast %cst_110 : f32 to vector<1x128xf32>
    %297 = vector.broadcast %cst_111 : f32 to vector<1x128xf32>
    %298 = arith.select %274, %296, %297 : vector<1x128xi1>, vector<1x128xf32>
    %cst_112 = arith.constant 1.57079637 : f32
    %299 = vector.broadcast %cst_112 : f32 to vector<1x128xf32>
    %300 = arith.select %270, %299, %298 : vector<1x128xi1>, vector<1x128xf32>
    %301 = arith.mulf %295, %295 : vector<1x128xf32>
    %cst_113 = arith.constant 0.0805374458 : f32
    %302 = vector.broadcast %cst_113 : f32 to vector<1x128xf32>
    %303 = arith.mulf %302, %301 : vector<1x128xf32>
    %cst_114 = arith.constant 0.138776854 : f32
    %304 = vector.broadcast %cst_114 : f32 to vector<1x128xf32>
    %305 = arith.subf %303, %304 : vector<1x128xf32>
    %306 = arith.mulf %305, %301 : vector<1x128xf32>
    %cst_115 = arith.constant 0.199777111 : f32
    %307 = vector.broadcast %cst_115 : f32 to vector<1x128xf32>
    %308 = arith.addf %306, %307 : vector<1x128xf32>
    %309 = arith.mulf %308, %301 : vector<1x128xf32>
    %cst_116 = arith.constant 0.333329499 : f32
    %310 = vector.broadcast %cst_116 : f32 to vector<1x128xf32>
    %311 = arith.subf %309, %310 : vector<1x128xf32>
    %312 = arith.mulf %311, %301 : vector<1x128xf32>
    %313 = arith.mulf %312, %295 : vector<1x128xf32>
    %314 = arith.addf %313, %295 : vector<1x128xf32>
    %315 = arith.addf %300, %314 : vector<1x128xf32>
    %316 = arith.mulf %268, %315 : vector<1x128xf32>
    %317 = arith.mulf %262, %262 : vector<1x128xf32>
    %318 = math.absf %317 : vector<1x128xf32>
    %cst_117 = arith.constant 0.000000e+00 : f32
    %319 = vector.broadcast %cst_117 : f32 to vector<1x128xf32>
    %320 = arith.cmpf olt, %317, %319 : vector<1x128xf32>
    %cst_118 = arith.constant -1.000000e+00 : f32
    %cst_119 = arith.constant 1.000000e+00 : f32
    %321 = vector.broadcast %cst_118 : f32 to vector<1x128xf32>
    %322 = vector.broadcast %cst_119 : f32 to vector<1x128xf32>
    %323 = arith.select %320, %321, %322 : vector<1x128xi1>, vector<1x128xf32>
    %cst_120 = arith.constant 2.41421366 : f32
    %324 = vector.broadcast %cst_120 : f32 to vector<1x128xf32>
    %325 = arith.cmpf ogt, %318, %324 : vector<1x128xf32>
    %cst_121 = arith.constant 0.414213568 : f32
    %326 = vector.broadcast %cst_121 : f32 to vector<1x128xf32>
    %327 = arith.cmpf ogt, %318, %326 : vector<1x128xf32>
    %cst_122 = arith.constant dense<true> : vector<1x128xi1>
    %328 = arith.xori %325, %cst_122 : vector<1x128xi1>
    %329 = arith.andi %327, %328 : vector<1x128xi1>
    %cst_123 = arith.constant 1.000000e+00 : f32
    %330 = vector.broadcast %cst_123 : f32 to vector<1x128xf32>
    %331 = arith.select %325, %318, %330 : vector<1x128xi1>, vector<1x128xf32>
    %332 = tpu.reciprocal %331 {approx = true} : vector<1x128xf32> -> vector<1x128xf32>
    %333 = arith.mulf %331, %332 : vector<1x128xf32>
    %cst_124 = arith.constant 2.000000e+00 : f32
    %334 = vector.broadcast %cst_124 : f32 to vector<1x128xf32>
    %335 = arith.subf %334, %333 : vector<1x128xf32>
    %336 = arith.mulf %332, %335 : vector<1x128xf32>
    %cst_125 = arith.constant 0.000000e+00 : f32
    %337 = vector.broadcast %cst_125 : f32 to vector<1x128xf32>
    %338 = arith.subf %337, %336 : vector<1x128xf32>
    %cst_126 = arith.constant 1.000000e+00 : f32
    %339 = vector.broadcast %cst_126 : f32 to vector<1x128xf32>
    %340 = arith.subf %318, %339 : vector<1x128xf32>
    %cst_127 = arith.constant 1.000000e+00 : f32
    %341 = vector.broadcast %cst_127 : f32 to vector<1x128xf32>
    %342 = arith.addf %318, %341 : vector<1x128xf32>
    %343 = tpu.reciprocal %342 {approx = true} : vector<1x128xf32> -> vector<1x128xf32>
    %344 = arith.mulf %342, %343 : vector<1x128xf32>
    %cst_128 = arith.constant 2.000000e+00 : f32
    %345 = vector.broadcast %cst_128 : f32 to vector<1x128xf32>
    %346 = arith.subf %345, %344 : vector<1x128xf32>
    %347 = arith.mulf %343, %346 : vector<1x128xf32>
    %348 = arith.mulf %340, %347 : vector<1x128xf32>
    %349 = arith.select %329, %348, %318 : vector<1x128xi1>, vector<1x128xf32>
    %350 = arith.select %325, %338, %349 : vector<1x128xi1>, vector<1x128xf32>
    %cst_129 = arith.constant 0.785398185 : f32
    %cst_130 = arith.constant 0.000000e+00 : f32
    %351 = vector.broadcast %cst_129 : f32 to vector<1x128xf32>
    %352 = vector.broadcast %cst_130 : f32 to vector<1x128xf32>
    %353 = arith.select %329, %351, %352 : vector<1x128xi1>, vector<1x128xf32>
    %cst_131 = arith.constant 1.57079637 : f32
    %354 = vector.broadcast %cst_131 : f32 to vector<1x128xf32>
    %355 = arith.select %325, %354, %353 : vector<1x128xi1>, vector<1x128xf32>
    %356 = arith.mulf %350, %350 : vector<1x128xf32>
    %cst_132 = arith.constant 0.0805374458 : f32
    %357 = vector.broadcast %cst_132 : f32 to vector<1x128xf32>
    %358 = arith.mulf %357, %356 : vector<1x128xf32>
    %cst_133 = arith.constant 0.138776854 : f32
    %359 = vector.broadcast %cst_133 : f32 to vector<1x128xf32>
    %360 = arith.subf %358, %359 : vector<1x128xf32>
    %361 = arith.mulf %360, %356 : vector<1x128xf32>
    %cst_134 = arith.constant 0.199777111 : f32
    %362 = vector.broadcast %cst_134 : f32 to vector<1x128xf32>
    %363 = arith.addf %361, %362 : vector<1x128xf32>
    %364 = arith.mulf %363, %356 : vector<1x128xf32>
    %cst_135 = arith.constant 0.333329499 : f32
    %365 = vector.broadcast %cst_135 : f32 to vector<1x128xf32>
    %366 = arith.subf %364, %365 : vector<1x128xf32>
    %367 = arith.mulf %366, %356 : vector<1x128xf32>
    %368 = arith.mulf %367, %350 : vector<1x128xf32>
    %369 = arith.addf %368, %350 : vector<1x128xf32>
    %370 = arith.addf %355, %369 : vector<1x128xf32>
    %371 = arith.mulf %323, %370 : vector<1x128xf32>
    %372 = tpu.concatenate %316, %371 in 1 : vector<1x128xf32>, vector<1x128xf32> -> vector<1x256xf32>
    %cst_136 = arith.constant dense<0.000000e+00> : vector<1x9xf32>
    %373 = tpu.matmul %372, %4, %cst_136 {dimension_numbers = #tpu.dot_dimension_numbers<[1], [0], [0], [1], [0, 0, 1, 1], [], []>} : vector<1x256xf32>, vector<256x9xf32>, vector<1x9xf32> -> vector<1x9xf32>
    %374 = arith.addf %373, %5 : vector<1x9xf32>
    %375 = vector.extract_strided_slice %374 {offsets = [0, 0], sizes = [1, 8], strides = [1, 1]} : vector<1x9xf32> to vector<1x8xf32>
    %376 = vector.extract_strided_slice %374 {offsets = [0, 8], sizes = [1, 1], strides = [1, 1]} : vector<1x9xf32> to vector<1x1xf32>
    %c0_137 = arith.constant 0 : index
    %c0_138 = arith.constant 0 : index
    %377 = vector.load %arg10[%c0_137, %c0_138] : memref<8x1xf32, #tpu.memory_space<vmem>>, vector<1x1xf32>
    tpu.vector_store %arg10[%c0_137, %c0_138], %376 {strides = array<i32>} : memref<8x1xf32, #tpu.memory_space<vmem>>, vector<1x1xf32>,
    %378 = vector.extract_strided_slice %121 {offsets = [1, 0], sizes = [1, 512], strides = [1, 1]} : vector<8x512xf32> to vector<1x512xf32>
    %379 = math.absf %375 : vector<1x8xf32>
    %cst_139 = arith.constant 0.000000e+00 : f32
    %380 = vector.broadcast %cst_139 : f32 to vector<1x8xf32>
    %381 = arith.cmpf olt, %375, %380 : vector<1x8xf32>
    %cst_140 = arith.constant -1.000000e+00 : f32
    %cst_141 = arith.constant 1.000000e+00 : f32
    %382 = vector.broadcast %cst_140 : f32 to vector<1x8xf32>
    %383 = vector.broadcast %cst_141 : f32 to vector<1x8xf32>
    %384 = arith.select %381, %382, %383 : vector<1x8xi1>, vector<1x8xf32>
    %cst_142 = arith.constant 2.41421366 : f32
    %385 = vector.broadcast %cst_142 : f32 to vector<1x8xf32>
    %386 = arith.cmpf ogt, %379, %385 : vector<1x8xf32>
    %cst_143 = arith.constant 0.414213568 : f32
    %387 = vector.broadcast %cst_143 : f32 to vector<1x8xf32>
    %388 = arith.cmpf ogt, %379, %387 : vector<1x8xf32>
    %cst_144 = arith.constant dense<true> : vector<1x8xi1>
    %389 = arith.xori %386, %cst_144 : vector<1x8xi1>
    %390 = arith.andi %388, %389 : vector<1x8xi1>
    %cst_145 = arith.constant 1.000000e+00 : f32
    %391 = vector.broadcast %cst_145 : f32 to vector<1x8xf32>
    %392 = arith.select %386, %379, %391 : vector<1x8xi1>, vector<1x8xf32>
    %393 = tpu.reciprocal %392 {approx = true} : vector<1x8xf32> -> vector<1x8xf32>
    %394 = arith.mulf %392, %393 : vector<1x8xf32>
    %cst_146 = arith.constant 2.000000e+00 : f32
    %395 = vector.broadcast %cst_146 : f32 to vector<1x8xf32>
    %396 = arith.subf %395, %394 : vector<1x8xf32>
    %397 = arith.mulf %393, %396 : vector<1x8xf32>
    %cst_147 = arith.constant 0.000000e+00 : f32
    %398 = vector.broadcast %cst_147 : f32 to vector<1x8xf32>
    %399 = arith.subf %398, %397 : vector<1x8xf32>
    %cst_148 = arith.constant 1.000000e+00 : f32
    %400 = vector.broadcast %cst_148 : f32 to vector<1x8xf32>
    %401 = arith.subf %379, %400 : vector<1x8xf32>
    %cst_149 = arith.constant 1.000000e+00 : f32
    %402 = vector.broadcast %cst_149 : f32 to vector<1x8xf32>
    %403 = arith.addf %379, %402 : vector<1x8xf32>
    %404 = tpu.reciprocal %403 {approx = true} : vector<1x8xf32> -> vector<1x8xf32>
    %405 = arith.mulf %403, %404 : vector<1x8xf32>
    %cst_150 = arith.constant 2.000000e+00 : f32
    %406 = vector.broadcast %cst_150 : f32 to vector<1x8xf32>
    %407 = arith.subf %406, %405 : vector<1x8xf32>
    %408 = arith.mulf %404, %407 : vector<1x8xf32>
    %409 = arith.mulf %401, %408 : vector<1x8xf32>
    %410 = arith.select %390, %409, %379 : vector<1x8xi1>, vector<1x8xf32>
    %411 = arith.select %386, %399, %410 : vector<1x8xi1>, vector<1x8xf32>
    %cst_151 = arith.constant 0.785398185 : f32
    %cst_152 = arith.constant 0.000000e+00 : f32
    %412 = vector.broadcast %cst_151 : f32 to vector<1x8xf32>
    %413 = vector.broadcast %cst_152 : f32 to vector<1x8xf32>
    %414 = arith.select %390, %412, %413 : vector<1x8xi1>, vector<1x8xf32>
    %cst_153 = arith.constant 1.57079637 : f32
    %415 = vector.broadcast %cst_153 : f32 to vector<1x8xf32>
    %416 = arith.select %386, %415, %414 : vector<1x8xi1>, vector<1x8xf32>
    %417 = arith.mulf %411, %411 : vector<1x8xf32>
    %cst_154 = arith.constant 0.0805374458 : f32
    %418 = vector.broadcast %cst_154 : f32 to vector<1x8xf32>
    %419 = arith.mulf %418, %417 : vector<1x8xf32>
    %cst_155 = arith.constant 0.138776854 : f32
    %420 = vector.broadcast %cst_155 : f32 to vector<1x8xf32>
    %421 = arith.subf %419, %420 : vector<1x8xf32>
    %422 = arith.mulf %421, %417 : vector<1x8xf32>
    %cst_156 = arith.constant 0.199777111 : f32
    %423 = vector.broadcast %cst_156 : f32 to vector<1x8xf32>
    %424 = arith.addf %422, %423 : vector<1x8xf32>
    %425 = arith.mulf %424, %417 : vector<1x8xf32>
    %cst_157 = arith.constant 0.333329499 : f32
    %426 = vector.broadcast %cst_157 : f32 to vector<1x8xf32>
    %427 = arith.subf %425, %426 : vector<1x8xf32>
    %428 = arith.mulf %427, %417 : vector<1x8xf32>
    %429 = arith.mulf %428, %411 : vector<1x8xf32>
    %430 = arith.addf %429, %411 : vector<1x8xf32>
    %431 = arith.addf %416, %430 : vector<1x8xf32>
    %432 = arith.mulf %384, %431 : vector<1x8xf32>
    %cst_158 = arith.constant dense<0.000000e+00> : vector<1x512xf32>
    %433 = tpu.matmul %432, %2, %cst_158 {dimension_numbers = #tpu.dot_dimension_numbers<[1], [0], [0], [1], [0, 0, 1, 1], [], []>} : vector<1x8xf32>, vector<8x512xf32>, vector<1x512xf32> -> vector<1x512xf32>
    %434 = arith.addf %378, %433 : vector<1x512xf32>
    %435 = arith.mulf %375, %375 : vector<1x8xf32>
    %436 = math.absf %435 : vector<1x8xf32>
    %cst_159 = arith.constant 0.000000e+00 : f32
    %437 = vector.broadcast %cst_159 : f32 to vector<1x8xf32>
    %438 = arith.cmpf olt, %435, %437 : vector<1x8xf32>
    %cst_160 = arith.constant -1.000000e+00 : f32
    %cst_161 = arith.constant 1.000000e+00 : f32
    %439 = vector.broadcast %cst_160 : f32 to vector<1x8xf32>
    %440 = vector.broadcast %cst_161 : f32 to vector<1x8xf32>
    %441 = arith.select %438, %439, %440 : vector<1x8xi1>, vector<1x8xf32>
    %cst_162 = arith.constant 2.41421366 : f32
    %442 = vector.broadcast %cst_162 : f32 to vector<1x8xf32>
    %443 = arith.cmpf ogt, %436, %442 : vector<1x8xf32>
    %cst_163 = arith.constant 0.414213568 : f32
    %444 = vector.broadcast %cst_163 : f32 to vector<1x8xf32>
    %445 = arith.cmpf ogt, %436, %444 : vector<1x8xf32>
    %cst_164 = arith.constant dense<true> : vector<1x8xi1>
    %446 = arith.xori %443, %cst_164 : vector<1x8xi1>
    %447 = arith.andi %445, %446 : vector<1x8xi1>
    %cst_165 = arith.constant 1.000000e+00 : f32
    %448 = vector.broadcast %cst_165 : f32 to vector<1x8xf32>
    %449 = arith.select %443, %436, %448 : vector<1x8xi1>, vector<1x8xf32>
    %450 = tpu.reciprocal %449 {approx = true} : vector<1x8xf32> -> vector<1x8xf32>
    %451 = arith.mulf %449, %450 : vector<1x8xf32>
    %cst_166 = arith.constant 2.000000e+00 : f32
    %452 = vector.broadcast %cst_166 : f32 to vector<1x8xf32>
    %453 = arith.subf %452, %451 : vector<1x8xf32>
    %454 = arith.mulf %450, %453 : vector<1x8xf32>
    %cst_167 = arith.constant 0.000000e+00 : f32
    %455 = vector.broadcast %cst_167 : f32 to vector<1x8xf32>
    %456 = arith.subf %455, %454 : vector<1x8xf32>
    %cst_168 = arith.constant 1.000000e+00 : f32
    %457 = vector.broadcast %cst_168 : f32 to vector<1x8xf32>
    %458 = arith.subf %436, %457 : vector<1x8xf32>
    %cst_169 = arith.constant 1.000000e+00 : f32
    %459 = vector.broadcast %cst_169 : f32 to vector<1x8xf32>
    %460 = arith.addf %436, %459 : vector<1x8xf32>
    %461 = tpu.reciprocal %460 {approx = true} : vector<1x8xf32> -> vector<1x8xf32>
    %462 = arith.mulf %460, %461 : vector<1x8xf32>
    %cst_170 = arith.constant 2.000000e+00 : f32
    %463 = vector.broadcast %cst_170 : f32 to vector<1x8xf32>
    %464 = arith.subf %463, %462 : vector<1x8xf32>
    %465 = arith.mulf %461, %464 : vector<1x8xf32>
    %466 = arith.mulf %458, %465 : vector<1x8xf32>
    %467 = arith.select %447, %466, %436 : vector<1x8xi1>, vector<1x8xf32>
    %468 = arith.select %443, %456, %467 : vector<1x8xi1>, vector<1x8xf32>
    %cst_171 = arith.constant 0.785398185 : f32
    %cst_172 = arith.constant 0.000000e+00 : f32
    %469 = vector.broadcast %cst_171 : f32 to vector<1x8xf32>
    %470 = vector.broadcast %cst_172 : f32 to vector<1x8xf32>
    %471 = arith.select %447, %469, %470 : vector<1x8xi1>, vector<1x8xf32>
    %cst_173 = arith.constant 1.57079637 : f32
    %472 = vector.broadcast %cst_173 : f32 to vector<1x8xf32>
    %473 = arith.select %443, %472, %471 : vector<1x8xi1>, vector<1x8xf32>
    %474 = arith.mulf %468, %468 : vector<1x8xf32>
    %cst_174 = arith.constant 0.0805374458 : f32
    %475 = vector.broadcast %cst_174 : f32 to vector<1x8xf32>
    %476 = arith.mulf %475, %474 : vector<1x8xf32>
    %cst_175 = arith.constant 0.138776854 : f32
    %477 = vector.broadcast %cst_175 : f32 to vector<1x8xf32>
    %478 = arith.subf %476, %477 : vector<1x8xf32>
    %479 = arith.mulf %478, %474 : vector<1x8xf32>
    %cst_176 = arith.constant 0.199777111 : f32
    %480 = vector.broadcast %cst_176 : f32 to vector<1x8xf32>
    %481 = arith.addf %479, %480 : vector<1x8xf32>
    %482 = arith.mulf %481, %474 : vector<1x8xf32>
    %cst_177 = arith.constant 0.333329499 : f32
    %483 = vector.broadcast %cst_177 : f32 to vector<1x8xf32>
    %484 = arith.subf %482, %483 : vector<1x8xf32>
    %485 = arith.mulf %484, %474 : vector<1x8xf32>
    %486 = arith.mulf %485, %468 : vector<1x8xf32>
    %487 = arith.addf %486, %468 : vector<1x8xf32>
    %488 = arith.addf %473, %487 : vector<1x8xf32>
    %489 = arith.mulf %441, %488 : vector<1x8xf32>
    %cst_178 = arith.constant dense<0.000000e+00> : vector<1x512xf32>
    %490 = tpu.matmul %489, %3, %cst_178 {dimension_numbers = #tpu.dot_dimension_numbers<[1], [0], [0], [1], [0, 0, 1, 1], [], []>} : vector<1x8xf32>, vector<8x512xf32>, vector<1x512xf32> -> vector<1x512xf32>
    %491 = arith.addf %434, %490 : vector<1x512xf32>
    %492 = vector.extract_strided_slice %491 {offsets = [0, 0], sizes = [1, 128], strides = [1, 1]} : vector<1x512xf32> to vector<1x128xf32>
    %493 = arith.negf %492 : vector<1x128xf32>
    %494 = math.exp %493 : vector<1x128xf32>
    %cst_179 = arith.constant 1.000000e+00 : f32
    %495 = vector.broadcast %cst_179 : f32 to vector<1x128xf32>
    %496 = arith.addf %495, %494 : vector<1x128xf32>
    %497 = arith.divf %495, %496 : vector<1x128xf32>
    %498 = vector.extract_strided_slice %491 {offsets = [0, 128], sizes = [1, 128], strides = [1, 1]} : vector<1x512xf32> to vector<1x128xf32>
    %499 = arith.negf %498 : vector<1x128xf32>
    %500 = math.exp %499 : vector<1x128xf32>
    %cst_180 = arith.constant 1.000000e+00 : f32
    %501 = vector.broadcast %cst_180 : f32 to vector<1x128xf32>
    %502 = arith.addf %501, %500 : vector<1x128xf32>
    %503 = arith.divf %501, %502 : vector<1x128xf32>
    %504 = vector.extract_strided_slice %491 {offsets = [0, 256], sizes = [1, 128], strides = [1, 1]} : vector<1x512xf32> to vector<1x128xf32>
    %505 = math.tanh %504 : vector<1x128xf32>
    %506 = vector.extract_strided_slice %491 {offsets = [0, 384], sizes = [1, 128], strides = [1, 1]} : vector<1x512xf32> to vector<1x128xf32>
    %507 = arith.negf %506 : vector<1x128xf32>
    %508 = math.exp %507 : vector<1x128xf32>
    %cst_181 = arith.constant 1.000000e+00 : f32
    %509 = vector.broadcast %cst_181 : f32 to vector<1x128xf32>
    %510 = arith.addf %509, %508 : vector<1x128xf32>
    %511 = arith.divf %509, %510 : vector<1x128xf32>
    %512 = arith.mulf %260, %497 : vector<1x128xf32>
    %513 = arith.mulf %503, %505 : vector<1x128xf32>
    %514 = arith.addf %512, %513 : vector<1x128xf32>
    %515 = math.tanh %514 : vector<1x128xf32>
    %516 = arith.mulf %511, %515 : vector<1x128xf32>
    %517 = math.absf %516 : vector<1x128xf32>
    %cst_182 = arith.constant 0.000000e+00 : f32
    %518 = vector.broadcast %cst_182 : f32 to vector<1x128xf32>
    %519 = arith.cmpf olt, %516, %518 : vector<1x128xf32>
    %cst_183 = arith.constant -1.000000e+00 : f32
    %cst_184 = arith.constant 1.000000e+00 : f32
    %520 = vector.broadcast %cst_183 : f32 to vector<1x128xf32>
    %521 = vector.broadcast %cst_184 : f32 to vector<1x128xf32>
    %522 = arith.select %519, %520, %521 : vector<1x128xi1>, vector<1x128xf32>
    %cst_185 = arith.constant 2.41421366 : f32
    %523 = vector.broadcast %cst_185 : f32 to vector<1x128xf32>
    %524 = arith.cmpf ogt, %517, %523 : vector<1x128xf32>
    %cst_186 = arith.constant 0.414213568 : f32
    %525 = vector.broadcast %cst_186 : f32 to vector<1x128xf32>
    %526 = arith.cmpf ogt, %517, %525 : vector<1x128xf32>
    %cst_187 = arith.constant dense<true> : vector<1x128xi1>
    %527 = arith.xori %524, %cst_187 : vector<1x128xi1>
    %528 = arith.andi %526, %527 : vector<1x128xi1>
    %cst_188 = arith.constant 1.000000e+00 : f32
    %529 = vector.broadcast %cst_188 : f32 to vector<1x128xf32>
    %530 = arith.select %524, %517, %529 : vector<1x128xi1>, vector<1x128xf32>
    %531 = tpu.reciprocal %530 {approx = true} : vector<1x128xf32> -> vector<1x128xf32>
    %532 = arith.mulf %530, %531 : vector<1x128xf32>
    %cst_189 = arith.constant 2.000000e+00 : f32
    %533 = vector.broadcast %cst_189 : f32 to vector<1x128xf32>
    %534 = arith.subf %533, %532 : vector<1x128xf32>
    %535 = arith.mulf %531, %534 : vector<1x128xf32>
    %cst_190 = arith.constant 0.000000e+00 : f32
    %536 = vector.broadcast %cst_190 : f32 to vector<1x128xf32>
    %537 = arith.subf %536, %535 : vector<1x128xf32>
    %cst_191 = arith.constant 1.000000e+00 : f32
    %538 = vector.broadcast %cst_191 : f32 to vector<1x128xf32>
    %539 = arith.subf %517, %538 : vector<1x128xf32>
    %cst_192 = arith.constant 1.000000e+00 : f32
    %540 = vector.broadcast %cst_192 : f32 to vector<1x128xf32>
    %541 = arith.addf %517, %540 : vector<1x128xf32>
    %542 = tpu.reciprocal %541 {approx = true} : vector<1x128xf32> -> vector<1x128xf32>
    %543 = arith.mulf %541, %542 : vector<1x128xf32>
    %cst_193 = arith.constant 2.000000e+00 : f32
    %544 = vector.broadcast %cst_193 : f32 to vector<1x128xf32>
    %545 = arith.subf %544, %543 : vector<1x128xf32>
    %546 = arith.mulf %542, %545 : vector<1x128xf32>
    %547 = arith.mulf %539, %546 : vector<1x128xf32>
    %548 = arith.select %528, %547, %517 : vector<1x128xi1>, vector<1x128xf32>
    %549 = arith.select %524, %537, %548 : vector<1x128xi1>, vector<1x128xf32>
    %cst_194 = arith.constant 0.785398185 : f32
    %cst_195 = arith.constant 0.000000e+00 : f32
    %550 = vector.broadcast %cst_194 : f32 to vector<1x128xf32>
    %551 = vector.broadcast %cst_195 : f32 to vector<1x128xf32>
    %552 = arith.select %528, %550, %551 : vector<1x128xi1>, vector<1x128xf32>
    %cst_196 = arith.constant 1.57079637 : f32
    %553 = vector.broadcast %cst_196 : f32 to vector<1x128xf32>
    %554 = arith.select %524, %553, %552 : vector<1x128xi1>, vector<1x128xf32>
    %555 = arith.mulf %549, %549 : vector<1x128xf32>
    %cst_197 = arith.constant 0.0805374458 : f32
    %556 = vector.broadcast %cst_197 : f32 to vector<1x128xf32>
    %557 = arith.mulf %556, %555 : vector<1x128xf32>
    %cst_198 = arith.constant 0.138776854 : f32
    %558 = vector.broadcast %cst_198 : f32 to vector<1x128xf32>
    %559 = arith.subf %557, %558 : vector<1x128xf32>
    %560 = arith.mulf %559, %555 : vector<1x128xf32>
    %cst_199 = arith.constant 0.199777111 : f32
    %561 = vector.broadcast %cst_199 : f32 to vector<1x128xf32>
    %562 = arith.addf %560, %561 : vector<1x128xf32>
    %563 = arith.mulf %562, %555 : vector<1x128xf32>
    %cst_200 = arith.constant 0.333329499 : f32
    %564 = vector.broadcast %cst_200 : f32 to vector<1x128xf32>
    %565 = arith.subf %563, %564 : vector<1x128xf32>
    %566 = arith.mulf %565, %555 : vector<1x128xf32>
    %567 = arith.mulf %566, %549 : vector<1x128xf32>
    %568 = arith.addf %567, %549 : vector<1x128xf32>
    %569 = arith.addf %554, %568 : vector<1x128xf32>
    %570 = arith.mulf %522, %569 : vector<1x128xf32>
    %571 = arith.mulf %516, %516 : vector<1x128xf32>
    %572 = math.absf %571 : vector<1x128xf32>
    %cst_201 = arith.constant 0.000000e+00 : f32
    %573 = vector.broadcast %cst_201 : f32 to vector<1x128xf32>
    %574 = arith.cmpf olt, %571, %573 : vector<1x128xf32>
    %cst_202 = arith.constant -1.000000e+00 : f32
    %cst_203 = arith.constant 1.000000e+00 : f32
    %575 = vector.broadcast %cst_202 : f32 to vector<1x128xf32>
    %576 = vector.broadcast %cst_203 : f32 to vector<1x128xf32>
    %577 = arith.select %574, %575, %576 : vector<1x128xi1>, vector<1x128xf32>
    %cst_204 = arith.constant 2.41421366 : f32
    %578 = vector.broadcast %cst_204 : f32 to vector<1x128xf32>
    %579 = arith.cmpf ogt, %572, %578 : vector<1x128xf32>
    %cst_205 = arith.constant 0.414213568 : f32
    %580 = vector.broadcast %cst_205 : f32 to vector<1x128xf32>
    %581 = arith.cmpf ogt, %572, %580 : vector<1x128xf32>
    %cst_206 = arith.constant dense<true> : vector<1x128xi1>
    %582 = arith.xori %579, %cst_206 : vector<1x128xi1>
    %583 = arith.andi %581, %582 : vector<1x128xi1>
    %cst_207 = arith.constant 1.000000e+00 : f32
    %584 = vector.broadcast %cst_207 : f32 to vector<1x128xf32>
    %585 = arith.select %579, %572, %584 : vector<1x128xi1>, vector<1x128xf32>
    %586 = tpu.reciprocal %585 {approx = true} : vector<1x128xf32> -> vector<1x128xf32>
    %587 = arith.mulf %585, %586 : vector<1x128xf32>
    %cst_208 = arith.constant 2.000000e+00 : f32
    %588 = vector.broadcast %cst_208 : f32 to vector<1x128xf32>
    %589 = arith.subf %588, %587 : vector<1x128xf32>
    %590 = arith.mulf %586, %589 : vector<1x128xf32>
    %cst_209 = arith.constant 0.000000e+00 : f32
    %591 = vector.broadcast %cst_209 : f32 to vector<1x128xf32>
    %592 = arith.subf %591, %590 : vector<1x128xf32>
    %cst_210 = arith.constant 1.000000e+00 : f32
    %593 = vector.broadcast %cst_210 : f32 to vector<1x128xf32>
    %594 = arith.subf %572, %593 : vector<1x128xf32>
    %cst_211 = arith.constant 1.000000e+00 : f32
    %595 = vector.broadcast %cst_211 : f32 to vector<1x128xf32>
    %596 = arith.addf %572, %595 : vector<1x128xf32>
    %597 = tpu.reciprocal %596 {approx = true} : vector<1x128xf32> -> vector<1x128xf32>
    %598 = arith.mulf %596, %597 : vector<1x128xf32>
    %cst_212 = arith.constant 2.000000e+00 : f32
    %599 = vector.broadcast %cst_212 : f32 to vector<1x128xf32>
    %600 = arith.subf %599, %598 : vector<1x128xf32>
    %601 = arith.mulf %597, %600 : vector<1x128xf32>
    %602 = arith.mulf %594, %601 : vector<1x128xf32>
    %603 = arith.select %583, %602, %572 : vector<1x128xi1>, vector<1x128xf32>
    %604 = arith.select %579, %592, %603 : vector<1x128xi1>, vector<1x128xf32>
    %cst_213 = arith.constant 0.785398185 : f32
    %cst_214 = arith.constant 0.000000e+00 : f32
    %605 = vector.broadcast %cst_213 : f32 to vector<1x128xf32>
    %606 = vector.broadcast %cst_214 : f32 to vector<1x128xf32>
    %607 = arith.select %583, %605, %606 : vector<1x128xi1>, vector<1x128xf32>
    %cst_215 = arith.constant 1.57079637 : f32
    %608 = vector.broadcast %cst_215 : f32 to vector<1x128xf32>
    %609 = arith.select %579, %608, %607 : vector<1x128xi1>, vector<1x128xf32>
    %610 = arith.mulf %604, %604 : vector<1x128xf32>
    %cst_216 = arith.constant 0.0805374458 : f32
    %611 = vector.broadcast %cst_216 : f32 to vector<1x128xf32>
    %612 = arith.mulf %611, %610 : vector<1x128xf32>
    %cst_217 = arith.constant 0.138776854 : f32
    %613 = vector.broadcast %cst_217 : f32 to vector<1x128xf32>
    %614 = arith.subf %612, %613 : vector<1x128xf32>
    %615 = arith.mulf %614, %610 : vector<1x128xf32>
    %cst_218 = arith.constant 0.199777111 : f32
    %616 = vector.broadcast %cst_218 : f32 to vector<1x128xf32>
    %617 = arith.addf %615, %616 : vector<1x128xf32>
    %618 = arith.mulf %617, %610 : vector<1x128xf32>
    %cst_219 = arith.constant 0.333329499 : f32
    %619 = vector.broadcast %cst_219 : f32 to vector<1x128xf32>
    %620 = arith.subf %618, %619 : vector<1x128xf32>
    %621 = arith.mulf %620, %610 : vector<1x128xf32>
    %622 = arith.mulf %621, %604 : vector<1x128xf32>
    %623 = arith.addf %622, %604 : vector<1x128xf32>
    %624 = arith.addf %609, %623 : vector<1x128xf32>
    %625 = arith.mulf %577, %624 : vector<1x128xf32>
    %626 = tpu.concatenate %570, %625 in 1 : vector<1x128xf32>, vector<1x128xf32> -> vector<1x256xf32>
    %cst_220 = arith.constant dense<0.000000e+00> : vector<1x9xf32>
    %627 = tpu.matmul %626, %4, %cst_220 {dimension_numbers = #tpu.dot_dimension_numbers<[1], [0], [0], [1], [0, 0, 1, 1], [], []>} : vector<1x256xf32>, vector<256x9xf32>, vector<1x9xf32> -> vector<1x9xf32>
    %628 = arith.addf %627, %5 : vector<1x9xf32>
    %629 = vector.extract_strided_slice %628 {offsets = [0, 0], sizes = [1, 8], strides = [1, 1]} : vector<1x9xf32> to vector<1x8xf32>
    %630 = vector.extract_strided_slice %628 {offsets = [0, 8], sizes = [1, 1], strides = [1, 1]} : vector<1x9xf32> to vector<1x1xf32>
    %c1 = arith.constant 1 : index
    %c0_221 = arith.constant 0 : index
    %631 = vector.load %arg10[%c1, %c0_221] : memref<8x1xf32, #tpu.memory_space<vmem>>, vector<1x1xf32>
    tpu.vector_store %arg10[%c1, %c0_221], %630 {strides = array<i32>} : memref<8x1xf32, #tpu.memory_space<vmem>>, vector<1x1xf32>,
    %632 = vector.extract_strided_slice %121 {offsets = [2, 0], sizes = [1, 512], strides = [1, 1]} : vector<8x512xf32> to vector<1x512xf32>
    %633 = math.absf %629 : vector<1x8xf32>
    %cst_222 = arith.constant 0.000000e+00 : f32
    %634 = vector.broadcast %cst_222 : f32 to vector<1x8xf32>
    %635 = arith.cmpf olt, %629, %634 : vector<1x8xf32>
    %cst_223 = arith.constant -1.000000e+00 : f32
    %cst_224 = arith.constant 1.000000e+00 : f32
    %636 = vector.broadcast %cst_223 : f32 to vector<1x8xf32>
    %637 = vector.broadcast %cst_224 : f32 to vector<1x8xf32>
    %638 = arith.select %635, %636, %637 : vector<1x8xi1>, vector<1x8xf32>
    %cst_225 = arith.constant 2.41421366 : f32
    %639 = vector.broadcast %cst_225 : f32 to vector<1x8xf32>
    %640 = arith.cmpf ogt, %633, %639 : vector<1x8xf32>
    %cst_226 = arith.constant 0.414213568 : f32
    %641 = vector.broadcast %cst_226 : f32 to vector<1x8xf32>
    %642 = arith.cmpf ogt, %633, %641 : vector<1x8xf32>
    %cst_227 = arith.constant dense<true> : vector<1x8xi1>
    %643 = arith.xori %640, %cst_227 : vector<1x8xi1>
    %644 = arith.andi %642, %643 : vector<1x8xi1>
    %cst_228 = arith.constant 1.000000e+00 : f32
    %645 = vector.broadcast %cst_228 : f32 to vector<1x8xf32>
    %646 = arith.select %640, %633, %645 : vector<1x8xi1>, vector<1x8xf32>
    %647 = tpu.reciprocal %646 {approx = true} : vector<1x8xf32> -> vector<1x8xf32>
    %648 = arith.mulf %646, %647 : vector<1x8xf32>
    %cst_229 = arith.constant 2.000000e+00 : f32
    %649 = vector.broadcast %cst_229 : f32 to vector<1x8xf32>
    %650 = arith.subf %649, %648 : vector<1x8xf32>
    %651 = arith.mulf %647, %650 : vector<1x8xf32>
    %cst_230 = arith.constant 0.000000e+00 : f32
    %652 = vector.broadcast %cst_230 : f32 to vector<1x8xf32>
    %653 = arith.subf %652, %651 : vector<1x8xf32>
    %cst_231 = arith.constant 1.000000e+00 : f32
    %654 = vector.broadcast %cst_231 : f32 to vector<1x8xf32>
    %655 = arith.subf %633, %654 : vector<1x8xf32>
    %cst_232 = arith.constant 1.000000e+00 : f32
    %656 = vector.broadcast %cst_232 : f32 to vector<1x8xf32>
    %657 = arith.addf %633, %656 : vector<1x8xf32>
    %658 = tpu.reciprocal %657 {approx = true} : vector<1x8xf32> -> vector<1x8xf32>
    %659 = arith.mulf %657, %658 : vector<1x8xf32>
    %cst_233 = arith.constant 2.000000e+00 : f32
    %660 = vector.broadcast %cst_233 : f32 to vector<1x8xf32>
    %661 = arith.subf %660, %659 : vector<1x8xf32>
    %662 = arith.mulf %658, %661 : vector<1x8xf32>
    %663 = arith.mulf %655, %662 : vector<1x8xf32>
    %664 = arith.select %644, %663, %633 : vector<1x8xi1>, vector<1x8xf32>
    %665 = arith.select %640, %653, %664 : vector<1x8xi1>, vector<1x8xf32>
    %cst_234 = arith.constant 0.785398185 : f32
    %cst_235 = arith.constant 0.000000e+00 : f32
    %666 = vector.broadcast %cst_234 : f32 to vector<1x8xf32>
    %667 = vector.broadcast %cst_235 : f32 to vector<1x8xf32>
    %668 = arith.select %644, %666, %667 : vector<1x8xi1>, vector<1x8xf32>
    %cst_236 = arith.constant 1.57079637 : f32
    %669 = vector.broadcast %cst_236 : f32 to vector<1x8xf32>
    %670 = arith.select %640, %669, %668 : vector<1x8xi1>, vector<1x8xf32>
    %671 = arith.mulf %665, %665 : vector<1x8xf32>
    %cst_237 = arith.constant 0.0805374458 : f32
    %672 = vector.broadcast %cst_237 : f32 to vector<1x8xf32>
    %673 = arith.mulf %672, %671 : vector<1x8xf32>
    %cst_238 = arith.constant 0.138776854 : f32
    %674 = vector.broadcast %cst_238 : f32 to vector<1x8xf32>
    %675 = arith.subf %673, %674 : vector<1x8xf32>
    %676 = arith.mulf %675, %671 : vector<1x8xf32>
    %cst_239 = arith.constant 0.199777111 : f32
    %677 = vector.broadcast %cst_239 : f32 to vector<1x8xf32>
    %678 = arith.addf %676, %677 : vector<1x8xf32>
    %679 = arith.mulf %678, %671 : vector<1x8xf32>
    %cst_240 = arith.constant 0.333329499 : f32
    %680 = vector.broadcast %cst_240 : f32 to vector<1x8xf32>
    %681 = arith.subf %679, %680 : vector<1x8xf32>
    %682 = arith.mulf %681, %671 : vector<1x8xf32>
    %683 = arith.mulf %682, %665 : vector<1x8xf32>
    %684 = arith.addf %683, %665 : vector<1x8xf32>
    %685 = arith.addf %670, %684 : vector<1x8xf32>
    %686 = arith.mulf %638, %685 : vector<1x8xf32>
    %cst_241 = arith.constant dense<0.000000e+00> : vector<1x512xf32>
    %687 = tpu.matmul %686, %2, %cst_241 {dimension_numbers = #tpu.dot_dimension_numbers<[1], [0], [0], [1], [0, 0, 1, 1], [], []>} : vector<1x8xf32>, vector<8x512xf32>, vector<1x512xf32> -> vector<1x512xf32>
    %688 = arith.addf %632, %687 : vector<1x512xf32>
    %689 = arith.mulf %629, %629 : vector<1x8xf32>
    %690 = math.absf %689 : vector<1x8xf32>
    %cst_242 = arith.constant 0.000000e+00 : f32
    %691 = vector.broadcast %cst_242 : f32 to vector<1x8xf32>
    %692 = arith.cmpf olt, %689, %691 : vector<1x8xf32>
    %cst_243 = arith.constant -1.000000e+00 : f32
    %cst_244 = arith.constant 1.000000e+00 : f32
    %693 = vector.broadcast %cst_243 : f32 to vector<1x8xf32>
    %694 = vector.broadcast %cst_244 : f32 to vector<1x8xf32>
    %695 = arith.select %692, %693, %694 : vector<1x8xi1>, vector<1x8xf32>
    %cst_245 = arith.constant 2.41421366 : f32
    %696 = vector.broadcast %cst_245 : f32 to vector<1x8xf32>
    %697 = arith.cmpf ogt, %690, %696 : vector<1x8xf32>
    %cst_246 = arith.constant 0.414213568 : f32
    %698 = vector.broadcast %cst_246 : f32 to vector<1x8xf32>
    %699 = arith.cmpf ogt, %690, %698 : vector<1x8xf32>
    %cst_247 = arith.constant dense<true> : vector<1x8xi1>
    %700 = arith.xori %697, %cst_247 : vector<1x8xi1>
    %701 = arith.andi %699, %700 : vector<1x8xi1>
    %cst_248 = arith.constant 1.000000e+00 : f32
    %702 = vector.broadcast %cst_248 : f32 to vector<1x8xf32>
    %703 = arith.select %697, %690, %702 : vector<1x8xi1>, vector<1x8xf32>
    %704 = tpu.reciprocal %703 {approx = true} : vector<1x8xf32> -> vector<1x8xf32>
    %705 = arith.mulf %703, %704 : vector<1x8xf32>
    %cst_249 = arith.constant 2.000000e+00 : f32
    %706 = vector.broadcast %cst_249 : f32 to vector<1x8xf32>
    %707 = arith.subf %706, %705 : vector<1x8xf32>
    %708 = arith.mulf %704, %707 : vector<1x8xf32>
    %cst_250 = arith.constant 0.000000e+00 : f32
    %709 = vector.broadcast %cst_250 : f32 to vector<1x8xf32>
    %710 = arith.subf %709, %708 : vector<1x8xf32>
    %cst_251 = arith.constant 1.000000e+00 : f32
    %711 = vector.broadcast %cst_251 : f32 to vector<1x8xf32>
    %712 = arith.subf %690, %711 : vector<1x8xf32>
    %cst_252 = arith.constant 1.000000e+00 : f32
    %713 = vector.broadcast %cst_252 : f32 to vector<1x8xf32>
    %714 = arith.addf %690, %713 : vector<1x8xf32>
    %715 = tpu.reciprocal %714 {approx = true} : vector<1x8xf32> -> vector<1x8xf32>
    %716 = arith.mulf %714, %715 : vector<1x8xf32>
    %cst_253 = arith.constant 2.000000e+00 : f32
    %717 = vector.broadcast %cst_253 : f32 to vector<1x8xf32>
    %718 = arith.subf %717, %716 : vector<1x8xf32>
    %719 = arith.mulf %715, %718 : vector<1x8xf32>
    %720 = arith.mulf %712, %719 : vector<1x8xf32>
    %721 = arith.select %701, %720, %690 : vector<1x8xi1>, vector<1x8xf32>
    %722 = arith.select %697, %710, %721 : vector<1x8xi1>, vector<1x8xf32>
    %cst_254 = arith.constant 0.785398185 : f32
    %cst_255 = arith.constant 0.000000e+00 : f32
    %723 = vector.broadcast %cst_254 : f32 to vector<1x8xf32>
    %724 = vector.broadcast %cst_255 : f32 to vector<1x8xf32>
    %725 = arith.select %701, %723, %724 : vector<1x8xi1>, vector<1x8xf32>
    %cst_256 = arith.constant 1.57079637 : f32
    %726 = vector.broadcast %cst_256 : f32 to vector<1x8xf32>
    %727 = arith.select %697, %726, %725 : vector<1x8xi1>, vector<1x8xf32>
    %728 = arith.mulf %722, %722 : vector<1x8xf32>
    %cst_257 = arith.constant 0.0805374458 : f32
    %729 = vector.broadcast %cst_257 : f32 to vector<1x8xf32>
    %730 = arith.mulf %729, %728 : vector<1x8xf32>
    %cst_258 = arith.constant 0.138776854 : f32
    %731 = vector.broadcast %cst_258 : f32 to vector<1x8xf32>
    %732 = arith.subf %730, %731 : vector<1x8xf32>
    %733 = arith.mulf %732, %728 : vector<1x8xf32>
    %cst_259 = arith.constant 0.199777111 : f32
    %734 = vector.broadcast %cst_259 : f32 to vector<1x8xf32>
    %735 = arith.addf %733, %734 : vector<1x8xf32>
    %736 = arith.mulf %735, %728 : vector<1x8xf32>
    %cst_260 = arith.constant 0.333329499 : f32
    %737 = vector.broadcast %cst_260 : f32 to vector<1x8xf32>
    %738 = arith.subf %736, %737 : vector<1x8xf32>
    %739 = arith.mulf %738, %728 : vector<1x8xf32>
    %740 = arith.mulf %739, %722 : vector<1x8xf32>
    %741 = arith.addf %740, %722 : vector<1x8xf32>
    %742 = arith.addf %727, %741 : vector<1x8xf32>
    %743 = arith.mulf %695, %742 : vector<1x8xf32>
    %cst_261 = arith.constant dense<0.000000e+00> : vector<1x512xf32>
    %744 = tpu.matmul %743, %3, %cst_261 {dimension_numbers = #tpu.dot_dimension_numbers<[1], [0], [0], [1], [0, 0, 1, 1], [], []>} : vector<1x8xf32>, vector<8x512xf32>, vector<1x512xf32> -> vector<1x512xf32>
    %745 = arith.addf %688, %744 : vector<1x512xf32>
    %746 = vector.extract_strided_slice %745 {offsets = [0, 0], sizes = [1, 128], strides = [1, 1]} : vector<1x512xf32> to vector<1x128xf32>
    %747 = arith.negf %746 : vector<1x128xf32>
    %748 = math.exp %747 : vector<1x128xf32>
    %cst_262 = arith.constant 1.000000e+00 : f32
    %749 = vector.broadcast %cst_262 : f32 to vector<1x128xf32>
    %750 = arith.addf %749, %748 : vector<1x128xf32>
    %751 = arith.divf %749, %750 : vector<1x128xf32>
    %752 = vector.extract_strided_slice %745 {offsets = [0, 128], sizes = [1, 128], strides = [1, 1]} : vector<1x512xf32> to vector<1x128xf32>
    %753 = arith.negf %752 : vector<1x128xf32>
    %754 = math.exp %753 : vector<1x128xf32>
    %cst_263 = arith.constant 1.000000e+00 : f32
    %755 = vector.broadcast %cst_263 : f32 to vector<1x128xf32>
    %756 = arith.addf %755, %754 : vector<1x128xf32>
    %757 = arith.divf %755, %756 : vector<1x128xf32>
    %758 = vector.extract_strided_slice %745 {offsets = [0, 256], sizes = [1, 128], strides = [1, 1]} : vector<1x512xf32> to vector<1x128xf32>
    %759 = math.tanh %758 : vector<1x128xf32>
    %760 = vector.extract_strided_slice %745 {offsets = [0, 384], sizes = [1, 128], strides = [1, 1]} : vector<1x512xf32> to vector<1x128xf32>
    %761 = arith.negf %760 : vector<1x128xf32>
    %762 = math.exp %761 : vector<1x128xf32>
    %cst_264 = arith.constant 1.000000e+00 : f32
    %763 = vector.broadcast %cst_264 : f32 to vector<1x128xf32>
    %764 = arith.addf %763, %762 : vector<1x128xf32>
    %765 = arith.divf %763, %764 : vector<1x128xf32>
    %766 = arith.mulf %514, %751 : vector<1x128xf32>
    %767 = arith.mulf %757, %759 : vector<1x128xf32>
    %768 = arith.addf %766, %767 : vector<1x128xf32>
    %769 = math.tanh %768 : vector<1x128xf32>
    %770 = arith.mulf %765, %769 : vector<1x128xf32>
    %771 = math.absf %770 : vector<1x128xf32>
    %cst_265 = arith.constant 0.000000e+00 : f32
    %772 = vector.broadcast %cst_265 : f32 to vector<1x128xf32>
    %773 = arith.cmpf olt, %770, %772 : vector<1x128xf32>
    %cst_266 = arith.constant -1.000000e+00 : f32
    %cst_267 = arith.constant 1.000000e+00 : f32
    %774 = vector.broadcast %cst_266 : f32 to vector<1x128xf32>
    %775 = vector.broadcast %cst_267 : f32 to vector<1x128xf32>
    %776 = arith.select %773, %774, %775 : vector<1x128xi1>, vector<1x128xf32>
    %cst_268 = arith.constant 2.41421366 : f32
    %777 = vector.broadcast %cst_268 : f32 to vector<1x128xf32>
    %778 = arith.cmpf ogt, %771, %777 : vector<1x128xf32>
    %cst_269 = arith.constant 0.414213568 : f32
    %779 = vector.broadcast %cst_269 : f32 to vector<1x128xf32>
    %780 = arith.cmpf ogt, %771, %779 : vector<1x128xf32>
    %cst_270 = arith.constant dense<true> : vector<1x128xi1>
    %781 = arith.xori %778, %cst_270 : vector<1x128xi1>
    %782 = arith.andi %780, %781 : vector<1x128xi1>
    %cst_271 = arith.constant 1.000000e+00 : f32
    %783 = vector.broadcast %cst_271 : f32 to vector<1x128xf32>
    %784 = arith.select %778, %771, %783 : vector<1x128xi1>, vector<1x128xf32>
    %785 = tpu.reciprocal %784 {approx = true} : vector<1x128xf32> -> vector<1x128xf32>
    %786 = arith.mulf %784, %785 : vector<1x128xf32>
    %cst_272 = arith.constant 2.000000e+00 : f32
    %787 = vector.broadcast %cst_272 : f32 to vector<1x128xf32>
    %788 = arith.subf %787, %786 : vector<1x128xf32>
    %789 = arith.mulf %785, %788 : vector<1x128xf32>
    %cst_273 = arith.constant 0.000000e+00 : f32
    %790 = vector.broadcast %cst_273 : f32 to vector<1x128xf32>
    %791 = arith.subf %790, %789 : vector<1x128xf32>
    %cst_274 = arith.constant 1.000000e+00 : f32
    %792 = vector.broadcast %cst_274 : f32 to vector<1x128xf32>
    %793 = arith.subf %771, %792 : vector<1x128xf32>
    %cst_275 = arith.constant 1.000000e+00 : f32
    %794 = vector.broadcast %cst_275 : f32 to vector<1x128xf32>
    %795 = arith.addf %771, %794 : vector<1x128xf32>
    %796 = tpu.reciprocal %795 {approx = true} : vector<1x128xf32> -> vector<1x128xf32>
    %797 = arith.mulf %795, %796 : vector<1x128xf32>
    %cst_276 = arith.constant 2.000000e+00 : f32
    %798 = vector.broadcast %cst_276 : f32 to vector<1x128xf32>
    %799 = arith.subf %798, %797 : vector<1x128xf32>
    %800 = arith.mulf %796, %799 : vector<1x128xf32>
    %801 = arith.mulf %793, %800 : vector<1x128xf32>
    %802 = arith.select %782, %801, %771 : vector<1x128xi1>, vector<1x128xf32>
    %803 = arith.select %778, %791, %802 : vector<1x128xi1>, vector<1x128xf32>
    %cst_277 = arith.constant 0.785398185 : f32
    %cst_278 = arith.constant 0.000000e+00 : f32
    %804 = vector.broadcast %cst_277 : f32 to vector<1x128xf32>
    %805 = vector.broadcast %cst_278 : f32 to vector<1x128xf32>
    %806 = arith.select %782, %804, %805 : vector<1x128xi1>, vector<1x128xf32>
    %cst_279 = arith.constant 1.57079637 : f32
    %807 = vector.broadcast %cst_279 : f32 to vector<1x128xf32>
    %808 = arith.select %778, %807, %806 : vector<1x128xi1>, vector<1x128xf32>
    %809 = arith.mulf %803, %803 : vector<1x128xf32>
    %cst_280 = arith.constant 0.0805374458 : f32
    %810 = vector.broadcast %cst_280 : f32 to vector<1x128xf32>
    %811 = arith.mulf %810, %809 : vector<1x128xf32>
    %cst_281 = arith.constant 0.138776854 : f32
    %812 = vector.broadcast %cst_281 : f32 to vector<1x128xf32>
    %813 = arith.subf %811, %812 : vector<1x128xf32>
    %814 = arith.mulf %813, %809 : vector<1x128xf32>
    %cst_282 = arith.constant 0.199777111 : f32
    %815 = vector.broadcast %cst_282 : f32 to vector<1x128xf32>
    %816 = arith.addf %814, %815 : vector<1x128xf32>
    %817 = arith.mulf %816, %809 : vector<1x128xf32>
    %cst_283 = arith.constant 0.333329499 : f32
    %818 = vector.broadcast %cst_283 : f32 to vector<1x128xf32>
    %819 = arith.subf %817, %818 : vector<1x128xf32>
    %820 = arith.mulf %819, %809 : vector<1x128xf32>
    %821 = arith.mulf %820, %803 : vector<1x128xf32>
    %822 = arith.addf %821, %803 : vector<1x128xf32>
    %823 = arith.addf %808, %822 : vector<1x128xf32>
    %824 = arith.mulf %776, %823 : vector<1x128xf32>
    %825 = arith.mulf %770, %770 : vector<1x128xf32>
    %826 = math.absf %825 : vector<1x128xf32>
    %cst_284 = arith.constant 0.000000e+00 : f32
    %827 = vector.broadcast %cst_284 : f32 to vector<1x128xf32>
    %828 = arith.cmpf olt, %825, %827 : vector<1x128xf32>
    %cst_285 = arith.constant -1.000000e+00 : f32
    %cst_286 = arith.constant 1.000000e+00 : f32
    %829 = vector.broadcast %cst_285 : f32 to vector<1x128xf32>
    %830 = vector.broadcast %cst_286 : f32 to vector<1x128xf32>
    %831 = arith.select %828, %829, %830 : vector<1x128xi1>, vector<1x128xf32>
    %cst_287 = arith.constant 2.41421366 : f32
    %832 = vector.broadcast %cst_287 : f32 to vector<1x128xf32>
    %833 = arith.cmpf ogt, %826, %832 : vector<1x128xf32>
    %cst_288 = arith.constant 0.414213568 : f32
    %834 = vector.broadcast %cst_288 : f32 to vector<1x128xf32>
    %835 = arith.cmpf ogt, %826, %834 : vector<1x128xf32>
    %cst_289 = arith.constant dense<true> : vector<1x128xi1>
    %836 = arith.xori %833, %cst_289 : vector<1x128xi1>
    %837 = arith.andi %835, %836 : vector<1x128xi1>
    %cst_290 = arith.constant 1.000000e+00 : f32
    %838 = vector.broadcast %cst_290 : f32 to vector<1x128xf32>
    %839 = arith.select %833, %826, %838 : vector<1x128xi1>, vector<1x128xf32>
    %840 = tpu.reciprocal %839 {approx = true} : vector<1x128xf32> -> vector<1x128xf32>
    %841 = arith.mulf %839, %840 : vector<1x128xf32>
    %cst_291 = arith.constant 2.000000e+00 : f32
    %842 = vector.broadcast %cst_291 : f32 to vector<1x128xf32>
    %843 = arith.subf %842, %841 : vector<1x128xf32>
    %844 = arith.mulf %840, %843 : vector<1x128xf32>
    %cst_292 = arith.constant 0.000000e+00 : f32
    %845 = vector.broadcast %cst_292 : f32 to vector<1x128xf32>
    %846 = arith.subf %845, %844 : vector<1x128xf32>
    %cst_293 = arith.constant 1.000000e+00 : f32
    %847 = vector.broadcast %cst_293 : f32 to vector<1x128xf32>
    %848 = arith.subf %826, %847 : vector<1x128xf32>
    %cst_294 = arith.constant 1.000000e+00 : f32
    %849 = vector.broadcast %cst_294 : f32 to vector<1x128xf32>
    %850 = arith.addf %826, %849 : vector<1x128xf32>
    %851 = tpu.reciprocal %850 {approx = true} : vector<1x128xf32> -> vector<1x128xf32>
    %852 = arith.mulf %850, %851 : vector<1x128xf32>
    %cst_295 = arith.constant 2.000000e+00 : f32
    %853 = vector.broadcast %cst_295 : f32 to vector<1x128xf32>
    %854 = arith.subf %853, %852 : vector<1x128xf32>
    %855 = arith.mulf %851, %854 : vector<1x128xf32>
    %856 = arith.mulf %848, %855 : vector<1x128xf32>
    %857 = arith.select %837, %856, %826 : vector<1x128xi1>, vector<1x128xf32>
    %858 = arith.select %833, %846, %857 : vector<1x128xi1>, vector<1x128xf32>
    %cst_296 = arith.constant 0.785398185 : f32
    %cst_297 = arith.constant 0.000000e+00 : f32
    %859 = vector.broadcast %cst_296 : f32 to vector<1x128xf32>
    %860 = vector.broadcast %cst_297 : f32 to vector<1x128xf32>
    %861 = arith.select %837, %859, %860 : vector<1x128xi1>, vector<1x128xf32>
    %cst_298 = arith.constant 1.57079637 : f32
    %862 = vector.broadcast %cst_298 : f32 to vector<1x128xf32>
    %863 = arith.select %833, %862, %861 : vector<1x128xi1>, vector<1x128xf32>
    %864 = arith.mulf %858, %858 : vector<1x128xf32>
    %cst_299 = arith.constant 0.0805374458 : f32
    %865 = vector.broadcast %cst_299 : f32 to vector<1x128xf32>
    %866 = arith.mulf %865, %864 : vector<1x128xf32>
    %cst_300 = arith.constant 0.138776854 : f32
    %867 = vector.broadcast %cst_300 : f32 to vector<1x128xf32>
    %868 = arith.subf %866, %867 : vector<1x128xf32>
    %869 = arith.mulf %868, %864 : vector<1x128xf32>
    %cst_301 = arith.constant 0.199777111 : f32
    %870 = vector.broadcast %cst_301 : f32 to vector<1x128xf32>
    %871 = arith.addf %869, %870 : vector<1x128xf32>
    %872 = arith.mulf %871, %864 : vector<1x128xf32>
    %cst_302 = arith.constant 0.333329499 : f32
    %873 = vector.broadcast %cst_302 : f32 to vector<1x128xf32>
    %874 = arith.subf %872, %873 : vector<1x128xf32>
    %875 = arith.mulf %874, %864 : vector<1x128xf32>
    %876 = arith.mulf %875, %858 : vector<1x128xf32>
    %877 = arith.addf %876, %858 : vector<1x128xf32>
    %878 = arith.addf %863, %877 : vector<1x128xf32>
    %879 = arith.mulf %831, %878 : vector<1x128xf32>
    %880 = tpu.concatenate %824, %879 in 1 : vector<1x128xf32>, vector<1x128xf32> -> vector<1x256xf32>
    %cst_303 = arith.constant dense<0.000000e+00> : vector<1x9xf32>
    %881 = tpu.matmul %880, %4, %cst_303 {dimension_numbers = #tpu.dot_dimension_numbers<[1], [0], [0], [1], [0, 0, 1, 1], [], []>} : vector<1x256xf32>, vector<256x9xf32>, vector<1x9xf32> -> vector<1x9xf32>
    %882 = arith.addf %881, %5 : vector<1x9xf32>
    %883 = vector.extract_strided_slice %882 {offsets = [0, 0], sizes = [1, 8], strides = [1, 1]} : vector<1x9xf32> to vector<1x8xf32>
    %884 = vector.extract_strided_slice %882 {offsets = [0, 8], sizes = [1, 1], strides = [1, 1]} : vector<1x9xf32> to vector<1x1xf32>
    %c2 = arith.constant 2 : index
    %c0_304 = arith.constant 0 : index
    %885 = vector.load %arg10[%c2, %c0_304] : memref<8x1xf32, #tpu.memory_space<vmem>>, vector<1x1xf32>
    tpu.vector_store %arg10[%c2, %c0_304], %884 {strides = array<i32>} : memref<8x1xf32, #tpu.memory_space<vmem>>, vector<1x1xf32>,
    %886 = vector.extract_strided_slice %121 {offsets = [3, 0], sizes = [1, 512], strides = [1, 1]} : vector<8x512xf32> to vector<1x512xf32>
    %887 = math.absf %883 : vector<1x8xf32>
    %cst_305 = arith.constant 0.000000e+00 : f32
    %888 = vector.broadcast %cst_305 : f32 to vector<1x8xf32>
    %889 = arith.cmpf olt, %883, %888 : vector<1x8xf32>
    %cst_306 = arith.constant -1.000000e+00 : f32
    %cst_307 = arith.constant 1.000000e+00 : f32
    %890 = vector.broadcast %cst_306 : f32 to vector<1x8xf32>
    %891 = vector.broadcast %cst_307 : f32 to vector<1x8xf32>
    %892 = arith.select %889, %890, %891 : vector<1x8xi1>, vector<1x8xf32>
    %cst_308 = arith.constant 2.41421366 : f32
    %893 = vector.broadcast %cst_308 : f32 to vector<1x8xf32>
    %894 = arith.cmpf ogt, %887, %893 : vector<1x8xf32>
    %cst_309 = arith.constant 0.414213568 : f32
    %895 = vector.broadcast %cst_309 : f32 to vector<1x8xf32>
    %896 = arith.cmpf ogt, %887, %895 : vector<1x8xf32>
    %cst_310 = arith.constant dense<true> : vector<1x8xi1>
    %897 = arith.xori %894, %cst_310 : vector<1x8xi1>
    %898 = arith.andi %896, %897 : vector<1x8xi1>
    %cst_311 = arith.constant 1.000000e+00 : f32
    %899 = vector.broadcast %cst_311 : f32 to vector<1x8xf32>
    %900 = arith.select %894, %887, %899 : vector<1x8xi1>, vector<1x8xf32>
    %901 = tpu.reciprocal %900 {approx = true} : vector<1x8xf32> -> vector<1x8xf32>
    %902 = arith.mulf %900, %901 : vector<1x8xf32>
    %cst_312 = arith.constant 2.000000e+00 : f32
    %903 = vector.broadcast %cst_312 : f32 to vector<1x8xf32>
    %904 = arith.subf %903, %902 : vector<1x8xf32>
    %905 = arith.mulf %901, %904 : vector<1x8xf32>
    %cst_313 = arith.constant 0.000000e+00 : f32
    %906 = vector.broadcast %cst_313 : f32 to vector<1x8xf32>
    %907 = arith.subf %906, %905 : vector<1x8xf32>
    %cst_314 = arith.constant 1.000000e+00 : f32
    %908 = vector.broadcast %cst_314 : f32 to vector<1x8xf32>
    %909 = arith.subf %887, %908 : vector<1x8xf32>
    %cst_315 = arith.constant 1.000000e+00 : f32
    %910 = vector.broadcast %cst_315 : f32 to vector<1x8xf32>
    %911 = arith.addf %887, %910 : vector<1x8xf32>
    %912 = tpu.reciprocal %911 {approx = true} : vector<1x8xf32> -> vector<1x8xf32>
    %913 = arith.mulf %911, %912 : vector<1x8xf32>
    %cst_316 = arith.constant 2.000000e+00 : f32
    %914 = vector.broadcast %cst_316 : f32 to vector<1x8xf32>
    %915 = arith.subf %914, %913 : vector<1x8xf32>
    %916 = arith.mulf %912, %915 : vector<1x8xf32>
    %917 = arith.mulf %909, %916 : vector<1x8xf32>
    %918 = arith.select %898, %917, %887 : vector<1x8xi1>, vector<1x8xf32>
    %919 = arith.select %894, %907, %918 : vector<1x8xi1>, vector<1x8xf32>
    %cst_317 = arith.constant 0.785398185 : f32
    %cst_318 = arith.constant 0.000000e+00 : f32
    %920 = vector.broadcast %cst_317 : f32 to vector<1x8xf32>
    %921 = vector.broadcast %cst_318 : f32 to vector<1x8xf32>
    %922 = arith.select %898, %920, %921 : vector<1x8xi1>, vector<1x8xf32>
    %cst_319 = arith.constant 1.57079637 : f32
    %923 = vector.broadcast %cst_319 : f32 to vector<1x8xf32>
    %924 = arith.select %894, %923, %922 : vector<1x8xi1>, vector<1x8xf32>
    %925 = arith.mulf %919, %919 : vector<1x8xf32>
    %cst_320 = arith.constant 0.0805374458 : f32
    %926 = vector.broadcast %cst_320 : f32 to vector<1x8xf32>
    %927 = arith.mulf %926, %925 : vector<1x8xf32>
    %cst_321 = arith.constant 0.138776854 : f32
    %928 = vector.broadcast %cst_321 : f32 to vector<1x8xf32>
    %929 = arith.subf %927, %928 : vector<1x8xf32>
    %930 = arith.mulf %929, %925 : vector<1x8xf32>
    %cst_322 = arith.constant 0.199777111 : f32
    %931 = vector.broadcast %cst_322 : f32 to vector<1x8xf32>
    %932 = arith.addf %930, %931 : vector<1x8xf32>
    %933 = arith.mulf %932, %925 : vector<1x8xf32>
    %cst_323 = arith.constant 0.333329499 : f32
    %934 = vector.broadcast %cst_323 : f32 to vector<1x8xf32>
    %935 = arith.subf %933, %934 : vector<1x8xf32>
    %936 = arith.mulf %935, %925 : vector<1x8xf32>
    %937 = arith.mulf %936, %919 : vector<1x8xf32>
    %938 = arith.addf %937, %919 : vector<1x8xf32>
    %939 = arith.addf %924, %938 : vector<1x8xf32>
    %940 = arith.mulf %892, %939 : vector<1x8xf32>
    %cst_324 = arith.constant dense<0.000000e+00> : vector<1x512xf32>
    %941 = tpu.matmul %940, %2, %cst_324 {dimension_numbers = #tpu.dot_dimension_numbers<[1], [0], [0], [1], [0, 0, 1, 1], [], []>} : vector<1x8xf32>, vector<8x512xf32>, vector<1x512xf32> -> vector<1x512xf32>
    %942 = arith.addf %886, %941 : vector<1x512xf32>
    %943 = arith.mulf %883, %883 : vector<1x8xf32>
    %944 = math.absf %943 : vector<1x8xf32>
    %cst_325 = arith.constant 0.000000e+00 : f32
    %945 = vector.broadcast %cst_325 : f32 to vector<1x8xf32>
    %946 = arith.cmpf olt, %943, %945 : vector<1x8xf32>
    %cst_326 = arith.constant -1.000000e+00 : f32
    %cst_327 = arith.constant 1.000000e+00 : f32
    %947 = vector.broadcast %cst_326 : f32 to vector<1x8xf32>
    %948 = vector.broadcast %cst_327 : f32 to vector<1x8xf32>
    %949 = arith.select %946, %947, %948 : vector<1x8xi1>, vector<1x8xf32>
    %cst_328 = arith.constant 2.41421366 : f32
    %950 = vector.broadcast %cst_328 : f32 to vector<1x8xf32>
    %951 = arith.cmpf ogt, %944, %950 : vector<1x8xf32>
    %cst_329 = arith.constant 0.414213568 : f32
    %952 = vector.broadcast %cst_329 : f32 to vector<1x8xf32>
    %953 = arith.cmpf ogt, %944, %952 : vector<1x8xf32>
    %cst_330 = arith.constant dense<true> : vector<1x8xi1>
    %954 = arith.xori %951, %cst_330 : vector<1x8xi1>
    %955 = arith.andi %953, %954 : vector<1x8xi1>
    %cst_331 = arith.constant 1.000000e+00 : f32
    %956 = vector.broadcast %cst_331 : f32 to vector<1x8xf32>
    %957 = arith.select %951, %944, %956 : vector<1x8xi1>, vector<1x8xf32>
    %958 = tpu.reciprocal %957 {approx = true} : vector<1x8xf32> -> vector<1x8xf32>
    %959 = arith.mulf %957, %958 : vector<1x8xf32>
    %cst_332 = arith.constant 2.000000e+00 : f32
    %960 = vector.broadcast %cst_332 : f32 to vector<1x8xf32>
    %961 = arith.subf %960, %959 : vector<1x8xf32>
    %962 = arith.mulf %958, %961 : vector<1x8xf32>
    %cst_333 = arith.constant 0.000000e+00 : f32
    %963 = vector.broadcast %cst_333 : f32 to vector<1x8xf32>
    %964 = arith.subf %963, %962 : vector<1x8xf32>
    %cst_334 = arith.constant 1.000000e+00 : f32
    %965 = vector.broadcast %cst_334 : f32 to vector<1x8xf32>
    %966 = arith.subf %944, %965 : vector<1x8xf32>
    %cst_335 = arith.constant 1.000000e+00 : f32
    %967 = vector.broadcast %cst_335 : f32 to vector<1x8xf32>
    %968 = arith.addf %944, %967 : vector<1x8xf32>
    %969 = tpu.reciprocal %968 {approx = true} : vector<1x8xf32> -> vector<1x8xf32>
    %970 = arith.mulf %968, %969 : vector<1x8xf32>
    %cst_336 = arith.constant 2.000000e+00 : f32
    %971 = vector.broadcast %cst_336 : f32 to vector<1x8xf32>
    %972 = arith.subf %971, %970 : vector<1x8xf32>
    %973 = arith.mulf %969, %972 : vector<1x8xf32>
    %974 = arith.mulf %966, %973 : vector<1x8xf32>
    %975 = arith.select %955, %974, %944 : vector<1x8xi1>, vector<1x8xf32>
    %976 = arith.select %951, %964, %975 : vector<1x8xi1>, vector<1x8xf32>
    %cst_337 = arith.constant 0.785398185 : f32
    %cst_338 = arith.constant 0.000000e+00 : f32
    %977 = vector.broadcast %cst_337 : f32 to vector<1x8xf32>
    %978 = vector.broadcast %cst_338 : f32 to vector<1x8xf32>
    %979 = arith.select %955, %977, %978 : vector<1x8xi1>, vector<1x8xf32>
    %cst_339 = arith.constant 1.57079637 : f32
    %980 = vector.broadcast %cst_339 : f32 to vector<1x8xf32>
    %981 = arith.select %951, %980, %979 : vector<1x8xi1>, vector<1x8xf32>
    %982 = arith.mulf %976, %976 : vector<1x8xf32>
    %cst_340 = arith.constant 0.0805374458 : f32
    %983 = vector.broadcast %cst_340 : f32 to vector<1x8xf32>
    %984 = arith.mulf %983, %982 : vector<1x8xf32>
    %cst_341 = arith.constant 0.138776854 : f32
    %985 = vector.broadcast %cst_341 : f32 to vector<1x8xf32>
    %986 = arith.subf %984, %985 : vector<1x8xf32>
    %987 = arith.mulf %986, %982 : vector<1x8xf32>
    %cst_342 = arith.constant 0.199777111 : f32
    %988 = vector.broadcast %cst_342 : f32 to vector<1x8xf32>
    %989 = arith.addf %987, %988 : vector<1x8xf32>
    %990 = arith.mulf %989, %982 : vector<1x8xf32>
    %cst_343 = arith.constant 0.333329499 : f32
    %991 = vector.broadcast %cst_343 : f32 to vector<1x8xf32>
    %992 = arith.subf %990, %991 : vector<1x8xf32>
    %993 = arith.mulf %992, %982 : vector<1x8xf32>
    %994 = arith.mulf %993, %976 : vector<1x8xf32>
    %995 = arith.addf %994, %976 : vector<1x8xf32>
    %996 = arith.addf %981, %995 : vector<1x8xf32>
    %997 = arith.mulf %949, %996 : vector<1x8xf32>
    %cst_344 = arith.constant dense<0.000000e+00> : vector<1x512xf32>
    %998 = tpu.matmul %997, %3, %cst_344 {dimension_numbers = #tpu.dot_dimension_numbers<[1], [0], [0], [1], [0, 0, 1, 1], [], []>} : vector<1x8xf32>, vector<8x512xf32>, vector<1x512xf32> -> vector<1x512xf32>
    %999 = arith.addf %942, %998 : vector<1x512xf32>
    %1000 = vector.extract_strided_slice %999 {offsets = [0, 0], sizes = [1, 128], strides = [1, 1]} : vector<1x512xf32> to vector<1x128xf32>
    %1001 = arith.negf %1000 : vector<1x128xf32>
    %1002 = math.exp %1001 : vector<1x128xf32>
    %cst_345 = arith.constant 1.000000e+00 : f32
    %1003 = vector.broadcast %cst_345 : f32 to vector<1x128xf32>
    %1004 = arith.addf %1003, %1002 : vector<1x128xf32>
    %1005 = arith.divf %1003, %1004 : vector<1x128xf32>
    %1006 = vector.extract_strided_slice %999 {offsets = [0, 128], sizes = [1, 128], strides = [1, 1]} : vector<1x512xf32> to vector<1x128xf32>
    %1007 = arith.negf %1006 : vector<1x128xf32>
    %1008 = math.exp %1007 : vector<1x128xf32>
    %cst_346 = arith.constant 1.000000e+00 : f32
    %1009 = vector.broadcast %cst_346 : f32 to vector<1x128xf32>
    %1010 = arith.addf %1009, %1008 : vector<1x128xf32>
    %1011 = arith.divf %1009, %1010 : vector<1x128xf32>
    %1012 = vector.extract_strided_slice %999 {offsets = [0, 256], sizes = [1, 128], strides = [1, 1]} : vector<1x512xf32> to vector<1x128xf32>
    %1013 = math.tanh %1012 : vector<1x128xf32>
    %1014 = vector.extract_strided_slice %999 {offsets = [0, 384], sizes = [1, 128], strides = [1, 1]} : vector<1x512xf32> to vector<1x128xf32>
    %1015 = arith.negf %1014 : vector<1x128xf32>
    %1016 = math.exp %1015 : vector<1x128xf32>
    %cst_347 = arith.constant 1.000000e+00 : f32
    %1017 = vector.broadcast %cst_347 : f32 to vector<1x128xf32>
    %1018 = arith.addf %1017, %1016 : vector<1x128xf32>
    %1019 = arith.divf %1017, %1018 : vector<1x128xf32>
    %1020 = arith.mulf %768, %1005 : vector<1x128xf32>
    %1021 = arith.mulf %1011, %1013 : vector<1x128xf32>
    %1022 = arith.addf %1020, %1021 : vector<1x128xf32>
    %1023 = math.tanh %1022 : vector<1x128xf32>
    %1024 = arith.mulf %1019, %1023 : vector<1x128xf32>
    %1025 = math.absf %1024 : vector<1x128xf32>
    %cst_348 = arith.constant 0.000000e+00 : f32
    %1026 = vector.broadcast %cst_348 : f32 to vector<1x128xf32>
    %1027 = arith.cmpf olt, %1024, %1026 : vector<1x128xf32>
    %cst_349 = arith.constant -1.000000e+00 : f32
    %cst_350 = arith.constant 1.000000e+00 : f32
    %1028 = vector.broadcast %cst_349 : f32 to vector<1x128xf32>
    %1029 = vector.broadcast %cst_350 : f32 to vector<1x128xf32>
    %1030 = arith.select %1027, %1028, %1029 : vector<1x128xi1>, vector<1x128xf32>
    %cst_351 = arith.constant 2.41421366 : f32
    %1031 = vector.broadcast %cst_351 : f32 to vector<1x128xf32>
    %1032 = arith.cmpf ogt, %1025, %1031 : vector<1x128xf32>
    %cst_352 = arith.constant 0.414213568 : f32
    %1033 = vector.broadcast %cst_352 : f32 to vector<1x128xf32>
    %1034 = arith.cmpf ogt, %1025, %1033 : vector<1x128xf32>
    %cst_353 = arith.constant dense<true> : vector<1x128xi1>
    %1035 = arith.xori %1032, %cst_353 : vector<1x128xi1>
    %1036 = arith.andi %1034, %1035 : vector<1x128xi1>
    %cst_354 = arith.constant 1.000000e+00 : f32
    %1037 = vector.broadcast %cst_354 : f32 to vector<1x128xf32>
    %1038 = arith.select %1032, %1025, %1037 : vector<1x128xi1>, vector<1x128xf32>
    %1039 = tpu.reciprocal %1038 {approx = true} : vector<1x128xf32> -> vector<1x128xf32>
    %1040 = arith.mulf %1038, %1039 : vector<1x128xf32>
    %cst_355 = arith.constant 2.000000e+00 : f32
    %1041 = vector.broadcast %cst_355 : f32 to vector<1x128xf32>
    %1042 = arith.subf %1041, %1040 : vector<1x128xf32>
    %1043 = arith.mulf %1039, %1042 : vector<1x128xf32>
    %cst_356 = arith.constant 0.000000e+00 : f32
    %1044 = vector.broadcast %cst_356 : f32 to vector<1x128xf32>
    %1045 = arith.subf %1044, %1043 : vector<1x128xf32>
    %cst_357 = arith.constant 1.000000e+00 : f32
    %1046 = vector.broadcast %cst_357 : f32 to vector<1x128xf32>
    %1047 = arith.subf %1025, %1046 : vector<1x128xf32>
    %cst_358 = arith.constant 1.000000e+00 : f32
    %1048 = vector.broadcast %cst_358 : f32 to vector<1x128xf32>
    %1049 = arith.addf %1025, %1048 : vector<1x128xf32>
    %1050 = tpu.reciprocal %1049 {approx = true} : vector<1x128xf32> -> vector<1x128xf32>
    %1051 = arith.mulf %1049, %1050 : vector<1x128xf32>
    %cst_359 = arith.constant 2.000000e+00 : f32
    %1052 = vector.broadcast %cst_359 : f32 to vector<1x128xf32>
    %1053 = arith.subf %1052, %1051 : vector<1x128xf32>
    %1054 = arith.mulf %1050, %1053 : vector<1x128xf32>
    %1055 = arith.mulf %1047, %1054 : vector<1x128xf32>
    %1056 = arith.select %1036, %1055, %1025 : vector<1x128xi1>, vector<1x128xf32>
    %1057 = arith.select %1032, %1045, %1056 : vector<1x128xi1>, vector<1x128xf32>
    %cst_360 = arith.constant 0.785398185 : f32
    %cst_361 = arith.constant 0.000000e+00 : f32
    %1058 = vector.broadcast %cst_360 : f32 to vector<1x128xf32>
    %1059 = vector.broadcast %cst_361 : f32 to vector<1x128xf32>
    %1060 = arith.select %1036, %1058, %1059 : vector<1x128xi1>, vector<1x128xf32>
    %cst_362 = arith.constant 1.57079637 : f32
    %1061 = vector.broadcast %cst_362 : f32 to vector<1x128xf32>
    %1062 = arith.select %1032, %1061, %1060 : vector<1x128xi1>, vector<1x128xf32>
    %1063 = arith.mulf %1057, %1057 : vector<1x128xf32>
    %cst_363 = arith.constant 0.0805374458 : f32
    %1064 = vector.broadcast %cst_363 : f32 to vector<1x128xf32>
    %1065 = arith.mulf %1064, %1063 : vector<1x128xf32>
    %cst_364 = arith.constant 0.138776854 : f32
    %1066 = vector.broadcast %cst_364 : f32 to vector<1x128xf32>
    %1067 = arith.subf %1065, %1066 : vector<1x128xf32>
    %1068 = arith.mulf %1067, %1063 : vector<1x128xf32>
    %cst_365 = arith.constant 0.199777111 : f32
    %1069 = vector.broadcast %cst_365 : f32 to vector<1x128xf32>
    %1070 = arith.addf %1068, %1069 : vector<1x128xf32>
    %1071 = arith.mulf %1070, %1063 : vector<1x128xf32>
    %cst_366 = arith.constant 0.333329499 : f32
    %1072 = vector.broadcast %cst_366 : f32 to vector<1x128xf32>
    %1073 = arith.subf %1071, %1072 : vector<1x128xf32>
    %1074 = arith.mulf %1073, %1063 : vector<1x128xf32>
    %1075 = arith.mulf %1074, %1057 : vector<1x128xf32>
    %1076 = arith.addf %1075, %1057 : vector<1x128xf32>
    %1077 = arith.addf %1062, %1076 : vector<1x128xf32>
    %1078 = arith.mulf %1030, %1077 : vector<1x128xf32>
    %1079 = arith.mulf %1024, %1024 : vector<1x128xf32>
    %1080 = math.absf %1079 : vector<1x128xf32>
    %cst_367 = arith.constant 0.000000e+00 : f32
    %1081 = vector.broadcast %cst_367 : f32 to vector<1x128xf32>
    %1082 = arith.cmpf olt, %1079, %1081 : vector<1x128xf32>
    %cst_368 = arith.constant -1.000000e+00 : f32
    %cst_369 = arith.constant 1.000000e+00 : f32
    %1083 = vector.broadcast %cst_368 : f32 to vector<1x128xf32>
    %1084 = vector.broadcast %cst_369 : f32 to vector<1x128xf32>
    %1085 = arith.select %1082, %1083, %1084 : vector<1x128xi1>, vector<1x128xf32>
    %cst_370 = arith.constant 2.41421366 : f32
    %1086 = vector.broadcast %cst_370 : f32 to vector<1x128xf32>
    %1087 = arith.cmpf ogt, %1080, %1086 : vector<1x128xf32>
    %cst_371 = arith.constant 0.414213568 : f32
    %1088 = vector.broadcast %cst_371 : f32 to vector<1x128xf32>
    %1089 = arith.cmpf ogt, %1080, %1088 : vector<1x128xf32>
    %cst_372 = arith.constant dense<true> : vector<1x128xi1>
    %1090 = arith.xori %1087, %cst_372 : vector<1x128xi1>
    %1091 = arith.andi %1089, %1090 : vector<1x128xi1>
    %cst_373 = arith.constant 1.000000e+00 : f32
    %1092 = vector.broadcast %cst_373 : f32 to vector<1x128xf32>
    %1093 = arith.select %1087, %1080, %1092 : vector<1x128xi1>, vector<1x128xf32>
    %1094 = tpu.reciprocal %1093 {approx = true} : vector<1x128xf32> -> vector<1x128xf32>
    %1095 = arith.mulf %1093, %1094 : vector<1x128xf32>
    %cst_374 = arith.constant 2.000000e+00 : f32
    %1096 = vector.broadcast %cst_374 : f32 to vector<1x128xf32>
    %1097 = arith.subf %1096, %1095 : vector<1x128xf32>
    %1098 = arith.mulf %1094, %1097 : vector<1x128xf32>
    %cst_375 = arith.constant 0.000000e+00 : f32
    %1099 = vector.broadcast %cst_375 : f32 to vector<1x128xf32>
    %1100 = arith.subf %1099, %1098 : vector<1x128xf32>
    %cst_376 = arith.constant 1.000000e+00 : f32
    %1101 = vector.broadcast %cst_376 : f32 to vector<1x128xf32>
    %1102 = arith.subf %1080, %1101 : vector<1x128xf32>
    %cst_377 = arith.constant 1.000000e+00 : f32
    %1103 = vector.broadcast %cst_377 : f32 to vector<1x128xf32>
    %1104 = arith.addf %1080, %1103 : vector<1x128xf32>
    %1105 = tpu.reciprocal %1104 {approx = true} : vector<1x128xf32> -> vector<1x128xf32>
    %1106 = arith.mulf %1104, %1105 : vector<1x128xf32>
    %cst_378 = arith.constant 2.000000e+00 : f32
    %1107 = vector.broadcast %cst_378 : f32 to vector<1x128xf32>
    %1108 = arith.subf %1107, %1106 : vector<1x128xf32>
    %1109 = arith.mulf %1105, %1108 : vector<1x128xf32>
    %1110 = arith.mulf %1102, %1109 : vector<1x128xf32>
    %1111 = arith.select %1091, %1110, %1080 : vector<1x128xi1>, vector<1x128xf32>
    %1112 = arith.select %1087, %1100, %1111 : vector<1x128xi1>, vector<1x128xf32>
    %cst_379 = arith.constant 0.785398185 : f32
    %cst_380 = arith.constant 0.000000e+00 : f32
    %1113 = vector.broadcast %cst_379 : f32 to vector<1x128xf32>
    %1114 = vector.broadcast %cst_380 : f32 to vector<1x128xf32>
    %1115 = arith.select %1091, %1113, %1114 : vector<1x128xi1>, vector<1x128xf32>
    %cst_381 = arith.constant 1.57079637 : f32
    %1116 = vector.broadcast %cst_381 : f32 to vector<1x128xf32>
    %1117 = arith.select %1087, %1116, %1115 : vector<1x128xi1>, vector<1x128xf32>
    %1118 = arith.mulf %1112, %1112 : vector<1x128xf32>
    %cst_382 = arith.constant 0.0805374458 : f32
    %1119 = vector.broadcast %cst_382 : f32 to vector<1x128xf32>
    %1120 = arith.mulf %1119, %1118 : vector<1x128xf32>
    %cst_383 = arith.constant 0.138776854 : f32
    %1121 = vector.broadcast %cst_383 : f32 to vector<1x128xf32>
    %1122 = arith.subf %1120, %1121 : vector<1x128xf32>
    %1123 = arith.mulf %1122, %1118 : vector<1x128xf32>
    %cst_384 = arith.constant 0.199777111 : f32
    %1124 = vector.broadcast %cst_384 : f32 to vector<1x128xf32>
    %1125 = arith.addf %1123, %1124 : vector<1x128xf32>
    %1126 = arith.mulf %1125, %1118 : vector<1x128xf32>
    %cst_385 = arith.constant 0.333329499 : f32
    %1127 = vector.broadcast %cst_385 : f32 to vector<1x128xf32>
    %1128 = arith.subf %1126, %1127 : vector<1x128xf32>
    %1129 = arith.mulf %1128, %1118 : vector<1x128xf32>
    %1130 = arith.mulf %1129, %1112 : vector<1x128xf32>
    %1131 = arith.addf %1130, %1112 : vector<1x128xf32>
    %1132 = arith.addf %1117, %1131 : vector<1x128xf32>
    %1133 = arith.mulf %1085, %1132 : vector<1x128xf32>
    %1134 = tpu.concatenate %1078, %1133 in 1 : vector<1x128xf32>, vector<1x128xf32> -> vector<1x256xf32>
    %cst_386 = arith.constant dense<0.000000e+00> : vector<1x9xf32>
    %1135 = tpu.matmul %1134, %4, %cst_386 {dimension_numbers = #tpu.dot_dimension_numbers<[1], [0], [0], [1], [0, 0, 1, 1], [], []>} : vector<1x256xf32>, vector<256x9xf32>, vector<1x9xf32> -> vector<1x9xf32>
    %1136 = arith.addf %1135, %5 : vector<1x9xf32>
    %1137 = vector.extract_strided_slice %1136 {offsets = [0, 0], sizes = [1, 8], strides = [1, 1]} : vector<1x9xf32> to vector<1x8xf32>
    %1138 = vector.extract_strided_slice %1136 {offsets = [0, 8], sizes = [1, 1], strides = [1, 1]} : vector<1x9xf32> to vector<1x1xf32>
    %c3 = arith.constant 3 : index
    %c0_387 = arith.constant 0 : index
    %1139 = vector.load %arg10[%c3, %c0_387] : memref<8x1xf32, #tpu.memory_space<vmem>>, vector<1x1xf32>
    tpu.vector_store %arg10[%c3, %c0_387], %1138 {strides = array<i32>} : memref<8x1xf32, #tpu.memory_space<vmem>>, vector<1x1xf32>,
    %1140 = vector.extract_strided_slice %121 {offsets = [4, 0], sizes = [1, 512], strides = [1, 1]} : vector<8x512xf32> to vector<1x512xf32>
    %1141 = math.absf %1137 : vector<1x8xf32>
    %cst_388 = arith.constant 0.000000e+00 : f32
    %1142 = vector.broadcast %cst_388 : f32 to vector<1x8xf32>
    %1143 = arith.cmpf olt, %1137, %1142 : vector<1x8xf32>
    %cst_389 = arith.constant -1.000000e+00 : f32
    %cst_390 = arith.constant 1.000000e+00 : f32
    %1144 = vector.broadcast %cst_389 : f32 to vector<1x8xf32>
    %1145 = vector.broadcast %cst_390 : f32 to vector<1x8xf32>
    %1146 = arith.select %1143, %1144, %1145 : vector<1x8xi1>, vector<1x8xf32>
    %cst_391 = arith.constant 2.41421366 : f32
    %1147 = vector.broadcast %cst_391 : f32 to vector<1x8xf32>
    %1148 = arith.cmpf ogt, %1141, %1147 : vector<1x8xf32>
    %cst_392 = arith.constant 0.414213568 : f32
    %1149 = vector.broadcast %cst_392 : f32 to vector<1x8xf32>
    %1150 = arith.cmpf ogt, %1141, %1149 : vector<1x8xf32>
    %cst_393 = arith.constant dense<true> : vector<1x8xi1>
    %1151 = arith.xori %1148, %cst_393 : vector<1x8xi1>
    %1152 = arith.andi %1150, %1151 : vector<1x8xi1>
    %cst_394 = arith.constant 1.000000e+00 : f32
    %1153 = vector.broadcast %cst_394 : f32 to vector<1x8xf32>
    %1154 = arith.select %1148, %1141, %1153 : vector<1x8xi1>, vector<1x8xf32>
    %1155 = tpu.reciprocal %1154 {approx = true} : vector<1x8xf32> -> vector<1x8xf32>
    %1156 = arith.mulf %1154, %1155 : vector<1x8xf32>
    %cst_395 = arith.constant 2.000000e+00 : f32
    %1157 = vector.broadcast %cst_395 : f32 to vector<1x8xf32>
    %1158 = arith.subf %1157, %1156 : vector<1x8xf32>
    %1159 = arith.mulf %1155, %1158 : vector<1x8xf32>
    %cst_396 = arith.constant 0.000000e+00 : f32
    %1160 = vector.broadcast %cst_396 : f32 to vector<1x8xf32>
    %1161 = arith.subf %1160, %1159 : vector<1x8xf32>
    %cst_397 = arith.constant 1.000000e+00 : f32
    %1162 = vector.broadcast %cst_397 : f32 to vector<1x8xf32>
    %1163 = arith.subf %1141, %1162 : vector<1x8xf32>
    %cst_398 = arith.constant 1.000000e+00 : f32
    %1164 = vector.broadcast %cst_398 : f32 to vector<1x8xf32>
    %1165 = arith.addf %1141, %1164 : vector<1x8xf32>
    %1166 = tpu.reciprocal %1165 {approx = true} : vector<1x8xf32> -> vector<1x8xf32>
    %1167 = arith.mulf %1165, %1166 : vector<1x8xf32>
    %cst_399 = arith.constant 2.000000e+00 : f32
    %1168 = vector.broadcast %cst_399 : f32 to vector<1x8xf32>
    %1169 = arith.subf %1168, %1167 : vector<1x8xf32>
    %1170 = arith.mulf %1166, %1169 : vector<1x8xf32>
    %1171 = arith.mulf %1163, %1170 : vector<1x8xf32>
    %1172 = arith.select %1152, %1171, %1141 : vector<1x8xi1>, vector<1x8xf32>
    %1173 = arith.select %1148, %1161, %1172 : vector<1x8xi1>, vector<1x8xf32>
    %cst_400 = arith.constant 0.785398185 : f32
    %cst_401 = arith.constant 0.000000e+00 : f32
    %1174 = vector.broadcast %cst_400 : f32 to vector<1x8xf32>
    %1175 = vector.broadcast %cst_401 : f32 to vector<1x8xf32>
    %1176 = arith.select %1152, %1174, %1175 : vector<1x8xi1>, vector<1x8xf32>
    %cst_402 = arith.constant 1.57079637 : f32
    %1177 = vector.broadcast %cst_402 : f32 to vector<1x8xf32>
    %1178 = arith.select %1148, %1177, %1176 : vector<1x8xi1>, vector<1x8xf32>
    %1179 = arith.mulf %1173, %1173 : vector<1x8xf32>
    %cst_403 = arith.constant 0.0805374458 : f32
    %1180 = vector.broadcast %cst_403 : f32 to vector<1x8xf32>
    %1181 = arith.mulf %1180, %1179 : vector<1x8xf32>
    %cst_404 = arith.constant 0.138776854 : f32
    %1182 = vector.broadcast %cst_404 : f32 to vector<1x8xf32>
    %1183 = arith.subf %1181, %1182 : vector<1x8xf32>
    %1184 = arith.mulf %1183, %1179 : vector<1x8xf32>
    %cst_405 = arith.constant 0.199777111 : f32
    %1185 = vector.broadcast %cst_405 : f32 to vector<1x8xf32>
    %1186 = arith.addf %1184, %1185 : vector<1x8xf32>
    %1187 = arith.mulf %1186, %1179 : vector<1x8xf32>
    %cst_406 = arith.constant 0.333329499 : f32
    %1188 = vector.broadcast %cst_406 : f32 to vector<1x8xf32>
    %1189 = arith.subf %1187, %1188 : vector<1x8xf32>
    %1190 = arith.mulf %1189, %1179 : vector<1x8xf32>
    %1191 = arith.mulf %1190, %1173 : vector<1x8xf32>
    %1192 = arith.addf %1191, %1173 : vector<1x8xf32>
    %1193 = arith.addf %1178, %1192 : vector<1x8xf32>
    %1194 = arith.mulf %1146, %1193 : vector<1x8xf32>
    %cst_407 = arith.constant dense<0.000000e+00> : vector<1x512xf32>
    %1195 = tpu.matmul %1194, %2, %cst_407 {dimension_numbers = #tpu.dot_dimension_numbers<[1], [0], [0], [1], [0, 0, 1, 1], [], []>} : vector<1x8xf32>, vector<8x512xf32>, vector<1x512xf32> -> vector<1x512xf32>
    %1196 = arith.addf %1140, %1195 : vector<1x512xf32>
    %1197 = arith.mulf %1137, %1137 : vector<1x8xf32>
    %1198 = math.absf %1197 : vector<1x8xf32>
    %cst_408 = arith.constant 0.000000e+00 : f32
    %1199 = vector.broadcast %cst_408 : f32 to vector<1x8xf32>
    %1200 = arith.cmpf olt, %1197, %1199 : vector<1x8xf32>
    %cst_409 = arith.constant -1.000000e+00 : f32
    %cst_410 = arith.constant 1.000000e+00 : f32
    %1201 = vector.broadcast %cst_409 : f32 to vector<1x8xf32>
    %1202 = vector.broadcast %cst_410 : f32 to vector<1x8xf32>
    %1203 = arith.select %1200, %1201, %1202 : vector<1x8xi1>, vector<1x8xf32>
    %cst_411 = arith.constant 2.41421366 : f32
    %1204 = vector.broadcast %cst_411 : f32 to vector<1x8xf32>
    %1205 = arith.cmpf ogt, %1198, %1204 : vector<1x8xf32>
    %cst_412 = arith.constant 0.414213568 : f32
    %1206 = vector.broadcast %cst_412 : f32 to vector<1x8xf32>
    %1207 = arith.cmpf ogt, %1198, %1206 : vector<1x8xf32>
    %cst_413 = arith.constant dense<true> : vector<1x8xi1>
    %1208 = arith.xori %1205, %cst_413 : vector<1x8xi1>
    %1209 = arith.andi %1207, %1208 : vector<1x8xi1>
    %cst_414 = arith.constant 1.000000e+00 : f32
    %1210 = vector.broadcast %cst_414 : f32 to vector<1x8xf32>
    %1211 = arith.select %1205, %1198, %1210 : vector<1x8xi1>, vector<1x8xf32>
    %1212 = tpu.reciprocal %1211 {approx = true} : vector<1x8xf32> -> vector<1x8xf32>
    %1213 = arith.mulf %1211, %1212 : vector<1x8xf32>
    %cst_415 = arith.constant 2.000000e+00 : f32
    %1214 = vector.broadcast %cst_415 : f32 to vector<1x8xf32>
    %1215 = arith.subf %1214, %1213 : vector<1x8xf32>
    %1216 = arith.mulf %1212, %1215 : vector<1x8xf32>
    %cst_416 = arith.constant 0.000000e+00 : f32
    %1217 = vector.broadcast %cst_416 : f32 to vector<1x8xf32>
    %1218 = arith.subf %1217, %1216 : vector<1x8xf32>
    %cst_417 = arith.constant 1.000000e+00 : f32
    %1219 = vector.broadcast %cst_417 : f32 to vector<1x8xf32>
    %1220 = arith.subf %1198, %1219 : vector<1x8xf32>
    %cst_418 = arith.constant 1.000000e+00 : f32
    %1221 = vector.broadcast %cst_418 : f32 to vector<1x8xf32>
    %1222 = arith.addf %1198, %1221 : vector<1x8xf32>
    %1223 = tpu.reciprocal %1222 {approx = true} : vector<1x8xf32> -> vector<1x8xf32>
    %1224 = arith.mulf %1222, %1223 : vector<1x8xf32>
    %cst_419 = arith.constant 2.000000e+00 : f32
    %1225 = vector.broadcast %cst_419 : f32 to vector<1x8xf32>
    %1226 = arith.subf %1225, %1224 : vector<1x8xf32>
    %1227 = arith.mulf %1223, %1226 : vector<1x8xf32>
    %1228 = arith.mulf %1220, %1227 : vector<1x8xf32>
    %1229 = arith.select %1209, %1228, %1198 : vector<1x8xi1>, vector<1x8xf32>
    %1230 = arith.select %1205, %1218, %1229 : vector<1x8xi1>, vector<1x8xf32>
    %cst_420 = arith.constant 0.785398185 : f32
    %cst_421 = arith.constant 0.000000e+00 : f32
    %1231 = vector.broadcast %cst_420 : f32 to vector<1x8xf32>
    %1232 = vector.broadcast %cst_421 : f32 to vector<1x8xf32>
    %1233 = arith.select %1209, %1231, %1232 : vector<1x8xi1>, vector<1x8xf32>
    %cst_422 = arith.constant 1.57079637 : f32
    %1234 = vector.broadcast %cst_422 : f32 to vector<1x8xf32>
    %1235 = arith.select %1205, %1234, %1233 : vector<1x8xi1>, vector<1x8xf32>
    %1236 = arith.mulf %1230, %1230 : vector<1x8xf32>
    %cst_423 = arith.constant 0.0805374458 : f32
    %1237 = vector.broadcast %cst_423 : f32 to vector<1x8xf32>
    %1238 = arith.mulf %1237, %1236 : vector<1x8xf32>
    %cst_424 = arith.constant 0.138776854 : f32
    %1239 = vector.broadcast %cst_424 : f32 to vector<1x8xf32>
    %1240 = arith.subf %1238, %1239 : vector<1x8xf32>
    %1241 = arith.mulf %1240, %1236 : vector<1x8xf32>
    %cst_425 = arith.constant 0.199777111 : f32
    %1242 = vector.broadcast %cst_425 : f32 to vector<1x8xf32>
    %1243 = arith.addf %1241, %1242 : vector<1x8xf32>
    %1244 = arith.mulf %1243, %1236 : vector<1x8xf32>
    %cst_426 = arith.constant 0.333329499 : f32
    %1245 = vector.broadcast %cst_426 : f32 to vector<1x8xf32>
    %1246 = arith.subf %1244, %1245 : vector<1x8xf32>
    %1247 = arith.mulf %1246, %1236 : vector<1x8xf32>
    %1248 = arith.mulf %1247, %1230 : vector<1x8xf32>
    %1249 = arith.addf %1248, %1230 : vector<1x8xf32>
    %1250 = arith.addf %1235, %1249 : vector<1x8xf32>
    %1251 = arith.mulf %1203, %1250 : vector<1x8xf32>
    %cst_427 = arith.constant dense<0.000000e+00> : vector<1x512xf32>
    %1252 = tpu.matmul %1251, %3, %cst_427 {dimension_numbers = #tpu.dot_dimension_numbers<[1], [0], [0], [1], [0, 0, 1, 1], [], []>} : vector<1x8xf32>, vector<8x512xf32>, vector<1x512xf32> -> vector<1x512xf32>
    %1253 = arith.addf %1196, %1252 : vector<1x512xf32>
    %1254 = vector.extract_strided_slice %1253 {offsets = [0, 0], sizes = [1, 128], strides = [1, 1]} : vector<1x512xf32> to vector<1x128xf32>
    %1255 = arith.negf %1254 : vector<1x128xf32>
    %1256 = math.exp %1255 : vector<1x128xf32>
    %cst_428 = arith.constant 1.000000e+00 : f32
    %1257 = vector.broadcast %cst_428 : f32 to vector<1x128xf32>
    %1258 = arith.addf %1257, %1256 : vector<1x128xf32>
    %1259 = arith.divf %1257, %1258 : vector<1x128xf32>
    %1260 = vector.extract_strided_slice %1253 {offsets = [0, 128], sizes = [1, 128], strides = [1, 1]} : vector<1x512xf32> to vector<1x128xf32>
    %1261 = arith.negf %1260 : vector<1x128xf32>
    %1262 = math.exp %1261 : vector<1x128xf32>
    %cst_429 = arith.constant 1.000000e+00 : f32
    %1263 = vector.broadcast %cst_429 : f32 to vector<1x128xf32>
    %1264 = arith.addf %1263, %1262 : vector<1x128xf32>
    %1265 = arith.divf %1263, %1264 : vector<1x128xf32>
    %1266 = vector.extract_strided_slice %1253 {offsets = [0, 256], sizes = [1, 128], strides = [1, 1]} : vector<1x512xf32> to vector<1x128xf32>
    %1267 = math.tanh %1266 : vector<1x128xf32>
    %1268 = vector.extract_strided_slice %1253 {offsets = [0, 384], sizes = [1, 128], strides = [1, 1]} : vector<1x512xf32> to vector<1x128xf32>
    %1269 = arith.negf %1268 : vector<1x128xf32>
    %1270 = math.exp %1269 : vector<1x128xf32>
    %cst_430 = arith.constant 1.000000e+00 : f32
    %1271 = vector.broadcast %cst_430 : f32 to vector<1x128xf32>
    %1272 = arith.addf %1271, %1270 : vector<1x128xf32>
    %1273 = arith.divf %1271, %1272 : vector<1x128xf32>
    %1274 = arith.mulf %1022, %1259 : vector<1x128xf32>
    %1275 = arith.mulf %1265, %1267 : vector<1x128xf32>
    %1276 = arith.addf %1274, %1275 : vector<1x128xf32>
    %1277 = math.tanh %1276 : vector<1x128xf32>
    %1278 = arith.mulf %1273, %1277 : vector<1x128xf32>
    %1279 = math.absf %1278 : vector<1x128xf32>
    %cst_431 = arith.constant 0.000000e+00 : f32
    %1280 = vector.broadcast %cst_431 : f32 to vector<1x128xf32>
    %1281 = arith.cmpf olt, %1278, %1280 : vector<1x128xf32>
    %cst_432 = arith.constant -1.000000e+00 : f32
    %cst_433 = arith.constant 1.000000e+00 : f32
    %1282 = vector.broadcast %cst_432 : f32 to vector<1x128xf32>
    %1283 = vector.broadcast %cst_433 : f32 to vector<1x128xf32>
    %1284 = arith.select %1281, %1282, %1283 : vector<1x128xi1>, vector<1x128xf32>
    %cst_434 = arith.constant 2.41421366 : f32
    %1285 = vector.broadcast %cst_434 : f32 to vector<1x128xf32>
    %1286 = arith.cmpf ogt, %1279, %1285 : vector<1x128xf32>
    %cst_435 = arith.constant 0.414213568 : f32
    %1287 = vector.broadcast %cst_435 : f32 to vector<1x128xf32>
    %1288 = arith.cmpf ogt, %1279, %1287 : vector<1x128xf32>
    %cst_436 = arith.constant dense<true> : vector<1x128xi1>
    %1289 = arith.xori %1286, %cst_436 : vector<1x128xi1>
    %1290 = arith.andi %1288, %1289 : vector<1x128xi1>
    %cst_437 = arith.constant 1.000000e+00 : f32
    %1291 = vector.broadcast %cst_437 : f32 to vector<1x128xf32>
    %1292 = arith.select %1286, %1279, %1291 : vector<1x128xi1>, vector<1x128xf32>
    %1293 = tpu.reciprocal %1292 {approx = true} : vector<1x128xf32> -> vector<1x128xf32>
    %1294 = arith.mulf %1292, %1293 : vector<1x128xf32>
    %cst_438 = arith.constant 2.000000e+00 : f32
    %1295 = vector.broadcast %cst_438 : f32 to vector<1x128xf32>
    %1296 = arith.subf %1295, %1294 : vector<1x128xf32>
    %1297 = arith.mulf %1293, %1296 : vector<1x128xf32>
    %cst_439 = arith.constant 0.000000e+00 : f32
    %1298 = vector.broadcast %cst_439 : f32 to vector<1x128xf32>
    %1299 = arith.subf %1298, %1297 : vector<1x128xf32>
    %cst_440 = arith.constant 1.000000e+00 : f32
    %1300 = vector.broadcast %cst_440 : f32 to vector<1x128xf32>
    %1301 = arith.subf %1279, %1300 : vector<1x128xf32>
    %cst_441 = arith.constant 1.000000e+00 : f32
    %1302 = vector.broadcast %cst_441 : f32 to vector<1x128xf32>
    %1303 = arith.addf %1279, %1302 : vector<1x128xf32>
    %1304 = tpu.reciprocal %1303 {approx = true} : vector<1x128xf32> -> vector<1x128xf32>
    %1305 = arith.mulf %1303, %1304 : vector<1x128xf32>
    %cst_442 = arith.constant 2.000000e+00 : f32
    %1306 = vector.broadcast %cst_442 : f32 to vector<1x128xf32>
    %1307 = arith.subf %1306, %1305 : vector<1x128xf32>
    %1308 = arith.mulf %1304, %1307 : vector<1x128xf32>
    %1309 = arith.mulf %1301, %1308 : vector<1x128xf32>
    %1310 = arith.select %1290, %1309, %1279 : vector<1x128xi1>, vector<1x128xf32>
    %1311 = arith.select %1286, %1299, %1310 : vector<1x128xi1>, vector<1x128xf32>
    %cst_443 = arith.constant 0.785398185 : f32
    %cst_444 = arith.constant 0.000000e+00 : f32
    %1312 = vector.broadcast %cst_443 : f32 to vector<1x128xf32>
    %1313 = vector.broadcast %cst_444 : f32 to vector<1x128xf32>
    %1314 = arith.select %1290, %1312, %1313 : vector<1x128xi1>, vector<1x128xf32>
    %cst_445 = arith.constant 1.57079637 : f32
    %1315 = vector.broadcast %cst_445 : f32 to vector<1x128xf32>
    %1316 = arith.select %1286, %1315, %1314 : vector<1x128xi1>, vector<1x128xf32>
    %1317 = arith.mulf %1311, %1311 : vector<1x128xf32>
    %cst_446 = arith.constant 0.0805374458 : f32
    %1318 = vector.broadcast %cst_446 : f32 to vector<1x128xf32>
    %1319 = arith.mulf %1318, %1317 : vector<1x128xf32>
    %cst_447 = arith.constant 0.138776854 : f32
    %1320 = vector.broadcast %cst_447 : f32 to vector<1x128xf32>
    %1321 = arith.subf %1319, %1320 : vector<1x128xf32>
    %1322 = arith.mulf %1321, %1317 : vector<1x128xf32>
    %cst_448 = arith.constant 0.199777111 : f32
    %1323 = vector.broadcast %cst_448 : f32 to vector<1x128xf32>
    %1324 = arith.addf %1322, %1323 : vector<1x128xf32>
    %1325 = arith.mulf %1324, %1317 : vector<1x128xf32>
    %cst_449 = arith.constant 0.333329499 : f32
    %1326 = vector.broadcast %cst_449 : f32 to vector<1x128xf32>
    %1327 = arith.subf %1325, %1326 : vector<1x128xf32>
    %1328 = arith.mulf %1327, %1317 : vector<1x128xf32>
    %1329 = arith.mulf %1328, %1311 : vector<1x128xf32>
    %1330 = arith.addf %1329, %1311 : vector<1x128xf32>
    %1331 = arith.addf %1316, %1330 : vector<1x128xf32>
    %1332 = arith.mulf %1284, %1331 : vector<1x128xf32>
    %1333 = arith.mulf %1278, %1278 : vector<1x128xf32>
    %1334 = math.absf %1333 : vector<1x128xf32>
    %cst_450 = arith.constant 0.000000e+00 : f32
    %1335 = vector.broadcast %cst_450 : f32 to vector<1x128xf32>
    %1336 = arith.cmpf olt, %1333, %1335 : vector<1x128xf32>
    %cst_451 = arith.constant -1.000000e+00 : f32
    %cst_452 = arith.constant 1.000000e+00 : f32
    %1337 = vector.broadcast %cst_451 : f32 to vector<1x128xf32>
    %1338 = vector.broadcast %cst_452 : f32 to vector<1x128xf32>
    %1339 = arith.select %1336, %1337, %1338 : vector<1x128xi1>, vector<1x128xf32>
    %cst_453 = arith.constant 2.41421366 : f32
    %1340 = vector.broadcast %cst_453 : f32 to vector<1x128xf32>
    %1341 = arith.cmpf ogt, %1334, %1340 : vector<1x128xf32>
    %cst_454 = arith.constant 0.414213568 : f32
    %1342 = vector.broadcast %cst_454 : f32 to vector<1x128xf32>
    %1343 = arith.cmpf ogt, %1334, %1342 : vector<1x128xf32>
    %cst_455 = arith.constant dense<true> : vector<1x128xi1>
    %1344 = arith.xori %1341, %cst_455 : vector<1x128xi1>
    %1345 = arith.andi %1343, %1344 : vector<1x128xi1>
    %cst_456 = arith.constant 1.000000e+00 : f32
    %1346 = vector.broadcast %cst_456 : f32 to vector<1x128xf32>
    %1347 = arith.select %1341, %1334, %1346 : vector<1x128xi1>, vector<1x128xf32>
    %1348 = tpu.reciprocal %1347 {approx = true} : vector<1x128xf32> -> vector<1x128xf32>
    %1349 = arith.mulf %1347, %1348 : vector<1x128xf32>
    %cst_457 = arith.constant 2.000000e+00 : f32
    %1350 = vector.broadcast %cst_457 : f32 to vector<1x128xf32>
    %1351 = arith.subf %1350, %1349 : vector<1x128xf32>
    %1352 = arith.mulf %1348, %1351 : vector<1x128xf32>
    %cst_458 = arith.constant 0.000000e+00 : f32
    %1353 = vector.broadcast %cst_458 : f32 to vector<1x128xf32>
    %1354 = arith.subf %1353, %1352 : vector<1x128xf32>
    %cst_459 = arith.constant 1.000000e+00 : f32
    %1355 = vector.broadcast %cst_459 : f32 to vector<1x128xf32>
    %1356 = arith.subf %1334, %1355 : vector<1x128xf32>
    %cst_460 = arith.constant 1.000000e+00 : f32
    %1357 = vector.broadcast %cst_460 : f32 to vector<1x128xf32>
    %1358 = arith.addf %1334, %1357 : vector<1x128xf32>
    %1359 = tpu.reciprocal %1358 {approx = true} : vector<1x128xf32> -> vector<1x128xf32>
    %1360 = arith.mulf %1358, %1359 : vector<1x128xf32>
    %cst_461 = arith.constant 2.000000e+00 : f32
    %1361 = vector.broadcast %cst_461 : f32 to vector<1x128xf32>
    %1362 = arith.subf %1361, %1360 : vector<1x128xf32>
    %1363 = arith.mulf %1359, %1362 : vector<1x128xf32>
    %1364 = arith.mulf %1356, %1363 : vector<1x128xf32>
    %1365 = arith.select %1345, %1364, %1334 : vector<1x128xi1>, vector<1x128xf32>
    %1366 = arith.select %1341, %1354, %1365 : vector<1x128xi1>, vector<1x128xf32>
    %cst_462 = arith.constant 0.785398185 : f32
    %cst_463 = arith.constant 0.000000e+00 : f32
    %1367 = vector.broadcast %cst_462 : f32 to vector<1x128xf32>
    %1368 = vector.broadcast %cst_463 : f32 to vector<1x128xf32>
    %1369 = arith.select %1345, %1367, %1368 : vector<1x128xi1>, vector<1x128xf32>
    %cst_464 = arith.constant 1.57079637 : f32
    %1370 = vector.broadcast %cst_464 : f32 to vector<1x128xf32>
    %1371 = arith.select %1341, %1370, %1369 : vector<1x128xi1>, vector<1x128xf32>
    %1372 = arith.mulf %1366, %1366 : vector<1x128xf32>
    %cst_465 = arith.constant 0.0805374458 : f32
    %1373 = vector.broadcast %cst_465 : f32 to vector<1x128xf32>
    %1374 = arith.mulf %1373, %1372 : vector<1x128xf32>
    %cst_466 = arith.constant 0.138776854 : f32
    %1375 = vector.broadcast %cst_466 : f32 to vector<1x128xf32>
    %1376 = arith.subf %1374, %1375 : vector<1x128xf32>
    %1377 = arith.mulf %1376, %1372 : vector<1x128xf32>
    %cst_467 = arith.constant 0.199777111 : f32
    %1378 = vector.broadcast %cst_467 : f32 to vector<1x128xf32>
    %1379 = arith.addf %1377, %1378 : vector<1x128xf32>
    %1380 = arith.mulf %1379, %1372 : vector<1x128xf32>
    %cst_468 = arith.constant 0.333329499 : f32
    %1381 = vector.broadcast %cst_468 : f32 to vector<1x128xf32>
    %1382 = arith.subf %1380, %1381 : vector<1x128xf32>
    %1383 = arith.mulf %1382, %1372 : vector<1x128xf32>
    %1384 = arith.mulf %1383, %1366 : vector<1x128xf32>
    %1385 = arith.addf %1384, %1366 : vector<1x128xf32>
    %1386 = arith.addf %1371, %1385 : vector<1x128xf32>
    %1387 = arith.mulf %1339, %1386 : vector<1x128xf32>
    %1388 = tpu.concatenate %1332, %1387 in 1 : vector<1x128xf32>, vector<1x128xf32> -> vector<1x256xf32>
    %cst_469 = arith.constant dense<0.000000e+00> : vector<1x9xf32>
    %1389 = tpu.matmul %1388, %4, %cst_469 {dimension_numbers = #tpu.dot_dimension_numbers<[1], [0], [0], [1], [0, 0, 1, 1], [], []>} : vector<1x256xf32>, vector<256x9xf32>, vector<1x9xf32> -> vector<1x9xf32>
    %1390 = arith.addf %1389, %5 : vector<1x9xf32>
    %1391 = vector.extract_strided_slice %1390 {offsets = [0, 0], sizes = [1, 8], strides = [1, 1]} : vector<1x9xf32> to vector<1x8xf32>
    %1392 = vector.extract_strided_slice %1390 {offsets = [0, 8], sizes = [1, 1], strides = [1, 1]} : vector<1x9xf32> to vector<1x1xf32>
    %c4_470 = arith.constant 4 : index
    %c0_471 = arith.constant 0 : index
    %1393 = vector.load %arg10[%c4_470, %c0_471] : memref<8x1xf32, #tpu.memory_space<vmem>>, vector<1x1xf32>
    tpu.vector_store %arg10[%c4_470, %c0_471], %1392 {strides = array<i32>} : memref<8x1xf32, #tpu.memory_space<vmem>>, vector<1x1xf32>,
    %1394 = vector.extract_strided_slice %121 {offsets = [5, 0], sizes = [1, 512], strides = [1, 1]} : vector<8x512xf32> to vector<1x512xf32>
    %1395 = math.absf %1391 : vector<1x8xf32>
    %cst_472 = arith.constant 0.000000e+00 : f32
    %1396 = vector.broadcast %cst_472 : f32 to vector<1x8xf32>
    %1397 = arith.cmpf olt, %1391, %1396 : vector<1x8xf32>
    %cst_473 = arith.constant -1.000000e+00 : f32
    %cst_474 = arith.constant 1.000000e+00 : f32
    %1398 = vector.broadcast %cst_473 : f32 to vector<1x8xf32>
    %1399 = vector.broadcast %cst_474 : f32 to vector<1x8xf32>
    %1400 = arith.select %1397, %1398, %1399 : vector<1x8xi1>, vector<1x8xf32>
    %cst_475 = arith.constant 2.41421366 : f32
    %1401 = vector.broadcast %cst_475 : f32 to vector<1x8xf32>
    %1402 = arith.cmpf ogt, %1395, %1401 : vector<1x8xf32>
    %cst_476 = arith.constant 0.414213568 : f32
    %1403 = vector.broadcast %cst_476 : f32 to vector<1x8xf32>
    %1404 = arith.cmpf ogt, %1395, %1403 : vector<1x8xf32>
    %cst_477 = arith.constant dense<true> : vector<1x8xi1>
    %1405 = arith.xori %1402, %cst_477 : vector<1x8xi1>
    %1406 = arith.andi %1404, %1405 : vector<1x8xi1>
    %cst_478 = arith.constant 1.000000e+00 : f32
    %1407 = vector.broadcast %cst_478 : f32 to vector<1x8xf32>
    %1408 = arith.select %1402, %1395, %1407 : vector<1x8xi1>, vector<1x8xf32>
    %1409 = tpu.reciprocal %1408 {approx = true} : vector<1x8xf32> -> vector<1x8xf32>
    %1410 = arith.mulf %1408, %1409 : vector<1x8xf32>
    %cst_479 = arith.constant 2.000000e+00 : f32
    %1411 = vector.broadcast %cst_479 : f32 to vector<1x8xf32>
    %1412 = arith.subf %1411, %1410 : vector<1x8xf32>
    %1413 = arith.mulf %1409, %1412 : vector<1x8xf32>
    %cst_480 = arith.constant 0.000000e+00 : f32
    %1414 = vector.broadcast %cst_480 : f32 to vector<1x8xf32>
    %1415 = arith.subf %1414, %1413 : vector<1x8xf32>
    %cst_481 = arith.constant 1.000000e+00 : f32
    %1416 = vector.broadcast %cst_481 : f32 to vector<1x8xf32>
    %1417 = arith.subf %1395, %1416 : vector<1x8xf32>
    %cst_482 = arith.constant 1.000000e+00 : f32
    %1418 = vector.broadcast %cst_482 : f32 to vector<1x8xf32>
    %1419 = arith.addf %1395, %1418 : vector<1x8xf32>
    %1420 = tpu.reciprocal %1419 {approx = true} : vector<1x8xf32> -> vector<1x8xf32>
    %1421 = arith.mulf %1419, %1420 : vector<1x8xf32>
    %cst_483 = arith.constant 2.000000e+00 : f32
    %1422 = vector.broadcast %cst_483 : f32 to vector<1x8xf32>
    %1423 = arith.subf %1422, %1421 : vector<1x8xf32>
    %1424 = arith.mulf %1420, %1423 : vector<1x8xf32>
    %1425 = arith.mulf %1417, %1424 : vector<1x8xf32>
    %1426 = arith.select %1406, %1425, %1395 : vector<1x8xi1>, vector<1x8xf32>
    %1427 = arith.select %1402, %1415, %1426 : vector<1x8xi1>, vector<1x8xf32>
    %cst_484 = arith.constant 0.785398185 : f32
    %cst_485 = arith.constant 0.000000e+00 : f32
    %1428 = vector.broadcast %cst_484 : f32 to vector<1x8xf32>
    %1429 = vector.broadcast %cst_485 : f32 to vector<1x8xf32>
    %1430 = arith.select %1406, %1428, %1429 : vector<1x8xi1>, vector<1x8xf32>
    %cst_486 = arith.constant 1.57079637 : f32
    %1431 = vector.broadcast %cst_486 : f32 to vector<1x8xf32>
    %1432 = arith.select %1402, %1431, %1430 : vector<1x8xi1>, vector<1x8xf32>
    %1433 = arith.mulf %1427, %1427 : vector<1x8xf32>
    %cst_487 = arith.constant 0.0805374458 : f32
    %1434 = vector.broadcast %cst_487 : f32 to vector<1x8xf32>
    %1435 = arith.mulf %1434, %1433 : vector<1x8xf32>
    %cst_488 = arith.constant 0.138776854 : f32
    %1436 = vector.broadcast %cst_488 : f32 to vector<1x8xf32>
    %1437 = arith.subf %1435, %1436 : vector<1x8xf32>
    %1438 = arith.mulf %1437, %1433 : vector<1x8xf32>
    %cst_489 = arith.constant 0.199777111 : f32
    %1439 = vector.broadcast %cst_489 : f32 to vector<1x8xf32>
    %1440 = arith.addf %1438, %1439 : vector<1x8xf32>
    %1441 = arith.mulf %1440, %1433 : vector<1x8xf32>
    %cst_490 = arith.constant 0.333329499 : f32
    %1442 = vector.broadcast %cst_490 : f32 to vector<1x8xf32>
    %1443 = arith.subf %1441, %1442 : vector<1x8xf32>
    %1444 = arith.mulf %1443, %1433 : vector<1x8xf32>
    %1445 = arith.mulf %1444, %1427 : vector<1x8xf32>
    %1446 = arith.addf %1445, %1427 : vector<1x8xf32>
    %1447 = arith.addf %1432, %1446 : vector<1x8xf32>
    %1448 = arith.mulf %1400, %1447 : vector<1x8xf32>
    %cst_491 = arith.constant dense<0.000000e+00> : vector<1x512xf32>
    %1449 = tpu.matmul %1448, %2, %cst_491 {dimension_numbers = #tpu.dot_dimension_numbers<[1], [0], [0], [1], [0, 0, 1, 1], [], []>} : vector<1x8xf32>, vector<8x512xf32>, vector<1x512xf32> -> vector<1x512xf32>
    %1450 = arith.addf %1394, %1449 : vector<1x512xf32>
    %1451 = arith.mulf %1391, %1391 : vector<1x8xf32>
    %1452 = math.absf %1451 : vector<1x8xf32>
    %cst_492 = arith.constant 0.000000e+00 : f32
    %1453 = vector.broadcast %cst_492 : f32 to vector<1x8xf32>
    %1454 = arith.cmpf olt, %1451, %1453 : vector<1x8xf32>
    %cst_493 = arith.constant -1.000000e+00 : f32
    %cst_494 = arith.constant 1.000000e+00 : f32
    %1455 = vector.broadcast %cst_493 : f32 to vector<1x8xf32>
    %1456 = vector.broadcast %cst_494 : f32 to vector<1x8xf32>
    %1457 = arith.select %1454, %1455, %1456 : vector<1x8xi1>, vector<1x8xf32>
    %cst_495 = arith.constant 2.41421366 : f32
    %1458 = vector.broadcast %cst_495 : f32 to vector<1x8xf32>
    %1459 = arith.cmpf ogt, %1452, %1458 : vector<1x8xf32>
    %cst_496 = arith.constant 0.414213568 : f32
    %1460 = vector.broadcast %cst_496 : f32 to vector<1x8xf32>
    %1461 = arith.cmpf ogt, %1452, %1460 : vector<1x8xf32>
    %cst_497 = arith.constant dense<true> : vector<1x8xi1>
    %1462 = arith.xori %1459, %cst_497 : vector<1x8xi1>
    %1463 = arith.andi %1461, %1462 : vector<1x8xi1>
    %cst_498 = arith.constant 1.000000e+00 : f32
    %1464 = vector.broadcast %cst_498 : f32 to vector<1x8xf32>
    %1465 = arith.select %1459, %1452, %1464 : vector<1x8xi1>, vector<1x8xf32>
    %1466 = tpu.reciprocal %1465 {approx = true} : vector<1x8xf32> -> vector<1x8xf32>
    %1467 = arith.mulf %1465, %1466 : vector<1x8xf32>
    %cst_499 = arith.constant 2.000000e+00 : f32
    %1468 = vector.broadcast %cst_499 : f32 to vector<1x8xf32>
    %1469 = arith.subf %1468, %1467 : vector<1x8xf32>
    %1470 = arith.mulf %1466, %1469 : vector<1x8xf32>
    %cst_500 = arith.constant 0.000000e+00 : f32
    %1471 = vector.broadcast %cst_500 : f32 to vector<1x8xf32>
    %1472 = arith.subf %1471, %1470 : vector<1x8xf32>
    %cst_501 = arith.constant 1.000000e+00 : f32
    %1473 = vector.broadcast %cst_501 : f32 to vector<1x8xf32>
    %1474 = arith.subf %1452, %1473 : vector<1x8xf32>
    %cst_502 = arith.constant 1.000000e+00 : f32
    %1475 = vector.broadcast %cst_502 : f32 to vector<1x8xf32>
    %1476 = arith.addf %1452, %1475 : vector<1x8xf32>
    %1477 = tpu.reciprocal %1476 {approx = true} : vector<1x8xf32> -> vector<1x8xf32>
    %1478 = arith.mulf %1476, %1477 : vector<1x8xf32>
    %cst_503 = arith.constant 2.000000e+00 : f32
    %1479 = vector.broadcast %cst_503 : f32 to vector<1x8xf32>
    %1480 = arith.subf %1479, %1478 : vector<1x8xf32>
    %1481 = arith.mulf %1477, %1480 : vector<1x8xf32>
    %1482 = arith.mulf %1474, %1481 : vector<1x8xf32>
    %1483 = arith.select %1463, %1482, %1452 : vector<1x8xi1>, vector<1x8xf32>
    %1484 = arith.select %1459, %1472, %1483 : vector<1x8xi1>, vector<1x8xf32>
    %cst_504 = arith.constant 0.785398185 : f32
    %cst_505 = arith.constant 0.000000e+00 : f32
    %1485 = vector.broadcast %cst_504 : f32 to vector<1x8xf32>
    %1486 = vector.broadcast %cst_505 : f32 to vector<1x8xf32>
    %1487 = arith.select %1463, %1485, %1486 : vector<1x8xi1>, vector<1x8xf32>
    %cst_506 = arith.constant 1.57079637 : f32
    %1488 = vector.broadcast %cst_506 : f32 to vector<1x8xf32>
    %1489 = arith.select %1459, %1488, %1487 : vector<1x8xi1>, vector<1x8xf32>
    %1490 = arith.mulf %1484, %1484 : vector<1x8xf32>
    %cst_507 = arith.constant 0.0805374458 : f32
    %1491 = vector.broadcast %cst_507 : f32 to vector<1x8xf32>
    %1492 = arith.mulf %1491, %1490 : vector<1x8xf32>
    %cst_508 = arith.constant 0.138776854 : f32
    %1493 = vector.broadcast %cst_508 : f32 to vector<1x8xf32>
    %1494 = arith.subf %1492, %1493 : vector<1x8xf32>
    %1495 = arith.mulf %1494, %1490 : vector<1x8xf32>
    %cst_509 = arith.constant 0.199777111 : f32
    %1496 = vector.broadcast %cst_509 : f32 to vector<1x8xf32>
    %1497 = arith.addf %1495, %1496 : vector<1x8xf32>
    %1498 = arith.mulf %1497, %1490 : vector<1x8xf32>
    %cst_510 = arith.constant 0.333329499 : f32
    %1499 = vector.broadcast %cst_510 : f32 to vector<1x8xf32>
    %1500 = arith.subf %1498, %1499 : vector<1x8xf32>
    %1501 = arith.mulf %1500, %1490 : vector<1x8xf32>
    %1502 = arith.mulf %1501, %1484 : vector<1x8xf32>
    %1503 = arith.addf %1502, %1484 : vector<1x8xf32>
    %1504 = arith.addf %1489, %1503 : vector<1x8xf32>
    %1505 = arith.mulf %1457, %1504 : vector<1x8xf32>
    %cst_511 = arith.constant dense<0.000000e+00> : vector<1x512xf32>
    %1506 = tpu.matmul %1505, %3, %cst_511 {dimension_numbers = #tpu.dot_dimension_numbers<[1], [0], [0], [1], [0, 0, 1, 1], [], []>} : vector<1x8xf32>, vector<8x512xf32>, vector<1x512xf32> -> vector<1x512xf32>
    %1507 = arith.addf %1450, %1506 : vector<1x512xf32>
    %1508 = vector.extract_strided_slice %1507 {offsets = [0, 0], sizes = [1, 128], strides = [1, 1]} : vector<1x512xf32> to vector<1x128xf32>
    %1509 = arith.negf %1508 : vector<1x128xf32>
    %1510 = math.exp %1509 : vector<1x128xf32>
    %cst_512 = arith.constant 1.000000e+00 : f32
    %1511 = vector.broadcast %cst_512 : f32 to vector<1x128xf32>
    %1512 = arith.addf %1511, %1510 : vector<1x128xf32>
    %1513 = arith.divf %1511, %1512 : vector<1x128xf32>
    %1514 = vector.extract_strided_slice %1507 {offsets = [0, 128], sizes = [1, 128], strides = [1, 1]} : vector<1x512xf32> to vector<1x128xf32>
    %1515 = arith.negf %1514 : vector<1x128xf32>
    %1516 = math.exp %1515 : vector<1x128xf32>
    %cst_513 = arith.constant 1.000000e+00 : f32
    %1517 = vector.broadcast %cst_513 : f32 to vector<1x128xf32>
    %1518 = arith.addf %1517, %1516 : vector<1x128xf32>
    %1519 = arith.divf %1517, %1518 : vector<1x128xf32>
    %1520 = vector.extract_strided_slice %1507 {offsets = [0, 256], sizes = [1, 128], strides = [1, 1]} : vector<1x512xf32> to vector<1x128xf32>
    %1521 = math.tanh %1520 : vector<1x128xf32>
    %1522 = vector.extract_strided_slice %1507 {offsets = [0, 384], sizes = [1, 128], strides = [1, 1]} : vector<1x512xf32> to vector<1x128xf32>
    %1523 = arith.negf %1522 : vector<1x128xf32>
    %1524 = math.exp %1523 : vector<1x128xf32>
    %cst_514 = arith.constant 1.000000e+00 : f32
    %1525 = vector.broadcast %cst_514 : f32 to vector<1x128xf32>
    %1526 = arith.addf %1525, %1524 : vector<1x128xf32>
    %1527 = arith.divf %1525, %1526 : vector<1x128xf32>
    %1528 = arith.mulf %1276, %1513 : vector<1x128xf32>
    %1529 = arith.mulf %1519, %1521 : vector<1x128xf32>
    %1530 = arith.addf %1528, %1529 : vector<1x128xf32>
    %1531 = math.tanh %1530 : vector<1x128xf32>
    %1532 = arith.mulf %1527, %1531 : vector<1x128xf32>
    %1533 = math.absf %1532 : vector<1x128xf32>
    %cst_515 = arith.constant 0.000000e+00 : f32
    %1534 = vector.broadcast %cst_515 : f32 to vector<1x128xf32>
    %1535 = arith.cmpf olt, %1532, %1534 : vector<1x128xf32>
    %cst_516 = arith.constant -1.000000e+00 : f32
    %cst_517 = arith.constant 1.000000e+00 : f32
    %1536 = vector.broadcast %cst_516 : f32 to vector<1x128xf32>
    %1537 = vector.broadcast %cst_517 : f32 to vector<1x128xf32>
    %1538 = arith.select %1535, %1536, %1537 : vector<1x128xi1>, vector<1x128xf32>
    %cst_518 = arith.constant 2.41421366 : f32
    %1539 = vector.broadcast %cst_518 : f32 to vector<1x128xf32>
    %1540 = arith.cmpf ogt, %1533, %1539 : vector<1x128xf32>
    %cst_519 = arith.constant 0.414213568 : f32
    %1541 = vector.broadcast %cst_519 : f32 to vector<1x128xf32>
    %1542 = arith.cmpf ogt, %1533, %1541 : vector<1x128xf32>
    %cst_520 = arith.constant dense<true> : vector<1x128xi1>
    %1543 = arith.xori %1540, %cst_520 : vector<1x128xi1>
    %1544 = arith.andi %1542, %1543 : vector<1x128xi1>
    %cst_521 = arith.constant 1.000000e+00 : f32
    %1545 = vector.broadcast %cst_521 : f32 to vector<1x128xf32>
    %1546 = arith.select %1540, %1533, %1545 : vector<1x128xi1>, vector<1x128xf32>
    %1547 = tpu.reciprocal %1546 {approx = true} : vector<1x128xf32> -> vector<1x128xf32>
    %1548 = arith.mulf %1546, %1547 : vector<1x128xf32>
    %cst_522 = arith.constant 2.000000e+00 : f32
    %1549 = vector.broadcast %cst_522 : f32 to vector<1x128xf32>
    %1550 = arith.subf %1549, %1548 : vector<1x128xf32>
    %1551 = arith.mulf %1547, %1550 : vector<1x128xf32>
    %cst_523 = arith.constant 0.000000e+00 : f32
    %1552 = vector.broadcast %cst_523 : f32 to vector<1x128xf32>
    %1553 = arith.subf %1552, %1551 : vector<1x128xf32>
    %cst_524 = arith.constant 1.000000e+00 : f32
    %1554 = vector.broadcast %cst_524 : f32 to vector<1x128xf32>
    %1555 = arith.subf %1533, %1554 : vector<1x128xf32>
    %cst_525 = arith.constant 1.000000e+00 : f32
    %1556 = vector.broadcast %cst_525 : f32 to vector<1x128xf32>
    %1557 = arith.addf %1533, %1556 : vector<1x128xf32>
    %1558 = tpu.reciprocal %1557 {approx = true} : vector<1x128xf32> -> vector<1x128xf32>
    %1559 = arith.mulf %1557, %1558 : vector<1x128xf32>
    %cst_526 = arith.constant 2.000000e+00 : f32
    %1560 = vector.broadcast %cst_526 : f32 to vector<1x128xf32>
    %1561 = arith.subf %1560, %1559 : vector<1x128xf32>
    %1562 = arith.mulf %1558, %1561 : vector<1x128xf32>
    %1563 = arith.mulf %1555, %1562 : vector<1x128xf32>
    %1564 = arith.select %1544, %1563, %1533 : vector<1x128xi1>, vector<1x128xf32>
    %1565 = arith.select %1540, %1553, %1564 : vector<1x128xi1>, vector<1x128xf32>
    %cst_527 = arith.constant 0.785398185 : f32
    %cst_528 = arith.constant 0.000000e+00 : f32
    %1566 = vector.broadcast %cst_527 : f32 to vector<1x128xf32>
    %1567 = vector.broadcast %cst_528 : f32 to vector<1x128xf32>
    %1568 = arith.select %1544, %1566, %1567 : vector<1x128xi1>, vector<1x128xf32>
    %cst_529 = arith.constant 1.57079637 : f32
    %1569 = vector.broadcast %cst_529 : f32 to vector<1x128xf32>
    %1570 = arith.select %1540, %1569, %1568 : vector<1x128xi1>, vector<1x128xf32>
    %1571 = arith.mulf %1565, %1565 : vector<1x128xf32>
    %cst_530 = arith.constant 0.0805374458 : f32
    %1572 = vector.broadcast %cst_530 : f32 to vector<1x128xf32>
    %1573 = arith.mulf %1572, %1571 : vector<1x128xf32>
    %cst_531 = arith.constant 0.138776854 : f32
    %1574 = vector.broadcast %cst_531 : f32 to vector<1x128xf32>
    %1575 = arith.subf %1573, %1574 : vector<1x128xf32>
    %1576 = arith.mulf %1575, %1571 : vector<1x128xf32>
    %cst_532 = arith.constant 0.199777111 : f32
    %1577 = vector.broadcast %cst_532 : f32 to vector<1x128xf32>
    %1578 = arith.addf %1576, %1577 : vector<1x128xf32>
    %1579 = arith.mulf %1578, %1571 : vector<1x128xf32>
    %cst_533 = arith.constant 0.333329499 : f32
    %1580 = vector.broadcast %cst_533 : f32 to vector<1x128xf32>
    %1581 = arith.subf %1579, %1580 : vector<1x128xf32>
    %1582 = arith.mulf %1581, %1571 : vector<1x128xf32>
    %1583 = arith.mulf %1582, %1565 : vector<1x128xf32>
    %1584 = arith.addf %1583, %1565 : vector<1x128xf32>
    %1585 = arith.addf %1570, %1584 : vector<1x128xf32>
    %1586 = arith.mulf %1538, %1585 : vector<1x128xf32>
    %1587 = arith.mulf %1532, %1532 : vector<1x128xf32>
    %1588 = math.absf %1587 : vector<1x128xf32>
    %cst_534 = arith.constant 0.000000e+00 : f32
    %1589 = vector.broadcast %cst_534 : f32 to vector<1x128xf32>
    %1590 = arith.cmpf olt, %1587, %1589 : vector<1x128xf32>
    %cst_535 = arith.constant -1.000000e+00 : f32
    %cst_536 = arith.constant 1.000000e+00 : f32
    %1591 = vector.broadcast %cst_535 : f32 to vector<1x128xf32>
    %1592 = vector.broadcast %cst_536 : f32 to vector<1x128xf32>
    %1593 = arith.select %1590, %1591, %1592 : vector<1x128xi1>, vector<1x128xf32>
    %cst_537 = arith.constant 2.41421366 : f32
    %1594 = vector.broadcast %cst_537 : f32 to vector<1x128xf32>
    %1595 = arith.cmpf ogt, %1588, %1594 : vector<1x128xf32>
    %cst_538 = arith.constant 0.414213568 : f32
    %1596 = vector.broadcast %cst_538 : f32 to vector<1x128xf32>
    %1597 = arith.cmpf ogt, %1588, %1596 : vector<1x128xf32>
    %cst_539 = arith.constant dense<true> : vector<1x128xi1>
    %1598 = arith.xori %1595, %cst_539 : vector<1x128xi1>
    %1599 = arith.andi %1597, %1598 : vector<1x128xi1>
    %cst_540 = arith.constant 1.000000e+00 : f32
    %1600 = vector.broadcast %cst_540 : f32 to vector<1x128xf32>
    %1601 = arith.select %1595, %1588, %1600 : vector<1x128xi1>, vector<1x128xf32>
    %1602 = tpu.reciprocal %1601 {approx = true} : vector<1x128xf32> -> vector<1x128xf32>
    %1603 = arith.mulf %1601, %1602 : vector<1x128xf32>
    %cst_541 = arith.constant 2.000000e+00 : f32
    %1604 = vector.broadcast %cst_541 : f32 to vector<1x128xf32>
    %1605 = arith.subf %1604, %1603 : vector<1x128xf32>
    %1606 = arith.mulf %1602, %1605 : vector<1x128xf32>
    %cst_542 = arith.constant 0.000000e+00 : f32
    %1607 = vector.broadcast %cst_542 : f32 to vector<1x128xf32>
    %1608 = arith.subf %1607, %1606 : vector<1x128xf32>
    %cst_543 = arith.constant 1.000000e+00 : f32
    %1609 = vector.broadcast %cst_543 : f32 to vector<1x128xf32>
    %1610 = arith.subf %1588, %1609 : vector<1x128xf32>
    %cst_544 = arith.constant 1.000000e+00 : f32
    %1611 = vector.broadcast %cst_544 : f32 to vector<1x128xf32>
    %1612 = arith.addf %1588, %1611 : vector<1x128xf32>
    %1613 = tpu.reciprocal %1612 {approx = true} : vector<1x128xf32> -> vector<1x128xf32>
    %1614 = arith.mulf %1612, %1613 : vector<1x128xf32>
    %cst_545 = arith.constant 2.000000e+00 : f32
    %1615 = vector.broadcast %cst_545 : f32 to vector<1x128xf32>
    %1616 = arith.subf %1615, %1614 : vector<1x128xf32>
    %1617 = arith.mulf %1613, %1616 : vector<1x128xf32>
    %1618 = arith.mulf %1610, %1617 : vector<1x128xf32>
    %1619 = arith.select %1599, %1618, %1588 : vector<1x128xi1>, vector<1x128xf32>
    %1620 = arith.select %1595, %1608, %1619 : vector<1x128xi1>, vector<1x128xf32>
    %cst_546 = arith.constant 0.785398185 : f32
    %cst_547 = arith.constant 0.000000e+00 : f32
    %1621 = vector.broadcast %cst_546 : f32 to vector<1x128xf32>
    %1622 = vector.broadcast %cst_547 : f32 to vector<1x128xf32>
    %1623 = arith.select %1599, %1621, %1622 : vector<1x128xi1>, vector<1x128xf32>
    %cst_548 = arith.constant 1.57079637 : f32
    %1624 = vector.broadcast %cst_548 : f32 to vector<1x128xf32>
    %1625 = arith.select %1595, %1624, %1623 : vector<1x128xi1>, vector<1x128xf32>
    %1626 = arith.mulf %1620, %1620 : vector<1x128xf32>
    %cst_549 = arith.constant 0.0805374458 : f32
    %1627 = vector.broadcast %cst_549 : f32 to vector<1x128xf32>
    %1628 = arith.mulf %1627, %1626 : vector<1x128xf32>
    %cst_550 = arith.constant 0.138776854 : f32
    %1629 = vector.broadcast %cst_550 : f32 to vector<1x128xf32>
    %1630 = arith.subf %1628, %1629 : vector<1x128xf32>
    %1631 = arith.mulf %1630, %1626 : vector<1x128xf32>
    %cst_551 = arith.constant 0.199777111 : f32
    %1632 = vector.broadcast %cst_551 : f32 to vector<1x128xf32>
    %1633 = arith.addf %1631, %1632 : vector<1x128xf32>
    %1634 = arith.mulf %1633, %1626 : vector<1x128xf32>
    %cst_552 = arith.constant 0.333329499 : f32
    %1635 = vector.broadcast %cst_552 : f32 to vector<1x128xf32>
    %1636 = arith.subf %1634, %1635 : vector<1x128xf32>
    %1637 = arith.mulf %1636, %1626 : vector<1x128xf32>
    %1638 = arith.mulf %1637, %1620 : vector<1x128xf32>
    %1639 = arith.addf %1638, %1620 : vector<1x128xf32>
    %1640 = arith.addf %1625, %1639 : vector<1x128xf32>
    %1641 = arith.mulf %1593, %1640 : vector<1x128xf32>
    %1642 = tpu.concatenate %1586, %1641 in 1 : vector<1x128xf32>, vector<1x128xf32> -> vector<1x256xf32>
    %cst_553 = arith.constant dense<0.000000e+00> : vector<1x9xf32>
    %1643 = tpu.matmul %1642, %4, %cst_553 {dimension_numbers = #tpu.dot_dimension_numbers<[1], [0], [0], [1], [0, 0, 1, 1], [], []>} : vector<1x256xf32>, vector<256x9xf32>, vector<1x9xf32> -> vector<1x9xf32>
    %1644 = arith.addf %1643, %5 : vector<1x9xf32>
    %1645 = vector.extract_strided_slice %1644 {offsets = [0, 0], sizes = [1, 8], strides = [1, 1]} : vector<1x9xf32> to vector<1x8xf32>
    %1646 = vector.extract_strided_slice %1644 {offsets = [0, 8], sizes = [1, 1], strides = [1, 1]} : vector<1x9xf32> to vector<1x1xf32>
    %c5 = arith.constant 5 : index
    %c0_554 = arith.constant 0 : index
    %1647 = vector.load %arg10[%c5, %c0_554] : memref<8x1xf32, #tpu.memory_space<vmem>>, vector<1x1xf32>
    tpu.vector_store %arg10[%c5, %c0_554], %1646 {strides = array<i32>} : memref<8x1xf32, #tpu.memory_space<vmem>>, vector<1x1xf32>,
    %1648 = vector.extract_strided_slice %121 {offsets = [6, 0], sizes = [1, 512], strides = [1, 1]} : vector<8x512xf32> to vector<1x512xf32>
    %1649 = math.absf %1645 : vector<1x8xf32>
    %cst_555 = arith.constant 0.000000e+00 : f32
    %1650 = vector.broadcast %cst_555 : f32 to vector<1x8xf32>
    %1651 = arith.cmpf olt, %1645, %1650 : vector<1x8xf32>
    %cst_556 = arith.constant -1.000000e+00 : f32
    %cst_557 = arith.constant 1.000000e+00 : f32
    %1652 = vector.broadcast %cst_556 : f32 to vector<1x8xf32>
    %1653 = vector.broadcast %cst_557 : f32 to vector<1x8xf32>
    %1654 = arith.select %1651, %1652, %1653 : vector<1x8xi1>, vector<1x8xf32>
    %cst_558 = arith.constant 2.41421366 : f32
    %1655 = vector.broadcast %cst_558 : f32 to vector<1x8xf32>
    %1656 = arith.cmpf ogt, %1649, %1655 : vector<1x8xf32>
    %cst_559 = arith.constant 0.414213568 : f32
    %1657 = vector.broadcast %cst_559 : f32 to vector<1x8xf32>
    %1658 = arith.cmpf ogt, %1649, %1657 : vector<1x8xf32>
    %cst_560 = arith.constant dense<true> : vector<1x8xi1>
    %1659 = arith.xori %1656, %cst_560 : vector<1x8xi1>
    %1660 = arith.andi %1658, %1659 : vector<1x8xi1>
    %cst_561 = arith.constant 1.000000e+00 : f32
    %1661 = vector.broadcast %cst_561 : f32 to vector<1x8xf32>
    %1662 = arith.select %1656, %1649, %1661 : vector<1x8xi1>, vector<1x8xf32>
    %1663 = tpu.reciprocal %1662 {approx = true} : vector<1x8xf32> -> vector<1x8xf32>
    %1664 = arith.mulf %1662, %1663 : vector<1x8xf32>
    %cst_562 = arith.constant 2.000000e+00 : f32
    %1665 = vector.broadcast %cst_562 : f32 to vector<1x8xf32>
    %1666 = arith.subf %1665, %1664 : vector<1x8xf32>
    %1667 = arith.mulf %1663, %1666 : vector<1x8xf32>
    %cst_563 = arith.constant 0.000000e+00 : f32
    %1668 = vector.broadcast %cst_563 : f32 to vector<1x8xf32>
    %1669 = arith.subf %1668, %1667 : vector<1x8xf32>
    %cst_564 = arith.constant 1.000000e+00 : f32
    %1670 = vector.broadcast %cst_564 : f32 to vector<1x8xf32>
    %1671 = arith.subf %1649, %1670 : vector<1x8xf32>
    %cst_565 = arith.constant 1.000000e+00 : f32
    %1672 = vector.broadcast %cst_565 : f32 to vector<1x8xf32>
    %1673 = arith.addf %1649, %1672 : vector<1x8xf32>
    %1674 = tpu.reciprocal %1673 {approx = true} : vector<1x8xf32> -> vector<1x8xf32>
    %1675 = arith.mulf %1673, %1674 : vector<1x8xf32>
    %cst_566 = arith.constant 2.000000e+00 : f32
    %1676 = vector.broadcast %cst_566 : f32 to vector<1x8xf32>
    %1677 = arith.subf %1676, %1675 : vector<1x8xf32>
    %1678 = arith.mulf %1674, %1677 : vector<1x8xf32>
    %1679 = arith.mulf %1671, %1678 : vector<1x8xf32>
    %1680 = arith.select %1660, %1679, %1649 : vector<1x8xi1>, vector<1x8xf32>
    %1681 = arith.select %1656, %1669, %1680 : vector<1x8xi1>, vector<1x8xf32>
    %cst_567 = arith.constant 0.785398185 : f32
    %cst_568 = arith.constant 0.000000e+00 : f32
    %1682 = vector.broadcast %cst_567 : f32 to vector<1x8xf32>
    %1683 = vector.broadcast %cst_568 : f32 to vector<1x8xf32>
    %1684 = arith.select %1660, %1682, %1683 : vector<1x8xi1>, vector<1x8xf32>
    %cst_569 = arith.constant 1.57079637 : f32
    %1685 = vector.broadcast %cst_569 : f32 to vector<1x8xf32>
    %1686 = arith.select %1656, %1685, %1684 : vector<1x8xi1>, vector<1x8xf32>
    %1687 = arith.mulf %1681, %1681 : vector<1x8xf32>
    %cst_570 = arith.constant 0.0805374458 : f32
    %1688 = vector.broadcast %cst_570 : f32 to vector<1x8xf32>
    %1689 = arith.mulf %1688, %1687 : vector<1x8xf32>
    %cst_571 = arith.constant 0.138776854 : f32
    %1690 = vector.broadcast %cst_571 : f32 to vector<1x8xf32>
    %1691 = arith.subf %1689, %1690 : vector<1x8xf32>
    %1692 = arith.mulf %1691, %1687 : vector<1x8xf32>
    %cst_572 = arith.constant 0.199777111 : f32
    %1693 = vector.broadcast %cst_572 : f32 to vector<1x8xf32>
    %1694 = arith.addf %1692, %1693 : vector<1x8xf32>
    %1695 = arith.mulf %1694, %1687 : vector<1x8xf32>
    %cst_573 = arith.constant 0.333329499 : f32
    %1696 = vector.broadcast %cst_573 : f32 to vector<1x8xf32>
    %1697 = arith.subf %1695, %1696 : vector<1x8xf32>
    %1698 = arith.mulf %1697, %1687 : vector<1x8xf32>
    %1699 = arith.mulf %1698, %1681 : vector<1x8xf32>
    %1700 = arith.addf %1699, %1681 : vector<1x8xf32>
    %1701 = arith.addf %1686, %1700 : vector<1x8xf32>
    %1702 = arith.mulf %1654, %1701 : vector<1x8xf32>
    %cst_574 = arith.constant dense<0.000000e+00> : vector<1x512xf32>
    %1703 = tpu.matmul %1702, %2, %cst_574 {dimension_numbers = #tpu.dot_dimension_numbers<[1], [0], [0], [1], [0, 0, 1, 1], [], []>} : vector<1x8xf32>, vector<8x512xf32>, vector<1x512xf32> -> vector<1x512xf32>
    %1704 = arith.addf %1648, %1703 : vector<1x512xf32>
    %1705 = arith.mulf %1645, %1645 : vector<1x8xf32>
    %1706 = math.absf %1705 : vector<1x8xf32>
    %cst_575 = arith.constant 0.000000e+00 : f32
    %1707 = vector.broadcast %cst_575 : f32 to vector<1x8xf32>
    %1708 = arith.cmpf olt, %1705, %1707 : vector<1x8xf32>
    %cst_576 = arith.constant -1.000000e+00 : f32
    %cst_577 = arith.constant 1.000000e+00 : f32
    %1709 = vector.broadcast %cst_576 : f32 to vector<1x8xf32>
    %1710 = vector.broadcast %cst_577 : f32 to vector<1x8xf32>
    %1711 = arith.select %1708, %1709, %1710 : vector<1x8xi1>, vector<1x8xf32>
    %cst_578 = arith.constant 2.41421366 : f32
    %1712 = vector.broadcast %cst_578 : f32 to vector<1x8xf32>
    %1713 = arith.cmpf ogt, %1706, %1712 : vector<1x8xf32>
    %cst_579 = arith.constant 0.414213568 : f32
    %1714 = vector.broadcast %cst_579 : f32 to vector<1x8xf32>
    %1715 = arith.cmpf ogt, %1706, %1714 : vector<1x8xf32>
    %cst_580 = arith.constant dense<true> : vector<1x8xi1>
    %1716 = arith.xori %1713, %cst_580 : vector<1x8xi1>
    %1717 = arith.andi %1715, %1716 : vector<1x8xi1>
    %cst_581 = arith.constant 1.000000e+00 : f32
    %1718 = vector.broadcast %cst_581 : f32 to vector<1x8xf32>
    %1719 = arith.select %1713, %1706, %1718 : vector<1x8xi1>, vector<1x8xf32>
    %1720 = tpu.reciprocal %1719 {approx = true} : vector<1x8xf32> -> vector<1x8xf32>
    %1721 = arith.mulf %1719, %1720 : vector<1x8xf32>
    %cst_582 = arith.constant 2.000000e+00 : f32
    %1722 = vector.broadcast %cst_582 : f32 to vector<1x8xf32>
    %1723 = arith.subf %1722, %1721 : vector<1x8xf32>
    %1724 = arith.mulf %1720, %1723 : vector<1x8xf32>
    %cst_583 = arith.constant 0.000000e+00 : f32
    %1725 = vector.broadcast %cst_583 : f32 to vector<1x8xf32>
    %1726 = arith.subf %1725, %1724 : vector<1x8xf32>
    %cst_584 = arith.constant 1.000000e+00 : f32
    %1727 = vector.broadcast %cst_584 : f32 to vector<1x8xf32>
    %1728 = arith.subf %1706, %1727 : vector<1x8xf32>
    %cst_585 = arith.constant 1.000000e+00 : f32
    %1729 = vector.broadcast %cst_585 : f32 to vector<1x8xf32>
    %1730 = arith.addf %1706, %1729 : vector<1x8xf32>
    %1731 = tpu.reciprocal %1730 {approx = true} : vector<1x8xf32> -> vector<1x8xf32>
    %1732 = arith.mulf %1730, %1731 : vector<1x8xf32>
    %cst_586 = arith.constant 2.000000e+00 : f32
    %1733 = vector.broadcast %cst_586 : f32 to vector<1x8xf32>
    %1734 = arith.subf %1733, %1732 : vector<1x8xf32>
    %1735 = arith.mulf %1731, %1734 : vector<1x8xf32>
    %1736 = arith.mulf %1728, %1735 : vector<1x8xf32>
    %1737 = arith.select %1717, %1736, %1706 : vector<1x8xi1>, vector<1x8xf32>
    %1738 = arith.select %1713, %1726, %1737 : vector<1x8xi1>, vector<1x8xf32>
    %cst_587 = arith.constant 0.785398185 : f32
    %cst_588 = arith.constant 0.000000e+00 : f32
    %1739 = vector.broadcast %cst_587 : f32 to vector<1x8xf32>
    %1740 = vector.broadcast %cst_588 : f32 to vector<1x8xf32>
    %1741 = arith.select %1717, %1739, %1740 : vector<1x8xi1>, vector<1x8xf32>
    %cst_589 = arith.constant 1.57079637 : f32
    %1742 = vector.broadcast %cst_589 : f32 to vector<1x8xf32>
    %1743 = arith.select %1713, %1742, %1741 : vector<1x8xi1>, vector<1x8xf32>
    %1744 = arith.mulf %1738, %1738 : vector<1x8xf32>
    %cst_590 = arith.constant 0.0805374458 : f32
    %1745 = vector.broadcast %cst_590 : f32 to vector<1x8xf32>
    %1746 = arith.mulf %1745, %1744 : vector<1x8xf32>
    %cst_591 = arith.constant 0.138776854 : f32
    %1747 = vector.broadcast %cst_591 : f32 to vector<1x8xf32>
    %1748 = arith.subf %1746, %1747 : vector<1x8xf32>
    %1749 = arith.mulf %1748, %1744 : vector<1x8xf32>
    %cst_592 = arith.constant 0.199777111 : f32
    %1750 = vector.broadcast %cst_592 : f32 to vector<1x8xf32>
    %1751 = arith.addf %1749, %1750 : vector<1x8xf32>
    %1752 = arith.mulf %1751, %1744 : vector<1x8xf32>
    %cst_593 = arith.constant 0.333329499 : f32
    %1753 = vector.broadcast %cst_593 : f32 to vector<1x8xf32>
    %1754 = arith.subf %1752, %1753 : vector<1x8xf32>
    %1755 = arith.mulf %1754, %1744 : vector<1x8xf32>
    %1756 = arith.mulf %1755, %1738 : vector<1x8xf32>
    %1757 = arith.addf %1756, %1738 : vector<1x8xf32>
    %1758 = arith.addf %1743, %1757 : vector<1x8xf32>
    %1759 = arith.mulf %1711, %1758 : vector<1x8xf32>
    %cst_594 = arith.constant dense<0.000000e+00> : vector<1x512xf32>
    %1760 = tpu.matmul %1759, %3, %cst_594 {dimension_numbers = #tpu.dot_dimension_numbers<[1], [0], [0], [1], [0, 0, 1, 1], [], []>} : vector<1x8xf32>, vector<8x512xf32>, vector<1x512xf32> -> vector<1x512xf32>
    %1761 = arith.addf %1704, %1760 : vector<1x512xf32>
    %1762 = vector.extract_strided_slice %1761 {offsets = [0, 0], sizes = [1, 128], strides = [1, 1]} : vector<1x512xf32> to vector<1x128xf32>
    %1763 = arith.negf %1762 : vector<1x128xf32>
    %1764 = math.exp %1763 : vector<1x128xf32>
    %cst_595 = arith.constant 1.000000e+00 : f32
    %1765 = vector.broadcast %cst_595 : f32 to vector<1x128xf32>
    %1766 = arith.addf %1765, %1764 : vector<1x128xf32>
    %1767 = arith.divf %1765, %1766 : vector<1x128xf32>
    %1768 = vector.extract_strided_slice %1761 {offsets = [0, 128], sizes = [1, 128], strides = [1, 1]} : vector<1x512xf32> to vector<1x128xf32>
    %1769 = arith.negf %1768 : vector<1x128xf32>
    %1770 = math.exp %1769 : vector<1x128xf32>
    %cst_596 = arith.constant 1.000000e+00 : f32
    %1771 = vector.broadcast %cst_596 : f32 to vector<1x128xf32>
    %1772 = arith.addf %1771, %1770 : vector<1x128xf32>
    %1773 = arith.divf %1771, %1772 : vector<1x128xf32>
    %1774 = vector.extract_strided_slice %1761 {offsets = [0, 256], sizes = [1, 128], strides = [1, 1]} : vector<1x512xf32> to vector<1x128xf32>
    %1775 = math.tanh %1774 : vector<1x128xf32>
    %1776 = vector.extract_strided_slice %1761 {offsets = [0, 384], sizes = [1, 128], strides = [1, 1]} : vector<1x512xf32> to vector<1x128xf32>
    %1777 = arith.negf %1776 : vector<1x128xf32>
    %1778 = math.exp %1777 : vector<1x128xf32>
    %cst_597 = arith.constant 1.000000e+00 : f32
    %1779 = vector.broadcast %cst_597 : f32 to vector<1x128xf32>
    %1780 = arith.addf %1779, %1778 : vector<1x128xf32>
    %1781 = arith.divf %1779, %1780 : vector<1x128xf32>
    %1782 = arith.mulf %1530, %1767 : vector<1x128xf32>
    %1783 = arith.mulf %1773, %1775 : vector<1x128xf32>
    %1784 = arith.addf %1782, %1783 : vector<1x128xf32>
    %1785 = math.tanh %1784 : vector<1x128xf32>
    %1786 = arith.mulf %1781, %1785 : vector<1x128xf32>
    %1787 = math.absf %1786 : vector<1x128xf32>
    %cst_598 = arith.constant 0.000000e+00 : f32
    %1788 = vector.broadcast %cst_598 : f32 to vector<1x128xf32>
    %1789 = arith.cmpf olt, %1786, %1788 : vector<1x128xf32>
    %cst_599 = arith.constant -1.000000e+00 : f32
    %cst_600 = arith.constant 1.000000e+00 : f32
    %1790 = vector.broadcast %cst_599 : f32 to vector<1x128xf32>
    %1791 = vector.broadcast %cst_600 : f32 to vector<1x128xf32>
    %1792 = arith.select %1789, %1790, %1791 : vector<1x128xi1>, vector<1x128xf32>
    %cst_601 = arith.constant 2.41421366 : f32
    %1793 = vector.broadcast %cst_601 : f32 to vector<1x128xf32>
    %1794 = arith.cmpf ogt, %1787, %1793 : vector<1x128xf32>
    %cst_602 = arith.constant 0.414213568 : f32
    %1795 = vector.broadcast %cst_602 : f32 to vector<1x128xf32>
    %1796 = arith.cmpf ogt, %1787, %1795 : vector<1x128xf32>
    %cst_603 = arith.constant dense<true> : vector<1x128xi1>
    %1797 = arith.xori %1794, %cst_603 : vector<1x128xi1>
    %1798 = arith.andi %1796, %1797 : vector<1x128xi1>
    %cst_604 = arith.constant 1.000000e+00 : f32
    %1799 = vector.broadcast %cst_604 : f32 to vector<1x128xf32>
    %1800 = arith.select %1794, %1787, %1799 : vector<1x128xi1>, vector<1x128xf32>
    %1801 = tpu.reciprocal %1800 {approx = true} : vector<1x128xf32> -> vector<1x128xf32>
    %1802 = arith.mulf %1800, %1801 : vector<1x128xf32>
    %cst_605 = arith.constant 2.000000e+00 : f32
    %1803 = vector.broadcast %cst_605 : f32 to vector<1x128xf32>
    %1804 = arith.subf %1803, %1802 : vector<1x128xf32>
    %1805 = arith.mulf %1801, %1804 : vector<1x128xf32>
    %cst_606 = arith.constant 0.000000e+00 : f32
    %1806 = vector.broadcast %cst_606 : f32 to vector<1x128xf32>
    %1807 = arith.subf %1806, %1805 : vector<1x128xf32>
    %cst_607 = arith.constant 1.000000e+00 : f32
    %1808 = vector.broadcast %cst_607 : f32 to vector<1x128xf32>
    %1809 = arith.subf %1787, %1808 : vector<1x128xf32>
    %cst_608 = arith.constant 1.000000e+00 : f32
    %1810 = vector.broadcast %cst_608 : f32 to vector<1x128xf32>
    %1811 = arith.addf %1787, %1810 : vector<1x128xf32>
    %1812 = tpu.reciprocal %1811 {approx = true} : vector<1x128xf32> -> vector<1x128xf32>
    %1813 = arith.mulf %1811, %1812 : vector<1x128xf32>
    %cst_609 = arith.constant 2.000000e+00 : f32
    %1814 = vector.broadcast %cst_609 : f32 to vector<1x128xf32>
    %1815 = arith.subf %1814, %1813 : vector<1x128xf32>
    %1816 = arith.mulf %1812, %1815 : vector<1x128xf32>
    %1817 = arith.mulf %1809, %1816 : vector<1x128xf32>
    %1818 = arith.select %1798, %1817, %1787 : vector<1x128xi1>, vector<1x128xf32>
    %1819 = arith.select %1794, %1807, %1818 : vector<1x128xi1>, vector<1x128xf32>
    %cst_610 = arith.constant 0.785398185 : f32
    %cst_611 = arith.constant 0.000000e+00 : f32
    %1820 = vector.broadcast %cst_610 : f32 to vector<1x128xf32>
    %1821 = vector.broadcast %cst_611 : f32 to vector<1x128xf32>
    %1822 = arith.select %1798, %1820, %1821 : vector<1x128xi1>, vector<1x128xf32>
    %cst_612 = arith.constant 1.57079637 : f32
    %1823 = vector.broadcast %cst_612 : f32 to vector<1x128xf32>
    %1824 = arith.select %1794, %1823, %1822 : vector<1x128xi1>, vector<1x128xf32>
    %1825 = arith.mulf %1819, %1819 : vector<1x128xf32>
    %cst_613 = arith.constant 0.0805374458 : f32
    %1826 = vector.broadcast %cst_613 : f32 to vector<1x128xf32>
    %1827 = arith.mulf %1826, %1825 : vector<1x128xf32>
    %cst_614 = arith.constant 0.138776854 : f32
    %1828 = vector.broadcast %cst_614 : f32 to vector<1x128xf32>
    %1829 = arith.subf %1827, %1828 : vector<1x128xf32>
    %1830 = arith.mulf %1829, %1825 : vector<1x128xf32>
    %cst_615 = arith.constant 0.199777111 : f32
    %1831 = vector.broadcast %cst_615 : f32 to vector<1x128xf32>
    %1832 = arith.addf %1830, %1831 : vector<1x128xf32>
    %1833 = arith.mulf %1832, %1825 : vector<1x128xf32>
    %cst_616 = arith.constant 0.333329499 : f32
    %1834 = vector.broadcast %cst_616 : f32 to vector<1x128xf32>
    %1835 = arith.subf %1833, %1834 : vector<1x128xf32>
    %1836 = arith.mulf %1835, %1825 : vector<1x128xf32>
    %1837 = arith.mulf %1836, %1819 : vector<1x128xf32>
    %1838 = arith.addf %1837, %1819 : vector<1x128xf32>
    %1839 = arith.addf %1824, %1838 : vector<1x128xf32>
    %1840 = arith.mulf %1792, %1839 : vector<1x128xf32>
    %1841 = arith.mulf %1786, %1786 : vector<1x128xf32>
    %1842 = math.absf %1841 : vector<1x128xf32>
    %cst_617 = arith.constant 0.000000e+00 : f32
    %1843 = vector.broadcast %cst_617 : f32 to vector<1x128xf32>
    %1844 = arith.cmpf olt, %1841, %1843 : vector<1x128xf32>
    %cst_618 = arith.constant -1.000000e+00 : f32
    %cst_619 = arith.constant 1.000000e+00 : f32
    %1845 = vector.broadcast %cst_618 : f32 to vector<1x128xf32>
    %1846 = vector.broadcast %cst_619 : f32 to vector<1x128xf32>
    %1847 = arith.select %1844, %1845, %1846 : vector<1x128xi1>, vector<1x128xf32>
    %cst_620 = arith.constant 2.41421366 : f32
    %1848 = vector.broadcast %cst_620 : f32 to vector<1x128xf32>
    %1849 = arith.cmpf ogt, %1842, %1848 : vector<1x128xf32>
    %cst_621 = arith.constant 0.414213568 : f32
    %1850 = vector.broadcast %cst_621 : f32 to vector<1x128xf32>
    %1851 = arith.cmpf ogt, %1842, %1850 : vector<1x128xf32>
    %cst_622 = arith.constant dense<true> : vector<1x128xi1>
    %1852 = arith.xori %1849, %cst_622 : vector<1x128xi1>
    %1853 = arith.andi %1851, %1852 : vector<1x128xi1>
    %cst_623 = arith.constant 1.000000e+00 : f32
    %1854 = vector.broadcast %cst_623 : f32 to vector<1x128xf32>
    %1855 = arith.select %1849, %1842, %1854 : vector<1x128xi1>, vector<1x128xf32>
    %1856 = tpu.reciprocal %1855 {approx = true} : vector<1x128xf32> -> vector<1x128xf32>
    %1857 = arith.mulf %1855, %1856 : vector<1x128xf32>
    %cst_624 = arith.constant 2.000000e+00 : f32
    %1858 = vector.broadcast %cst_624 : f32 to vector<1x128xf32>
    %1859 = arith.subf %1858, %1857 : vector<1x128xf32>
    %1860 = arith.mulf %1856, %1859 : vector<1x128xf32>
    %cst_625 = arith.constant 0.000000e+00 : f32
    %1861 = vector.broadcast %cst_625 : f32 to vector<1x128xf32>
    %1862 = arith.subf %1861, %1860 : vector<1x128xf32>
    %cst_626 = arith.constant 1.000000e+00 : f32
    %1863 = vector.broadcast %cst_626 : f32 to vector<1x128xf32>
    %1864 = arith.subf %1842, %1863 : vector<1x128xf32>
    %cst_627 = arith.constant 1.000000e+00 : f32
    %1865 = vector.broadcast %cst_627 : f32 to vector<1x128xf32>
    %1866 = arith.addf %1842, %1865 : vector<1x128xf32>
    %1867 = tpu.reciprocal %1866 {approx = true} : vector<1x128xf32> -> vector<1x128xf32>
    %1868 = arith.mulf %1866, %1867 : vector<1x128xf32>
    %cst_628 = arith.constant 2.000000e+00 : f32
    %1869 = vector.broadcast %cst_628 : f32 to vector<1x128xf32>
    %1870 = arith.subf %1869, %1868 : vector<1x128xf32>
    %1871 = arith.mulf %1867, %1870 : vector<1x128xf32>
    %1872 = arith.mulf %1864, %1871 : vector<1x128xf32>
    %1873 = arith.select %1853, %1872, %1842 : vector<1x128xi1>, vector<1x128xf32>
    %1874 = arith.select %1849, %1862, %1873 : vector<1x128xi1>, vector<1x128xf32>
    %cst_629 = arith.constant 0.785398185 : f32
    %cst_630 = arith.constant 0.000000e+00 : f32
    %1875 = vector.broadcast %cst_629 : f32 to vector<1x128xf32>
    %1876 = vector.broadcast %cst_630 : f32 to vector<1x128xf32>
    %1877 = arith.select %1853, %1875, %1876 : vector<1x128xi1>, vector<1x128xf32>
    %cst_631 = arith.constant 1.57079637 : f32
    %1878 = vector.broadcast %cst_631 : f32 to vector<1x128xf32>
    %1879 = arith.select %1849, %1878, %1877 : vector<1x128xi1>, vector<1x128xf32>
    %1880 = arith.mulf %1874, %1874 : vector<1x128xf32>
    %cst_632 = arith.constant 0.0805374458 : f32
    %1881 = vector.broadcast %cst_632 : f32 to vector<1x128xf32>
    %1882 = arith.mulf %1881, %1880 : vector<1x128xf32>
    %cst_633 = arith.constant 0.138776854 : f32
    %1883 = vector.broadcast %cst_633 : f32 to vector<1x128xf32>
    %1884 = arith.subf %1882, %1883 : vector<1x128xf32>
    %1885 = arith.mulf %1884, %1880 : vector<1x128xf32>
    %cst_634 = arith.constant 0.199777111 : f32
    %1886 = vector.broadcast %cst_634 : f32 to vector<1x128xf32>
    %1887 = arith.addf %1885, %1886 : vector<1x128xf32>
    %1888 = arith.mulf %1887, %1880 : vector<1x128xf32>
    %cst_635 = arith.constant 0.333329499 : f32
    %1889 = vector.broadcast %cst_635 : f32 to vector<1x128xf32>
    %1890 = arith.subf %1888, %1889 : vector<1x128xf32>
    %1891 = arith.mulf %1890, %1880 : vector<1x128xf32>
    %1892 = arith.mulf %1891, %1874 : vector<1x128xf32>
    %1893 = arith.addf %1892, %1874 : vector<1x128xf32>
    %1894 = arith.addf %1879, %1893 : vector<1x128xf32>
    %1895 = arith.mulf %1847, %1894 : vector<1x128xf32>
    %1896 = tpu.concatenate %1840, %1895 in 1 : vector<1x128xf32>, vector<1x128xf32> -> vector<1x256xf32>
    %cst_636 = arith.constant dense<0.000000e+00> : vector<1x9xf32>
    %1897 = tpu.matmul %1896, %4, %cst_636 {dimension_numbers = #tpu.dot_dimension_numbers<[1], [0], [0], [1], [0, 0, 1, 1], [], []>} : vector<1x256xf32>, vector<256x9xf32>, vector<1x9xf32> -> vector<1x9xf32>
    %1898 = arith.addf %1897, %5 : vector<1x9xf32>
    %1899 = vector.extract_strided_slice %1898 {offsets = [0, 0], sizes = [1, 8], strides = [1, 1]} : vector<1x9xf32> to vector<1x8xf32>
    %1900 = vector.extract_strided_slice %1898 {offsets = [0, 8], sizes = [1, 1], strides = [1, 1]} : vector<1x9xf32> to vector<1x1xf32>
    %c6 = arith.constant 6 : index
    %c0_637 = arith.constant 0 : index
    %1901 = vector.load %arg10[%c6, %c0_637] : memref<8x1xf32, #tpu.memory_space<vmem>>, vector<1x1xf32>
    tpu.vector_store %arg10[%c6, %c0_637], %1900 {strides = array<i32>} : memref<8x1xf32, #tpu.memory_space<vmem>>, vector<1x1xf32>,
    %1902 = vector.extract_strided_slice %121 {offsets = [7, 0], sizes = [1, 512], strides = [1, 1]} : vector<8x512xf32> to vector<1x512xf32>
    %1903 = math.absf %1899 : vector<1x8xf32>
    %cst_638 = arith.constant 0.000000e+00 : f32
    %1904 = vector.broadcast %cst_638 : f32 to vector<1x8xf32>
    %1905 = arith.cmpf olt, %1899, %1904 : vector<1x8xf32>
    %cst_639 = arith.constant -1.000000e+00 : f32
    %cst_640 = arith.constant 1.000000e+00 : f32
    %1906 = vector.broadcast %cst_639 : f32 to vector<1x8xf32>
    %1907 = vector.broadcast %cst_640 : f32 to vector<1x8xf32>
    %1908 = arith.select %1905, %1906, %1907 : vector<1x8xi1>, vector<1x8xf32>
    %cst_641 = arith.constant 2.41421366 : f32
    %1909 = vector.broadcast %cst_641 : f32 to vector<1x8xf32>
    %1910 = arith.cmpf ogt, %1903, %1909 : vector<1x8xf32>
    %cst_642 = arith.constant 0.414213568 : f32
    %1911 = vector.broadcast %cst_642 : f32 to vector<1x8xf32>
    %1912 = arith.cmpf ogt, %1903, %1911 : vector<1x8xf32>
    %cst_643 = arith.constant dense<true> : vector<1x8xi1>
    %1913 = arith.xori %1910, %cst_643 : vector<1x8xi1>
    %1914 = arith.andi %1912, %1913 : vector<1x8xi1>
    %cst_644 = arith.constant 1.000000e+00 : f32
    %1915 = vector.broadcast %cst_644 : f32 to vector<1x8xf32>
    %1916 = arith.select %1910, %1903, %1915 : vector<1x8xi1>, vector<1x8xf32>
    %1917 = tpu.reciprocal %1916 {approx = true} : vector<1x8xf32> -> vector<1x8xf32>
    %1918 = arith.mulf %1916, %1917 : vector<1x8xf32>
    %cst_645 = arith.constant 2.000000e+00 : f32
    %1919 = vector.broadcast %cst_645 : f32 to vector<1x8xf32>
    %1920 = arith.subf %1919, %1918 : vector<1x8xf32>
    %1921 = arith.mulf %1917, %1920 : vector<1x8xf32>
    %cst_646 = arith.constant 0.000000e+00 : f32
    %1922 = vector.broadcast %cst_646 : f32 to vector<1x8xf32>
    %1923 = arith.subf %1922, %1921 : vector<1x8xf32>
    %cst_647 = arith.constant 1.000000e+00 : f32
    %1924 = vector.broadcast %cst_647 : f32 to vector<1x8xf32>
    %1925 = arith.subf %1903, %1924 : vector<1x8xf32>
    %cst_648 = arith.constant 1.000000e+00 : f32
    %1926 = vector.broadcast %cst_648 : f32 to vector<1x8xf32>
    %1927 = arith.addf %1903, %1926 : vector<1x8xf32>
    %1928 = tpu.reciprocal %1927 {approx = true} : vector<1x8xf32> -> vector<1x8xf32>
    %1929 = arith.mulf %1927, %1928 : vector<1x8xf32>
    %cst_649 = arith.constant 2.000000e+00 : f32
    %1930 = vector.broadcast %cst_649 : f32 to vector<1x8xf32>
    %1931 = arith.subf %1930, %1929 : vector<1x8xf32>
    %1932 = arith.mulf %1928, %1931 : vector<1x8xf32>
    %1933 = arith.mulf %1925, %1932 : vector<1x8xf32>
    %1934 = arith.select %1914, %1933, %1903 : vector<1x8xi1>, vector<1x8xf32>
    %1935 = arith.select %1910, %1923, %1934 : vector<1x8xi1>, vector<1x8xf32>
    %cst_650 = arith.constant 0.785398185 : f32
    %cst_651 = arith.constant 0.000000e+00 : f32
    %1936 = vector.broadcast %cst_650 : f32 to vector<1x8xf32>
    %1937 = vector.broadcast %cst_651 : f32 to vector<1x8xf32>
    %1938 = arith.select %1914, %1936, %1937 : vector<1x8xi1>, vector<1x8xf32>
    %cst_652 = arith.constant 1.57079637 : f32
    %1939 = vector.broadcast %cst_652 : f32 to vector<1x8xf32>
    %1940 = arith.select %1910, %1939, %1938 : vector<1x8xi1>, vector<1x8xf32>
    %1941 = arith.mulf %1935, %1935 : vector<1x8xf32>
    %cst_653 = arith.constant 0.0805374458 : f32
    %1942 = vector.broadcast %cst_653 : f32 to vector<1x8xf32>
    %1943 = arith.mulf %1942, %1941 : vector<1x8xf32>
    %cst_654 = arith.constant 0.138776854 : f32
    %1944 = vector.broadcast %cst_654 : f32 to vector<1x8xf32>
    %1945 = arith.subf %1943, %1944 : vector<1x8xf32>
    %1946 = arith.mulf %1945, %1941 : vector<1x8xf32>
    %cst_655 = arith.constant 0.199777111 : f32
    %1947 = vector.broadcast %cst_655 : f32 to vector<1x8xf32>
    %1948 = arith.addf %1946, %1947 : vector<1x8xf32>
    %1949 = arith.mulf %1948, %1941 : vector<1x8xf32>
    %cst_656 = arith.constant 0.333329499 : f32
    %1950 = vector.broadcast %cst_656 : f32 to vector<1x8xf32>
    %1951 = arith.subf %1949, %1950 : vector<1x8xf32>
    %1952 = arith.mulf %1951, %1941 : vector<1x8xf32>
    %1953 = arith.mulf %1952, %1935 : vector<1x8xf32>
    %1954 = arith.addf %1953, %1935 : vector<1x8xf32>
    %1955 = arith.addf %1940, %1954 : vector<1x8xf32>
    %1956 = arith.mulf %1908, %1955 : vector<1x8xf32>
    %cst_657 = arith.constant dense<0.000000e+00> : vector<1x512xf32>
    %1957 = tpu.matmul %1956, %2, %cst_657 {dimension_numbers = #tpu.dot_dimension_numbers<[1], [0], [0], [1], [0, 0, 1, 1], [], []>} : vector<1x8xf32>, vector<8x512xf32>, vector<1x512xf32> -> vector<1x512xf32>
    %1958 = arith.addf %1902, %1957 : vector<1x512xf32>
    %1959 = arith.mulf %1899, %1899 : vector<1x8xf32>
    %1960 = math.absf %1959 : vector<1x8xf32>
    %cst_658 = arith.constant 0.000000e+00 : f32
    %1961 = vector.broadcast %cst_658 : f32 to vector<1x8xf32>
    %1962 = arith.cmpf olt, %1959, %1961 : vector<1x8xf32>
    %cst_659 = arith.constant -1.000000e+00 : f32
    %cst_660 = arith.constant 1.000000e+00 : f32
    %1963 = vector.broadcast %cst_659 : f32 to vector<1x8xf32>
    %1964 = vector.broadcast %cst_660 : f32 to vector<1x8xf32>
    %1965 = arith.select %1962, %1963, %1964 : vector<1x8xi1>, vector<1x8xf32>
    %cst_661 = arith.constant 2.41421366 : f32
    %1966 = vector.broadcast %cst_661 : f32 to vector<1x8xf32>
    %1967 = arith.cmpf ogt, %1960, %1966 : vector<1x8xf32>
    %cst_662 = arith.constant 0.414213568 : f32
    %1968 = vector.broadcast %cst_662 : f32 to vector<1x8xf32>
    %1969 = arith.cmpf ogt, %1960, %1968 : vector<1x8xf32>
    %cst_663 = arith.constant dense<true> : vector<1x8xi1>
    %1970 = arith.xori %1967, %cst_663 : vector<1x8xi1>
    %1971 = arith.andi %1969, %1970 : vector<1x8xi1>
    %cst_664 = arith.constant 1.000000e+00 : f32
    %1972 = vector.broadcast %cst_664 : f32 to vector<1x8xf32>
    %1973 = arith.select %1967, %1960, %1972 : vector<1x8xi1>, vector<1x8xf32>
    %1974 = tpu.reciprocal %1973 {approx = true} : vector<1x8xf32> -> vector<1x8xf32>
    %1975 = arith.mulf %1973, %1974 : vector<1x8xf32>
    %cst_665 = arith.constant 2.000000e+00 : f32
    %1976 = vector.broadcast %cst_665 : f32 to vector<1x8xf32>
    %1977 = arith.subf %1976, %1975 : vector<1x8xf32>
    %1978 = arith.mulf %1974, %1977 : vector<1x8xf32>
    %cst_666 = arith.constant 0.000000e+00 : f32
    %1979 = vector.broadcast %cst_666 : f32 to vector<1x8xf32>
    %1980 = arith.subf %1979, %1978 : vector<1x8xf32>
    %cst_667 = arith.constant 1.000000e+00 : f32
    %1981 = vector.broadcast %cst_667 : f32 to vector<1x8xf32>
    %1982 = arith.subf %1960, %1981 : vector<1x8xf32>
    %cst_668 = arith.constant 1.000000e+00 : f32
    %1983 = vector.broadcast %cst_668 : f32 to vector<1x8xf32>
    %1984 = arith.addf %1960, %1983 : vector<1x8xf32>
    %1985 = tpu.reciprocal %1984 {approx = true} : vector<1x8xf32> -> vector<1x8xf32>
    %1986 = arith.mulf %1984, %1985 : vector<1x8xf32>
    %cst_669 = arith.constant 2.000000e+00 : f32
    %1987 = vector.broadcast %cst_669 : f32 to vector<1x8xf32>
    %1988 = arith.subf %1987, %1986 : vector<1x8xf32>
    %1989 = arith.mulf %1985, %1988 : vector<1x8xf32>
    %1990 = arith.mulf %1982, %1989 : vector<1x8xf32>
    %1991 = arith.select %1971, %1990, %1960 : vector<1x8xi1>, vector<1x8xf32>
    %1992 = arith.select %1967, %1980, %1991 : vector<1x8xi1>, vector<1x8xf32>
    %cst_670 = arith.constant 0.785398185 : f32
    %cst_671 = arith.constant 0.000000e+00 : f32
    %1993 = vector.broadcast %cst_670 : f32 to vector<1x8xf32>
    %1994 = vector.broadcast %cst_671 : f32 to vector<1x8xf32>
    %1995 = arith.select %1971, %1993, %1994 : vector<1x8xi1>, vector<1x8xf32>
    %cst_672 = arith.constant 1.57079637 : f32
    %1996 = vector.broadcast %cst_672 : f32 to vector<1x8xf32>
    %1997 = arith.select %1967, %1996, %1995 : vector<1x8xi1>, vector<1x8xf32>
    %1998 = arith.mulf %1992, %1992 : vector<1x8xf32>
    %cst_673 = arith.constant 0.0805374458 : f32
    %1999 = vector.broadcast %cst_673 : f32 to vector<1x8xf32>
    %2000 = arith.mulf %1999, %1998 : vector<1x8xf32>
    %cst_674 = arith.constant 0.138776854 : f32
    %2001 = vector.broadcast %cst_674 : f32 to vector<1x8xf32>
    %2002 = arith.subf %2000, %2001 : vector<1x8xf32>
    %2003 = arith.mulf %2002, %1998 : vector<1x8xf32>
    %cst_675 = arith.constant 0.199777111 : f32
    %2004 = vector.broadcast %cst_675 : f32 to vector<1x8xf32>
    %2005 = arith.addf %2003, %2004 : vector<1x8xf32>
    %2006 = arith.mulf %2005, %1998 : vector<1x8xf32>
    %cst_676 = arith.constant 0.333329499 : f32
    %2007 = vector.broadcast %cst_676 : f32 to vector<1x8xf32>
    %2008 = arith.subf %2006, %2007 : vector<1x8xf32>
    %2009 = arith.mulf %2008, %1998 : vector<1x8xf32>
    %2010 = arith.mulf %2009, %1992 : vector<1x8xf32>
    %2011 = arith.addf %2010, %1992 : vector<1x8xf32>
    %2012 = arith.addf %1997, %2011 : vector<1x8xf32>
    %2013 = arith.mulf %1965, %2012 : vector<1x8xf32>
    %cst_677 = arith.constant dense<0.000000e+00> : vector<1x512xf32>
    %2014 = tpu.matmul %2013, %3, %cst_677 {dimension_numbers = #tpu.dot_dimension_numbers<[1], [0], [0], [1], [0, 0, 1, 1], [], []>} : vector<1x8xf32>, vector<8x512xf32>, vector<1x512xf32> -> vector<1x512xf32>
    %2015 = arith.addf %1958, %2014 : vector<1x512xf32>
    %2016 = vector.extract_strided_slice %2015 {offsets = [0, 0], sizes = [1, 128], strides = [1, 1]} : vector<1x512xf32> to vector<1x128xf32>
    %2017 = arith.negf %2016 : vector<1x128xf32>
    %2018 = math.exp %2017 : vector<1x128xf32>
    %cst_678 = arith.constant 1.000000e+00 : f32
    %2019 = vector.broadcast %cst_678 : f32 to vector<1x128xf32>
    %2020 = arith.addf %2019, %2018 : vector<1x128xf32>
    %2021 = arith.divf %2019, %2020 : vector<1x128xf32>
    %2022 = vector.extract_strided_slice %2015 {offsets = [0, 128], sizes = [1, 128], strides = [1, 1]} : vector<1x512xf32> to vector<1x128xf32>
    %2023 = arith.negf %2022 : vector<1x128xf32>
    %2024 = math.exp %2023 : vector<1x128xf32>
    %cst_679 = arith.constant 1.000000e+00 : f32
    %2025 = vector.broadcast %cst_679 : f32 to vector<1x128xf32>
    %2026 = arith.addf %2025, %2024 : vector<1x128xf32>
    %2027 = arith.divf %2025, %2026 : vector<1x128xf32>
    %2028 = vector.extract_strided_slice %2015 {offsets = [0, 256], sizes = [1, 128], strides = [1, 1]} : vector<1x512xf32> to vector<1x128xf32>
    %2029 = math.tanh %2028 : vector<1x128xf32>
    %2030 = vector.extract_strided_slice %2015 {offsets = [0, 384], sizes = [1, 128], strides = [1, 1]} : vector<1x512xf32> to vector<1x128xf32>
    %2031 = arith.negf %2030 : vector<1x128xf32>
    %2032 = math.exp %2031 : vector<1x128xf32>
    %cst_680 = arith.constant 1.000000e+00 : f32
    %2033 = vector.broadcast %cst_680 : f32 to vector<1x128xf32>
    %2034 = arith.addf %2033, %2032 : vector<1x128xf32>
    %2035 = arith.divf %2033, %2034 : vector<1x128xf32>
    %2036 = arith.mulf %1784, %2021 : vector<1x128xf32>
    %2037 = arith.mulf %2027, %2029 : vector<1x128xf32>
    %2038 = arith.addf %2036, %2037 : vector<1x128xf32>
    %2039 = math.tanh %2038 : vector<1x128xf32>
    %2040 = arith.mulf %2035, %2039 : vector<1x128xf32>
    %2041 = math.absf %2040 : vector<1x128xf32>
    %cst_681 = arith.constant 0.000000e+00 : f32
    %2042 = vector.broadcast %cst_681 : f32 to vector<1x128xf32>
    %2043 = arith.cmpf olt, %2040, %2042 : vector<1x128xf32>
    %cst_682 = arith.constant -1.000000e+00 : f32
    %cst_683 = arith.constant 1.000000e+00 : f32
    %2044 = vector.broadcast %cst_682 : f32 to vector<1x128xf32>
    %2045 = vector.broadcast %cst_683 : f32 to vector<1x128xf32>
    %2046 = arith.select %2043, %2044, %2045 : vector<1x128xi1>, vector<1x128xf32>
    %cst_684 = arith.constant 2.41421366 : f32
    %2047 = vector.broadcast %cst_684 : f32 to vector<1x128xf32>
    %2048 = arith.cmpf ogt, %2041, %2047 : vector<1x128xf32>
    %cst_685 = arith.constant 0.414213568 : f32
    %2049 = vector.broadcast %cst_685 : f32 to vector<1x128xf32>
    %2050 = arith.cmpf ogt, %2041, %2049 : vector<1x128xf32>
    %cst_686 = arith.constant dense<true> : vector<1x128xi1>
    %2051 = arith.xori %2048, %cst_686 : vector<1x128xi1>
    %2052 = arith.andi %2050, %2051 : vector<1x128xi1>
    %cst_687 = arith.constant 1.000000e+00 : f32
    %2053 = vector.broadcast %cst_687 : f32 to vector<1x128xf32>
    %2054 = arith.select %2048, %2041, %2053 : vector<1x128xi1>, vector<1x128xf32>
    %2055 = tpu.reciprocal %2054 {approx = true} : vector<1x128xf32> -> vector<1x128xf32>
    %2056 = arith.mulf %2054, %2055 : vector<1x128xf32>
    %cst_688 = arith.constant 2.000000e+00 : f32
    %2057 = vector.broadcast %cst_688 : f32 to vector<1x128xf32>
    %2058 = arith.subf %2057, %2056 : vector<1x128xf32>
    %2059 = arith.mulf %2055, %2058 : vector<1x128xf32>
    %cst_689 = arith.constant 0.000000e+00 : f32
    %2060 = vector.broadcast %cst_689 : f32 to vector<1x128xf32>
    %2061 = arith.subf %2060, %2059 : vector<1x128xf32>
    %cst_690 = arith.constant 1.000000e+00 : f32
    %2062 = vector.broadcast %cst_690 : f32 to vector<1x128xf32>
    %2063 = arith.subf %2041, %2062 : vector<1x128xf32>
    %cst_691 = arith.constant 1.000000e+00 : f32
    %2064 = vector.broadcast %cst_691 : f32 to vector<1x128xf32>
    %2065 = arith.addf %2041, %2064 : vector<1x128xf32>
    %2066 = tpu.reciprocal %2065 {approx = true} : vector<1x128xf32> -> vector<1x128xf32>
    %2067 = arith.mulf %2065, %2066 : vector<1x128xf32>
    %cst_692 = arith.constant 2.000000e+00 : f32
    %2068 = vector.broadcast %cst_692 : f32 to vector<1x128xf32>
    %2069 = arith.subf %2068, %2067 : vector<1x128xf32>
    %2070 = arith.mulf %2066, %2069 : vector<1x128xf32>
    %2071 = arith.mulf %2063, %2070 : vector<1x128xf32>
    %2072 = arith.select %2052, %2071, %2041 : vector<1x128xi1>, vector<1x128xf32>
    %2073 = arith.select %2048, %2061, %2072 : vector<1x128xi1>, vector<1x128xf32>
    %cst_693 = arith.constant 0.785398185 : f32
    %cst_694 = arith.constant 0.000000e+00 : f32
    %2074 = vector.broadcast %cst_693 : f32 to vector<1x128xf32>
    %2075 = vector.broadcast %cst_694 : f32 to vector<1x128xf32>
    %2076 = arith.select %2052, %2074, %2075 : vector<1x128xi1>, vector<1x128xf32>
    %cst_695 = arith.constant 1.57079637 : f32
    %2077 = vector.broadcast %cst_695 : f32 to vector<1x128xf32>
    %2078 = arith.select %2048, %2077, %2076 : vector<1x128xi1>, vector<1x128xf32>
    %2079 = arith.mulf %2073, %2073 : vector<1x128xf32>
    %cst_696 = arith.constant 0.0805374458 : f32
    %2080 = vector.broadcast %cst_696 : f32 to vector<1x128xf32>
    %2081 = arith.mulf %2080, %2079 : vector<1x128xf32>
    %cst_697 = arith.constant 0.138776854 : f32
    %2082 = vector.broadcast %cst_697 : f32 to vector<1x128xf32>
    %2083 = arith.subf %2081, %2082 : vector<1x128xf32>
    %2084 = arith.mulf %2083, %2079 : vector<1x128xf32>
    %cst_698 = arith.constant 0.199777111 : f32
    %2085 = vector.broadcast %cst_698 : f32 to vector<1x128xf32>
    %2086 = arith.addf %2084, %2085 : vector<1x128xf32>
    %2087 = arith.mulf %2086, %2079 : vector<1x128xf32>
    %cst_699 = arith.constant 0.333329499 : f32
    %2088 = vector.broadcast %cst_699 : f32 to vector<1x128xf32>
    %2089 = arith.subf %2087, %2088 : vector<1x128xf32>
    %2090 = arith.mulf %2089, %2079 : vector<1x128xf32>
    %2091 = arith.mulf %2090, %2073 : vector<1x128xf32>
    %2092 = arith.addf %2091, %2073 : vector<1x128xf32>
    %2093 = arith.addf %2078, %2092 : vector<1x128xf32>
    %2094 = arith.mulf %2046, %2093 : vector<1x128xf32>
    %2095 = arith.mulf %2040, %2040 : vector<1x128xf32>
    %2096 = math.absf %2095 : vector<1x128xf32>
    %cst_700 = arith.constant 0.000000e+00 : f32
    %2097 = vector.broadcast %cst_700 : f32 to vector<1x128xf32>
    %2098 = arith.cmpf olt, %2095, %2097 : vector<1x128xf32>
    %cst_701 = arith.constant -1.000000e+00 : f32
    %cst_702 = arith.constant 1.000000e+00 : f32
    %2099 = vector.broadcast %cst_701 : f32 to vector<1x128xf32>
    %2100 = vector.broadcast %cst_702 : f32 to vector<1x128xf32>
    %2101 = arith.select %2098, %2099, %2100 : vector<1x128xi1>, vector<1x128xf32>
    %cst_703 = arith.constant 2.41421366 : f32
    %2102 = vector.broadcast %cst_703 : f32 to vector<1x128xf32>
    %2103 = arith.cmpf ogt, %2096, %2102 : vector<1x128xf32>
    %cst_704 = arith.constant 0.414213568 : f32
    %2104 = vector.broadcast %cst_704 : f32 to vector<1x128xf32>
    %2105 = arith.cmpf ogt, %2096, %2104 : vector<1x128xf32>
    %cst_705 = arith.constant dense<true> : vector<1x128xi1>
    %2106 = arith.xori %2103, %cst_705 : vector<1x128xi1>
    %2107 = arith.andi %2105, %2106 : vector<1x128xi1>
    %cst_706 = arith.constant 1.000000e+00 : f32
    %2108 = vector.broadcast %cst_706 : f32 to vector<1x128xf32>
    %2109 = arith.select %2103, %2096, %2108 : vector<1x128xi1>, vector<1x128xf32>
    %2110 = tpu.reciprocal %2109 {approx = true} : vector<1x128xf32> -> vector<1x128xf32>
    %2111 = arith.mulf %2109, %2110 : vector<1x128xf32>
    %cst_707 = arith.constant 2.000000e+00 : f32
    %2112 = vector.broadcast %cst_707 : f32 to vector<1x128xf32>
    %2113 = arith.subf %2112, %2111 : vector<1x128xf32>
    %2114 = arith.mulf %2110, %2113 : vector<1x128xf32>
    %cst_708 = arith.constant 0.000000e+00 : f32
    %2115 = vector.broadcast %cst_708 : f32 to vector<1x128xf32>
    %2116 = arith.subf %2115, %2114 : vector<1x128xf32>
    %cst_709 = arith.constant 1.000000e+00 : f32
    %2117 = vector.broadcast %cst_709 : f32 to vector<1x128xf32>
    %2118 = arith.subf %2096, %2117 : vector<1x128xf32>
    %cst_710 = arith.constant 1.000000e+00 : f32
    %2119 = vector.broadcast %cst_710 : f32 to vector<1x128xf32>
    %2120 = arith.addf %2096, %2119 : vector<1x128xf32>
    %2121 = tpu.reciprocal %2120 {approx = true} : vector<1x128xf32> -> vector<1x128xf32>
    %2122 = arith.mulf %2120, %2121 : vector<1x128xf32>
    %cst_711 = arith.constant 2.000000e+00 : f32
    %2123 = vector.broadcast %cst_711 : f32 to vector<1x128xf32>
    %2124 = arith.subf %2123, %2122 : vector<1x128xf32>
    %2125 = arith.mulf %2121, %2124 : vector<1x128xf32>
    %2126 = arith.mulf %2118, %2125 : vector<1x128xf32>
    %2127 = arith.select %2107, %2126, %2096 : vector<1x128xi1>, vector<1x128xf32>
    %2128 = arith.select %2103, %2116, %2127 : vector<1x128xi1>, vector<1x128xf32>
    %cst_712 = arith.constant 0.785398185 : f32
    %cst_713 = arith.constant 0.000000e+00 : f32
    %2129 = vector.broadcast %cst_712 : f32 to vector<1x128xf32>
    %2130 = vector.broadcast %cst_713 : f32 to vector<1x128xf32>
    %2131 = arith.select %2107, %2129, %2130 : vector<1x128xi1>, vector<1x128xf32>
    %cst_714 = arith.constant 1.57079637 : f32
    %2132 = vector.broadcast %cst_714 : f32 to vector<1x128xf32>
    %2133 = arith.select %2103, %2132, %2131 : vector<1x128xi1>, vector<1x128xf32>
    %2134 = arith.mulf %2128, %2128 : vector<1x128xf32>
    %cst_715 = arith.constant 0.0805374458 : f32
    %2135 = vector.broadcast %cst_715 : f32 to vector<1x128xf32>
    %2136 = arith.mulf %2135, %2134 : vector<1x128xf32>
    %cst_716 = arith.constant 0.138776854 : f32
    %2137 = vector.broadcast %cst_716 : f32 to vector<1x128xf32>
    %2138 = arith.subf %2136, %2137 : vector<1x128xf32>
    %2139 = arith.mulf %2138, %2134 : vector<1x128xf32>
    %cst_717 = arith.constant 0.199777111 : f32
    %2140 = vector.broadcast %cst_717 : f32 to vector<1x128xf32>
    %2141 = arith.addf %2139, %2140 : vector<1x128xf32>
    %2142 = arith.mulf %2141, %2134 : vector<1x128xf32>
    %cst_718 = arith.constant 0.333329499 : f32
    %2143 = vector.broadcast %cst_718 : f32 to vector<1x128xf32>
    %2144 = arith.subf %2142, %2143 : vector<1x128xf32>
    %2145 = arith.mulf %2144, %2134 : vector<1x128xf32>
    %2146 = arith.mulf %2145, %2128 : vector<1x128xf32>
    %2147 = arith.addf %2146, %2128 : vector<1x128xf32>
    %2148 = arith.addf %2133, %2147 : vector<1x128xf32>
    %2149 = arith.mulf %2101, %2148 : vector<1x128xf32>
    %2150 = tpu.concatenate %2094, %2149 in 1 : vector<1x128xf32>, vector<1x128xf32> -> vector<1x256xf32>
    %cst_719 = arith.constant dense<0.000000e+00> : vector<1x9xf32>
    %2151 = tpu.matmul %2150, %4, %cst_719 {dimension_numbers = #tpu.dot_dimension_numbers<[1], [0], [0], [1], [0, 0, 1, 1], [], []>} : vector<1x256xf32>, vector<256x9xf32>, vector<1x9xf32> -> vector<1x9xf32>
    %2152 = arith.addf %2151, %5 : vector<1x9xf32>
    %2153 = vector.extract_strided_slice %2152 {offsets = [0, 0], sizes = [1, 8], strides = [1, 1]} : vector<1x9xf32> to vector<1x8xf32>
    %2154 = vector.extract_strided_slice %2152 {offsets = [0, 8], sizes = [1, 1], strides = [1, 1]} : vector<1x9xf32> to vector<1x1xf32>
    %c7 = arith.constant 7 : index
    %c0_720 = arith.constant 0 : index
    %2155 = vector.load %arg10[%c7, %c0_720] : memref<8x1xf32, #tpu.memory_space<vmem>>, vector<1x1xf32>
    tpu.vector_store %arg10[%c7, %c0_720], %2154 {strides = array<i32>} : memref<8x1xf32, #tpu.memory_space<vmem>>, vector<1x1xf32>,
    %c0_721 = arith.constant 0 : index
    %c0_722 = arith.constant 0 : index
    %2156 = vector.load %arg8[%c0_721, %c0_722] : memref<1x8xf32, #tpu.memory_space<vmem>>, vector<1x8xf32>
    tpu.vector_store %arg8[%c0_721, %c0_722], %2153 {strides = array<i32>} : memref<1x8xf32, #tpu.memory_space<vmem>>, vector<1x8xf32>,
    %c0_723 = arith.constant 0 : index
    %c0_724 = arith.constant 0 : index
    %2157 = vector.load %arg9[%c0_723, %c0_724] : memref<1x128xf32, #tpu.memory_space<vmem>>, vector<1x128xf32>
    tpu.vector_store %arg9[%c0_723, %c0_724], %2038 {strides = array<i32>} : memref<1x128xf32, #tpu.memory_space<vmem>>, vector<1x128xf32>,
    return
  }
  func.func @transform_0(%arg0: i32) -> (i32, i32) {
    %c0_i32 = arith.constant 0 : i32
    %c0_i32_0 = arith.constant 0 : i32
    %c0_i32_1 = arith.constant 0 : i32
    return %c0_i32, %c0_i32_0 : i32, i32
  }
  func.func @transform_1(%arg0: i32) -> (i32, i32) {
    %c0_i32 = arith.constant 0 : i32
    %c0_i32_0 = arith.constant 0 : i32
    %c0_i32_1 = arith.constant 0 : i32
    return %c0_i32, %c0_i32_0 : i32, i32
  }
  func.func @transform_2(%arg0: i32) -> (i32, i32) {
    %c0_i32 = arith.constant 0 : i32
    %c0_i32_0 = arith.constant 0 : i32
    %c0_i32_1 = arith.constant 0 : i32
    return %c0_i32, %c0_i32_0 : i32, i32
  }
  func.func @transform_3(%arg0: i32) -> (i32, i32) {
    %c0_i32 = arith.constant 0 : i32
    %c0_i32_0 = arith.constant 0 : i32
    %c0_i32_1 = arith.constant 0 : i32
    return %c0_i32, %c0_i32_0 : i32, i32
  }
  func.func @transform_4(%arg0: i32) -> (i32, i32) {
    %c0_i32 = arith.constant 0 : i32
    %c0_i32_0 = arith.constant 0 : i32
    %c0_i32_1 = arith.constant 0 : i32
    return %c0_i32, %c0_i32_0 : i32, i32
  }
  func.func @transform_5(%arg0: i32) -> (i32, i32) {
    %c0_i32 = arith.constant 0 : i32
    %c0_i32_0 = arith.constant 0 : i32
    %c0_i32_1 = arith.constant 0 : i32
    return %c0_i32, %c0_i32_0 : i32, i32
  }
  func.func @transform_6(%arg0: i32) -> (i32, i32) {
    %c0_i32 = arith.constant 0 : i32
    %c0_i32_0 = arith.constant 0 : i32
    %c0_i32_1 = arith.constant 0 : i32
    return %c0_i32, %c0_i32_0 : i32, i32
  }
  func.func @transform_7(%arg0: i32) -> (i32, i32) {
    %c0_i32 = arith.constant 0 : i32
    %c0_i32_0 = arith.constant 0 : i32
    %c0_i32_1 = arith.constant 0 : i32
    return %c0_i32, %c0_i32_0 : i32, i32
  }
  func.func @transform_8(%arg0: i32) -> (i32, i32) {
    %c0_i32 = arith.constant 0 : i32
    %c0_i32_0 = arith.constant 0 : i32
    %c0_i32_1 = arith.constant 0 : i32
    return %c0_i32, %c0_i32_0 : i32, i32
  }
  func.func @transform_9(%arg0: i32) -> (i32, i32) {
    %c0_i32 = arith.constant 0 : i32
    %c0_i32_0 = arith.constant 0 : i32
    %c0_i32_1 = arith.constant 0 : i32
    return %c0_i32, %c0_i32_0 : i32, i32
  }
}

</mosaic_0001>

<llo_original>
// kernel: tpu_custom_call.1
$region0: #{tpu_custom_call.1}
  #allocation0 [shape = 'u32[]', space=smem, size = 0x4, offset = 0x4, fixed_abs, tag = 'smem constant byte address 0x4 - core index']
  #allocation1 [shape = 'u32[144,128]{1,0:T(1,128)}', space=vmem, size = 0x12000, scoped, tag = 'internal scratch']
  %s0 = inlined_call_operand.vmem [shape: f32[8,4], index: 0, kind: input, shape index: {}]
  %s1 = inlined_call_operand.vmem [shape: f32[1,8], index: 1, kind: input, shape index: {}]
  %s2 = inlined_call_operand.vmem [shape: f32[1,128], index: 2, kind: input, shape index: {}]
  %s3 = inlined_call_operand.vmem [shape: f32[24,512], index: 3, kind: input, shape index: {}]
  %s4 = inlined_call_operand.vmem [shape: f32[1,512], index: 4, kind: input, shape index: {}]
  %s5 = inlined_call_operand.vmem [shape: f32[256,9], index: 5, kind: input, shape index: {}]
  %s6 = inlined_call_operand.vmem [shape: f32[1,9], index: 6, kind: input, shape index: {}]
  %s7 = inlined_call_operand.hbm [shape: f32[1,8], index: 7, kind: output, shape index: {0}]
  %s8 = inlined_call_operand.hbm [shape: f32[1,128], index: 8, kind: output, shape index: {1}]
  %s9 = inlined_call_operand.vmem [shape: f32[8,1], index: 9, kind: output, shape index: {2}]
  %10 = xla_tuple %s7, %s8, %s9
  %s11 = sld [smem:[#allocation0]]
  $region54: #{tpu_custom_call.1} parent=0
    _
  %s13 = ssub.s32 1, %s11
  %s14 = scalar_select 0, %s13, %s11
  $region1: #{tpu_custom_call.1} parent=0
    #allocation2 [shape = 'u8[512]{0}', space=vmem, size = 0x400, scoped, tag = 'output window, operand 0, single buffered']
    #allocation3 [shape = 's32[1]{0}', space=sflag, size = 0x4, scoped, tag = 'scoped memory for tpu_custom_call.1']
    #allocation4 [shape = 'u8[512]{0}', space=vmem, size = 0x400, scoped, tag = 'output window, operand 1, single buffered']
    #allocation5 [shape = 's32[1]{0}', space=sflag, size = 0x4, scoped, tag = 'scoped memory for tpu_custom_call.1']
    %15 = vsyncpa [#allocation3], 0
    %16 = vsyncpa [#allocation5], 0
    // Predicated region
    $region2: #{tpu_custom_call.1} parent=1 // pred_check
      _
    $region3: #{tpu_custom_call.1} parent=1 // pred_check_branch
      %18 = sbr.rel (0) target = $region5
    $region4: #{tpu_custom_call.1} parent=1 // pred_region
      _
    $region5: #{tpu_custom_call.1} parent=1 // pred_fallthru
      _
    // Predicated region
    $region6: #{tpu_custom_call.1} parent=1 // pred_check
      _
    $region7: #{tpu_custom_call.1} parent=1 // pred_check_branch
      %20 = sbr.rel (0) target = $region9
    $region8: #{tpu_custom_call.1} parent=1 // pred_region
      _
    $region9: #{tpu_custom_call.1} parent=1 // pred_fallthru
      _
    // Predicated region
    $region10: #{tpu_custom_call.1} parent=1 // pred_check
      _
    $region11: #{tpu_custom_call.1} parent=1 // pred_check_branch
      %22 = sbr.rel (0) target = $region13
    $region12: #{tpu_custom_call.1} parent=1 // pred_region
      _
    $region13: #{tpu_custom_call.1} parent=1 // pred_fallthru
      _
    // Predicated region
    $region14: #{tpu_custom_call.1} parent=1 // pred_check
      _
    $region15: #{tpu_custom_call.1} parent=1 // pred_check_branch
      %24 = sbr.rel (0) target = $region17
    $region16: #{tpu_custom_call.1} parent=1 // pred_region
      _
    $region17: #{tpu_custom_call.1} parent=1 // pred_fallthru
      _
    // Predicated region
    $region18: #{tpu_custom_call.1} parent=1 // pred_check
      _
    $region19: #{tpu_custom_call.1} parent=1 // pred_check_branch
      %26 = sbr.rel (0) target = $region21
    $region20: #{tpu_custom_call.1} parent=1 // pred_region
      _
    $region21: #{tpu_custom_call.1} parent=1 // pred_fallthru
      _
    // Predicated region
    $region22: #{tpu_custom_call.1} parent=1 // pred_check
      _
    $region23: #{tpu_custom_call.1} parent=1 // pred_check_branch
      %28 = sbr.rel (0) target = $region25
    $region24: #{tpu_custom_call.1} parent=1 // pred_region
      _
    $region25: #{tpu_custom_call.1} parent=1 // pred_fallthru
      _
    // Predicated region
    $region26: #{tpu_custom_call.1} parent=1 // pred_check
      _
    $region27: #{tpu_custom_call.1} parent=1 // pred_check_branch
      %30 = sbr.rel (0) target = $region29
    $region28: #{tpu_custom_call.1} parent=1 // pred_region
      _
    $region29: #{tpu_custom_call.1} parent=1 // pred_fallthru
      _
    %v31 = vld [vmem:[%s3] sm:$0xf]
    %v32 = vld [vmem:[%s3 + $0x8] sm:$0xf]
    %v33 = vld [vmem:[%s3 + $0x10] sm:$0xf]
    %v34 = vld [vmem:[%s3 + $0x18] sm:$0xf]
    %v35 = vld [vmem:[%s3] sm:$0xf0]
    %v36 = vld [vmem:[%s3 + $0x8] sm:$0xf0]
    %v37 = vld [vmem:[%s3 + $0x10] sm:$0xf0]
    %v38 = vld [vmem:[%s3 + $0x18] sm:$0xf0]
    %v39 = vld [vmem:[%s3 + $0x20] sm:$0xff]
    %v40 = vld [vmem:[%s3 + $0x28] sm:$0xff]
    %v41 = vld [vmem:[%s3 + $0x30] sm:$0xff]
    %v42 = vld [vmem:[%s3 + $0x38] sm:$0xff]
    %v43 = vld [vmem:[%s3 + $0x40] sm:$0xff]
    %v44 = vld [vmem:[%s3 + $0x48] sm:$0xff]
    %v45 = vld [vmem:[%s3 + $0x50] sm:$0xff]
    %v46 = vld [vmem:[%s3 + $0x58] sm:$0xff]
    %v47 = vld [vmem:[%s5] sm:$0xff]
    %v48 = vld [vmem:[%s5 + $0x8] sm:$0xff]
    %v49 = vld [vmem:[%s5 + $0x10] sm:$0xff]
    %v50 = vld [vmem:[%s5 + $0x18] sm:$0xff]
    %v51 = vld [vmem:[%s5 + $0x20] sm:$0xff]
    %v52 = vld [vmem:[%s5 + $0x28] sm:$0xff]
    %v53 = vld [vmem:[%s5 + $0x30] sm:$0xff]
    %v54 = vld [vmem:[%s5 + $0x38] sm:$0xff]
    %v55 = vld [vmem:[%s5 + $0x40] sm:$0xff]
    %v56 = vld [vmem:[%s5 + $0x48] sm:$0xff]
    %v57 = vld [vmem:[%s5 + $0x50] sm:$0xff]
    %v58 = vld [vmem:[%s5 + $0x58] sm:$0xff]
    %v59 = vld [vmem:[%s5 + $0x60] sm:$0xff]
    %v60 = vld [vmem:[%s5 + $0x68] sm:$0xff]
    %v61 = vld [vmem:[%s5 + $0x70] sm:$0xff]
    %v62 = vld [vmem:[%s5 + $0x78] sm:$0xff]
    %v63 = vld [vmem:[%s5 + $0x80] sm:$0xff]
    %v64 = vld [vmem:[%s5 + $0x88] sm:$0xff]
    %v65 = vld [vmem:[%s5 + $0x90] sm:$0xff]
    %v66 = vld [vmem:[%s5 + $0x98] sm:$0xff]
    %v67 = vld [vmem:[%s5 + $0xa0] sm:$0xff]
    %v68 = vld [vmem:[%s5 + $0xa8] sm:$0xff]
    %v69 = vld [vmem:[%s5 + $0xb0] sm:$0xff]
    %v70 = vld [vmem:[%s5 + $0xb8] sm:$0xff]
    %v71 = vld [vmem:[%s5 + $0xc0] sm:$0xff]
    %v72 = vld [vmem:[%s5 + $0xc8] sm:$0xff]
    %v73 = vld [vmem:[%s5 + $0xd0] sm:$0xff]
    %v74 = vld [vmem:[%s5 + $0xd8] sm:$0xff]
    %v75 = vld [vmem:[%s5 + $0xe0] sm:$0xff]
    %v76 = vld [vmem:[%s5 + $0xe8] sm:$0xff]
    %v77 = vld [vmem:[%s5 + $0xf0] sm:$0xff]
    %v78 = vld [vmem:[%s5 + $0xf8] sm:$0xff]
    %v79 = vld [vmem:[%s6] sm:$0x1]
    %v80 = vld [vmem:[%s0] sm:$0xff]
    %v81 = vand.u32 2147483647, %v80
    %vm82 = vcmp.lt.f32.partialorder %v80, 0.0
    %v83 = vsel %vm82, -1.0, 1.0
    %vm84 = vcmp.gt.f32.partialorder %v81, 2.4142137
    %vm85 = vcmp.gt.f32.partialorder %v81, 0.41421357
    %vm86 = vmxor %vm84, 1
    %vm87 = vmand %vm85, %vm86
    %v88 = vsel %vm84, %v81, 1.0
    %v89 = vrcp.pop %v88
    %v90 = vmul.f32 %v88, %v89
    %v91 = vsub.f32 2.0, %v90
    %v92 = vmul.f32 %v89, %v91
    %v93 = vsub.f32 0.0, %v92
    %v94 = vsub.f32 %v81, 1.0
    %v95 = vadd.f32 %v81, 1.0
    %v96 = vrcp.pop %v95
    %v97 = vmul.f32 %v95, %v96
    %v98 = vsub.f32 2.0, %v97
    %v99 = vmul.f32 %v96, %v98
    %v100 = vmul.f32 %v94, %v99
    %v101 = vsel %vm87, %v100, %v81
    %v102 = vsel %vm84, %v93, %v101
    %v103 = vsel %vm87, 0.7853982, 0.0
    %v104 = vsel %vm84, 1.5707964, %v103
    %v105 = vmul.f32 %v102, %v102
    %v106 = vmul.f32 %v105, 0.080537446
    %v107 = vsub.f32 %v106, 0.13877685
    %v108 = vmul.f32 %v107, %v105
    %v109 = vadd.f32 %v108, 0.19977711
    %v110 = vmul.f32 %v109, %v105
    %v111 = vsub.f32 %v110, 0.3333295
    %v112 = vmul.f32 %v111, %v105
    %v113 = vmul.f32 %v112, %v102
    %v114 = vadd.f32 %v113, %v102
    %v115 = vadd.f32 %v104, %v114
    %v116 = vmul.f32 %v83, %v115
    %v117 = vmul.f32 %v80, %v80
    %v118 = vand.u32 2147483647, %v117
    %vm119 = vcmp.lt.f32.partialorder %v117, 0.0
    %v120 = vsel %vm119, -1.0, 1.0
    %vm121 = vcmp.gt.f32.partialorder %v118, 2.4142137
    %vm122 = vcmp.gt.f32.partialorder %v118, 0.41421357
    %vm123 = vmxor %vm121, 1
    %vm124 = vmand %vm122, %vm123
    %v125 = vsel %vm121, %v118, 1.0
    %v126 = vrcp.pop %v125
    %v127 = vmul.f32 %v125, %v126
    %v128 = vsub.f32 2.0, %v127
    %v129 = vmul.f32 %v126, %v128
    %v130 = vsub.f32 0.0, %v129
    %v131 = vsub.f32 %v118, 1.0
    %v132 = vadd.f32 %v118, 1.0
    %v133 = vrcp.pop %v132
    %v134 = vmul.f32 %v132, %v133
    %v135 = vsub.f32 2.0, %v134
    %v136 = vmul.f32 %v133, %v135
    %v137 = vmul.f32 %v131, %v136
    %v138 = vsel %vm124, %v137, %v118
    %v139 = vsel %vm121, %v130, %v138
    %v140 = vsel %vm124, 0.7853982, 0.0
    %v141 = vsel %vm121, 1.5707964, %v140
    %v142 = vmul.f32 %v139, %v139
    %v143 = vmul.f32 %v142, 0.080537446
    %v144 = vsub.f32 %v143, 0.13877685
    %v145 = vmul.f32 %v144, %v142
    %v146 = vadd.f32 %v145, 0.19977711
    %v147 = vmul.f32 %v146, %v142
    %v148 = vsub.f32 %v147, 0.3333295
    %v149 = vmul.f32 %v148, %v142
    %v150 = vmul.f32 %v149, %v139
    %v151 = vadd.f32 %v150, %v139
    %v152 = vadd.f32 %v141, %v151
    %v153 = vmul.f32 %v120, %v152
    %v158 = vrot.slane %v35, 4
    %v159 = vrot.slane %v36, 4
    %v160 = vrot.slane %v37, 4
    %v161 = vrot.slane %v38, 4
    %vm162 = vcmask 31744
    %v164 = vsel %vm162, %v153, 0
    %vm166 = vcmask 1043456
    %v167 = vsel %vm166, %v158, 0
    %v169 = vsel %vm166, %v159, 0
    %v171 = vsel %vm166, %v160, 0
    %v173 = vsel %vm166, %v161, 0
    %175 = vmatprep.subr.mxu0 %v169
    %176 = vmatpush1.msra.mxu0 %v167
    %177 = vmatprep.subr.mxu0 0.0
    %178 = vmatpush1.msra.mxu0 0.0
    %179 = vmatprep.subr.mxu0 0.0
    %180 = vmatpush1.msra.mxu0 0.0
    %181 = vmatprep.subr.mxu0 0.0
    %182 = vmatpush1.msra.mxu0 0.0
    %183 = vmatprep.subr.mxu0 0.0
    %184 = vmatpush1.msra.mxu0 0.0
    %185 = vmatprep.subr.mxu0 0.0
    %186 = vmatpush1.msra.mxu0 0.0
    %187 = vmatprep.subr.mxu0 0.0
    %188 = vmatpush1.msra.mxu0 0.0
    %189 = vmatprep.subr.mxu0 0.0
    %190 = vmatpush1.msra.mxu0 0.0
    %191 = vmatprep.subr.mxu0 0.0
    %192 = vmatpush1.msra.mxu0 0.0
    %193 = vmatprep.subr.mxu0 0.0
    %194 = vmatpush1.msra.mxu0 0.0
    %195 = vmatprep.subr.mxu0 0.0
    %196 = vmatpush1.msra.mxu0 0.0
    %197 = vmatprep.subr.mxu0 0.0
    %198 = vmatpush1.msra.mxu0 0.0
    %199 = vmatprep.subr.mxu0 0.0
    %200 = vmatpush1.msra.mxu0 0.0
    %201 = vmatprep.subr.mxu0 0.0
    %202 = vmatpush1.msra.mxu0 0.0
    %203 = vmatprep.subr.mxu0 0.0
    %204 = vmatpush1.msra.mxu0 0.0
    %205 = vmatprep.subr.mxu0 0.0
    %206 = vmatpush1.msra.mxu0 0.0
    %207 = vmatprep.subr.mxu0 0.0
    %208 = vmatpush1.msra.mxu0 0.0
    %209 = vmatprep.subr.mxu0 0.0
    %210 = vmatpush1.msra.mxu0 0.0
    %211 = vmatprep.subr.mxu0 0.0
    %212 = vmatpush1.msra.mxu0 0.0
    %213 = vmatprep.subr.mxu0 0.0
    %214 = vmatpush1.msra.mxu0 0.0
    %215 = vmatprep.subr.mxu0 0.0
    %216 = vmatpush1.msra.mxu0 0.0
    %217 = vmatprep.subr.mxu0 0.0
    %218 = vmatpush1.msra.mxu0 0.0
    %219 = vmatprep.subr.mxu0 0.0
    %220 = vmatpush1.msra.mxu0 0.0
    %221 = vmatprep.subr.mxu0 0.0
    %222 = vmatpush1.msra.mxu0 0.0
    %223 = vmatprep.subr.mxu0 0.0
    %224 = vmatpush1.msra.mxu0 0.0
    %225 = vmatprep.subr.mxu0 0.0
    %226 = vmatpush1.msra.mxu0 0.0
    %227 = vmatprep.subr.mxu0 0.0
    %228 = vmatpush1.msra.mxu0 0.0
    %229 = vmatprep.subr.mxu0 0.0
    %230 = vmatpush1.msra.mxu0 0.0
    %231 = vmatprep.subr.mxu0 0.0
    %232 = vmatpush1.msra.mxu0 0.0
    %233 = vmatprep.subr.mxu0 0.0
    %234 = vmatpush1.msra.mxu0 0.0
    %235 = vmatprep.subr.mxu0 0.0
    %236 = vmatpush1.msra.mxu0 0.0
    %237 = vmatprep.subr.mxu0 0.0
    %238 = vmatpush1.msra.mxu0 0.0
    %239 = vmatprep.mubr.f32.mxu0 0.0
    %240 = vmatmul.mubr.f32.gmra.mrb[0].mxu0 %v164
    %v241 = vpop.f32.mrb[0].mxu0
    %v242 = vadd.f32 0.0, %v241
    %v243 = vpop.f32.mrb[0].mxu0
    %v244 = vadd.f32 0.0, %v243
    %245 = vdwg.mxu0
    %246 = vmatprep.subr.mxu0 %v173
    %247 = vmatpush1.msra.mxu0 %v171
    %248 = vmatprep.subr.mxu0 0.0
    %249 = vmatpush1.msra.mxu0 0.0
    %250 = vmatprep.subr.mxu0 0.0
    %251 = vmatpush1.msra.mxu0 0.0
    %252 = vmatprep.subr.mxu0 0.0
    %253 = vmatpush1.msra.mxu0 0.0
    %254 = vmatprep.subr.mxu0 0.0
    %255 = vmatpush1.msra.mxu0 0.0
    %256 = vmatprep.subr.mxu0 0.0
    %257 = vmatpush1.msra.mxu0 0.0
    %258 = vmatprep.subr.mxu0 0.0
    %259 = vmatpush1.msra.mxu0 0.0
    %260 = vmatprep.subr.mxu0 0.0
    %261 = vmatpush1.msra.mxu0 0.0
    %262 = vmatprep.subr.mxu0 0.0
    %263 = vmatpush1.msra.mxu0 0.0
    %264 = vmatprep.subr.mxu0 0.0
    %265 = vmatpush1.msra.mxu0 0.0
    %266 = vmatprep.subr.mxu0 0.0
    %267 = vmatpush1.msra.mxu0 0.0
    %268 = vmatprep.subr.mxu0 0.0
    %269 = vmatpush1.msra.mxu0 0.0
    %270 = vmatprep.subr.mxu0 0.0
    %271 = vmatpush1.msra.mxu0 0.0
    %272 = vmatprep.subr.mxu0 0.0
    %273 = vmatpush1.msra.mxu0 0.0
    %274 = vmatprep.subr.mxu0 0.0
    %275 = vmatpush1.msra.mxu0 0.0
    %276 = vmatprep.subr.mxu0 0.0
    %277 = vmatpush1.msra.mxu0 0.0
    %278 = vmatprep.subr.mxu0 0.0
    %279 = vmatpush1.msra.mxu0 0.0
    %280 = vmatprep.subr.mxu0 0.0
    %281 = vmatpush1.msra.mxu0 0.0
    %282 = vmatprep.subr.mxu0 0.0
    %283 = vmatpush1.msra.mxu0 0.0
    %284 = vmatprep.subr.mxu0 0.0
    %285 = vmatpush1.msra.mxu0 0.0
    %286 = vmatprep.subr.mxu0 0.0
    %287 = vmatpush1.msra.mxu0 0.0
    %288 = vmatprep.subr.mxu0 0.0
    %289 = vmatpush1.msra.mxu0 0.0
    %290 = vmatprep.subr.mxu0 0.0
    %291 = vmatpush1.msra.mxu0 0.0
    %292 = vmatprep.subr.mxu0 0.0
    %293 = vmatpush1.msra.mxu0 0.0
    %294 = vmatprep.subr.mxu0 0.0
    %295 = vmatpush1.msra.mxu0 0.0
    %296 = vmatprep.subr.mxu0 0.0
    %297 = vmatpush1.msra.mxu0 0.0
    %298 = vmatprep.subr.mxu0 0.0
    %299 = vmatpush1.msra.mxu0 0.0
    %300 = vmatprep.subr.mxu0 0.0
    %301 = vmatpush1.msra.mxu0 0.0
    %302 = vmatprep.subr.mxu0 0.0
    %303 = vmatpush1.msra.mxu0 0.0
    %304 = vmatprep.subr.mxu0 0.0
    %305 = vmatpush1.msra.mxu0 0.0
    %306 = vmatprep.subr.mxu0 0.0
    %307 = vmatpush1.msra.mxu0 0.0
    %308 = vmatprep.subr.mxu0 0.0
    %309 = vmatpush1.msra.mxu0 0.0
    %310 = vmatprep.mubr.f32.mxu0 0.0
    %311 = vmatmul.mubr.f32.gmra.mrb[0].mxu0 %v164
    %v312 = vpop.f32.mrb[0].mxu0
    %v313 = vadd.f32 0.0, %v312
    %v314 = vpop.f32.mrb[0].mxu0
    %v315 = vadd.f32 0.0, %v314
    %316 = vdwg.mxu0
    %v318 = vsel %vm162, %v116, 0
    %v321 = vsel %vm166, %v31, 0
    %v324 = vsel %vm166, %v32, 0
    %v327 = vsel %vm166, %v33, 0
    %v330 = vsel %vm166, %v34, 0
    %332 = vmatprep.subr.mxu0 %v324
    %333 = vmatpush1.msra.mxu0 %v321
    %334 = vmatprep.subr.mxu0 0.0
    %335 = vmatpush1.msra.mxu0 0.0
    %336 = vmatprep.subr.mxu0 0.0
    %337 = vmatpush1.msra.mxu0 0.0
    %338 = vmatprep.subr.mxu0 0.0
    %339 = vmatpush1.msra.mxu0 0.0
    %340 = vmatprep.subr.mxu0 0.0
    %341 = vmatpush1.msra.mxu0 0.0
    %342 = vmatprep.subr.mxu0 0.0
    %343 = vmatpush1.msra.mxu0 0.0
    %344 = vmatprep.subr.mxu0 0.0
    %345 = vmatpush1.msra.mxu0 0.0
    %346 = vmatprep.subr.mxu0 0.0
    %347 = vmatpush1.msra.mxu0 0.0
    %348 = vmatprep.subr.mxu0 0.0
    %349 = vmatpush1.msra.mxu0 0.0
    %350 = vmatprep.subr.mxu0 0.0
    %351 = vmatpush1.msra.mxu0 0.0
    %352 = vmatprep.subr.mxu0 0.0
    %353 = vmatpush1.msra.mxu0 0.0
    %354 = vmatprep.subr.mxu0 0.0
    %355 = vmatpush1.msra.mxu0 0.0
    %356 = vmatprep.subr.mxu0 0.0
    %357 = vmatpush1.msra.mxu0 0.0
    %358 = vmatprep.subr.mxu0 0.0
    %359 = vmatpush1.msra.mxu0 0.0
    %360 = vmatprep.subr.mxu0 0.0
    %361 = vmatpush1.msra.mxu0 0.0
    %362 = vmatprep.subr.mxu0 0.0
    %363 = vmatpush1.msra.mxu0 0.0
    %364 = vmatprep.subr.mxu0 0.0
    %365 = vmatpush1.msra.mxu0 0.0
    %366 = vmatprep.subr.mxu0 0.0
    %367 = vmatpush1.msra.mxu0 0.0
    %368 = vmatprep.subr.mxu0 0.0
    %369 = vmatpush1.msra.mxu0 0.0
    %370 = vmatprep.subr.mxu0 0.0
    %371 = vmatpush1.msra.mxu0 0.0
    %372 = vmatprep.subr.mxu0 0.0
    %373 = vmatpush1.msra.mxu0 0.0
    %374 = vmatprep.subr.mxu0 0.0
    %375 = vmatpush1.msra.mxu0 0.0
    %376 = vmatprep.subr.mxu0 0.0
    %377 = vmatpush1.msra.mxu0 0.0
    %378 = vmatprep.subr.mxu0 0.0
    %379 = vmatpush1.msra.mxu0 0.0
    %380 = vmatprep.subr.mxu0 0.0
    %381 = vmatpush1.msra.mxu0 0.0
    %382 = vmatprep.subr.mxu0 0.0
    %383 = vmatpush1.msra.mxu0 0.0
    %384 = vmatprep.subr.mxu0 0.0
    %385 = vmatpush1.msra.mxu0 0.0
    %386 = vmatprep.subr.mxu0 0.0
    %387 = vmatpush1.msra.mxu0 0.0
    %388 = vmatprep.subr.mxu0 0.0
    %389 = vmatpush1.msra.mxu0 0.0
    %390 = vmatprep.subr.mxu0 0.0
    %391 = vmatpush1.msra.mxu0 0.0
    %392 = vmatprep.subr.mxu0 0.0
    %393 = vmatpush1.msra.mxu0 0.0
    %394 = vmatprep.subr.mxu0 0.0
    %395 = vmatpush1.msra.mxu0 0.0
    %396 = vmatprep.mubr.f32.mxu0 0.0
    %397 = vmatmul.mubr.f32.gmra.mrb[0].mxu0 %v318
    %v398 = vpop.f32.mrb[0].mxu0
    %v399 = vadd.f32 %v242, %v398
    %v400 = vpop.f32.mrb[0].mxu0
    %v401 = vadd.f32 %v244, %v400
    %402 = vdwg.mxu0
    %403 = vmatprep.subr.mxu0 %v330
    %404 = vmatpush1.msra.mxu0 %v327
    %405 = vmatprep.subr.mxu0 0.0
    %406 = vmatpush1.msra.mxu0 0.0
    %407 = vmatprep.subr.mxu0 0.0
    %408 = vmatpush1.msra.mxu0 0.0
    %409 = vmatprep.subr.mxu0 0.0
    %410 = vmatpush1.msra.mxu0 0.0
    %411 = vmatprep.subr.mxu0 0.0
    %412 = vmatpush1.msra.mxu0 0.0
    %413 = vmatprep.subr.mxu0 0.0
    %414 = vmatpush1.msra.mxu0 0.0
    %415 = vmatprep.subr.mxu0 0.0
    %416 = vmatpush1.msra.mxu0 0.0
    %417 = vmatprep.subr.mxu0 0.0
    %418 = vmatpush1.msra.mxu0 0.0
    %419 = vmatprep.subr.mxu0 0.0
    %420 = vmatpush1.msra.mxu0 0.0
    %421 = vmatprep.subr.mxu0 0.0
    %422 = vmatpush1.msra.mxu0 0.0
    %423 = vmatprep.subr.mxu0 0.0
    %424 = vmatpush1.msra.mxu0 0.0
    %425 = vmatprep.subr.mxu0 0.0
    %426 = vmatpush1.msra.mxu0 0.0
    %427 = vmatprep.subr.mxu0 0.0
    %428 = vmatpush1.msra.mxu0 0.0
    %429 = vmatprep.subr.mxu0 0.0
    %430 = vmatpush1.msra.mxu0 0.0
    %431 = vmatprep.subr.mxu0 0.0
    %432 = vmatpush1.msra.mxu0 0.0
    %433 = vmatprep.subr.mxu0 0.0
    %434 = vmatpush1.msra.mxu0 0.0
    %435 = vmatprep.subr.mxu0 0.0
    %436 = vmatpush1.msra.mxu0 0.0
    %437 = vmatprep.subr.mxu0 0.0
    %438 = vmatpush1.msra.mxu0 0.0
    %439 = vmatprep.subr.mxu0 0.0
    %440 = vmatpush1.msra.mxu0 0.0
    %441 = vmatprep.subr.mxu0 0.0
    %442 = vmatpush1.msra.mxu0 0.0
    %443 = vmatprep.subr.mxu0 0.0
    %444 = vmatpush1.msra.mxu0 0.0
    %445 = vmatprep.subr.mxu0 0.0
    %446 = vmatpush1.msra.mxu0 0.0
    %447 = vmatprep.subr.mxu0 0.0
    %448 = vmatpush1.msra.mxu0 0.0
    %449 = vmatprep.subr.mxu0 0.0
    %450 = vmatpush1.msra.mxu0 0.0
    %451 = vmatprep.subr.mxu0 0.0
    %452 = vmatpush1.msra.mxu0 0.0
    %453 = vmatprep.subr.mxu0 0.0
    %454 = vmatpush1.msra.mxu0 0.0
    %455 = vmatprep.subr.mxu0 0.0
    %456 = vmatpush1.msra.mxu0 0.0
    %457 = vmatprep.subr.mxu0 0.0
    %458 = vmatpush1.msra.mxu0 0.0
    %459 = vmatprep.subr.mxu0 0.0
    %460 = vmatpush1.msra.mxu0 0.0
    %461 = vmatprep.subr.mxu0 0.0
    %462 = vmatpush1.msra.mxu0 0.0
    %463 = vmatprep.subr.mxu0 0.0
    %464 = vmatpush1.msra.mxu0 0.0
    %465 = vmatprep.subr.mxu0 0.0
    %466 = vmatpush1.msra.mxu0 0.0
    %467 = vmatprep.mubr.f32.mxu0 0.0
    %468 = vmatmul.mubr.f32.gmra.mrb[0].mxu0 %v318
    %v469 = vpop.f32.mrb[0].mxu0
    %v470 = vadd.f32 %v313, %v469
    %v471 = vpop.f32.mrb[0].mxu0
    %v472 = vadd.f32 %v315, %v471
    %473 = vdwg.mxu0
    %v474 = vld [vmem:[%s4] sm:$0xf]
    %v476 = vlaneseq
    %v477 = vshrl.u32 %v476, 7
    %v478 = vsub.s32 0, %v477
    %v479 = vrot.slane %v474, %v478
    %v480 = vlaneseq
    %v481 = vshrl.u32 %v480, 7
    %v482 = vsub.s32 1, %v481
    %v483 = vrot.slane %v474, %v482
    %v484 = vlaneseq
    %v485 = vshrl.u32 %v484, 7
    %v486 = vsub.s32 2, %v485
    %v487 = vrot.slane %v474, %v486
    %v488 = vlaneseq
    %v489 = vshrl.u32 %v488, 7
    %v490 = vsub.s32 3, %v489
    %v491 = vrot.slane %v474, %v490
    %v496 = vadd.f32 %v399, %v479
    %v497 = vadd.f32 %v401, %v483
    %v498 = vadd.f32 %v470, %v487
    %v499 = vadd.f32 %v472, %v491
    %v500 = vld [vmem:[%s1] sm:$0x1]
    %v501 = vld [vmem:[%s2] sm:$0x1]
    %v502 = vand.u32 2147483647, %v500
    %vm503 = vcmp.lt.f32.partialorder %v500, 0.0
    %v504 = vsel %vm503, -1.0, 1.0
    %vm505 = vcmp.gt.f32.partialorder %v502, 2.4142137
    %vm506 = vcmp.gt.f32.partialorder %v502, 0.41421357
    %vm507 = vmxor %vm505, 1
    %vm508 = vmand %vm506, %vm507
    %v509 = vsel %vm505, %v502, 1.0
    %v510 = vrcp.pop %v509
    %v511 = vmul.f32 %v509, %v510
    %v512 = vsub.f32 2.0, %v511
    %v513 = vmul.f32 %v510, %v512
    %v514 = vsub.f32 0.0, %v513
    %v515 = vsub.f32 %v502, 1.0
    %v516 = vadd.f32 %v502, 1.0
    %v517 = vrcp.pop %v516
    %v518 = vmul.f32 %v516, %v517
    %v519 = vsub.f32 2.0, %v518
    %v520 = vmul.f32 %v517, %v519
    %v521 = vmul.f32 %v515, %v520
    %v522 = vsel %vm508, %v521, %v502
    %v523 = vsel %vm505, %v514, %v522
    %v524 = vsel %vm508, 0.7853982, 0.0
    %v525 = vsel %vm505, 1.5707964, %v524
    %v526 = vmul.f32 %v523, %v523
    %v527 = vmul.f32 %v526, 0.080537446
    %v528 = vsub.f32 %v527, 0.13877685
    %v529 = vmul.f32 %v528, %v526
    %v530 = vadd.f32 %v529, 0.19977711
    %v531 = vmul.f32 %v530, %v526
    %v532 = vsub.f32 %v531, 0.3333295
    %v533 = vmul.f32 %v532, %v526
    %v534 = vmul.f32 %v533, %v523
    %v535 = vadd.f32 %v534, %v523
    %v536 = vadd.f32 %v525, %v535
    %v537 = vmul.f32 %v504, %v536
    %vm538 = vcmask 64512
    %v540 = vsel %vm538, %v537, 0
    %542 = vmatprep.subr.mxu0 %v40
    %543 = vmatpush1.msra.mxu0 %v39
    %544 = vmatprep.subr.mxu0 0.0
    %545 = vmatpush1.msra.mxu0 0.0
    %546 = vmatprep.subr.mxu0 0.0
    %547 = vmatpush1.msra.mxu0 0.0
    %548 = vmatprep.subr.mxu0 0.0
    %549 = vmatpush1.msra.mxu0 0.0
    %550 = vmatprep.subr.mxu0 0.0
    %551 = vmatpush1.msra.mxu0 0.0
    %552 = vmatprep.subr.mxu0 0.0
    %553 = vmatpush1.msra.mxu0 0.0
    %554 = vmatprep.subr.mxu0 0.0
    %555 = vmatpush1.msra.mxu0 0.0
    %556 = vmatprep.subr.mxu0 0.0
    %557 = vmatpush1.msra.mxu0 0.0
    %558 = vmatprep.subr.mxu0 0.0
    %559 = vmatpush1.msra.mxu0 0.0
    %560 = vmatprep.subr.mxu0 0.0
    %561 = vmatpush1.msra.mxu0 0.0
    %562 = vmatprep.subr.mxu0 0.0
    %563 = vmatpush1.msra.mxu0 0.0
    %564 = vmatprep.subr.mxu0 0.0
    %565 = vmatpush1.msra.mxu0 0.0
    %566 = vmatprep.subr.mxu0 0.0
    %567 = vmatpush1.msra.mxu0 0.0
    %568 = vmatprep.subr.mxu0 0.0
    %569 = vmatpush1.msra.mxu0 0.0
    %570 = vmatprep.subr.mxu0 0.0
    %571 = vmatpush1.msra.mxu0 0.0
    %572 = vmatprep.subr.mxu0 0.0
    %573 = vmatpush1.msra.mxu0 0.0
    %574 = vmatprep.subr.mxu0 0.0
    %575 = vmatpush1.msra.mxu0 0.0
    %576 = vmatprep.subr.mxu0 0.0
    %577 = vmatpush1.msra.mxu0 0.0
    %578 = vmatprep.subr.mxu0 0.0
    %579 = vmatpush1.msra.mxu0 0.0
    %580 = vmatprep.subr.mxu0 0.0
    %581 = vmatpush1.msra.mxu0 0.0
    %582 = vmatprep.subr.mxu0 0.0
    %583 = vmatpush1.msra.mxu0 0.0
    %584 = vmatprep.subr.mxu0 0.0
    %585 = vmatpush1.msra.mxu0 0.0
    %586 = vmatprep.subr.mxu0 0.0
    %587 = vmatpush1.msra.mxu0 0.0
    %588 = vmatprep.subr.mxu0 0.0
    %589 = vmatpush1.msra.mxu0 0.0
    %590 = vmatprep.subr.mxu0 0.0
    %591 = vmatpush1.msra.mxu0 0.0
    %592 = vmatprep.subr.mxu0 0.0
    %593 = vmatpush1.msra.mxu0 0.0
    %594 = vmatprep.subr.mxu0 0.0
    %595 = vmatpush1.msra.mxu0 0.0
    %596 = vmatprep.subr.mxu0 0.0
    %597 = vmatpush1.msra.mxu0 0.0
    %598 = vmatprep.subr.mxu0 0.0
    %599 = vmatpush1.msra.mxu0 0.0
    %600 = vmatprep.subr.mxu0 0.0
    %601 = vmatpush1.msra.mxu0 0.0
    %602 = vmatprep.subr.mxu0 0.0
    %603 = vmatpush1.msra.mxu0 0.0
    %604 = vmatprep.subr.mxu0 0.0
    %605 = vmatpush1.msra.mxu0 0.0
    %606 = vmatprep.mubr.f32.mxu0 0.0
    %607 = vmatmul.mubr.f32.gmra.mrb[0].mxu0 %v540
    %v608 = vpop.f32.mrb[0].mxu0
    %v609 = vadd.f32 0.0, %v608
    %v610 = vpop.f32.mrb[0].mxu0
    %v611 = vadd.f32 0.0, %v610
    %612 = vdwg.mxu0
    %613 = vmatprep.subr.mxu0 %v42
    %614 = vmatpush1.msra.mxu0 %v41
    %615 = vmatprep.subr.mxu0 0.0
    %616 = vmatpush1.msra.mxu0 0.0
    %617 = vmatprep.subr.mxu0 0.0
    %618 = vmatpush1.msra.mxu0 0.0
    %619 = vmatprep.subr.mxu0 0.0
    %620 = vmatpush1.msra.mxu0 0.0
    %621 = vmatprep.subr.mxu0 0.0
    %622 = vmatpush1.msra.mxu0 0.0
    %623 = vmatprep.subr.mxu0 0.0
    %624 = vmatpush1.msra.mxu0 0.0
    %625 = vmatprep.subr.mxu0 0.0
    %626 = vmatpush1.msra.mxu0 0.0
    %627 = vmatprep.subr.mxu0 0.0
    %628 = vmatpush1.msra.mxu0 0.0
    %629 = vmatprep.subr.mxu0 0.0
    %630 = vmatpush1.msra.mxu0 0.0
    %631 = vmatprep.subr.mxu0 0.0
    %632 = vmatpush1.msra.mxu0 0.0
    %633 = vmatprep.subr.mxu0 0.0
    %634 = vmatpush1.msra.mxu0 0.0
    %635 = vmatprep.subr.mxu0 0.0
    %636 = vmatpush1.msra.mxu0 0.0
    %637 = vmatprep.subr.mxu0 0.0
    %638 = vmatpush1.msra.mxu0 0.0
    %639 = vmatprep.subr.mxu0 0.0
    %640 = vmatpush1.msra.mxu0 0.0
    %641 = vmatprep.subr.mxu0 0.0
    %642 = vmatpush1.msra.mxu0 0.0
    %643 = vmatprep.subr.mxu0 0.0
    %644 = vmatpush1.msra.mxu0 0.0
    %645 = vmatprep.subr.mxu0 0.0
    %646 = vmatpush1.msra.mxu0 0.0
    %647 = vmatprep.subr.mxu0 0.0
    %648 = vmatpush1.msra.mxu0 0.0
    %649 = vmatprep.subr.mxu0 0.0
    %650 = vmatpush1.msra.mxu0 0.0
    %651 = vmatprep.subr.mxu0 0.0
    %652 = vmatpush1.msra.mxu0 0.0
    %653 = vmatprep.subr.mxu0 0.0
    %654 = vmatpush1.msra.mxu0 0.0
    %655 = vmatprep.subr.mxu0 0.0
    %656 = vmatpush1.msra.mxu0 0.0
    %657 = vmatprep.subr.mxu0 0.0
    %658 = vmatpush1.msra.mxu0 0.0
    %659 = vmatprep.subr.mxu0 0.0
    %660 = vmatpush1.msra.mxu0 0.0
    %661 = vmatprep.subr.mxu0 0.0
    %662 = vmatpush1.msra.mxu0 0.0
    %663 = vmatprep.subr.mxu0 0.0
    %664 = vmatpush1.msra.mxu0 0.0
    %665 = vmatprep.subr.mxu0 0.0
    %666 = vmatpush1.msra.mxu0 0.0
    %667 = vmatprep.subr.mxu0 0.0
    %668 = vmatpush1.msra.mxu0 0.0
    %669 = vmatprep.subr.mxu0 0.0
    %670 = vmatpush1.msra.mxu0 0.0
    %671 = vmatprep.subr.mxu0 0.0
    %672 = vmatpush1.msra.mxu0 0.0
    %673 = vmatprep.subr.mxu0 0.0
    %674 = vmatpush1.msra.mxu0 0.0
    %675 = vmatprep.subr.mxu0 0.0
    %676 = vmatpush1.msra.mxu0 0.0
    %677 = vmatprep.mubr.f32.mxu0 0.0
    %678 = vmatmul.mubr.f32.gmra.mrb[0].mxu0 %v540
    %v679 = vpop.f32.mrb[0].mxu0
    %v680 = vadd.f32 0.0, %v679
    %v681 = vpop.f32.mrb[0].mxu0
    %v682 = vadd.f32 0.0, %v681
    %683 = vdwg.mxu0
    %v684 = vadd.f32 %v496, %v609
    %v685 = vadd.f32 %v497, %v611
    %v686 = vadd.f32 %v498, %v680
    %v687 = vadd.f32 %v499, %v682
    %v688 = vmul.f32 %v500, %v500
    %v689 = vand.u32 2147483647, %v688
    %vm690 = vcmp.lt.f32.partialorder %v688, 0.0
    %v691 = vsel %vm690, -1.0, 1.0
    %vm692 = vcmp.gt.f32.partialorder %v689, 2.4142137
    %vm693 = vcmp.gt.f32.partialorder %v689, 0.41421357
    %vm694 = vmxor %vm692, 1
    %vm695 = vmand %vm693, %vm694
    %v696 = vsel %vm692, %v689, 1.0
    %v697 = vrcp.pop %v696
    %v698 = vmul.f32 %v696, %v697
    %v699 = vsub.f32 2.0, %v698
    %v700 = vmul.f32 %v697, %v699
    %v701 = vsub.f32 0.0, %v700
    %v702 = vsub.f32 %v689, 1.0
    %v703 = vadd.f32 %v689, 1.0
    %v704 = vrcp.pop %v703
    %v705 = vmul.f32 %v703, %v704
    %v706 = vsub.f32 2.0, %v705
    %v707 = vmul.f32 %v704, %v706
    %v708 = vmul.f32 %v702, %v707
    %v709 = vsel %vm695, %v708, %v689
    %v710 = vsel %vm692, %v701, %v709
    %v711 = vsel %vm695, 0.7853982, 0.0
    %v712 = vsel %vm692, 1.5707964, %v711
    %v713 = vmul.f32 %v710, %v710
    %v714 = vmul.f32 %v713, 0.080537446
    %v715 = vsub.f32 %v714, 0.13877685
    %v716 = vmul.f32 %v715, %v713
    %v717 = vadd.f32 %v716, 0.19977711
    %v718 = vmul.f32 %v717, %v713
    %v719 = vsub.f32 %v718, 0.3333295
    %v720 = vmul.f32 %v719, %v713
    %v721 = vmul.f32 %v720, %v710
    %v722 = vadd.f32 %v721, %v710
    %v723 = vadd.f32 %v712, %v722
    %v724 = vmul.f32 %v691, %v723
    %v726 = vsel %vm538, %v724, 0
    %728 = vmatprep.subr.mxu0 %v44
    %729 = vmatpush1.msra.mxu0 %v43
    %730 = vmatprep.subr.mxu0 0.0
    %731 = vmatpush1.msra.mxu0 0.0
    %732 = vmatprep.subr.mxu0 0.0
    %733 = vmatpush1.msra.mxu0 0.0
    %734 = vmatprep.subr.mxu0 0.0
    %735 = vmatpush1.msra.mxu0 0.0
    %736 = vmatprep.subr.mxu0 0.0
    %737 = vmatpush1.msra.mxu0 0.0
    %738 = vmatprep.subr.mxu0 0.0
    %739 = vmatpush1.msra.mxu0 0.0
    %740 = vmatprep.subr.mxu0 0.0
    %741 = vmatpush1.msra.mxu0 0.0
    %742 = vmatprep.subr.mxu0 0.0
    %743 = vmatpush1.msra.mxu0 0.0
    %744 = vmatprep.subr.mxu0 0.0
    %745 = vmatpush1.msra.mxu0 0.0
    %746 = vmatprep.subr.mxu0 0.0
    %747 = vmatpush1.msra.mxu0 0.0
    %748 = vmatprep.subr.mxu0 0.0
    %749 = vmatpush1.msra.mxu0 0.0
    %750 = vmatprep.subr.mxu0 0.0
    %751 = vmatpush1.msra.mxu0 0.0
    %752 = vmatprep.subr.mxu0 0.0
    %753 = vmatpush1.msra.mxu0 0.0
    %754 = vmatprep.subr.mxu0 0.0
    %755 = vmatpush1.msra.mxu0 0.0
    %756 = vmatprep.subr.mxu0 0.0
    %757 = vmatpush1.msra.mxu0 0.0
    %758 = vmatprep.subr.mxu0 0.0
    %759 = vmatpush1.msra.mxu0 0.0
    %760 = vmatprep.subr.mxu0 0.0
    %761 = vmatpush1.msra.mxu0 0.0
    %762 = vmatprep.subr.mxu0 0.0
    %763 = vmatpush1.msra.mxu0 0.0
    %764 = vmatprep.subr.mxu0 0.0
    %765 = vmatpush1.msra.mxu0 0.0
    %766 = vmatprep.subr.mxu0 0.0
    %767 = vmatpush1.msra.mxu0 0.0
    %768 = vmatprep.subr.mxu0 0.0
    %769 = vmatpush1.msra.mxu0 0.0
    %770 = vmatprep.subr.mxu0 0.0
    %771 = vmatpush1.msra.mxu0 0.0
    %772 = vmatprep.subr.mxu0 0.0
    %773 = vmatpush1.msra.mxu0 0.0
    %774 = vmatprep.subr.mxu0 0.0
    %775 = vmatpush1.msra.mxu0 0.0
    %776 = vmatprep.subr.mxu0 0.0
    %777 = vmatpush1.msra.mxu0 0.0
    %778 = vmatprep.subr.mxu0 0.0
    %779 = vmatpush1.msra.mxu0 0.0
    %780 = vmatprep.subr.mxu0 0.0
    %781 = vmatpush1.msra.mxu0 0.0
    %782 = vmatprep.subr.mxu0 0.0
    %783 = vmatpush1.msra.mxu0 0.0
    %784 = vmatprep.subr.mxu0 0.0
    %785 = vmatpush1.msra.mxu0 0.0
    %786 = vmatprep.subr.mxu0 0.0
    %787 = vmatpush1.msra.mxu0 0.0
    %788 = vmatprep.subr.mxu0 0.0
    %789 = vmatpush1.msra.mxu0 0.0
    %790 = vmatprep.subr.mxu0 0.0
    %791 = vmatpush1.msra.mxu0 0.0
    %792 = vmatprep.mubr.f32.mxu0 0.0
    %793 = vmatmul.mubr.f32.gmra.mrb[0].mxu0 %v726
    %v794 = vpop.f32.mrb[0].mxu0
    %v795 = vadd.f32 0.0, %v794
    %v796 = vpop.f32.mrb[0].mxu0
    %v797 = vadd.f32 0.0, %v796
    %798 = vdwg.mxu0
    %799 = vmatprep.subr.mxu0 %v46
    %800 = vmatpush1.msra.mxu0 %v45
    %801 = vmatprep.subr.mxu0 0.0
    %802 = vmatpush1.msra.mxu0 0.0
    %803 = vmatprep.subr.mxu0 0.0
    %804 = vmatpush1.msra.mxu0 0.0
    %805 = vmatprep.subr.mxu0 0.0
    %806 = vmatpush1.msra.mxu0 0.0
    %807 = vmatprep.subr.mxu0 0.0
    %808 = vmatpush1.msra.mxu0 0.0
    %809 = vmatprep.subr.mxu0 0.0
    %810 = vmatpush1.msra.mxu0 0.0
    %811 = vmatprep.subr.mxu0 0.0
    %812 = vmatpush1.msra.mxu0 0.0
    %813 = vmatprep.subr.mxu0 0.0
    %814 = vmatpush1.msra.mxu0 0.0
    %815 = vmatprep.subr.mxu0 0.0
    %816 = vmatpush1.msra.mxu0 0.0
    %817 = vmatprep.subr.mxu0 0.0
    %818 = vmatpush1.msra.mxu0 0.0
    %819 = vmatprep.subr.mxu0 0.0
    %820 = vmatpush1.msra.mxu0 0.0
    %821 = vmatprep.subr.mxu0 0.0
    %822 = vmatpush1.msra.mxu0 0.0
    %823 = vmatprep.subr.mxu0 0.0
    %824 = vmatpush1.msra.mxu0 0.0
    %825 = vmatprep.subr.mxu0 0.0
    %826 = vmatpush1.msra.mxu0 0.0
    %827 = vmatprep.subr.mxu0 0.0
    %828 = vmatpush1.msra.mxu0 0.0
    %829 = vmatprep.subr.mxu0 0.0
    %830 = vmatpush1.msra.mxu0 0.0
    %831 = vmatprep.subr.mxu0 0.0
    %832 = vmatpush1.msra.mxu0 0.0
    %833 = vmatprep.subr.mxu0 0.0
    %834 = vmatpush1.msra.mxu0 0.0
    %835 = vmatprep.subr.mxu0 0.0
    %836 = vmatpush1.msra.mxu0 0.0
    %837 = vmatprep.subr.mxu0 0.0
    %838 = vmatpush1.msra.mxu0 0.0
    %839 = vmatprep.subr.mxu0 0.0
    %840 = vmatpush1.msra.mxu0 0.0
    %841 = vmatprep.subr.mxu0 0.0
    %842 = vmatpush1.msra.mxu0 0.0
    %843 = vmatprep.subr.mxu0 0.0
    %844 = vmatpush1.msra.mxu0 0.0
    %845 = vmatprep.subr.mxu0 0.0
    %846 = vmatpush1.msra.mxu0 0.0
    %847 = vmatprep.subr.mxu0 0.0
    %848 = vmatpush1.msra.mxu0 0.0
    %849 = vmatprep.subr.mxu0 0.0
    %850 = vmatpush1.msra.mxu0 0.0
    %851 = vmatprep.subr.mxu0 0.0
    %852 = vmatpush1.msra.mxu0 0.0
    %853 = vmatprep.subr.mxu0 0.0
    %854 = vmatpush1.msra.mxu0 0.0
    %855 = vmatprep.subr.mxu0 0.0
    %856 = vmatpush1.msra.mxu0 0.0
    %857 = vmatprep.subr.mxu0 0.0
    %858 = vmatpush1.msra.mxu0 0.0
    %859 = vmatprep.subr.mxu0 0.0
    %860 = vmatpush1.msra.mxu0 0.0
    %861 = vmatprep.subr.mxu0 0.0
    %862 = vmatpush1.msra.mxu0 0.0
    %863 = vmatprep.mubr.f32.mxu0 0.0
    %864 = vmatmul.mubr.f32.gmra.mrb[0].mxu0 %v726
    %v865 = vpop.f32.mrb[0].mxu0
    %v866 = vadd.f32 0.0, %v865
    %v867 = vpop.f32.mrb[0].mxu0
    %v868 = vadd.f32 0.0, %v867
    %869 = vdwg.mxu0
    %v870 = vadd.f32 %v684, %v795
    %v871 = vadd.f32 %v685, %v797
    %v872 = vadd.f32 %v686, %v866
    %v873 = vadd.f32 %v687, %v868
    %v874 = vxor.u32 %v870, 2147483648
    %v875 = vmul.f32 %v874, 1.442695
    %v876 = vpow.pop %v875
    %v877 = vadd.f32 %v876, 1.0
    %v878 = vrcp.pop %v877
    %v879 = vmul.f32 1.0, %v878
    %v880 = vxor.u32 %v871, 2147483648
    %v881 = vmul.f32 %v880, 1.442695
    %v882 = vpow.pop %v881
    %v883 = vadd.f32 %v882, 1.0
    %v884 = vrcp.pop %v883
    %v885 = vmul.f32 1.0, %v884
    %v886 = vtanh.pop %v872
    %v887 = vxor.u32 %v873, 2147483648
    %v888 = vmul.f32 %v887, 1.442695
    %v889 = vpow.pop %v888
    %v890 = vadd.f32 %v889, 1.0
    %v891 = vrcp.pop %v890
    %v892 = vmul.f32 1.0, %v891
    %v893 = vmul.f32 %v501, %v879
    %v894 = vmul.f32 %v885, %v886
    %v895 = vadd.f32 %v893, %v894
    %v896 = vtanh.pop %v895
    %v897 = vmul.f32 %v892, %v896
    %v898 = vand.u32 2147483647, %v897
    %vm899 = vcmp.lt.f32.partialorder %v897, 0.0
    %v900 = vsel %vm899, -1.0, 1.0
    %vm901 = vcmp.gt.f32.partialorder %v898, 2.4142137
    %vm902 = vcmp.gt.f32.partialorder %v898, 0.41421357
    %vm903 = vmxor %vm901, 1
    %vm904 = vmand %vm902, %vm903
    %v905 = vsel %vm901, %v898, 1.0
    %v906 = vrcp.pop %v905
    %v907 = vmul.f32 %v905, %v906
    %v908 = vsub.f32 2.0, %v907
    %v909 = vmul.f32 %v906, %v908
    %v910 = vsub.f32 0.0, %v909
    %v911 = vsub.f32 %v898, 1.0
    %v912 = vadd.f32 %v898, 1.0
    %v913 = vrcp.pop %v912
    %v914 = vmul.f32 %v912, %v913
    %v915 = vsub.f32 2.0, %v914
    %v916 = vmul.f32 %v913, %v915
    %v917 = vmul.f32 %v911, %v916
    %v918 = vsel %vm904, %v917, %v898
    %v919 = vsel %vm901, %v910, %v918
    %v920 = vsel %vm904, 0.7853982, 0.0
    %v921 = vsel %vm901, 1.5707964, %v920
    %v922 = vmul.f32 %v919, %v919
    %v923 = vmul.f32 %v922, 0.080537446
    %v924 = vsub.f32 %v923, 0.13877685
    %v925 = vmul.f32 %v924, %v922
    %v926 = vadd.f32 %v925, 0.19977711
    %v927 = vmul.f32 %v926, %v922
    %v928 = vsub.f32 %v927, 0.3333295
    %v929 = vmul.f32 %v928, %v922
    %v930 = vmul.f32 %v929, %v919
    %v931 = vadd.f32 %v930, %v919
    %v932 = vadd.f32 %v921, %v931
    %v933 = vmul.f32 %v900, %v932
    %v934 = vmul.f32 %v897, %v897
    %v935 = vand.u32 2147483647, %v934
    %vm936 = vcmp.lt.f32.partialorder %v934, 0.0
    %v937 = vsel %vm936, -1.0, 1.0
    %vm938 = vcmp.gt.f32.partialorder %v935, 2.4142137
    %vm939 = vcmp.gt.f32.partialorder %v935, 0.41421357
    %vm940 = vmxor %vm938, 1
    %vm941 = vmand %vm939, %vm940
    %v942 = vsel %vm938, %v935, 1.0
    %v943 = vrcp.pop %v942
    %v944 = vmul.f32 %v942, %v943
    %v945 = vsub.f32 2.0, %v944
    %v946 = vmul.f32 %v943, %v945
    %v947 = vsub.f32 0.0, %v946
    %v948 = vsub.f32 %v935, 1.0
    %v949 = vadd.f32 %v935, 1.0
    %v950 = vrcp.pop %v949
    %v951 = vmul.f32 %v949, %v950
    %v952 = vsub.f32 2.0, %v951
    %v953 = vmul.f32 %v950, %v952
    %v954 = vmul.f32 %v948, %v953
    %v955 = vsel %vm941, %v954, %v935
    %v956 = vsel %vm938, %v947, %v955
    %v957 = vsel %vm941, 0.7853982, 0.0
    %v958 = vsel %vm938, 1.5707964, %v957
    %v959 = vmul.f32 %v956, %v956
    %v960 = vmul.f32 %v959, 0.080537446
    %v961 = vsub.f32 %v960, 0.13877685
    %v962 = vmul.f32 %v961, %v959
    %v963 = vadd.f32 %v962, 0.19977711
    %v964 = vmul.f32 %v963, %v959
    %v965 = vsub.f32 %v964, 0.3333295
    %v966 = vmul.f32 %v965, %v959
    %v967 = vmul.f32 %v966, %v956
    %v968 = vadd.f32 %v967, %v956
    %v969 = vadd.f32 %v958, %v968
    %v970 = vmul.f32 %v937, %v969
    %971 = vmatprep.subr.mxu0 0.0
    %972 = vmatpush1.msra.mxu0 %v47
    %973 = vmatprep.subr.mxu0 0.0
    %974 = vmatpush1.msra.mxu0 %v48
    %975 = vmatprep.subr.mxu0 0.0
    %976 = vmatpush1.msra.mxu0 %v49
    %977 = vmatprep.subr.mxu0 0.0
    %978 = vmatpush1.msra.mxu0 %v50
    %979 = vmatprep.subr.mxu0 0.0
    %980 = vmatpush1.msra.mxu0 %v51
    %981 = vmatprep.subr.mxu0 0.0
    %982 = vmatpush1.msra.mxu0 %v52
    %983 = vmatprep.subr.mxu0 0.0
    %984 = vmatpush1.msra.mxu0 %v53
    %985 = vmatprep.subr.mxu0 0.0
    %986 = vmatpush1.msra.mxu0 %v54
    %987 = vmatprep.subr.mxu0 0.0
    %988 = vmatpush1.msra.mxu0 %v55
    %989 = vmatprep.subr.mxu0 0.0
    %990 = vmatpush1.msra.mxu0 %v56
    %991 = vmatprep.subr.mxu0 0.0
    %992 = vmatpush1.msra.mxu0 %v57
    %993 = vmatprep.subr.mxu0 0.0
    %994 = vmatpush1.msra.mxu0 %v58
    %995 = vmatprep.subr.mxu0 0.0
    %996 = vmatpush1.msra.mxu0 %v59
    %997 = vmatprep.subr.mxu0 0.0
    %998 = vmatpush1.msra.mxu0 %v60
    %999 = vmatprep.subr.mxu0 0.0
    %1000 = vmatpush1.msra.mxu0 %v61
    %1001 = vmatprep.subr.mxu0 0.0
    %1002 = vmatpush1.msra.mxu0 %v62
    %1003 = vmatprep.subr.mxu0 0.0
    %1004 = vmatpush1.msra.mxu0 %v63
    %1005 = vmatprep.subr.mxu0 0.0
    %1006 = vmatpush1.msra.mxu0 %v64
    %1007 = vmatprep.subr.mxu0 0.0
    %1008 = vmatpush1.msra.mxu0 %v65
    %1009 = vmatprep.subr.mxu0 0.0
    %1010 = vmatpush1.msra.mxu0 %v66
    %1011 = vmatprep.subr.mxu0 0.0
    %1012 = vmatpush1.msra.mxu0 %v67
    %1013 = vmatprep.subr.mxu0 0.0
    %1014 = vmatpush1.msra.mxu0 %v68
    %1015 = vmatprep.subr.mxu0 0.0
    %1016 = vmatpush1.msra.mxu0 %v69
    %1017 = vmatprep.subr.mxu0 0.0
    %1018 = vmatpush1.msra.mxu0 %v70
    %1019 = vmatprep.subr.mxu0 0.0
    %1020 = vmatpush1.msra.mxu0 %v71
    %1021 = vmatprep.subr.mxu0 0.0
    %1022 = vmatpush1.msra.mxu0 %v72
    %1023 = vmatprep.subr.mxu0 0.0
    %1024 = vmatpush1.msra.mxu0 %v73
    %1025 = vmatprep.subr.mxu0 0.0
    %1026 = vmatpush1.msra.mxu0 %v74
    %1027 = vmatprep.subr.mxu0 0.0
    %1028 = vmatpush1.msra.mxu0 %v75
    %1029 = vmatprep.subr.mxu0 0.0
    %1030 = vmatpush1.msra.mxu0 %v76
    %1031 = vmatprep.subr.mxu0 0.0
    %1032 = vmatpush1.msra.mxu0 %v77
    %1033 = vmatprep.subr.mxu0 0.0
    %1034 = vmatpush1.msra.mxu0 %v78
    %1035 = vmatprep.mubr.f32.mxu0 %v970
    %1036 = vmatmul.mubr.f32.gmra.mrb[0].mxu0 %v933
    %v1037 = vpop.f32.mrb[0].mxu0
    %v1038 = vadd.f32 %v79, %v1037
    %v1039 = vpop.f32.mrb[0].mxu0
    %1040 = vdwg.mxu0
    %1042 = vrot.lane.b32.xlu0 %v1038, 120
    %v1043 = vpop.permute.xlu0 %1042
    %vm1045 = vcmask 0
    %1046 = vst.msk [vmem:[%s9] sm:$0x1] %vm1045, %v1043
    %v1047 = vand.u32 2147483647, %v1038
    %vm1048 = vcmp.lt.f32.partialorder %v1038, 0.0
    %v1049 = vsel %vm1048, -1.0, 1.0
    %vm1050 = vcmp.gt.f32.partialorder %v1047, 2.4142137
    %vm1051 = vcmp.gt.f32.partialorder %v1047, 0.41421357
    %vm1052 = vmxor %vm1050, 1
    %vm1053 = vmand %vm1051, %vm1052
    %v1054 = vsel %vm1050, %v1047, 1.0
    %v1055 = vrcp.pop %v1054
    %v1056 = vmul.f32 %v1054, %v1055
    %v1057 = vsub.f32 2.0, %v1056
    %v1058 = vmul.f32 %v1055, %v1057
    %v1059 = vsub.f32 0.0, %v1058
    %v1060 = vsub.f32 %v1047, 1.0
    %v1061 = vadd.f32 %v1047, 1.0
    %v1062 = vrcp.pop %v1061
    %v1063 = vmul.f32 %v1061, %v1062
    %v1064 = vsub.f32 2.0, %v1063
    %v1065 = vmul.f32 %v1062, %v1064
    %v1066 = vmul.f32 %v1060, %v1065
    %v1067 = vsel %vm1053, %v1066, %v1047
    %v1068 = vsel %vm1050, %v1059, %v1067
    %v1069 = vsel %vm1053, 0.7853982, 0.0
    %v1070 = vsel %vm1050, 1.5707964, %v1069
    %v1071 = vmul.f32 %v1068, %v1068
    %v1072 = vmul.f32 %v1071, 0.080537446
    %v1073 = vsub.f32 %v1072, 0.13877685
    %v1074 = vmul.f32 %v1073, %v1071
    %v1075 = vadd.f32 %v1074, 0.19977711
    %v1076 = vmul.f32 %v1075, %v1071
    %v1077 = vsub.f32 %v1076, 0.3333295
    %v1078 = vmul.f32 %v1077, %v1071
    %v1079 = vmul.f32 %v1078, %v1068
    %v1080 = vadd.f32 %v1079, %v1068
    %v1081 = vadd.f32 %v1070, %v1080
    %v1082 = vmul.f32 %v1049, %v1081
    %v1084 = vsel %vm538, %v1082, 0
    %1086 = vmatprep.subr.mxu0 %v40
    %1087 = vmatpush1.msra.mxu0 %v39
    %1088 = vmatprep.subr.mxu0 0.0
    %1089 = vmatpush1.msra.mxu0 0.0
    %1090 = vmatprep.subr.mxu0 0.0
    %1091 = vmatpush1.msra.mxu0 0.0
    %1092 = vmatprep.subr.mxu0 0.0
    %1093 = vmatpush1.msra.mxu0 0.0
    %1094 = vmatprep.subr.mxu0 0.0
    %1095 = vmatpush1.msra.mxu0 0.0
    %1096 = vmatprep.subr.mxu0 0.0
    %1097 = vmatpush1.msra.mxu0 0.0
    %1098 = vmatprep.subr.mxu0 0.0
    %1099 = vmatpush1.msra.mxu0 0.0
    %1100 = vmatprep.subr.mxu0 0.0
    %1101 = vmatpush1.msra.mxu0 0.0
    %1102 = vmatprep.subr.mxu0 0.0
    %1103 = vmatpush1.msra.mxu0 0.0
    %1104 = vmatprep.subr.mxu0 0.0
    %1105 = vmatpush1.msra.mxu0 0.0
    %1106 = vmatprep.subr.mxu0 0.0
    %1107 = vmatpush1.msra.mxu0 0.0
    %1108 = vmatprep.subr.mxu0 0.0
    %1109 = vmatpush1.msra.mxu0 0.0
    %1110 = vmatprep.subr.mxu0 0.0
    %1111 = vmatpush1.msra.mxu0 0.0
    %1112 = vmatprep.subr.mxu0 0.0
    %1113 = vmatpush1.msra.mxu0 0.0
    %1114 = vmatprep.subr.mxu0 0.0
    %1115 = vmatpush1.msra.mxu0 0.0
    %1116 = vmatprep.subr.mxu0 0.0
    %1117 = vmatpush1.msra.mxu0 0.0
    %1118 = vmatprep.subr.mxu0 0.0
    %1119 = vmatpush1.msra.mxu0 0.0
    %1120 = vmatprep.subr.mxu0 0.0
    %1121 = vmatpush1.msra.mxu0 0.0
    %1122 = vmatprep.subr.mxu0 0.0
    %1123 = vmatpush1.msra.mxu0 0.0
    %1124 = vmatprep.subr.mxu0 0.0
    %1125 = vmatpush1.msra.mxu0 0.0
    %1126 = vmatprep.subr.mxu0 0.0
    %1127 = vmatpush1.msra.mxu0 0.0
    %1128 = vmatprep.subr.mxu0 0.0
    %1129 = vmatpush1.msra.mxu0 0.0
    %1130 = vmatprep.subr.mxu0 0.0
    %1131 = vmatpush1.msra.mxu0 0.0
    %1132 = vmatprep.subr.mxu0 0.0
    %1133 = vmatpush1.msra.mxu0 0.0
    %1134 = vmatprep.subr.mxu0 0.0
    %1135 = vmatpush1.msra.mxu0 0.0
    %1136 = vmatprep.subr.mxu0 0.0
    %1137 = vmatpush1.msra.mxu0 0.0
    %1138 = vmatprep.subr.mxu0 0.0
    %1139 = vmatpush1.msra.mxu0 0.0
    %1140 = vmatprep.subr.mxu0 0.0
    %1141 = vmatpush1.msra.mxu0 0.0
    %1142 = vmatprep.subr.mxu0 0.0
    %1143 = vmatpush1.msra.mxu0 0.0
    %1144 = vmatprep.subr.mxu0 0.0
    %1145 = vmatpush1.msra.mxu0 0.0
    %1146 = vmatprep.subr.mxu0 0.0
    %1147 = vmatpush1.msra.mxu0 0.0
    %1148 = vmatprep.subr.mxu0 0.0
    %1149 = vmatpush1.msra.mxu0 0.0
    %1150 = vmatprep.mubr.f32.mxu0 0.0
    %1151 = vmatmul.mubr.f32.gmra.mrb[0].mxu0 %v1084
    %v1152 = vpop.f32.mrb[0].mxu0
    %v1153 = vadd.f32 0.0, %v1152
    %v1154 = vpop.f32.mrb[0].mxu0
    %v1155 = vadd.f32 0.0, %v1154
    %1156 = vdwg.mxu0
    %1157 = vmatprep.subr.mxu0 %v42
    %1158 = vmatpush1.msra.mxu0 %v41
    %1159 = vmatprep.subr.mxu0 0.0
    %1160 = vmatpush1.msra.mxu0 0.0
    %1161 = vmatprep.subr.mxu0 0.0
    %1162 = vmatpush1.msra.mxu0 0.0
    %1163 = vmatprep.subr.mxu0 0.0
    %1164 = vmatpush1.msra.mxu0 0.0
    %1165 = vmatprep.subr.mxu0 0.0
    %1166 = vmatpush1.msra.mxu0 0.0
    %1167 = vmatprep.subr.mxu0 0.0
    %1168 = vmatpush1.msra.mxu0 0.0
    %1169 = vmatprep.subr.mxu0 0.0
    %1170 = vmatpush1.msra.mxu0 0.0
    %1171 = vmatprep.subr.mxu0 0.0
    %1172 = vmatpush1.msra.mxu0 0.0
    %1173 = vmatprep.subr.mxu0 0.0
    %1174 = vmatpush1.msra.mxu0 0.0
    %1175 = vmatprep.subr.mxu0 0.0
    %1176 = vmatpush1.msra.mxu0 0.0
    %1177 = vmatprep.subr.mxu0 0.0
    %1178 = vmatpush1.msra.mxu0 0.0
    %1179 = vmatprep.subr.mxu0 0.0
    %1180 = vmatpush1.msra.mxu0 0.0
    %1181 = vmatprep.subr.mxu0 0.0
    %1182 = vmatpush1.msra.mxu0 0.0
    %1183 = vmatprep.subr.mxu0 0.0
    %1184 = vmatpush1.msra.mxu0 0.0
    %1185 = vmatprep.subr.mxu0 0.0
    %1186 = vmatpush1.msra.mxu0 0.0
    %1187 = vmatprep.subr.mxu0 0.0
    %1188 = vmatpush1.msra.mxu0 0.0
    %1189 = vmatprep.subr.mxu0 0.0
    %1190 = vmatpush1.msra.mxu0 0.0
    %1191 = vmatprep.subr.mxu0 0.0
    %1192 = vmatpush1.msra.mxu0 0.0
    %1193 = vmatprep.subr.mxu0 0.0
    %1194 = vmatpush1.msra.mxu0 0.0
    %1195 = vmatprep.subr.mxu0 0.0
    %1196 = vmatpush1.msra.mxu0 0.0
    %1197 = vmatprep.subr.mxu0 0.0
    %1198 = vmatpush1.msra.mxu0 0.0
    %1199 = vmatprep.subr.mxu0 0.0
    %1200 = vmatpush1.msra.mxu0 0.0
    %1201 = vmatprep.subr.mxu0 0.0
    %1202 = vmatpush1.msra.mxu0 0.0
    %1203 = vmatprep.subr.mxu0 0.0
    %1204 = vmatpush1.msra.mxu0 0.0
    %1205 = vmatprep.subr.mxu0 0.0
    %1206 = vmatpush1.msra.mxu0 0.0
    %1207 = vmatprep.subr.mxu0 0.0
    %1208 = vmatpush1.msra.mxu0 0.0
    %1209 = vmatprep.subr.mxu0 0.0
    %1210 = vmatpush1.msra.mxu0 0.0
    %1211 = vmatprep.subr.mxu0 0.0
    %1212 = vmatpush1.msra.mxu0 0.0
    %1213 = vmatprep.subr.mxu0 0.0
    %1214 = vmatpush1.msra.mxu0 0.0
    %1215 = vmatprep.subr.mxu0 0.0
    %1216 = vmatpush1.msra.mxu0 0.0
    %1217 = vmatprep.subr.mxu0 0.0
    %1218 = vmatpush1.msra.mxu0 0.0
    %1219 = vmatprep.subr.mxu0 0.0
    %1220 = vmatpush1.msra.mxu0 0.0
    %1221 = vmatprep.mubr.f32.mxu0 0.0
    %1222 = vmatmul.mubr.f32.gmra.mrb[0].mxu0 %v1084
    %v1223 = vpop.f32.mrb[0].mxu0
    %v1224 = vadd.f32 0.0, %v1223
    %v1225 = vpop.f32.mrb[0].mxu0
    %v1226 = vadd.f32 0.0, %v1225
    %1227 = vdwg.mxu0
    %v1232 = vrot.slane %v1153, 7
    %v1233 = vrot.slane %v1155, 7
    %v1234 = vrot.slane %v1224, 7
    %v1235 = vrot.slane %v1226, 7
    %v1240 = vadd.f32 %v496, %v1232
    %v1241 = vadd.f32 %v497, %v1233
    %v1242 = vadd.f32 %v498, %v1234
    %v1243 = vadd.f32 %v499, %v1235
    %v1244 = vmul.f32 %v1038, %v1038
    %v1245 = vand.u32 2147483647, %v1244
    %vm1246 = vcmp.lt.f32.partialorder %v1244, 0.0
    %v1247 = vsel %vm1246, -1.0, 1.0
    %vm1248 = vcmp.gt.f32.partialorder %v1245, 2.4142137
    %vm1249 = vcmp.gt.f32.partialorder %v1245, 0.41421357
    %vm1250 = vmxor %vm1248, 1
    %vm1251 = vmand %vm1249, %vm1250
    %v1252 = vsel %vm1248, %v1245, 1.0
    %v1253 = vrcp.pop %v1252
    %v1254 = vmul.f32 %v1252, %v1253
    %v1255 = vsub.f32 2.0, %v1254
    %v1256 = vmul.f32 %v1253, %v1255
    %v1257 = vsub.f32 0.0, %v1256
    %v1258 = vsub.f32 %v1245, 1.0
    %v1259 = vadd.f32 %v1245, 1.0
    %v1260 = vrcp.pop %v1259
    %v1261 = vmul.f32 %v1259, %v1260
    %v1262 = vsub.f32 2.0, %v1261
    %v1263 = vmul.f32 %v1260, %v1262
    %v1264 = vmul.f32 %v1258, %v1263
    %v1265 = vsel %vm1251, %v1264, %v1245
    %v1266 = vsel %vm1248, %v1257, %v1265
    %v1267 = vsel %vm1251, 0.7853982, 0.0
    %v1268 = vsel %vm1248, 1.5707964, %v1267
    %v1269 = vmul.f32 %v1266, %v1266
    %v1270 = vmul.f32 %v1269, 0.080537446
    %v1271 = vsub.f32 %v1270, 0.13877685
    %v1272 = vmul.f32 %v1271, %v1269
    %v1273 = vadd.f32 %v1272, 0.19977711
    %v1274 = vmul.f32 %v1273, %v1269
    %v1275 = vsub.f32 %v1274, 0.3333295
    %v1276 = vmul.f32 %v1275, %v1269
    %v1277 = vmul.f32 %v1276, %v1266
    %v1278 = vadd.f32 %v1277, %v1266
    %v1279 = vadd.f32 %v1268, %v1278
    %v1280 = vmul.f32 %v1247, %v1279
    %v1282 = vsel %vm538, %v1280, 0
    %1284 = vmatprep.subr.mxu0 %v44
    %1285 = vmatpush1.msra.mxu0 %v43
    %1286 = vmatprep.subr.mxu0 0.0
    %1287 = vmatpush1.msra.mxu0 0.0
    %1288 = vmatprep.subr.mxu0 0.0
    %1289 = vmatpush1.msra.mxu0 0.0
    %1290 = vmatprep.subr.mxu0 0.0
    %1291 = vmatpush1.msra.mxu0 0.0
    %1292 = vmatprep.subr.mxu0 0.0
    %1293 = vmatpush1.msra.mxu0 0.0
    %1294 = vmatprep.subr.mxu0 0.0
    %1295 = vmatpush1.msra.mxu0 0.0
    %1296 = vmatprep.subr.mxu0 0.0
    %1297 = vmatpush1.msra.mxu0 0.0
    %1298 = vmatprep.subr.mxu0 0.0
    %1299 = vmatpush1.msra.mxu0 0.0
    %1300 = vmatprep.subr.mxu0 0.0
    %1301 = vmatpush1.msra.mxu0 0.0
    %1302 = vmatprep.subr.mxu0 0.0
    %1303 = vmatpush1.msra.mxu0 0.0
    %1304 = vmatprep.subr.mxu0 0.0
    %1305 = vmatpush1.msra.mxu0 0.0
    %1306 = vmatprep.subr.mxu0 0.0
    %1307 = vmatpush1.msra.mxu0 0.0
    %1308 = vmatprep.subr.mxu0 0.0
    %1309 = vmatpush1.msra.mxu0 0.0
    %1310 = vmatprep.subr.mxu0 0.0
    %1311 = vmatpush1.msra.mxu0 0.0
    %1312 = vmatprep.subr.mxu0 0.0
    %1313 = vmatpush1.msra.mxu0 0.0
    %1314 = vmatprep.subr.mxu0 0.0
    %1315 = vmatpush1.msra.mxu0 0.0
    %1316 = vmatprep.subr.mxu0 0.0
    %1317 = vmatpush1.msra.mxu0 0.0
    %1318 = vmatprep.subr.mxu0 0.0
    %1319 = vmatpush1.msra.mxu0 0.0
    %1320 = vmatprep.subr.mxu0 0.0
    %1321 = vmatpush1.msra.mxu0 0.0
    %1322 = vmatprep.subr.mxu0 0.0
    %1323 = vmatpush1.msra.mxu0 0.0
    %1324 = vmatprep.subr.mxu0 0.0
    %1325 = vmatpush1.msra.mxu0 0.0
    %1326 = vmatprep.subr.mxu0 0.0
    %1327 = vmatpush1.msra.mxu0 0.0
    %1328 = vmatprep.subr.mxu0 0.0
    %1329 = vmatpush1.msra.mxu0 0.0
    %1330 = vmatprep.subr.mxu0 0.0
    %1331 = vmatpush1.msra.mxu0 0.0
    %1332 = vmatprep.subr.mxu0 0.0
    %1333 = vmatpush1.msra.mxu0 0.0
    %1334 = vmatprep.subr.mxu0 0.0
    %1335 = vmatpush1.msra.mxu0 0.0
    %1336 = vmatprep.subr.mxu0 0.0
    %1337 = vmatpush1.msra.mxu0 0.0
    %1338 = vmatprep.subr.mxu0 0.0
    %1339 = vmatpush1.msra.mxu0 0.0
    %1340 = vmatprep.subr.mxu0 0.0
    %1341 = vmatpush1.msra.mxu0 0.0
    %1342 = vmatprep.subr.mxu0 0.0
    %1343 = vmatpush1.msra.mxu0 0.0
    %1344 = vmatprep.subr.mxu0 0.0
    %1345 = vmatpush1.msra.mxu0 0.0
    %1346 = vmatprep.subr.mxu0 0.0
    %1347 = vmatpush1.msra.mxu0 0.0
    %1348 = vmatprep.mubr.f32.mxu0 0.0
    %1349 = vmatmul.mubr.f32.gmra.mrb[0].mxu0 %v1282
    %v1350 = vpop.f32.mrb[0].mxu0
    %v1351 = vadd.f32 0.0, %v1350
    %v1352 = vpop.f32.mrb[0].mxu0
    %v1353 = vadd.f32 0.0, %v1352
    %1354 = vdwg.mxu0
    %1355 = vmatprep.subr.mxu0 %v46
    %1356 = vmatpush1.msra.mxu0 %v45
    %1357 = vmatprep.subr.mxu0 0.0
    %1358 = vmatpush1.msra.mxu0 0.0
    %1359 = vmatprep.subr.mxu0 0.0
    %1360 = vmatpush1.msra.mxu0 0.0
    %1361 = vmatprep.subr.mxu0 0.0
    %1362 = vmatpush1.msra.mxu0 0.0
    %1363 = vmatprep.subr.mxu0 0.0
    %1364 = vmatpush1.msra.mxu0 0.0
    %1365 = vmatprep.subr.mxu0 0.0
    %1366 = vmatpush1.msra.mxu0 0.0
    %1367 = vmatprep.subr.mxu0 0.0
    %1368 = vmatpush1.msra.mxu0 0.0
    %1369 = vmatprep.subr.mxu0 0.0
    %1370 = vmatpush1.msra.mxu0 0.0
    %1371 = vmatprep.subr.mxu0 0.0
    %1372 = vmatpush1.msra.mxu0 0.0
    %1373 = vmatprep.subr.mxu0 0.0
    %1374 = vmatpush1.msra.mxu0 0.0
    %1375 = vmatprep.subr.mxu0 0.0
    %1376 = vmatpush1.msra.mxu0 0.0
    %1377 = vmatprep.subr.mxu0 0.0
    %1378 = vmatpush1.msra.mxu0 0.0
    %1379 = vmatprep.subr.mxu0 0.0
    %1380 = vmatpush1.msra.mxu0 0.0
    %1381 = vmatprep.subr.mxu0 0.0
    %1382 = vmatpush1.msra.mxu0 0.0
    %1383 = vmatprep.subr.mxu0 0.0
    %1384 = vmatpush1.msra.mxu0 0.0
    %1385 = vmatprep.subr.mxu0 0.0
    %1386 = vmatpush1.msra.mxu0 0.0
    %1387 = vmatprep.subr.mxu0 0.0
    %1388 = vmatpush1.msra.mxu0 0.0
    %1389 = vmatprep.subr.mxu0 0.0
    %1390 = vmatpush1.msra.mxu0 0.0
    %1391 = vmatprep.subr.mxu0 0.0
    %1392 = vmatpush1.msra.mxu0 0.0
    %1393 = vmatprep.subr.mxu0 0.0
    %1394 = vmatpush1.msra.mxu0 0.0
    %1395 = vmatprep.subr.mxu0 0.0
    %1396 = vmatpush1.msra.mxu0 0.0
    %1397 = vmatprep.subr.mxu0 0.0
    %1398 = vmatpush1.msra.mxu0 0.0
    %1399 = vmatprep.subr.mxu0 0.0
    %1400 = vmatpush1.msra.mxu0 0.0
    %1401 = vmatprep.subr.mxu0 0.0
    %1402 = vmatpush1.msra.mxu0 0.0
    %1403 = vmatprep.subr.mxu0 0.0
    %1404 = vmatpush1.msra.mxu0 0.0
    %1405 = vmatprep.subr.mxu0 0.0
    %1406 = vmatpush1.msra.mxu0 0.0
    %1407 = vmatprep.subr.mxu0 0.0
    %1408 = vmatpush1.msra.mxu0 0.0
    %1409 = vmatprep.subr.mxu0 0.0
    %1410 = vmatpush1.msra.mxu0 0.0
    %1411 = vmatprep.subr.mxu0 0.0
    %1412 = vmatpush1.msra.mxu0 0.0
    %1413 = vmatprep.subr.mxu0 0.0
    %1414 = vmatpush1.msra.mxu0 0.0
    %1415 = vmatprep.subr.mxu0 0.0
    %1416 = vmatpush1.msra.mxu0 0.0
    %1417 = vmatprep.subr.mxu0 0.0
    %1418 = vmatpush1.msra.mxu0 0.0
    %1419 = vmatprep.mubr.f32.mxu0 0.0
    %1420 = vmatmul.mubr.f32.gmra.mrb[0].mxu0 %v1282
    %v1421 = vpop.f32.mrb[0].mxu0
    %v1422 = vadd.f32 0.0, %v1421
    %v1423 = vpop.f32.mrb[0].mxu0
    %v1424 = vadd.f32 0.0, %v1423
    %1425 = vdwg.mxu0
    %v1430 = vrot.slane %v1351, 7
    %v1431 = vrot.slane %v1353, 7
    %v1432 = vrot.slane %v1422, 7
    %v1433 = vrot.slane %v1424, 7
    %v1438 = vadd.f32 %v1240, %v1430
    %v1439 = vadd.f32 %v1241, %v1431
    %v1440 = vadd.f32 %v1242, %v1432
    %v1441 = vadd.f32 %v1243, %v1433
    %v1442 = vxor.u32 %v1438, 2147483648
    %v1443 = vmul.f32 %v1442, 1.442695
    %v1444 = vpow.pop %v1443
    %v1445 = vadd.f32 %v1444, 1.0
    %v1446 = vrcp.pop %v1445
    %v1447 = vmul.f32 1.0, %v1446
    %v1448 = vxor.u32 %v1439, 2147483648
    %v1449 = vmul.f32 %v1448, 1.442695
    %v1450 = vpow.pop %v1449
    %v1451 = vadd.f32 %v1450, 1.0
    %v1452 = vrcp.pop %v1451
    %v1453 = vmul.f32 1.0, %v1452
    %v1454 = vtanh.pop %v1440
    %v1455 = vxor.u32 %v1441, 2147483648
    %v1456 = vmul.f32 %v1455, 1.442695
    %v1457 = vpow.pop %v1456
    %v1458 = vadd.f32 %v1457, 1.0
    %v1459 = vrcp.pop %v1458
    %v1460 = vmul.f32 1.0, %v1459
    %v1463 = vunpack.c.l.s4 1966171168
    %v1464 = vunpack.c.0.s8 %v1463
    %v1465 = vlaneseq
    %v1466 = vshrl.u32 %v1465, 7
    %v1467 = vsub.s32 %v1464, %v1466
    %v1468 = vrot.slane %v1447, %v1467
    %v1469 = vcombine.high %v1468, %v1468
    %v1471 = vunpack.c.l.s4 1966171168
    %v1472 = vunpack.c.0.s8 %v1471
    %v1473 = vlaneseq
    %v1474 = vshrl.u32 %v1473, 7
    %v1475 = vsub.s32 %v1472, %v1474
    %v1476 = vrot.slane %v1469, %v1475
    %v1478 = vmul.f32 %v895, %v1476
    %v1479 = vmul.f32 %v1453, %v1454
    %v1482 = vunpack.c.l.s4 1966171168
    %v1483 = vunpack.c.0.s8 %v1482
    %v1484 = vlaneseq
    %v1485 = vshrl.u32 %v1484, 7
    %v1486 = vsub.s32 %v1483, %v1485
    %v1487 = vrot.slane %v1479, %v1486
    %v1488 = vcombine.high %v1487, %v1487
    %v1490 = vunpack.c.l.s4 1966171168
    %v1491 = vunpack.c.0.s8 %v1490
    %v1492 = vlaneseq
    %v1493 = vshrl.u32 %v1492, 7
    %v1494 = vsub.s32 %v1491, %v1493
    %v1495 = vrot.slane %v1488, %v1494
    %v1497 = vadd.f32 %v1478, %v1495
    %v1498 = vtanh.pop %v1497
    %v1500 = vlaneseq
    %v1501 = vshrl.u32 %v1500, 7
    %v1502 = vsub.s32 0, %v1501
    %v1503 = vrot.slane %v1498, %v1502
    %v1505 = vmul.f32 %v1460, %v1503
    %v1506 = vand.u32 2147483647, %v1505
    %vm1507 = vcmp.lt.f32.partialorder %v1505, 0.0
    %v1508 = vsel %vm1507, -1.0, 1.0
    %vm1509 = vcmp.gt.f32.partialorder %v1506, 2.4142137
    %vm1510 = vcmp.gt.f32.partialorder %v1506, 0.41421357
    %vm1511 = vmxor %vm1509, 1
    %vm1512 = vmand %vm1510, %vm1511
    %v1513 = vsel %vm1509, %v1506, 1.0
    %v1514 = vrcp.pop %v1513
    %v1515 = vmul.f32 %v1513, %v1514
    %v1516 = vsub.f32 2.0, %v1515
    %v1517 = vmul.f32 %v1514, %v1516
    %v1518 = vsub.f32 0.0, %v1517
    %v1519 = vsub.f32 %v1506, 1.0
    %v1520 = vadd.f32 %v1506, 1.0
    %v1521 = vrcp.pop %v1520
    %v1522 = vmul.f32 %v1520, %v1521
    %v1523 = vsub.f32 2.0, %v1522
    %v1524 = vmul.f32 %v1521, %v1523
    %v1525 = vmul.f32 %v1519, %v1524
    %v1526 = vsel %vm1512, %v1525, %v1506
    %v1527 = vsel %vm1509, %v1518, %v1526
    %v1528 = vsel %vm1512, 0.7853982, 0.0
    %v1529 = vsel %vm1509, 1.5707964, %v1528
    %v1530 = vmul.f32 %v1527, %v1527
    %v1531 = vmul.f32 %v1530, 0.080537446
    %v1532 = vsub.f32 %v1531, 0.13877685
    %v1533 = vmul.f32 %v1532, %v1530
    %v1534 = vadd.f32 %v1533, 0.19977711
    %v1535 = vmul.f32 %v1534, %v1530
    %v1536 = vsub.f32 %v1535, 0.3333295
    %v1537 = vmul.f32 %v1536, %v1530
    %v1538 = vmul.f32 %v1537, %v1527
    %v1539 = vadd.f32 %v1538, %v1527
    %v1540 = vadd.f32 %v1529, %v1539
    %v1541 = vmul.f32 %v1508, %v1540
    %v1542 = vmul.f32 %v1505, %v1505
    %v1543 = vand.u32 2147483647, %v1542
    %vm1544 = vcmp.lt.f32.partialorder %v1542, 0.0
    %v1545 = vsel %vm1544, -1.0, 1.0
    %vm1546 = vcmp.gt.f32.partialorder %v1543, 2.4142137
    %vm1547 = vcmp.gt.f32.partialorder %v1543, 0.41421357
    %vm1548 = vmxor %vm1546, 1
    %vm1549 = vmand %vm1547, %vm1548
    %v1550 = vsel %vm1546, %v1543, 1.0
    %v1551 = vrcp.pop %v1550
    %v1552 = vmul.f32 %v1550, %v1551
    %v1553 = vsub.f32 2.0, %v1552
    %v1554 = vmul.f32 %v1551, %v1553
    %v1555 = vsub.f32 0.0, %v1554
    %v1556 = vsub.f32 %v1543, 1.0
    %v1557 = vadd.f32 %v1543, 1.0
    %v1558 = vrcp.pop %v1557
    %v1559 = vmul.f32 %v1557, %v1558
    %v1560 = vsub.f32 2.0, %v1559
    %v1561 = vmul.f32 %v1558, %v1560
    %v1562 = vmul.f32 %v1556, %v1561
    %v1563 = vsel %vm1549, %v1562, %v1543
    %v1564 = vsel %vm1546, %v1555, %v1563
    %v1565 = vsel %vm1549, 0.7853982, 0.0
    %v1566 = vsel %vm1546, 1.5707964, %v1565
    %v1567 = vmul.f32 %v1564, %v1564
    %v1568 = vmul.f32 %v1567, 0.080537446
    %v1569 = vsub.f32 %v1568, 0.13877685
    %v1570 = vmul.f32 %v1569, %v1567
    %v1571 = vadd.f32 %v1570, 0.19977711
    %v1572 = vmul.f32 %v1571, %v1567
    %v1573 = vsub.f32 %v1572, 0.3333295
    %v1574 = vmul.f32 %v1573, %v1567
    %v1575 = vmul.f32 %v1574, %v1564
    %v1576 = vadd.f32 %v1575, %v1564
    %v1577 = vadd.f32 %v1566, %v1576
    %v1578 = vmul.f32 %v1545, %v1577
    %v1581 = vrot.slane %v1541, 1
    %v1582 = vrot.slane %v1578, 1
    %1585 = vmatprep.subr.mxu0 0.0
    %1586 = vmatpush1.msra.mxu0 %v47
    %1587 = vmatprep.subr.mxu0 0.0
    %1588 = vmatpush1.msra.mxu0 %v48
    %1589 = vmatprep.subr.mxu0 0.0
    %1590 = vmatpush1.msra.mxu0 %v49
    %1591 = vmatprep.subr.mxu0 0.0
    %1592 = vmatpush1.msra.mxu0 %v50
    %1593 = vmatprep.subr.mxu0 0.0
    %1594 = vmatpush1.msra.mxu0 %v51
    %1595 = vmatprep.subr.mxu0 0.0
    %1596 = vmatpush1.msra.mxu0 %v52
    %1597 = vmatprep.subr.mxu0 0.0
    %1598 = vmatpush1.msra.mxu0 %v53
    %1599 = vmatprep.subr.mxu0 0.0
    %1600 = vmatpush1.msra.mxu0 %v54
    %1601 = vmatprep.subr.mxu0 0.0
    %1602 = vmatpush1.msra.mxu0 %v55
    %1603 = vmatprep.subr.mxu0 0.0
    %1604 = vmatpush1.msra.mxu0 %v56
    %1605 = vmatprep.subr.mxu0 0.0
    %1606 = vmatpush1.msra.mxu0 %v57
    %1607 = vmatprep.subr.mxu0 0.0
    %1608 = vmatpush1.msra.mxu0 %v58
    %1609 = vmatprep.subr.mxu0 0.0
    %1610 = vmatpush1.msra.mxu0 %v59
    %1611 = vmatprep.subr.mxu0 0.0
    %1612 = vmatpush1.msra.mxu0 %v60
    %1613 = vmatprep.subr.mxu0 0.0
    %1614 = vmatpush1.msra.mxu0 %v61
    %1615 = vmatprep.subr.mxu0 0.0
    %1616 = vmatpush1.msra.mxu0 %v62
    %1617 = vmatprep.subr.mxu0 0.0
    %1618 = vmatpush1.msra.mxu0 %v63
    %1619 = vmatprep.subr.mxu0 0.0
    %1620 = vmatpush1.msra.mxu0 %v64
    %1621 = vmatprep.subr.mxu0 0.0
    %1622 = vmatpush1.msra.mxu0 %v65
    %1623 = vmatprep.subr.mxu0 0.0
    %1624 = vmatpush1.msra.mxu0 %v66
    %1625 = vmatprep.subr.mxu0 0.0
    %1626 = vmatpush1.msra.mxu0 %v67
    %1627 = vmatprep.subr.mxu0 0.0
    %1628 = vmatpush1.msra.mxu0 %v68
    %1629 = vmatprep.subr.mxu0 0.0
    %1630 = vmatpush1.msra.mxu0 %v69
    %1631 = vmatprep.subr.mxu0 0.0
    %1632 = vmatpush1.msra.mxu0 %v70
    %1633 = vmatprep.subr.mxu0 0.0
    %1634 = vmatpush1.msra.mxu0 %v71
    %1635 = vmatprep.subr.mxu0 0.0
    %1636 = vmatpush1.msra.mxu0 %v72
    %1637 = vmatprep.subr.mxu0 0.0
    %1638 = vmatpush1.msra.mxu0 %v73
    %1639 = vmatprep.subr.mxu0 0.0
    %1640 = vmatpush1.msra.mxu0 %v74
    %1641 = vmatprep.subr.mxu0 0.0
    %1642 = vmatpush1.msra.mxu0 %v75
    %1643 = vmatprep.subr.mxu0 0.0
    %1644 = vmatpush1.msra.mxu0 %v76
    %1645 = vmatprep.subr.mxu0 0.0
    %1646 = vmatpush1.msra.mxu0 %v77
    %1647 = vmatprep.subr.mxu0 0.0
    %1648 = vmatpush1.msra.mxu0 %v78
    %1649 = vmatprep.mubr.f32.mxu0 %v1582
    %1650 = vmatmul.mubr.f32.gmra.mrb[0].mxu0 %v1581
    %v1651 = vpop.f32.mrb[0].mxu0
    %v1652 = vadd.f32 %v79, %v1651
    %v1653 = vpop.f32.mrb[0].mxu0
    %1654 = vdwg.mxu0
    %1656 = vrot.lane.b32.xlu0 %v1652, 120
    %v1657 = vpop.permute.xlu0 %1656
    %1659 = vst.msk [vmem:[%s9 + $0x1] sm:$0x1] %vm1045, %v1657
    %v1660 = vand.u32 2147483647, %v1652
    %vm1661 = vcmp.lt.f32.partialorder %v1652, 0.0
    %v1662 = vsel %vm1661, -1.0, 1.0
    %vm1663 = vcmp.gt.f32.partialorder %v1660, 2.4142137
    %vm1664 = vcmp.gt.f32.partialorder %v1660, 0.41421357
    %vm1665 = vmxor %vm1663, 1
    %vm1666 = vmand %vm1664, %vm1665
    %v1667 = vsel %vm1663, %v1660, 1.0
    %v1668 = vrcp.pop %v1667
    %v1669 = vmul.f32 %v1667, %v1668
    %v1670 = vsub.f32 2.0, %v1669
    %v1671 = vmul.f32 %v1668, %v1670
    %v1672 = vsub.f32 0.0, %v1671
    %v1673 = vsub.f32 %v1660, 1.0
    %v1674 = vadd.f32 %v1660, 1.0
    %v1675 = vrcp.pop %v1674
    %v1676 = vmul.f32 %v1674, %v1675
    %v1677 = vsub.f32 2.0, %v1676
    %v1678 = vmul.f32 %v1675, %v1677
    %v1679 = vmul.f32 %v1673, %v1678
    %v1680 = vsel %vm1666, %v1679, %v1660
    %v1681 = vsel %vm1663, %v1672, %v1680
    %v1682 = vsel %vm1666, 0.7853982, 0.0
    %v1683 = vsel %vm1663, 1.5707964, %v1682
    %v1684 = vmul.f32 %v1681, %v1681
    %v1685 = vmul.f32 %v1684, 0.080537446
    %v1686 = vsub.f32 %v1685, 0.13877685
    %v1687 = vmul.f32 %v1686, %v1684
    %v1688 = vadd.f32 %v1687, 0.19977711
    %v1689 = vmul.f32 %v1688, %v1684
    %v1690 = vsub.f32 %v1689, 0.3333295
    %v1691 = vmul.f32 %v1690, %v1684
    %v1692 = vmul.f32 %v1691, %v1681
    %v1693 = vadd.f32 %v1692, %v1681
    %v1694 = vadd.f32 %v1683, %v1693
    %v1695 = vmul.f32 %v1662, %v1694
    %v1697 = vsel %vm538, %v1695, 0
    %1699 = vmatprep.subr.mxu0 %v40
    %1700 = vmatpush1.msra.mxu0 %v39
    %1701 = vmatprep.subr.mxu0 0.0
    %1702 = vmatpush1.msra.mxu0 0.0
    %1703 = vmatprep.subr.mxu0 0.0
    %1704 = vmatpush1.msra.mxu0 0.0
    %1705 = vmatprep.subr.mxu0 0.0
    %1706 = vmatpush1.msra.mxu0 0.0
    %1707 = vmatprep.subr.mxu0 0.0
    %1708 = vmatpush1.msra.mxu0 0.0
    %1709 = vmatprep.subr.mxu0 0.0
    %1710 = vmatpush1.msra.mxu0 0.0
    %1711 = vmatprep.subr.mxu0 0.0
    %1712 = vmatpush1.msra.mxu0 0.0
    %1713 = vmatprep.subr.mxu0 0.0
    %1714 = vmatpush1.msra.mxu0 0.0
    %1715 = vmatprep.subr.mxu0 0.0
    %1716 = vmatpush1.msra.mxu0 0.0
    %1717 = vmatprep.subr.mxu0 0.0
    %1718 = vmatpush1.msra.mxu0 0.0
    %1719 = vmatprep.subr.mxu0 0.0
    %1720 = vmatpush1.msra.mxu0 0.0
    %1721 = vmatprep.subr.mxu0 0.0
    %1722 = vmatpush1.msra.mxu0 0.0
    %1723 = vmatprep.subr.mxu0 0.0
    %1724 = vmatpush1.msra.mxu0 0.0
    %1725 = vmatprep.subr.mxu0 0.0
    %1726 = vmatpush1.msra.mxu0 0.0
    %1727 = vmatprep.subr.mxu0 0.0
    %1728 = vmatpush1.msra.mxu0 0.0
    %1729 = vmatprep.subr.mxu0 0.0
    %1730 = vmatpush1.msra.mxu0 0.0
    %1731 = vmatprep.subr.mxu0 0.0
    %1732 = vmatpush1.msra.mxu0 0.0
    %1733 = vmatprep.subr.mxu0 0.0
    %1734 = vmatpush1.msra.mxu0 0.0
    %1735 = vmatprep.subr.mxu0 0.0
    %1736 = vmatpush1.msra.mxu0 0.0
    %1737 = vmatprep.subr.mxu0 0.0
    %1738 = vmatpush1.msra.mxu0 0.0
    %1739 = vmatprep.subr.mxu0 0.0
    %1740 = vmatpush1.msra.mxu0 0.0
    %1741 = vmatprep.subr.mxu0 0.0
    %1742 = vmatpush1.msra.mxu0 0.0
    %1743 = vmatprep.subr.mxu0 0.0
    %1744 = vmatpush1.msra.mxu0 0.0
    %1745 = vmatprep.subr.mxu0 0.0
    %1746 = vmatpush1.msra.mxu0 0.0
    %1747 = vmatprep.subr.mxu0 0.0
    %1748 = vmatpush1.msra.mxu0 0.0
    %1749 = vmatprep.subr.mxu0 0.0
    %1750 = vmatpush1.msra.mxu0 0.0
    %1751 = vmatprep.subr.mxu0 0.0
    %1752 = vmatpush1.msra.mxu0 0.0
    %1753 = vmatprep.subr.mxu0 0.0
    %1754 = vmatpush1.msra.mxu0 0.0
    %1755 = vmatprep.subr.mxu0 0.0
    %1756 = vmatpush1.msra.mxu0 0.0
    %1757 = vmatprep.subr.mxu0 0.0
    %1758 = vmatpush1.msra.mxu0 0.0
    %1759 = vmatprep.subr.mxu0 0.0
    %1760 = vmatpush1.msra.mxu0 0.0
    %1761 = vmatprep.subr.mxu0 0.0
    %1762 = vmatpush1.msra.mxu0 0.0
    %1763 = vmatprep.mubr.f32.mxu0 0.0
    %1764 = vmatmul.mubr.f32.gmra.mrb[0].mxu0 %v1697
    %v1765 = vpop.f32.mrb[0].mxu0
    %v1766 = vadd.f32 0.0, %v1765
    %v1767 = vpop.f32.mrb[0].mxu0
    %v1768 = vadd.f32 0.0, %v1767
    %1769 = vdwg.mxu0
    %1770 = vmatprep.subr.mxu0 %v42
    %1771 = vmatpush1.msra.mxu0 %v41
    %1772 = vmatprep.subr.mxu0 0.0
    %1773 = vmatpush1.msra.mxu0 0.0
    %1774 = vmatprep.subr.mxu0 0.0
    %1775 = vmatpush1.msra.mxu0 0.0
    %1776 = vmatprep.subr.mxu0 0.0
    %1777 = vmatpush1.msra.mxu0 0.0
    %1778 = vmatprep.subr.mxu0 0.0
    %1779 = vmatpush1.msra.mxu0 0.0
    %1780 = vmatprep.subr.mxu0 0.0
    %1781 = vmatpush1.msra.mxu0 0.0
    %1782 = vmatprep.subr.mxu0 0.0
    %1783 = vmatpush1.msra.mxu0 0.0
    %1784 = vmatprep.subr.mxu0 0.0
    %1785 = vmatpush1.msra.mxu0 0.0
    %1786 = vmatprep.subr.mxu0 0.0
    %1787 = vmatpush1.msra.mxu0 0.0
    %1788 = vmatprep.subr.mxu0 0.0
    %1789 = vmatpush1.msra.mxu0 0.0
    %1790 = vmatprep.subr.mxu0 0.0
    %1791 = vmatpush1.msra.mxu0 0.0
    %1792 = vmatprep.subr.mxu0 0.0
    %1793 = vmatpush1.msra.mxu0 0.0
    %1794 = vmatprep.subr.mxu0 0.0
    %1795 = vmatpush1.msra.mxu0 0.0
    %1796 = vmatprep.subr.mxu0 0.0
    %1797 = vmatpush1.msra.mxu0 0.0
    %1798 = vmatprep.subr.mxu0 0.0
    %1799 = vmatpush1.msra.mxu0 0.0
    %1800 = vmatprep.subr.mxu0 0.0
    %1801 = vmatpush1.msra.mxu0 0.0
    %1802 = vmatprep.subr.mxu0 0.0
    %1803 = vmatpush1.msra.mxu0 0.0
    %1804 = vmatprep.subr.mxu0 0.0
    %1805 = vmatpush1.msra.mxu0 0.0
    %1806 = vmatprep.subr.mxu0 0.0
    %1807 = vmatpush1.msra.mxu0 0.0
    %1808 = vmatprep.subr.mxu0 0.0
    %1809 = vmatpush1.msra.mxu0 0.0
    %1810 = vmatprep.subr.mxu0 0.0
    %1811 = vmatpush1.msra.mxu0 0.0
    %1812 = vmatprep.subr.mxu0 0.0
    %1813 = vmatpush1.msra.mxu0 0.0
    %1814 = vmatprep.subr.mxu0 0.0
    %1815 = vmatpush1.msra.mxu0 0.0
    %1816 = vmatprep.subr.mxu0 0.0
    %1817 = vmatpush1.msra.mxu0 0.0
    %1818 = vmatprep.subr.mxu0 0.0
    %1819 = vmatpush1.msra.mxu0 0.0
    %1820 = vmatprep.subr.mxu0 0.0
    %1821 = vmatpush1.msra.mxu0 0.0
    %1822 = vmatprep.subr.mxu0 0.0
    %1823 = vmatpush1.msra.mxu0 0.0
    %1824 = vmatprep.subr.mxu0 0.0
    %1825 = vmatpush1.msra.mxu0 0.0
    %1826 = vmatprep.subr.mxu0 0.0
    %1827 = vmatpush1.msra.mxu0 0.0
    %1828 = vmatprep.subr.mxu0 0.0
    %1829 = vmatpush1.msra.mxu0 0.0
    %1830 = vmatprep.subr.mxu0 0.0
    %1831 = vmatpush1.msra.mxu0 0.0
    %1832 = vmatprep.subr.mxu0 0.0
    %1833 = vmatpush1.msra.mxu0 0.0
    %1834 = vmatprep.mubr.f32.mxu0 0.0
    %1835 = vmatmul.mubr.f32.gmra.mrb[0].mxu0 %v1697
    %v1836 = vpop.f32.mrb[0].mxu0
    %v1837 = vadd.f32 0.0, %v1836
    %v1838 = vpop.f32.mrb[0].mxu0
    %v1839 = vadd.f32 0.0, %v1838
    %1840 = vdwg.mxu0
    %v1845 = vrot.slane %v1766, 6
    %v1846 = vrot.slane %v1768, 6
    %v1847 = vrot.slane %v1837, 6
    %v1848 = vrot.slane %v1839, 6
    %v1853 = vadd.f32 %v496, %v1845
    %v1854 = vadd.f32 %v497, %v1846
    %v1855 = vadd.f32 %v498, %v1847
    %v1856 = vadd.f32 %v499, %v1848
    %v1857 = vmul.f32 %v1652, %v1652
    %v1858 = vand.u32 2147483647, %v1857
    %vm1859 = vcmp.lt.f32.partialorder %v1857, 0.0
    %v1860 = vsel %vm1859, -1.0, 1.0
    %vm1861 = vcmp.gt.f32.partialorder %v1858, 2.4142137
    %vm1862 = vcmp.gt.f32.partialorder %v1858, 0.41421357
    %vm1863 = vmxor %vm1861, 1
    %vm1864 = vmand %vm1862, %vm1863
    %v1865 = vsel %vm1861, %v1858, 1.0
    %v1866 = vrcp.pop %v1865
    %v1867 = vmul.f32 %v1865, %v1866
    %v1868 = vsub.f32 2.0, %v1867
    %v1869 = vmul.f32 %v1866, %v1868
    %v1870 = vsub.f32 0.0, %v1869
    %v1871 = vsub.f32 %v1858, 1.0
    %v1872 = vadd.f32 %v1858, 1.0
    %v1873 = vrcp.pop %v1872
    %v1874 = vmul.f32 %v1872, %v1873
    %v1875 = vsub.f32 2.0, %v1874
    %v1876 = vmul.f32 %v1873, %v1875
    %v1877 = vmul.f32 %v1871, %v1876
    %v1878 = vsel %vm1864, %v1877, %v1858
    %v1879 = vsel %vm1861, %v1870, %v1878
    %v1880 = vsel %vm1864, 0.7853982, 0.0
    %v1881 = vsel %vm1861, 1.5707964, %v1880
    %v1882 = vmul.f32 %v1879, %v1879
    %v1883 = vmul.f32 %v1882, 0.080537446
    %v1884 = vsub.f32 %v1883, 0.13877685
    %v1885 = vmul.f32 %v1884, %v1882
    %v1886 = vadd.f32 %v1885, 0.19977711
    %v1887 = vmul.f32 %v1886, %v1882
    %v1888 = vsub.f32 %v1887, 0.3333295
    %v1889 = vmul.f32 %v1888, %v1882
    %v1890 = vmul.f32 %v1889, %v1879
    %v1891 = vadd.f32 %v1890, %v1879
    %v1892 = vadd.f32 %v1881, %v1891
    %v1893 = vmul.f32 %v1860, %v1892
    %v1895 = vsel %vm538, %v1893, 0
    %1897 = vmatprep.subr.mxu0 %v44
    %1898 = vmatpush1.msra.mxu0 %v43
    %1899 = vmatprep.subr.mxu0 0.0
    %1900 = vmatpush1.msra.mxu0 0.0
    %1901 = vmatprep.subr.mxu0 0.0
    %1902 = vmatpush1.msra.mxu0 0.0
    %1903 = vmatprep.subr.mxu0 0.0
    %1904 = vmatpush1.msra.mxu0 0.0
    %1905 = vmatprep.subr.mxu0 0.0
    %1906 = vmatpush1.msra.mxu0 0.0
    %1907 = vmatprep.subr.mxu0 0.0
    %1908 = vmatpush1.msra.mxu0 0.0
    %1909 = vmatprep.subr.mxu0 0.0
    %1910 = vmatpush1.msra.mxu0 0.0
    %1911 = vmatprep.subr.mxu0 0.0
    %1912 = vmatpush1.msra.mxu0 0.0
    %1913 = vmatprep.subr.mxu0 0.0
    %1914 = vmatpush1.msra.mxu0 0.0
    %1915 = vmatprep.subr.mxu0 0.0
    %1916 = vmatpush1.msra.mxu0 0.0
    %1917 = vmatprep.subr.mxu0 0.0
    %1918 = vmatpush1.msra.mxu0 0.0
    %1919 = vmatprep.subr.mxu0 0.0
    %1920 = vmatpush1.msra.mxu0 0.0
    %1921 = vmatprep.subr.mxu0 0.0
    %1922 = vmatpush1.msra.mxu0 0.0
    %1923 = vmatprep.subr.mxu0 0.0
    %1924 = vmatpush1.msra.mxu0 0.0
    %1925 = vmatprep.subr.mxu0 0.0
    %1926 = vmatpush1.msra.mxu0 0.0
    %1927 = vmatprep.subr.mxu0 0.0
    %1928 = vmatpush1.msra.mxu0 0.0
    %1929 = vmatprep.subr.mxu0 0.0
    %1930 = vmatpush1.msra.mxu0 0.0
    %1931 = vmatprep.subr.mxu0 0.0
    %1932 = vmatpush1.msra.mxu0 0.0
    %1933 = vmatprep.subr.mxu0 0.0
    %1934 = vmatpush1.msra.mxu0 0.0
    %1935 = vmatprep.subr.mxu0 0.0
    %1936 = vmatpush1.msra.mxu0 0.0
    %1937 = vmatprep.subr.mxu0 0.0
    %1938 = vmatpush1.msra.mxu0 0.0
    %1939 = vmatprep.subr.mxu0 0.0
    %1940 = vmatpush1.msra.mxu0 0.0
    %1941 = vmatprep.subr.mxu0 0.0
    %1942 = vmatpush1.msra.mxu0 0.0
    %1943 = vmatprep.subr.mxu0 0.0
    %1944 = vmatpush1.msra.mxu0 0.0
    %1945 = vmatprep.subr.mxu0 0.0
    %1946 = vmatpush1.msra.mxu0 0.0
    %1947 = vmatprep.subr.mxu0 0.0
    %1948 = vmatpush1.msra.mxu0 0.0
    %1949 = vmatprep.subr.mxu0 0.0
    %1950 = vmatpush1.msra.mxu0 0.0
    %1951 = vmatprep.subr.mxu0 0.0
    %1952 = vmatpush1.msra.mxu0 0.0
    %1953 = vmatprep.subr.mxu0 0.0
    %1954 = vmatpush1.msra.mxu0 0.0
    %1955 = vmatprep.subr.mxu0 0.0
    %1956 = vmatpush1.msra.mxu0 0.0
    %1957 = vmatprep.subr.mxu0 0.0
    %1958 = vmatpush1.msra.mxu0 0.0
    %1959 = vmatprep.subr.mxu0 0.0
    %1960 = vmatpush1.msra.mxu0 0.0
    %1961 = vmatprep.mubr.f32.mxu0 0.0
    %1962 = vmatmul.mubr.f32.gmra.mrb[0].mxu0 %v1895
    %v1963 = vpop.f32.mrb[0].mxu0
    %v1964 = vadd.f32 0.0, %v1963
    %v1965 = vpop.f32.mrb[0].mxu0
    %v1966 = vadd.f32 0.0, %v1965
    %1967 = vdwg.mxu0
    %1968 = vmatprep.subr.mxu0 %v46
    %1969 = vmatpush1.msra.mxu0 %v45
    %1970 = vmatprep.subr.mxu0 0.0
    %1971 = vmatpush1.msra.mxu0 0.0
    %1972 = vmatprep.subr.mxu0 0.0
    %1973 = vmatpush1.msra.mxu0 0.0
    %1974 = vmatprep.subr.mxu0 0.0
    %1975 = vmatpush1.msra.mxu0 0.0
    %1976 = vmatprep.subr.mxu0 0.0
    %1977 = vmatpush1.msra.mxu0 0.0
    %1978 = vmatprep.subr.mxu0 0.0
    %1979 = vmatpush1.msra.mxu0 0.0
    %1980 = vmatprep.subr.mxu0 0.0
    %1981 = vmatpush1.msra.mxu0 0.0
    %1982 = vmatprep.subr.mxu0 0.0
    %1983 = vmatpush1.msra.mxu0 0.0
    %1984 = vmatprep.subr.mxu0 0.0
    %1985 = vmatpush1.msra.mxu0 0.0
    %1986 = vmatprep.subr.mxu0 0.0
    %1987 = vmatpush1.msra.mxu0 0.0
    %1988 = vmatprep.subr.mxu0 0.0
    %1989 = vmatpush1.msra.mxu0 0.0
    %1990 = vmatprep.subr.mxu0 0.0
    %1991 = vmatpush1.msra.mxu0 0.0
    %1992 = vmatprep.subr.mxu0 0.0
    %1993 = vmatpush1.msra.mxu0 0.0
    %1994 = vmatprep.subr.mxu0 0.0
    %1995 = vmatpush1.msra.mxu0 0.0
    %1996 = vmatprep.subr.mxu0 0.0
    %1997 = vmatpush1.msra.mxu0 0.0
    %1998 = vmatprep.subr.mxu0 0.0
    %1999 = vmatpush1.msra.mxu0 0.0
    %2000 = vmatprep.subr.mxu0 0.0
    %2001 = vmatpush1.msra.mxu0 0.0
    %2002 = vmatprep.subr.mxu0 0.0
    %2003 = vmatpush1.msra.mxu0 0.0
    %2004 = vmatprep.subr.mxu0 0.0
    %2005 = vmatpush1.msra.mxu0 0.0
    %2006 = vmatprep.subr.mxu0 0.0
    %2007 = vmatpush1.msra.mxu0 0.0
    %2008 = vmatprep.subr.mxu0 0.0
    %2009 = vmatpush1.msra.mxu0 0.0
    %2010 = vmatprep.subr.mxu0 0.0
    %2011 = vmatpush1.msra.mxu0 0.0
    %2012 = vmatprep.subr.mxu0 0.0
    %2013 = vmatpush1.msra.mxu0 0.0
    %2014 = vmatprep.subr.mxu0 0.0
    %2015 = vmatpush1.msra.mxu0 0.0
    %2016 = vmatprep.subr.mxu0 0.0
    %2017 = vmatpush1.msra.mxu0 0.0
    %2018 = vmatprep.subr.mxu0 0.0
    %2019 = vmatpush1.msra.mxu0 0.0
    %2020 = vmatprep.subr.mxu0 0.0
    %2021 = vmatpush1.msra.mxu0 0.0
    %2022 = vmatprep.subr.mxu0 0.0
    %2023 = vmatpush1.msra.mxu0 0.0
    %2024 = vmatprep.subr.mxu0 0.0
    %2025 = vmatpush1.msra.mxu0 0.0
    %2026 = vmatprep.subr.mxu0 0.0
    %2027 = vmatpush1.msra.mxu0 0.0
    %2028 = vmatprep.subr.mxu0 0.0
    %2029 = vmatpush1.msra.mxu0 0.0
    %2030 = vmatprep.subr.mxu0 0.0
    %2031 = vmatpush1.msra.mxu0 0.0
    %2032 = vmatprep.mubr.f32.mxu0 0.0
    %2033 = vmatmul.mubr.f32.gmra.mrb[0].mxu0 %v1895
    %v2034 = vpop.f32.mrb[0].mxu0
    %v2035 = vadd.f32 0.0, %v2034
    %v2036 = vpop.f32.mrb[0].mxu0
    %v2037 = vadd.f32 0.0, %v2036
    %2038 = vdwg.mxu0
    %v2043 = vrot.slane %v1964, 6
    %v2044 = vrot.slane %v1966, 6
    %v2045 = vrot.slane %v2035, 6
    %v2046 = vrot.slane %v2037, 6
    %v2051 = vadd.f32 %v1853, %v2043
    %v2052 = vadd.f32 %v1854, %v2044
    %v2053 = vadd.f32 %v1855, %v2045
    %v2054 = vadd.f32 %v1856, %v2046
    %v2055 = vxor.u32 %v2051, 2147483648
    %v2056 = vmul.f32 %v2055, 1.442695
    %v2057 = vpow.pop %v2056
    %v2058 = vadd.f32 %v2057, 1.0
    %v2059 = vrcp.pop %v2058
    %v2060 = vmul.f32 1.0, %v2059
    %v2061 = vxor.u32 %v2052, 2147483648
    %v2062 = vmul.f32 %v2061, 1.442695
    %v2063 = vpow.pop %v2062
    %v2064 = vadd.f32 %v2063, 1.0
    %v2065 = vrcp.pop %v2064
    %v2066 = vmul.f32 1.0, %v2065
    %v2067 = vtanh.pop %v2053
    %v2068 = vxor.u32 %v2054, 2147483648
    %v2069 = vmul.f32 %v2068, 1.442695
    %v2070 = vpow.pop %v2069
    %v2071 = vadd.f32 %v2070, 1.0
    %v2072 = vrcp.pop %v2071
    %v2073 = vmul.f32 1.0, %v2072
    %v2076 = vunpack.c.l.s4 1966171168
    %v2077 = vunpack.c.0.s8 %v2076
    %v2078 = vlaneseq
    %v2079 = vshrl.u32 %v2078, 7
    %v2080 = vsub.s32 %v2077, %v2079
    %v2081 = vrot.slane %v2060, %v2080
    %v2083 = vunpack.c.l.s4 1966171168
    %v2084 = vunpack.c.0.s8 %v2083
    %v2085 = vlaneseq
    %v2086 = vshrl.u32 %v2085, 7
    %v2087 = vsub.s32 %v2084, %v2086
    %v2088 = vrot.slane %v2081, %v2087
    %v2089 = vcombine.high %v2088, %v2088
    %v2091 = vmul.f32 %v1497, %v2089
    %v2092 = vmul.f32 %v2066, %v2067
    %v2095 = vunpack.c.l.s4 1966171168
    %v2096 = vunpack.c.0.s8 %v2095
    %v2097 = vlaneseq
    %v2098 = vshrl.u32 %v2097, 7
    %v2099 = vsub.s32 %v2096, %v2098
    %v2100 = vrot.slane %v2092, %v2099
    %v2102 = vunpack.c.l.s4 1966171168
    %v2103 = vunpack.c.0.s8 %v2102
    %v2104 = vlaneseq
    %v2105 = vshrl.u32 %v2104, 7
    %v2106 = vsub.s32 %v2103, %v2105
    %v2107 = vrot.slane %v2100, %v2106
    %v2108 = vcombine.high %v2107, %v2107
    %v2110 = vadd.f32 %v2091, %v2108
    %v2111 = vtanh.pop %v2110
    %v2113 = vlaneseq
    %v2114 = vshrl.u32 %v2113, 7
    %v2115 = vsub.s32 0, %v2114
    %v2116 = vrot.slane %v2111, %v2115
    %v2118 = vmul.f32 %v2073, %v2116
    %v2119 = vand.u32 2147483647, %v2118
    %vm2120 = vcmp.lt.f32.partialorder %v2118, 0.0
    %v2121 = vsel %vm2120, -1.0, 1.0
    %vm2122 = vcmp.gt.f32.partialorder %v2119, 2.4142137
    %vm2123 = vcmp.gt.f32.partialorder %v2119, 0.41421357
    %vm2124 = vmxor %vm2122, 1
    %vm2125 = vmand %vm2123, %vm2124
    %v2126 = vsel %vm2122, %v2119, 1.0
    %v2127 = vrcp.pop %v2126
    %v2128 = vmul.f32 %v2126, %v2127
    %v2129 = vsub.f32 2.0, %v2128
    %v2130 = vmul.f32 %v2127, %v2129
    %v2131 = vsub.f32 0.0, %v2130
    %v2132 = vsub.f32 %v2119, 1.0
    %v2133 = vadd.f32 %v2119, 1.0
    %v2134 = vrcp.pop %v2133
    %v2135 = vmul.f32 %v2133, %v2134
    %v2136 = vsub.f32 2.0, %v2135
    %v2137 = vmul.f32 %v2134, %v2136
    %v2138 = vmul.f32 %v2132, %v2137
    %v2139 = vsel %vm2125, %v2138, %v2119
    %v2140 = vsel %vm2122, %v2131, %v2139
    %v2141 = vsel %vm2125, 0.7853982, 0.0
    %v2142 = vsel %vm2122, 1.5707964, %v2141
    %v2143 = vmul.f32 %v2140, %v2140
    %v2144 = vmul.f32 %v2143, 0.080537446
    %v2145 = vsub.f32 %v2144, 0.13877685
    %v2146 = vmul.f32 %v2145, %v2143
    %v2147 = vadd.f32 %v2146, 0.19977711
    %v2148 = vmul.f32 %v2147, %v2143
    %v2149 = vsub.f32 %v2148, 0.3333295
    %v2150 = vmul.f32 %v2149, %v2143
    %v2151 = vmul.f32 %v2150, %v2140
    %v2152 = vadd.f32 %v2151, %v2140
    %v2153 = vadd.f32 %v2142, %v2152
    %v2154 = vmul.f32 %v2121, %v2153
    %v2155 = vmul.f32 %v2118, %v2118
    %v2156 = vand.u32 2147483647, %v2155
    %vm2157 = vcmp.lt.f32.partialorder %v2155, 0.0
    %v2158 = vsel %vm2157, -1.0, 1.0
    %vm2159 = vcmp.gt.f32.partialorder %v2156, 2.4142137
    %vm2160 = vcmp.gt.f32.partialorder %v2156, 0.41421357
    %vm2161 = vmxor %vm2159, 1
    %vm2162 = vmand %vm2160, %vm2161
    %v2163 = vsel %vm2159, %v2156, 1.0
    %v2164 = vrcp.pop %v2163
    %v2165 = vmul.f32 %v2163, %v2164
    %v2166 = vsub.f32 2.0, %v2165
    %v2167 = vmul.f32 %v2164, %v2166
    %v2168 = vsub.f32 0.0, %v2167
    %v2169 = vsub.f32 %v2156, 1.0
    %v2170 = vadd.f32 %v2156, 1.0
    %v2171 = vrcp.pop %v2170
    %v2172 = vmul.f32 %v2170, %v2171
    %v2173 = vsub.f32 2.0, %v2172
    %v2174 = vmul.f32 %v2171, %v2173
    %v2175 = vmul.f32 %v2169, %v2174
    %v2176 = vsel %vm2162, %v2175, %v2156
    %v2177 = vsel %vm2159, %v2168, %v2176
    %v2178 = vsel %vm2162, 0.7853982, 0.0
    %v2179 = vsel %vm2159, 1.5707964, %v2178
    %v2180 = vmul.f32 %v2177, %v2177
    %v2181 = vmul.f32 %v2180, 0.080537446
    %v2182 = vsub.f32 %v2181, 0.13877685
    %v2183 = vmul.f32 %v2182, %v2180
    %v2184 = vadd.f32 %v2183, 0.19977711
    %v2185 = vmul.f32 %v2184, %v2180
    %v2186 = vsub.f32 %v2185, 0.3333295
    %v2187 = vmul.f32 %v2186, %v2180
    %v2188 = vmul.f32 %v2187, %v2177
    %v2189 = vadd.f32 %v2188, %v2177
    %v2190 = vadd.f32 %v2179, %v2189
    %v2191 = vmul.f32 %v2158, %v2190
    %v2194 = vrot.slane %v2154, 2
    %v2195 = vrot.slane %v2191, 2
    %2198 = vmatprep.subr.mxu0 0.0
    %2199 = vmatpush1.msra.mxu0 %v47
    %2200 = vmatprep.subr.mxu0 0.0
    %2201 = vmatpush1.msra.mxu0 %v48
    %2202 = vmatprep.subr.mxu0 0.0
    %2203 = vmatpush1.msra.mxu0 %v49
    %2204 = vmatprep.subr.mxu0 0.0
    %2205 = vmatpush1.msra.mxu0 %v50
    %2206 = vmatprep.subr.mxu0 0.0
    %2207 = vmatpush1.msra.mxu0 %v51
    %2208 = vmatprep.subr.mxu0 0.0
    %2209 = vmatpush1.msra.mxu0 %v52
    %2210 = vmatprep.subr.mxu0 0.0
    %2211 = vmatpush1.msra.mxu0 %v53
    %2212 = vmatprep.subr.mxu0 0.0
    %2213 = vmatpush1.msra.mxu0 %v54
    %2214 = vmatprep.subr.mxu0 0.0
    %2215 = vmatpush1.msra.mxu0 %v55
    %2216 = vmatprep.subr.mxu0 0.0
    %2217 = vmatpush1.msra.mxu0 %v56
    %2218 = vmatprep.subr.mxu0 0.0
    %2219 = vmatpush1.msra.mxu0 %v57
    %2220 = vmatprep.subr.mxu0 0.0
    %2221 = vmatpush1.msra.mxu0 %v58
    %2222 = vmatprep.subr.mxu0 0.0
    %2223 = vmatpush1.msra.mxu0 %v59
    %2224 = vmatprep.subr.mxu0 0.0
    %2225 = vmatpush1.msra.mxu0 %v60
    %2226 = vmatprep.subr.mxu0 0.0
    %2227 = vmatpush1.msra.mxu0 %v61
    %2228 = vmatprep.subr.mxu0 0.0
    %2229 = vmatpush1.msra.mxu0 %v62
    %2230 = vmatprep.subr.mxu0 0.0
    %2231 = vmatpush1.msra.mxu0 %v63
    %2232 = vmatprep.subr.mxu0 0.0
    %2233 = vmatpush1.msra.mxu0 %v64
    %2234 = vmatprep.subr.mxu0 0.0
    %2235 = vmatpush1.msra.mxu0 %v65
    %2236 = vmatprep.subr.mxu0 0.0
    %2237 = vmatpush1.msra.mxu0 %v66
    %2238 = vmatprep.subr.mxu0 0.0
    %2239 = vmatpush1.msra.mxu0 %v67
    %2240 = vmatprep.subr.mxu0 0.0
    %2241 = vmatpush1.msra.mxu0 %v68
    %2242 = vmatprep.subr.mxu0 0.0
    %2243 = vmatpush1.msra.mxu0 %v69
    %2244 = vmatprep.subr.mxu0 0.0
    %2245 = vmatpush1.msra.mxu0 %v70
    %2246 = vmatprep.subr.mxu0 0.0
    %2247 = vmatpush1.msra.mxu0 %v71
    %2248 = vmatprep.subr.mxu0 0.0
    %2249 = vmatpush1.msra.mxu0 %v72
    %2250 = vmatprep.subr.mxu0 0.0
    %2251 = vmatpush1.msra.mxu0 %v73
    %2252 = vmatprep.subr.mxu0 0.0
    %2253 = vmatpush1.msra.mxu0 %v74
    %2254 = vmatprep.subr.mxu0 0.0
    %2255 = vmatpush1.msra.mxu0 %v75
    %2256 = vmatprep.subr.mxu0 0.0
    %2257 = vmatpush1.msra.mxu0 %v76
    %2258 = vmatprep.subr.mxu0 0.0
    %2259 = vmatpush1.msra.mxu0 %v77
    %2260 = vmatprep.subr.mxu0 0.0
    %2261 = vmatpush1.msra.mxu0 %v78
    %2262 = vmatprep.mubr.f32.mxu0 %v2195
    %2263 = vmatmul.mubr.f32.gmra.mrb[0].mxu0 %v2194
    %v2264 = vpop.f32.mrb[0].mxu0
    %v2265 = vadd.f32 %v79, %v2264
    %v2266 = vpop.f32.mrb[0].mxu0
    %2267 = vdwg.mxu0
    %2269 = vrot.lane.b32.xlu0 %v2265, 120
    %v2270 = vpop.permute.xlu0 %2269
    %2272 = vst.msk [vmem:[%s9 + $0x2] sm:$0x1] %vm1045, %v2270
    %v2273 = vand.u32 2147483647, %v2265
    %vm2274 = vcmp.lt.f32.partialorder %v2265, 0.0
    %v2275 = vsel %vm2274, -1.0, 1.0
    %vm2276 = vcmp.gt.f32.partialorder %v2273, 2.4142137
    %vm2277 = vcmp.gt.f32.partialorder %v2273, 0.41421357
    %vm2278 = vmxor %vm2276, 1
    %vm2279 = vmand %vm2277, %vm2278
    %v2280 = vsel %vm2276, %v2273, 1.0
    %v2281 = vrcp.pop %v2280
    %v2282 = vmul.f32 %v2280, %v2281
    %v2283 = vsub.f32 2.0, %v2282
    %v2284 = vmul.f32 %v2281, %v2283
    %v2285 = vsub.f32 0.0, %v2284
    %v2286 = vsub.f32 %v2273, 1.0
    %v2287 = vadd.f32 %v2273, 1.0
    %v2288 = vrcp.pop %v2287
    %v2289 = vmul.f32 %v2287, %v2288
    %v2290 = vsub.f32 2.0, %v2289
    %v2291 = vmul.f32 %v2288, %v2290
    %v2292 = vmul.f32 %v2286, %v2291
    %v2293 = vsel %vm2279, %v2292, %v2273
    %v2294 = vsel %vm2276, %v2285, %v2293
    %v2295 = vsel %vm2279, 0.7853982, 0.0
    %v2296 = vsel %vm2276, 1.5707964, %v2295
    %v2297 = vmul.f32 %v2294, %v2294
    %v2298 = vmul.f32 %v2297, 0.080537446
    %v2299 = vsub.f32 %v2298, 0.13877685
    %v2300 = vmul.f32 %v2299, %v2297
    %v2301 = vadd.f32 %v2300, 0.19977711
    %v2302 = vmul.f32 %v2301, %v2297
    %v2303 = vsub.f32 %v2302, 0.3333295
    %v2304 = vmul.f32 %v2303, %v2297
    %v2305 = vmul.f32 %v2304, %v2294
    %v2306 = vadd.f32 %v2305, %v2294
    %v2307 = vadd.f32 %v2296, %v2306
    %v2308 = vmul.f32 %v2275, %v2307
    %v2310 = vsel %vm538, %v2308, 0
    %2312 = vmatprep.subr.mxu0 %v40
    %2313 = vmatpush1.msra.mxu0 %v39
    %2314 = vmatprep.subr.mxu0 0.0
    %2315 = vmatpush1.msra.mxu0 0.0
    %2316 = vmatprep.subr.mxu0 0.0
    %2317 = vmatpush1.msra.mxu0 0.0
    %2318 = vmatprep.subr.mxu0 0.0
    %2319 = vmatpush1.msra.mxu0 0.0
    %2320 = vmatprep.subr.mxu0 0.0
    %2321 = vmatpush1.msra.mxu0 0.0
    %2322 = vmatprep.subr.mxu0 0.0
    %2323 = vmatpush1.msra.mxu0 0.0
    %2324 = vmatprep.subr.mxu0 0.0
    %2325 = vmatpush1.msra.mxu0 0.0
    %2326 = vmatprep.subr.mxu0 0.0
    %2327 = vmatpush1.msra.mxu0 0.0
    %2328 = vmatprep.subr.mxu0 0.0
    %2329 = vmatpush1.msra.mxu0 0.0
    %2330 = vmatprep.subr.mxu0 0.0
    %2331 = vmatpush1.msra.mxu0 0.0
    %2332 = vmatprep.subr.mxu0 0.0
    %2333 = vmatpush1.msra.mxu0 0.0
    %2334 = vmatprep.subr.mxu0 0.0
    %2335 = vmatpush1.msra.mxu0 0.0
    %2336 = vmatprep.subr.mxu0 0.0
    %2337 = vmatpush1.msra.mxu0 0.0
    %2338 = vmatprep.subr.mxu0 0.0
    %2339 = vmatpush1.msra.mxu0 0.0
    %2340 = vmatprep.subr.mxu0 0.0
    %2341 = vmatpush1.msra.mxu0 0.0
    %2342 = vmatprep.subr.mxu0 0.0
    %2343 = vmatpush1.msra.mxu0 0.0
    %2344 = vmatprep.subr.mxu0 0.0
    %2345 = vmatpush1.msra.mxu0 0.0
    %2346 = vmatprep.subr.mxu0 0.0
    %2347 = vmatpush1.msra.mxu0 0.0
    %2348 = vmatprep.subr.mxu0 0.0
    %2349 = vmatpush1.msra.mxu0 0.0
    %2350 = vmatprep.subr.mxu0 0.0
    %2351 = vmatpush1.msra.mxu0 0.0
    %2352 = vmatprep.subr.mxu0 0.0
    %2353 = vmatpush1.msra.mxu0 0.0
    %2354 = vmatprep.subr.mxu0 0.0
    %2355 = vmatpush1.msra.mxu0 0.0
    %2356 = vmatprep.subr.mxu0 0.0
    %2357 = vmatpush1.msra.mxu0 0.0
    %2358 = vmatprep.subr.mxu0 0.0
    %2359 = vmatpush1.msra.mxu0 0.0
    %2360 = vmatprep.subr.mxu0 0.0
    %2361 = vmatpush1.msra.mxu0 0.0
    %2362 = vmatprep.subr.mxu0 0.0
    %2363 = vmatpush1.msra.mxu0 0.0
    %2364 = vmatprep.subr.mxu0 0.0
    %2365 = vmatpush1.msra.mxu0 0.0
    %2366 = vmatprep.subr.mxu0 0.0
    %2367 = vmatpush1.msra.mxu0 0.0
    %2368 = vmatprep.subr.mxu0 0.0
    %2369 = vmatpush1.msra.mxu0 0.0
    %2370 = vmatprep.subr.mxu0 0.0
    %2371 = vmatpush1.msra.mxu0 0.0
    %2372 = vmatprep.subr.mxu0 0.0
    %2373 = vmatpush1.msra.mxu0 0.0
    %2374 = vmatprep.subr.mxu0 0.0
    %2375 = vmatpush1.msra.mxu0 0.0
    %2376 = vmatprep.mubr.f32.mxu0 0.0
    %2377 = vmatmul.mubr.f32.gmra.mrb[0].mxu0 %v2310
    %v2378 = vpop.f32.mrb[0].mxu0
    %v2379 = vadd.f32 0.0, %v2378
    %v2380 = vpop.f32.mrb[0].mxu0
    %v2381 = vadd.f32 0.0, %v2380
    %2382 = vdwg.mxu0
    %2383 = vmatprep.subr.mxu0 %v42
    %2384 = vmatpush1.msra.mxu0 %v41
    %2385 = vmatprep.subr.mxu0 0.0
    %2386 = vmatpush1.msra.mxu0 0.0
    %2387 = vmatprep.subr.mxu0 0.0
    %2388 = vmatpush1.msra.mxu0 0.0
    %2389 = vmatprep.subr.mxu0 0.0
    %2390 = vmatpush1.msra.mxu0 0.0
    %2391 = vmatprep.subr.mxu0 0.0
    %2392 = vmatpush1.msra.mxu0 0.0
    %2393 = vmatprep.subr.mxu0 0.0
    %2394 = vmatpush1.msra.mxu0 0.0
    %2395 = vmatprep.subr.mxu0 0.0
    %2396 = vmatpush1.msra.mxu0 0.0
    %2397 = vmatprep.subr.mxu0 0.0
    %2398 = vmatpush1.msra.mxu0 0.0
    %2399 = vmatprep.subr.mxu0 0.0
    %2400 = vmatpush1.msra.mxu0 0.0
    %2401 = vmatprep.subr.mxu0 0.0
    %2402 = vmatpush1.msra.mxu0 0.0
    %2403 = vmatprep.subr.mxu0 0.0
    %2404 = vmatpush1.msra.mxu0 0.0
    %2405 = vmatprep.subr.mxu0 0.0
    %2406 = vmatpush1.msra.mxu0 0.0
    %2407 = vmatprep.subr.mxu0 0.0
    %2408 = vmatpush1.msra.mxu0 0.0
    %2409 = vmatprep.subr.mxu0 0.0
    %2410 = vmatpush1.msra.mxu0 0.0
    %2411 = vmatprep.subr.mxu0 0.0
    %2412 = vmatpush1.msra.mxu0 0.0
    %2413 = vmatprep.subr.mxu0 0.0
    %2414 = vmatpush1.msra.mxu0 0.0
    %2415 = vmatprep.subr.mxu0 0.0
    %2416 = vmatpush1.msra.mxu0 0.0
    %2417 = vmatprep.subr.mxu0 0.0
    %2418 = vmatpush1.msra.mxu0 0.0
    %2419 = vmatprep.subr.mxu0 0.0
    %2420 = vmatpush1.msra.mxu0 0.0
    %2421 = vmatprep.subr.mxu0 0.0
    %2422 = vmatpush1.msra.mxu0 0.0
    %2423 = vmatprep.subr.mxu0 0.0
    %2424 = vmatpush1.msra.mxu0 0.0
    %2425 = vmatprep.subr.mxu0 0.0
    %2426 = vmatpush1.msra.mxu0 0.0
    %2427 = vmatprep.subr.mxu0 0.0
    %2428 = vmatpush1.msra.mxu0 0.0
    %2429 = vmatprep.subr.mxu0 0.0
    %2430 = vmatpush1.msra.mxu0 0.0
    %2431 = vmatprep.subr.mxu0 0.0
    %2432 = vmatpush1.msra.mxu0 0.0
    %2433 = vmatprep.subr.mxu0 0.0
    %2434 = vmatpush1.msra.mxu0 0.0
    %2435 = vmatprep.subr.mxu0 0.0
    %2436 = vmatpush1.msra.mxu0 0.0
    %2437 = vmatprep.subr.mxu0 0.0
    %2438 = vmatpush1.msra.mxu0 0.0
    %2439 = vmatprep.subr.mxu0 0.0
    %2440 = vmatpush1.msra.mxu0 0.0
    %2441 = vmatprep.subr.mxu0 0.0
    %2442 = vmatpush1.msra.mxu0 0.0
    %2443 = vmatprep.subr.mxu0 0.0
    %2444 = vmatpush1.msra.mxu0 0.0
    %2445 = vmatprep.subr.mxu0 0.0
    %2446 = vmatpush1.msra.mxu0 0.0
    %2447 = vmatprep.mubr.f32.mxu0 0.0
    %2448 = vmatmul.mubr.f32.gmra.mrb[0].mxu0 %v2310
    %v2449 = vpop.f32.mrb[0].mxu0
    %v2450 = vadd.f32 0.0, %v2449
    %v2451 = vpop.f32.mrb[0].mxu0
    %v2452 = vadd.f32 0.0, %v2451
    %2453 = vdwg.mxu0
    %v2458 = vrot.slane %v2379, 5
    %v2459 = vrot.slane %v2381, 5
    %v2460 = vrot.slane %v2450, 5
    %v2461 = vrot.slane %v2452, 5
    %v2466 = vadd.f32 %v496, %v2458
    %v2467 = vadd.f32 %v497, %v2459
    %v2468 = vadd.f32 %v498, %v2460
    %v2469 = vadd.f32 %v499, %v2461
    %v2470 = vmul.f32 %v2265, %v2265
    %v2471 = vand.u32 2147483647, %v2470
    %vm2472 = vcmp.lt.f32.partialorder %v2470, 0.0
    %v2473 = vsel %vm2472, -1.0, 1.0
    %vm2474 = vcmp.gt.f32.partialorder %v2471, 2.4142137
    %vm2475 = vcmp.gt.f32.partialorder %v2471, 0.41421357
    %vm2476 = vmxor %vm2474, 1
    %vm2477 = vmand %vm2475, %vm2476
    %v2478 = vsel %vm2474, %v2471, 1.0
    %v2479 = vrcp.pop %v2478
    %v2480 = vmul.f32 %v2478, %v2479
    %v2481 = vsub.f32 2.0, %v2480
    %v2482 = vmul.f32 %v2479, %v2481
    %v2483 = vsub.f32 0.0, %v2482
    %v2484 = vsub.f32 %v2471, 1.0
    %v2485 = vadd.f32 %v2471, 1.0
    %v2486 = vrcp.pop %v2485
    %v2487 = vmul.f32 %v2485, %v2486
    %v2488 = vsub.f32 2.0, %v2487
    %v2489 = vmul.f32 %v2486, %v2488
    %v2490 = vmul.f32 %v2484, %v2489
    %v2491 = vsel %vm2477, %v2490, %v2471
    %v2492 = vsel %vm2474, %v2483, %v2491
    %v2493 = vsel %vm2477, 0.7853982, 0.0
    %v2494 = vsel %vm2474, 1.5707964, %v2493
    %v2495 = vmul.f32 %v2492, %v2492
    %v2496 = vmul.f32 %v2495, 0.080537446
    %v2497 = vsub.f32 %v2496, 0.13877685
    %v2498 = vmul.f32 %v2497, %v2495
    %v2499 = vadd.f32 %v2498, 0.19977711
    %v2500 = vmul.f32 %v2499, %v2495
    %v2501 = vsub.f32 %v2500, 0.3333295
    %v2502 = vmul.f32 %v2501, %v2495
    %v2503 = vmul.f32 %v2502, %v2492
    %v2504 = vadd.f32 %v2503, %v2492
    %v2505 = vadd.f32 %v2494, %v2504
    %v2506 = vmul.f32 %v2473, %v2505
    %v2508 = vsel %vm538, %v2506, 0
    %2510 = vmatprep.subr.mxu0 %v44
    %2511 = vmatpush1.msra.mxu0 %v43
    %2512 = vmatprep.subr.mxu0 0.0
    %2513 = vmatpush1.msra.mxu0 0.0
    %2514 = vmatprep.subr.mxu0 0.0
    %2515 = vmatpush1.msra.mxu0 0.0
    %2516 = vmatprep.subr.mxu0 0.0
    %2517 = vmatpush1.msra.mxu0 0.0
    %2518 = vmatprep.subr.mxu0 0.0
    %2519 = vmatpush1.msra.mxu0 0.0
    %2520 = vmatprep.subr.mxu0 0.0
    %2521 = vmatpush1.msra.mxu0 0.0
    %2522 = vmatprep.subr.mxu0 0.0
    %2523 = vmatpush1.msra.mxu0 0.0
    %2524 = vmatprep.subr.mxu0 0.0
    %2525 = vmatpush1.msra.mxu0 0.0
    %2526 = vmatprep.subr.mxu0 0.0
    %2527 = vmatpush1.msra.mxu0 0.0
    %2528 = vmatprep.subr.mxu0 0.0
    %2529 = vmatpush1.msra.mxu0 0.0
    %2530 = vmatprep.subr.mxu0 0.0
    %2531 = vmatpush1.msra.mxu0 0.0
    %2532 = vmatprep.subr.mxu0 0.0
    %2533 = vmatpush1.msra.mxu0 0.0
    %2534 = vmatprep.subr.mxu0 0.0
    %2535 = vmatpush1.msra.mxu0 0.0
    %2536 = vmatprep.subr.mxu0 0.0
    %2537 = vmatpush1.msra.mxu0 0.0
    %2538 = vmatprep.subr.mxu0 0.0
    %2539 = vmatpush1.msra.mxu0 0.0
    %2540 = vmatprep.subr.mxu0 0.0
    %2541 = vmatpush1.msra.mxu0 0.0
    %2542 = vmatprep.subr.mxu0 0.0
    %2543 = vmatpush1.msra.mxu0 0.0
    %2544 = vmatprep.subr.mxu0 0.0
    %2545 = vmatpush1.msra.mxu0 0.0
    %2546 = vmatprep.subr.mxu0 0.0
    %2547 = vmatpush1.msra.mxu0 0.0
    %2548 = vmatprep.subr.mxu0 0.0
    %2549 = vmatpush1.msra.mxu0 0.0
    %2550 = vmatprep.subr.mxu0 0.0
    %2551 = vmatpush1.msra.mxu0 0.0
    %2552 = vmatprep.subr.mxu0 0.0
    %2553 = vmatpush1.msra.mxu0 0.0
    %2554 = vmatprep.subr.mxu0 0.0
    %2555 = vmatpush1.msra.mxu0 0.0
    %2556 = vmatprep.subr.mxu0 0.0
    %2557 = vmatpush1.msra.mxu0 0.0
    %2558 = vmatprep.subr.mxu0 0.0
    %2559 = vmatpush1.msra.mxu0 0.0
    %2560 = vmatprep.subr.mxu0 0.0
    %2561 = vmatpush1.msra.mxu0 0.0
    %2562 = vmatprep.subr.mxu0 0.0
    %2563 = vmatpush1.msra.mxu0 0.0
    %2564 = vmatprep.subr.mxu0 0.0
    %2565 = vmatpush1.msra.mxu0 0.0
    %2566 = vmatprep.subr.mxu0 0.0
    %2567 = vmatpush1.msra.mxu0 0.0
    %2568 = vmatprep.subr.mxu0 0.0
    %2569 = vmatpush1.msra.mxu0 0.0
    %2570 = vmatprep.subr.mxu0 0.0
    %2571 = vmatpush1.msra.mxu0 0.0
    %2572 = vmatprep.subr.mxu0 0.0
    %2573 = vmatpush1.msra.mxu0 0.0
    %2574 = vmatprep.mubr.f32.mxu0 0.0
    %2575 = vmatmul.mubr.f32.gmra.mrb[0].mxu0 %v2508
    %v2576 = vpop.f32.mrb[0].mxu0
    %v2577 = vadd.f32 0.0, %v2576
    %v2578 = vpop.f32.mrb[0].mxu0
    %v2579 = vadd.f32 0.0, %v2578
    %2580 = vdwg.mxu0
    %2581 = vmatprep.subr.mxu0 %v46
    %2582 = vmatpush1.msra.mxu0 %v45
    %2583 = vmatprep.subr.mxu0 0.0
    %2584 = vmatpush1.msra.mxu0 0.0
    %2585 = vmatprep.subr.mxu0 0.0
    %2586 = vmatpush1.msra.mxu0 0.0
    %2587 = vmatprep.subr.mxu0 0.0
    %2588 = vmatpush1.msra.mxu0 0.0
    %2589 = vmatprep.subr.mxu0 0.0
    %2590 = vmatpush1.msra.mxu0 0.0
    %2591 = vmatprep.subr.mxu0 0.0
    %2592 = vmatpush1.msra.mxu0 0.0
    %2593 = vmatprep.subr.mxu0 0.0
    %2594 = vmatpush1.msra.mxu0 0.0
    %2595 = vmatprep.subr.mxu0 0.0
    %2596 = vmatpush1.msra.mxu0 0.0
    %2597 = vmatprep.subr.mxu0 0.0
    %2598 = vmatpush1.msra.mxu0 0.0
    %2599 = vmatprep.subr.mxu0 0.0
    %2600 = vmatpush1.msra.mxu0 0.0
    %2601 = vmatprep.subr.mxu0 0.0
    %2602 = vmatpush1.msra.mxu0 0.0
    %2603 = vmatprep.subr.mxu0 0.0
    %2604 = vmatpush1.msra.mxu0 0.0
    %2605 = vmatprep.subr.mxu0 0.0
    %2606 = vmatpush1.msra.mxu0 0.0
    %2607 = vmatprep.subr.mxu0 0.0
    %2608 = vmatpush1.msra.mxu0 0.0
    %2609 = vmatprep.subr.mxu0 0.0
    %2610 = vmatpush1.msra.mxu0 0.0
    %2611 = vmatprep.subr.mxu0 0.0
    %2612 = vmatpush1.msra.mxu0 0.0
    %2613 = vmatprep.subr.mxu0 0.0
    %2614 = vmatpush1.msra.mxu0 0.0
    %2615 = vmatprep.subr.mxu0 0.0
    %2616 = vmatpush1.msra.mxu0 0.0
    %2617 = vmatprep.subr.mxu0 0.0
    %2618 = vmatpush1.msra.mxu0 0.0
    %2619 = vmatprep.subr.mxu0 0.0
    %2620 = vmatpush1.msra.mxu0 0.0
    %2621 = vmatprep.subr.mxu0 0.0
    %2622 = vmatpush1.msra.mxu0 0.0
    %2623 = vmatprep.subr.mxu0 0.0
    %2624 = vmatpush1.msra.mxu0 0.0
    %2625 = vmatprep.subr.mxu0 0.0
    %2626 = vmatpush1.msra.mxu0 0.0
    %2627 = vmatprep.subr.mxu0 0.0
    %2628 = vmatpush1.msra.mxu0 0.0
    %2629 = vmatprep.subr.mxu0 0.0
    %2630 = vmatpush1.msra.mxu0 0.0
    %2631 = vmatprep.subr.mxu0 0.0
    %2632 = vmatpush1.msra.mxu0 0.0
    %2633 = vmatprep.subr.mxu0 0.0
    %2634 = vmatpush1.msra.mxu0 0.0
    %2635 = vmatprep.subr.mxu0 0.0
    %2636 = vmatpush1.msra.mxu0 0.0
    %2637 = vmatprep.subr.mxu0 0.0
    %2638 = vmatpush1.msra.mxu0 0.0
    %2639 = vmatprep.subr.mxu0 0.0
    %2640 = vmatpush1.msra.mxu0 0.0
    %2641 = vmatprep.subr.mxu0 0.0
    %2642 = vmatpush1.msra.mxu0 0.0
    %2643 = vmatprep.subr.mxu0 0.0
    %2644 = vmatpush1.msra.mxu0 0.0
    %2645 = vmatprep.mubr.f32.mxu0 0.0
    %2646 = vmatmul.mubr.f32.gmra.mrb[0].mxu0 %v2508
    %v2647 = vpop.f32.mrb[0].mxu0
    %v2648 = vadd.f32 0.0, %v2647
    %v2649 = vpop.f32.mrb[0].mxu0
    %v2650 = vadd.f32 0.0, %v2649
    %2651 = vdwg.mxu0
    %v2656 = vrot.slane %v2577, 5
    %v2657 = vrot.slane %v2579, 5
    %v2658 = vrot.slane %v2648, 5
    %v2659 = vrot.slane %v2650, 5
    %v2664 = vadd.f32 %v2466, %v2656
    %v2665 = vadd.f32 %v2467, %v2657
    %v2666 = vadd.f32 %v2468, %v2658
    %v2667 = vadd.f32 %v2469, %v2659
    %v2668 = vxor.u32 %v2664, 2147483648
    %v2669 = vmul.f32 %v2668, 1.442695
    %v2670 = vpow.pop %v2669
    %v2671 = vadd.f32 %v2670, 1.0
    %v2672 = vrcp.pop %v2671
    %v2673 = vmul.f32 1.0, %v2672
    %v2674 = vxor.u32 %v2665, 2147483648
    %v2675 = vmul.f32 %v2674, 1.442695
    %v2676 = vpow.pop %v2675
    %v2677 = vadd.f32 %v2676, 1.0
    %v2678 = vrcp.pop %v2677
    %v2679 = vmul.f32 1.0, %v2678
    %v2680 = vtanh.pop %v2666
    %v2681 = vxor.u32 %v2667, 2147483648
    %v2682 = vmul.f32 %v2681, 1.442695
    %v2683 = vpow.pop %v2682
    %v2684 = vadd.f32 %v2683, 1.0
    %v2685 = vrcp.pop %v2684
    %v2686 = vmul.f32 1.0, %v2685
    %v2689 = vunpack.c.l.s4 1966171168
    %v2690 = vunpack.c.0.s8 %v2689
    %v2691 = vlaneseq
    %v2692 = vshrl.u32 %v2691, 7
    %v2693 = vsub.s32 %v2690, %v2692
    %v2694 = vrot.slane %v2673, %v2693
    %v2695 = vcombine.high %v2694, %v2694
    %v2697 = vunpack.c.l.s4 1966171168
    %v2698 = vunpack.c.0.s8 %v2697
    %v2699 = vlaneseq
    %v2700 = vshrl.u32 %v2699, 7
    %v2701 = vsub.s32 %v2698, %v2700
    %v2702 = vrot.slane %v2695, %v2701
    %v2703 = vcombine.high %v2702, %v2702
    %v2705 = vmul.f32 %v2110, %v2703
    %v2706 = vmul.f32 %v2679, %v2680
    %v2709 = vunpack.c.l.s4 1966171168
    %v2710 = vunpack.c.0.s8 %v2709
    %v2711 = vlaneseq
    %v2712 = vshrl.u32 %v2711, 7
    %v2713 = vsub.s32 %v2710, %v2712
    %v2714 = vrot.slane %v2706, %v2713
    %v2715 = vcombine.high %v2714, %v2714
    %v2717 = vunpack.c.l.s4 1966171168
    %v2718 = vunpack.c.0.s8 %v2717
    %v2719 = vlaneseq
    %v2720 = vshrl.u32 %v2719, 7
    %v2721 = vsub.s32 %v2718, %v2720
    %v2722 = vrot.slane %v2715, %v2721
    %v2723 = vcombine.high %v2722, %v2722
    %v2725 = vadd.f32 %v2705, %v2723
    %v2726 = vtanh.pop %v2725
    %v2728 = vlaneseq
    %v2729 = vshrl.u32 %v2728, 7
    %v2730 = vsub.s32 0, %v2729
    %v2731 = vrot.slane %v2726, %v2730
    %v2733 = vmul.f32 %v2686, %v2731
    %v2734 = vand.u32 2147483647, %v2733
    %vm2735 = vcmp.lt.f32.partialorder %v2733, 0.0
    %v2736 = vsel %vm2735, -1.0, 1.0
    %vm2737 = vcmp.gt.f32.partialorder %v2734, 2.4142137
    %vm2738 = vcmp.gt.f32.partialorder %v2734, 0.41421357
    %vm2739 = vmxor %vm2737, 1
    %vm2740 = vmand %vm2738, %vm2739
    %v2741 = vsel %vm2737, %v2734, 1.0
    %v2742 = vrcp.pop %v2741
    %v2743 = vmul.f32 %v2741, %v2742
    %v2744 = vsub.f32 2.0, %v2743
    %v2745 = vmul.f32 %v2742, %v2744
    %v2746 = vsub.f32 0.0, %v2745
    %v2747 = vsub.f32 %v2734, 1.0
    %v2748 = vadd.f32 %v2734, 1.0
    %v2749 = vrcp.pop %v2748
    %v2750 = vmul.f32 %v2748, %v2749
    %v2751 = vsub.f32 2.0, %v2750
    %v2752 = vmul.f32 %v2749, %v2751
    %v2753 = vmul.f32 %v2747, %v2752
    %v2754 = vsel %vm2740, %v2753, %v2734
    %v2755 = vsel %vm2737, %v2746, %v2754
    %v2756 = vsel %vm2740, 0.7853982, 0.0
    %v2757 = vsel %vm2737, 1.5707964, %v2756
    %v2758 = vmul.f32 %v2755, %v2755
    %v2759 = vmul.f32 %v2758, 0.080537446
    %v2760 = vsub.f32 %v2759, 0.13877685
    %v2761 = vmul.f32 %v2760, %v2758
    %v2762 = vadd.f32 %v2761, 0.19977711
    %v2763 = vmul.f32 %v2762, %v2758
    %v2764 = vsub.f32 %v2763, 0.3333295
    %v2765 = vmul.f32 %v2764, %v2758
    %v2766 = vmul.f32 %v2765, %v2755
    %v2767 = vadd.f32 %v2766, %v2755
    %v2768 = vadd.f32 %v2757, %v2767
    %v2769 = vmul.f32 %v2736, %v2768
    %v2770 = vmul.f32 %v2733, %v2733
    %v2771 = vand.u32 2147483647, %v2770
    %vm2772 = vcmp.lt.f32.partialorder %v2770, 0.0
    %v2773 = vsel %vm2772, -1.0, 1.0
    %vm2774 = vcmp.gt.f32.partialorder %v2771, 2.4142137
    %vm2775 = vcmp.gt.f32.partialorder %v2771, 0.41421357
    %vm2776 = vmxor %vm2774, 1
    %vm2777 = vmand %vm2775, %vm2776
    %v2778 = vsel %vm2774, %v2771, 1.0
    %v2779 = vrcp.pop %v2778
    %v2780 = vmul.f32 %v2778, %v2779
    %v2781 = vsub.f32 2.0, %v2780
    %v2782 = vmul.f32 %v2779, %v2781
    %v2783 = vsub.f32 0.0, %v2782
    %v2784 = vsub.f32 %v2771, 1.0
    %v2785 = vadd.f32 %v2771, 1.0
    %v2786 = vrcp.pop %v2785
    %v2787 = vmul.f32 %v2785, %v2786
    %v2788 = vsub.f32 2.0, %v2787
    %v2789 = vmul.f32 %v2786, %v2788
    %v2790 = vmul.f32 %v2784, %v2789
    %v2791 = vsel %vm2777, %v2790, %v2771
    %v2792 = vsel %vm2774, %v2783, %v2791
    %v2793 = vsel %vm2777, 0.7853982, 0.0
    %v2794 = vsel %vm2774, 1.5707964, %v2793
    %v2795 = vmul.f32 %v2792, %v2792
    %v2796 = vmul.f32 %v2795, 0.080537446
    %v2797 = vsub.f32 %v2796, 0.13877685
    %v2798 = vmul.f32 %v2797, %v2795
    %v2799 = vadd.f32 %v2798, 0.19977711
    %v2800 = vmul.f32 %v2799, %v2795
    %v2801 = vsub.f32 %v2800, 0.3333295
    %v2802 = vmul.f32 %v2801, %v2795
    %v2803 = vmul.f32 %v2802, %v2792
    %v2804 = vadd.f32 %v2803, %v2792
    %v2805 = vadd.f32 %v2794, %v2804
    %v2806 = vmul.f32 %v2773, %v2805
    %v2809 = vrot.slane %v2769, 3
    %v2810 = vrot.slane %v2806, 3
    %2813 = vmatprep.subr.mxu0 0.0
    %2814 = vmatpush1.msra.mxu0 %v47
    %2815 = vmatprep.subr.mxu0 0.0
    %2816 = vmatpush1.msra.mxu0 %v48
    %2817 = vmatprep.subr.mxu0 0.0
    %2818 = vmatpush1.msra.mxu0 %v49
    %2819 = vmatprep.subr.mxu0 0.0
    %2820 = vmatpush1.msra.mxu0 %v50
    %2821 = vmatprep.subr.mxu0 0.0
    %2822 = vmatpush1.msra.mxu0 %v51
    %2823 = vmatprep.subr.mxu0 0.0
    %2824 = vmatpush1.msra.mxu0 %v52
    %2825 = vmatprep.subr.mxu0 0.0
    %2826 = vmatpush1.msra.mxu0 %v53
    %2827 = vmatprep.subr.mxu0 0.0
    %2828 = vmatpush1.msra.mxu0 %v54
    %2829 = vmatprep.subr.mxu0 0.0
    %2830 = vmatpush1.msra.mxu0 %v55
    %2831 = vmatprep.subr.mxu0 0.0
    %2832 = vmatpush1.msra.mxu0 %v56
    %2833 = vmatprep.subr.mxu0 0.0
    %2834 = vmatpush1.msra.mxu0 %v57
    %2835 = vmatprep.subr.mxu0 0.0
    %2836 = vmatpush1.msra.mxu0 %v58
    %2837 = vmatprep.subr.mxu0 0.0
    %2838 = vmatpush1.msra.mxu0 %v59
    %2839 = vmatprep.subr.mxu0 0.0
    %2840 = vmatpush1.msra.mxu0 %v60
    %2841 = vmatprep.subr.mxu0 0.0
    %2842 = vmatpush1.msra.mxu0 %v61
    %2843 = vmatprep.subr.mxu0 0.0
    %2844 = vmatpush1.msra.mxu0 %v62
    %2845 = vmatprep.subr.mxu0 0.0
    %2846 = vmatpush1.msra.mxu0 %v63
    %2847 = vmatprep.subr.mxu0 0.0
    %2848 = vmatpush1.msra.mxu0 %v64
    %2849 = vmatprep.subr.mxu0 0.0
    %2850 = vmatpush1.msra.mxu0 %v65
    %2851 = vmatprep.subr.mxu0 0.0
    %2852 = vmatpush1.msra.mxu0 %v66
    %2853 = vmatprep.subr.mxu0 0.0
    %2854 = vmatpush1.msra.mxu0 %v67
    %2855 = vmatprep.subr.mxu0 0.0
    %2856 = vmatpush1.msra.mxu0 %v68
    %2857 = vmatprep.subr.mxu0 0.0
    %2858 = vmatpush1.msra.mxu0 %v69
    %2859 = vmatprep.subr.mxu0 0.0
    %2860 = vmatpush1.msra.mxu0 %v70
    %2861 = vmatprep.subr.mxu0 0.0
    %2862 = vmatpush1.msra.mxu0 %v71
    %2863 = vmatprep.subr.mxu0 0.0
    %2864 = vmatpush1.msra.mxu0 %v72
    %2865 = vmatprep.subr.mxu0 0.0
    %2866 = vmatpush1.msra.mxu0 %v73
    %2867 = vmatprep.subr.mxu0 0.0
    %2868 = vmatpush1.msra.mxu0 %v74
    %2869 = vmatprep.subr.mxu0 0.0
    %2870 = vmatpush1.msra.mxu0 %v75
    %2871 = vmatprep.subr.mxu0 0.0
    %2872 = vmatpush1.msra.mxu0 %v76
    %2873 = vmatprep.subr.mxu0 0.0
    %2874 = vmatpush1.msra.mxu0 %v77
    %2875 = vmatprep.subr.mxu0 0.0
    %2876 = vmatpush1.msra.mxu0 %v78
    %2877 = vmatprep.mubr.f32.mxu0 %v2810
    %2878 = vmatmul.mubr.f32.gmra.mrb[0].mxu0 %v2809
    %v2879 = vpop.f32.mrb[0].mxu0
    %v2880 = vadd.f32 %v79, %v2879
    %v2881 = vpop.f32.mrb[0].mxu0
    %2882 = vdwg.mxu0
    %2884 = vrot.lane.b32.xlu0 %v2880, 120
    %v2885 = vpop.permute.xlu0 %2884
    %2887 = vst.msk [vmem:[%s9 + $0x3] sm:$0x1] %vm1045, %v2885
    %v2888 = vand.u32 2147483647, %v2880
    %vm2889 = vcmp.lt.f32.partialorder %v2880, 0.0
    %v2890 = vsel %vm2889, -1.0, 1.0
    %vm2891 = vcmp.gt.f32.partialorder %v2888, 2.4142137
    %vm2892 = vcmp.gt.f32.partialorder %v2888, 0.41421357
    %vm2893 = vmxor %vm2891, 1
    %vm2894 = vmand %vm2892, %vm2893
    %v2895 = vsel %vm2891, %v2888, 1.0
    %v2896 = vrcp.pop %v2895
    %v2897 = vmul.f32 %v2895, %v2896
    %v2898 = vsub.f32 2.0, %v2897
    %v2899 = vmul.f32 %v2896, %v2898
    %v2900 = vsub.f32 0.0, %v2899
    %v2901 = vsub.f32 %v2888, 1.0
    %v2902 = vadd.f32 %v2888, 1.0
    %v2903 = vrcp.pop %v2902
    %v2904 = vmul.f32 %v2902, %v2903
    %v2905 = vsub.f32 2.0, %v2904
    %v2906 = vmul.f32 %v2903, %v2905
    %v2907 = vmul.f32 %v2901, %v2906
    %v2908 = vsel %vm2894, %v2907, %v2888
    %v2909 = vsel %vm2891, %v2900, %v2908
    %v2910 = vsel %vm2894, 0.7853982, 0.0
    %v2911 = vsel %vm2891, 1.5707964, %v2910
    %v2912 = vmul.f32 %v2909, %v2909
    %v2913 = vmul.f32 %v2912, 0.080537446
    %v2914 = vsub.f32 %v2913, 0.13877685
    %v2915 = vmul.f32 %v2914, %v2912
    %v2916 = vadd.f32 %v2915, 0.19977711
    %v2917 = vmul.f32 %v2916, %v2912
    %v2918 = vsub.f32 %v2917, 0.3333295
    %v2919 = vmul.f32 %v2918, %v2912
    %v2920 = vmul.f32 %v2919, %v2909
    %v2921 = vadd.f32 %v2920, %v2909
    %v2922 = vadd.f32 %v2911, %v2921
    %v2923 = vmul.f32 %v2890, %v2922
    %v2925 = vsel %vm538, %v2923, 0
    %2927 = vmatprep.subr.mxu0 %v40
    %2928 = vmatpush1.msra.mxu0 %v39
    %2929 = vmatprep.subr.mxu0 0.0
    %2930 = vmatpush1.msra.mxu0 0.0
    %2931 = vmatprep.subr.mxu0 0.0
    %2932 = vmatpush1.msra.mxu0 0.0
    %2933 = vmatprep.subr.mxu0 0.0
    %2934 = vmatpush1.msra.mxu0 0.0
    %2935 = vmatprep.subr.mxu0 0.0
    %2936 = vmatpush1.msra.mxu0 0.0
    %2937 = vmatprep.subr.mxu0 0.0
    %2938 = vmatpush1.msra.mxu0 0.0
    %2939 = vmatprep.subr.mxu0 0.0
    %2940 = vmatpush1.msra.mxu0 0.0
    %2941 = vmatprep.subr.mxu0 0.0
    %2942 = vmatpush1.msra.mxu0 0.0
    %2943 = vmatprep.subr.mxu0 0.0
    %2944 = vmatpush1.msra.mxu0 0.0
    %2945 = vmatprep.subr.mxu0 0.0
    %2946 = vmatpush1.msra.mxu0 0.0
    %2947 = vmatprep.subr.mxu0 0.0
    %2948 = vmatpush1.msra.mxu0 0.0
    %2949 = vmatprep.subr.mxu0 0.0
    %2950 = vmatpush1.msra.mxu0 0.0
    %2951 = vmatprep.subr.mxu0 0.0
    %2952 = vmatpush1.msra.mxu0 0.0
    %2953 = vmatprep.subr.mxu0 0.0
    %2954 = vmatpush1.msra.mxu0 0.0
    %2955 = vmatprep.subr.mxu0 0.0
    %2956 = vmatpush1.msra.mxu0 0.0
    %2957 = vmatprep.subr.mxu0 0.0
    %2958 = vmatpush1.msra.mxu0 0.0
    %2959 = vmatprep.subr.mxu0 0.0
    %2960 = vmatpush1.msra.mxu0 0.0
    %2961 = vmatprep.subr.mxu0 0.0
    %2962 = vmatpush1.msra.mxu0 0.0
    %2963 = vmatprep.subr.mxu0 0.0
    %2964 = vmatpush1.msra.mxu0 0.0
    %2965 = vmatprep.subr.mxu0 0.0
    %2966 = vmatpush1.msra.mxu0 0.0
    %2967 = vmatprep.subr.mxu0 0.0
    %2968 = vmatpush1.msra.mxu0 0.0
    %2969 = vmatprep.subr.mxu0 0.0
    %2970 = vmatpush1.msra.mxu0 0.0
    %2971 = vmatprep.subr.mxu0 0.0
    %2972 = vmatpush1.msra.mxu0 0.0
    %2973 = vmatprep.subr.mxu0 0.0
    %2974 = vmatpush1.msra.mxu0 0.0
    %2975 = vmatprep.subr.mxu0 0.0
    %2976 = vmatpush1.msra.mxu0 0.0
    %2977 = vmatprep.subr.mxu0 0.0
    %2978 = vmatpush1.msra.mxu0 0.0
    %2979 = vmatprep.subr.mxu0 0.0
    %2980 = vmatpush1.msra.mxu0 0.0
    %2981 = vmatprep.subr.mxu0 0.0
    %2982 = vmatpush1.msra.mxu0 0.0
    %2983 = vmatprep.subr.mxu0 0.0
    %2984 = vmatpush1.msra.mxu0 0.0
    %2985 = vmatprep.subr.mxu0 0.0
    %2986 = vmatpush1.msra.mxu0 0.0
    %2987 = vmatprep.subr.mxu0 0.0
    %2988 = vmatpush1.msra.mxu0 0.0
    %2989 = vmatprep.subr.mxu0 0.0
    %2990 = vmatpush1.msra.mxu0 0.0
    %2991 = vmatprep.mubr.f32.mxu0 0.0
    %2992 = vmatmul.mubr.f32.gmra.mrb[0].mxu0 %v2925
    %v2993 = vpop.f32.mrb[0].mxu0
    %v2994 = vadd.f32 0.0, %v2993
    %v2995 = vpop.f32.mrb[0].mxu0
    %v2996 = vadd.f32 0.0, %v2995
    %2997 = vdwg.mxu0
    %2998 = vmatprep.subr.mxu0 %v42
    %2999 = vmatpush1.msra.mxu0 %v41
    %3000 = vmatprep.subr.mxu0 0.0
    %3001 = vmatpush1.msra.mxu0 0.0
    %3002 = vmatprep.subr.mxu0 0.0
    %3003 = vmatpush1.msra.mxu0 0.0
    %3004 = vmatprep.subr.mxu0 0.0
    %3005 = vmatpush1.msra.mxu0 0.0
    %3006 = vmatprep.subr.mxu0 0.0
    %3007 = vmatpush1.msra.mxu0 0.0
    %3008 = vmatprep.subr.mxu0 0.0
    %3009 = vmatpush1.msra.mxu0 0.0
    %3010 = vmatprep.subr.mxu0 0.0
    %3011 = vmatpush1.msra.mxu0 0.0
    %3012 = vmatprep.subr.mxu0 0.0
    %3013 = vmatpush1.msra.mxu0 0.0
    %3014 = vmatprep.subr.mxu0 0.0
    %3015 = vmatpush1.msra.mxu0 0.0
    %3016 = vmatprep.subr.mxu0 0.0
    %3017 = vmatpush1.msra.mxu0 0.0
    %3018 = vmatprep.subr.mxu0 0.0
    %3019 = vmatpush1.msra.mxu0 0.0
    %3020 = vmatprep.subr.mxu0 0.0
    %3021 = vmatpush1.msra.mxu0 0.0
    %3022 = vmatprep.subr.mxu0 0.0
    %3023 = vmatpush1.msra.mxu0 0.0
    %3024 = vmatprep.subr.mxu0 0.0
    %3025 = vmatpush1.msra.mxu0 0.0
    %3026 = vmatprep.subr.mxu0 0.0
    %3027 = vmatpush1.msra.mxu0 0.0
    %3028 = vmatprep.subr.mxu0 0.0
    %3029 = vmatpush1.msra.mxu0 0.0
    %3030 = vmatprep.subr.mxu0 0.0
    %3031 = vmatpush1.msra.mxu0 0.0
    %3032 = vmatprep.subr.mxu0 0.0
    %3033 = vmatpush1.msra.mxu0 0.0
    %3034 = vmatprep.subr.mxu0 0.0
    %3035 = vmatpush1.msra.mxu0 0.0
    %3036 = vmatprep.subr.mxu0 0.0
    %3037 = vmatpush1.msra.mxu0 0.0
    %3038 = vmatprep.subr.mxu0 0.0
    %3039 = vmatpush1.msra.mxu0 0.0
    %3040 = vmatprep.subr.mxu0 0.0
    %3041 = vmatpush1.msra.mxu0 0.0
    %3042 = vmatprep.subr.mxu0 0.0
    %3043 = vmatpush1.msra.mxu0 0.0
    %3044 = vmatprep.subr.mxu0 0.0
    %3045 = vmatpush1.msra.mxu0 0.0
    %3046 = vmatprep.subr.mxu0 0.0
    %3047 = vmatpush1.msra.mxu0 0.0
    %3048 = vmatprep.subr.mxu0 0.0
    %3049 = vmatpush1.msra.mxu0 0.0
    %3050 = vmatprep.subr.mxu0 0.0
    %3051 = vmatpush1.msra.mxu0 0.0
    %3052 = vmatprep.subr.mxu0 0.0
    %3053 = vmatpush1.msra.mxu0 0.0
    %3054 = vmatprep.subr.mxu0 0.0
    %3055 = vmatpush1.msra.mxu0 0.0
    %3056 = vmatprep.subr.mxu0 0.0
    %3057 = vmatpush1.msra.mxu0 0.0
    %3058 = vmatprep.subr.mxu0 0.0
    %3059 = vmatpush1.msra.mxu0 0.0
    %3060 = vmatprep.subr.mxu0 0.0
    %3061 = vmatpush1.msra.mxu0 0.0
    %3062 = vmatprep.mubr.f32.mxu0 0.0
    %3063 = vmatmul.mubr.f32.gmra.mrb[0].mxu0 %v2925
    %v3064 = vpop.f32.mrb[0].mxu0
    %v3065 = vadd.f32 0.0, %v3064
    %v3066 = vpop.f32.mrb[0].mxu0
    %v3067 = vadd.f32 0.0, %v3066
    %3068 = vdwg.mxu0
    %v3073 = vrot.slane %v2994, 4
    %v3074 = vrot.slane %v2996, 4
    %v3075 = vrot.slane %v3065, 4
    %v3076 = vrot.slane %v3067, 4
    %v3081 = vadd.f32 %v496, %v3073
    %v3082 = vadd.f32 %v497, %v3074
    %v3083 = vadd.f32 %v498, %v3075
    %v3084 = vadd.f32 %v499, %v3076
    %v3085 = vmul.f32 %v2880, %v2880
    %v3086 = vand.u32 2147483647, %v3085
    %vm3087 = vcmp.lt.f32.partialorder %v3085, 0.0
    %v3088 = vsel %vm3087, -1.0, 1.0
    %vm3089 = vcmp.gt.f32.partialorder %v3086, 2.4142137
    %vm3090 = vcmp.gt.f32.partialorder %v3086, 0.41421357
    %vm3091 = vmxor %vm3089, 1
    %vm3092 = vmand %vm3090, %vm3091
    %v3093 = vsel %vm3089, %v3086, 1.0
    %v3094 = vrcp.pop %v3093
    %v3095 = vmul.f32 %v3093, %v3094
    %v3096 = vsub.f32 2.0, %v3095
    %v3097 = vmul.f32 %v3094, %v3096
    %v3098 = vsub.f32 0.0, %v3097
    %v3099 = vsub.f32 %v3086, 1.0
    %v3100 = vadd.f32 %v3086, 1.0
    %v3101 = vrcp.pop %v3100
    %v3102 = vmul.f32 %v3100, %v3101
    %v3103 = vsub.f32 2.0, %v3102
    %v3104 = vmul.f32 %v3101, %v3103
    %v3105 = vmul.f32 %v3099, %v3104
    %v3106 = vsel %vm3092, %v3105, %v3086
    %v3107 = vsel %vm3089, %v3098, %v3106
    %v3108 = vsel %vm3092, 0.7853982, 0.0
    %v3109 = vsel %vm3089, 1.5707964, %v3108
    %v3110 = vmul.f32 %v3107, %v3107
    %v3111 = vmul.f32 %v3110, 0.080537446
    %v3112 = vsub.f32 %v3111, 0.13877685
    %v3113 = vmul.f32 %v3112, %v3110
    %v3114 = vadd.f32 %v3113, 0.19977711
    %v3115 = vmul.f32 %v3114, %v3110
    %v3116 = vsub.f32 %v3115, 0.3333295
    %v3117 = vmul.f32 %v3116, %v3110
    %v3118 = vmul.f32 %v3117, %v3107
    %v3119 = vadd.f32 %v3118, %v3107
    %v3120 = vadd.f32 %v3109, %v3119
    %v3121 = vmul.f32 %v3088, %v3120
    %v3123 = vsel %vm538, %v3121, 0
    %3125 = vmatprep.subr.mxu0 %v44
    %3126 = vmatpush1.msra.mxu0 %v43
    %3127 = vmatprep.subr.mxu0 0.0
    %3128 = vmatpush1.msra.mxu0 0.0
    %3129 = vmatprep.subr.mxu0 0.0
    %3130 = vmatpush1.msra.mxu0 0.0
    %3131 = vmatprep.subr.mxu0 0.0
    %3132 = vmatpush1.msra.mxu0 0.0
    %3133 = vmatprep.subr.mxu0 0.0
    %3134 = vmatpush1.msra.mxu0 0.0
    %3135 = vmatprep.subr.mxu0 0.0
    %3136 = vmatpush1.msra.mxu0 0.0
    %3137 = vmatprep.subr.mxu0 0.0
    %3138 = vmatpush1.msra.mxu0 0.0
    %3139 = vmatprep.subr.mxu0 0.0
    %3140 = vmatpush1.msra.mxu0 0.0
    %3141 = vmatprep.subr.mxu0 0.0
    %3142 = vmatpush1.msra.mxu0 0.0
    %3143 = vmatprep.subr.mxu0 0.0
    %3144 = vmatpush1.msra.mxu0 0.0
    %3145 = vmatprep.subr.mxu0 0.0
    %3146 = vmatpush1.msra.mxu0 0.0
    %3147 = vmatprep.subr.mxu0 0.0
    %3148 = vmatpush1.msra.mxu0 0.0
    %3149 = vmatprep.subr.mxu0 0.0
    %3150 = vmatpush1.msra.mxu0 0.0
    %3151 = vmatprep.subr.mxu0 0.0
    %3152 = vmatpush1.msra.mxu0 0.0
    %3153 = vmatprep.subr.mxu0 0.0
    %3154 = vmatpush1.msra.mxu0 0.0
    %3155 = vmatprep.subr.mxu0 0.0
    %3156 = vmatpush1.msra.mxu0 0.0
    %3157 = vmatprep.subr.mxu0 0.0
    %3158 = vmatpush1.msra.mxu0 0.0
    %3159 = vmatprep.subr.mxu0 0.0
    %3160 = vmatpush1.msra.mxu0 0.0
    %3161 = vmatprep.subr.mxu0 0.0
    %3162 = vmatpush1.msra.mxu0 0.0
    %3163 = vmatprep.subr.mxu0 0.0
    %3164 = vmatpush1.msra.mxu0 0.0
    %3165 = vmatprep.subr.mxu0 0.0
    %3166 = vmatpush1.msra.mxu0 0.0
    %3167 = vmatprep.subr.mxu0 0.0
    %3168 = vmatpush1.msra.mxu0 0.0
    %3169 = vmatprep.subr.mxu0 0.0
    %3170 = vmatpush1.msra.mxu0 0.0
    %3171 = vmatprep.subr.mxu0 0.0
    %3172 = vmatpush1.msra.mxu0 0.0
    %3173 = vmatprep.subr.mxu0 0.0
    %3174 = vmatpush1.msra.mxu0 0.0
    %3175 = vmatprep.subr.mxu0 0.0
    %3176 = vmatpush1.msra.mxu0 0.0
    %3177 = vmatprep.subr.mxu0 0.0
    %3178 = vmatpush1.msra.mxu0 0.0
    %3179 = vmatprep.subr.mxu0 0.0
    %3180 = vmatpush1.msra.mxu0 0.0
    %3181 = vmatprep.subr.mxu0 0.0
    %3182 = vmatpush1.msra.mxu0 0.0
    %3183 = vmatprep.subr.mxu0 0.0
    %3184 = vmatpush1.msra.mxu0 0.0
    %3185 = vmatprep.subr.mxu0 0.0
    %3186 = vmatpush1.msra.mxu0 0.0
    %3187 = vmatprep.subr.mxu0 0.0
    %3188 = vmatpush1.msra.mxu0 0.0
    %3189 = vmatprep.mubr.f32.mxu0 0.0
    %3190 = vmatmul.mubr.f32.gmra.mrb[0].mxu0 %v3123
    %v3191 = vpop.f32.mrb[0].mxu0
    %v3192 = vadd.f32 0.0, %v3191
    %v3193 = vpop.f32.mrb[0].mxu0
    %v3194 = vadd.f32 0.0, %v3193
    %3195 = vdwg.mxu0
    %3196 = vmatprep.subr.mxu0 %v46
    %3197 = vmatpush1.msra.mxu0 %v45
    %3198 = vmatprep.subr.mxu0 0.0
    %3199 = vmatpush1.msra.mxu0 0.0
    %3200 = vmatprep.subr.mxu0 0.0
    %3201 = vmatpush1.msra.mxu0 0.0
    %3202 = vmatprep.subr.mxu0 0.0
    %3203 = vmatpush1.msra.mxu0 0.0
    %3204 = vmatprep.subr.mxu0 0.0
    %3205 = vmatpush1.msra.mxu0 0.0
    %3206 = vmatprep.subr.mxu0 0.0
    %3207 = vmatpush1.msra.mxu0 0.0
    %3208 = vmatprep.subr.mxu0 0.0
    %3209 = vmatpush1.msra.mxu0 0.0
    %3210 = vmatprep.subr.mxu0 0.0
    %3211 = vmatpush1.msra.mxu0 0.0
    %3212 = vmatprep.subr.mxu0 0.0
    %3213 = vmatpush1.msra.mxu0 0.0
    %3214 = vmatprep.subr.mxu0 0.0
    %3215 = vmatpush1.msra.mxu0 0.0
    %3216 = vmatprep.subr.mxu0 0.0
    %3217 = vmatpush1.msra.mxu0 0.0
    %3218 = vmatprep.subr.mxu0 0.0
    %3219 = vmatpush1.msra.mxu0 0.0
    %3220 = vmatprep.subr.mxu0 0.0
    %3221 = vmatpush1.msra.mxu0 0.0
    %3222 = vmatprep.subr.mxu0 0.0
    %3223 = vmatpush1.msra.mxu0 0.0
    %3224 = vmatprep.subr.mxu0 0.0
    %3225 = vmatpush1.msra.mxu0 0.0
    %3226 = vmatprep.subr.mxu0 0.0
    %3227 = vmatpush1.msra.mxu0 0.0
    %3228 = vmatprep.subr.mxu0 0.0
    %3229 = vmatpush1.msra.mxu0 0.0
    %3230 = vmatprep.subr.mxu0 0.0
    %3231 = vmatpush1.msra.mxu0 0.0
    %3232 = vmatprep.subr.mxu0 0.0
    %3233 = vmatpush1.msra.mxu0 0.0
    %3234 = vmatprep.subr.mxu0 0.0
    %3235 = vmatpush1.msra.mxu0 0.0
    %3236 = vmatprep.subr.mxu0 0.0
    %3237 = vmatpush1.msra.mxu0 0.0
    %3238 = vmatprep.subr.mxu0 0.0
    %3239 = vmatpush1.msra.mxu0 0.0
    %3240 = vmatprep.subr.mxu0 0.0
    %3241 = vmatpush1.msra.mxu0 0.0
    %3242 = vmatprep.subr.mxu0 0.0
    %3243 = vmatpush1.msra.mxu0 0.0
    %3244 = vmatprep.subr.mxu0 0.0
    %3245 = vmatpush1.msra.mxu0 0.0
    %3246 = vmatprep.subr.mxu0 0.0
    %3247 = vmatpush1.msra.mxu0 0.0
    %3248 = vmatprep.subr.mxu0 0.0
    %3249 = vmatpush1.msra.mxu0 0.0
    %3250 = vmatprep.subr.mxu0 0.0
    %3251 = vmatpush1.msra.mxu0 0.0
    %3252 = vmatprep.subr.mxu0 0.0
    %3253 = vmatpush1.msra.mxu0 0.0
    %3254 = vmatprep.subr.mxu0 0.0
    %3255 = vmatpush1.msra.mxu0 0.0
    %3256 = vmatprep.subr.mxu0 0.0
    %3257 = vmatpush1.msra.mxu0 0.0
    %3258 = vmatprep.subr.mxu0 0.0
    %3259 = vmatpush1.msra.mxu0 0.0
    %3260 = vmatprep.mubr.f32.mxu0 0.0
    %3261 = vmatmul.mubr.f32.gmra.mrb[0].mxu0 %v3123
    %v3262 = vpop.f32.mrb[0].mxu0
    %v3263 = vadd.f32 0.0, %v3262
    %v3264 = vpop.f32.mrb[0].mxu0
    %v3265 = vadd.f32 0.0, %v3264
    %3266 = vdwg.mxu0
    %v3271 = vrot.slane %v3192, 4
    %v3272 = vrot.slane %v3194, 4
    %v3273 = vrot.slane %v3263, 4
    %v3274 = vrot.slane %v3265, 4
    %v3279 = vadd.f32 %v3081, %v3271
    %v3280 = vadd.f32 %v3082, %v3272
    %v3281 = vadd.f32 %v3083, %v3273
    %v3282 = vadd.f32 %v3084, %v3274
    %v3283 = vxor.u32 %v3279, 2147483648
    %v3284 = vmul.f32 %v3283, 1.442695
    %v3285 = vpow.pop %v3284
    %v3286 = vadd.f32 %v3285, 1.0
    %v3287 = vrcp.pop %v3286
    %v3288 = vmul.f32 1.0, %v3287
    %v3289 = vxor.u32 %v3280, 2147483648
    %v3290 = vmul.f32 %v3289, 1.442695
    %v3291 = vpow.pop %v3290
    %v3292 = vadd.f32 %v3291, 1.0
    %v3293 = vrcp.pop %v3292
    %v3294 = vmul.f32 1.0, %v3293
    %v3295 = vtanh.pop %v3281
    %v3296 = vxor.u32 %v3282, 2147483648
    %v3297 = vmul.f32 %v3296, 1.442695
    %v3298 = vpow.pop %v3297
    %v3299 = vadd.f32 %v3298, 1.0
    %v3300 = vrcp.pop %v3299
    %v3301 = vmul.f32 1.0, %v3300
    %v3303 = vcombine.high %v3288, %v3288
    %v3305 = vunpack.c.l.s4 1966171168
    %v3306 = vunpack.c.0.s8 %v3305
    %v3307 = vlaneseq
    %v3308 = vshrl.u32 %v3307, 7
    %v3309 = vsub.s32 %v3306, %v3308
    %v3310 = vrot.slane %v3303, %v3309
    %v3312 = vunpack.c.l.s4 1966171168
    %v3313 = vunpack.c.0.s8 %v3312
    %v3314 = vlaneseq
    %v3315 = vshrl.u32 %v3314, 7
    %v3316 = vsub.s32 %v3313, %v3315
    %v3317 = vrot.slane %v3310, %v3316
    %v3319 = vmul.f32 %v2725, %v3317
    %v3320 = vmul.f32 %v3294, %v3295
    %v3322 = vcombine.high %v3320, %v3320
    %v3324 = vunpack.c.l.s4 1966171168
    %v3325 = vunpack.c.0.s8 %v3324
    %v3326 = vlaneseq
    %v3327 = vshrl.u32 %v3326, 7
    %v3328 = vsub.s32 %v3325, %v3327
    %v3329 = vrot.slane %v3322, %v3328
    %v3331 = vunpack.c.l.s4 1966171168
    %v3332 = vunpack.c.0.s8 %v3331
    %v3333 = vlaneseq
    %v3334 = vshrl.u32 %v3333, 7
    %v3335 = vsub.s32 %v3332, %v3334
    %v3336 = vrot.slane %v3329, %v3335
    %v3338 = vadd.f32 %v3319, %v3336
    %v3339 = vtanh.pop %v3338
    %v3341 = vlaneseq
    %v3342 = vshrl.u32 %v3341, 7
    %v3343 = vsub.s32 0, %v3342
    %v3344 = vrot.slane %v3339, %v3343
    %v3346 = vmul.f32 %v3301, %v3344
    %v3347 = vand.u32 2147483647, %v3346
    %vm3348 = vcmp.lt.f32.partialorder %v3346, 0.0
    %v3349 = vsel %vm3348, -1.0, 1.0
    %vm3350 = vcmp.gt.f32.partialorder %v3347, 2.4142137
    %vm3351 = vcmp.gt.f32.partialorder %v3347, 0.41421357
    %vm3352 = vmxor %vm3350, 1
    %vm3353 = vmand %vm3351, %vm3352
    %v3354 = vsel %vm3350, %v3347, 1.0
    %v3355 = vrcp.pop %v3354
    %v3356 = vmul.f32 %v3354, %v3355
    %v3357 = vsub.f32 2.0, %v3356
    %v3358 = vmul.f32 %v3355, %v3357
    %v3359 = vsub.f32 0.0, %v3358
    %v3360 = vsub.f32 %v3347, 1.0
    %v3361 = vadd.f32 %v3347, 1.0
    %v3362 = vrcp.pop %v3361
    %v3363 = vmul.f32 %v3361, %v3362
    %v3364 = vsub.f32 2.0, %v3363
    %v3365 = vmul.f32 %v3362, %v3364
    %v3366 = vmul.f32 %v3360, %v3365
    %v3367 = vsel %vm3353, %v3366, %v3347
    %v3368 = vsel %vm3350, %v3359, %v3367
    %v3369 = vsel %vm3353, 0.7853982, 0.0
    %v3370 = vsel %vm3350, 1.5707964, %v3369
    %v3371 = vmul.f32 %v3368, %v3368
    %v3372 = vmul.f32 %v3371, 0.080537446
    %v3373 = vsub.f32 %v3372, 0.13877685
    %v3374 = vmul.f32 %v3373, %v3371
    %v3375 = vadd.f32 %v3374, 0.19977711
    %v3376 = vmul.f32 %v3375, %v3371
    %v3377 = vsub.f32 %v3376, 0.3333295
    %v3378 = vmul.f32 %v3377, %v3371
    %v3379 = vmul.f32 %v3378, %v3368
    %v3380 = vadd.f32 %v3379, %v3368
    %v3381 = vadd.f32 %v3370, %v3380
    %v3382 = vmul.f32 %v3349, %v3381
    %v3383 = vmul.f32 %v3346, %v3346
    %v3384 = vand.u32 2147483647, %v3383
    %vm3385 = vcmp.lt.f32.partialorder %v3383, 0.0
    %v3386 = vsel %vm3385, -1.0, 1.0
    %vm3387 = vcmp.gt.f32.partialorder %v3384, 2.4142137
    %vm3388 = vcmp.gt.f32.partialorder %v3384, 0.41421357
    %vm3389 = vmxor %vm3387, 1
    %vm3390 = vmand %vm3388, %vm3389
    %v3391 = vsel %vm3387, %v3384, 1.0
    %v3392 = vrcp.pop %v3391
    %v3393 = vmul.f32 %v3391, %v3392
    %v3394 = vsub.f32 2.0, %v3393
    %v3395 = vmul.f32 %v3392, %v3394
    %v3396 = vsub.f32 0.0, %v3395
    %v3397 = vsub.f32 %v3384, 1.0
    %v3398 = vadd.f32 %v3384, 1.0
    %v3399 = vrcp.pop %v3398
    %v3400 = vmul.f32 %v3398, %v3399
    %v3401 = vsub.f32 2.0, %v3400
    %v3402 = vmul.f32 %v3399, %v3401
    %v3403 = vmul.f32 %v3397, %v3402
    %v3404 = vsel %vm3390, %v3403, %v3384
    %v3405 = vsel %vm3387, %v3396, %v3404
    %v3406 = vsel %vm3390, 0.7853982, 0.0
    %v3407 = vsel %vm3387, 1.5707964, %v3406
    %v3408 = vmul.f32 %v3405, %v3405
    %v3409 = vmul.f32 %v3408, 0.080537446
    %v3410 = vsub.f32 %v3409, 0.13877685
    %v3411 = vmul.f32 %v3410, %v3408
    %v3412 = vadd.f32 %v3411, 0.19977711
    %v3413 = vmul.f32 %v3412, %v3408
    %v3414 = vsub.f32 %v3413, 0.3333295
    %v3415 = vmul.f32 %v3414, %v3408
    %v3416 = vmul.f32 %v3415, %v3405
    %v3417 = vadd.f32 %v3416, %v3405
    %v3418 = vadd.f32 %v3407, %v3417
    %v3419 = vmul.f32 %v3386, %v3418
    %v3422 = vrot.slane %v3382, 4
    %v3423 = vrot.slane %v3419, 4
    %3426 = vmatprep.subr.mxu0 0.0
    %3427 = vmatpush1.msra.mxu0 %v47
    %3428 = vmatprep.subr.mxu0 0.0
    %3429 = vmatpush1.msra.mxu0 %v48
    %3430 = vmatprep.subr.mxu0 0.0
    %3431 = vmatpush1.msra.mxu0 %v49
    %3432 = vmatprep.subr.mxu0 0.0
    %3433 = vmatpush1.msra.mxu0 %v50
    %3434 = vmatprep.subr.mxu0 0.0
    %3435 = vmatpush1.msra.mxu0 %v51
    %3436 = vmatprep.subr.mxu0 0.0
    %3437 = vmatpush1.msra.mxu0 %v52
    %3438 = vmatprep.subr.mxu0 0.0
    %3439 = vmatpush1.msra.mxu0 %v53
    %3440 = vmatprep.subr.mxu0 0.0
    %3441 = vmatpush1.msra.mxu0 %v54
    %3442 = vmatprep.subr.mxu0 0.0
    %3443 = vmatpush1.msra.mxu0 %v55
    %3444 = vmatprep.subr.mxu0 0.0
    %3445 = vmatpush1.msra.mxu0 %v56
    %3446 = vmatprep.subr.mxu0 0.0
    %3447 = vmatpush1.msra.mxu0 %v57
    %3448 = vmatprep.subr.mxu0 0.0
    %3449 = vmatpush1.msra.mxu0 %v58
    %3450 = vmatprep.subr.mxu0 0.0
    %3451 = vmatpush1.msra.mxu0 %v59
    %3452 = vmatprep.subr.mxu0 0.0
    %3453 = vmatpush1.msra.mxu0 %v60
    %3454 = vmatprep.subr.mxu0 0.0
    %3455 = vmatpush1.msra.mxu0 %v61
    %3456 = vmatprep.subr.mxu0 0.0
    %3457 = vmatpush1.msra.mxu0 %v62
    %3458 = vmatprep.subr.mxu0 0.0
    %3459 = vmatpush1.msra.mxu0 %v63
    %3460 = vmatprep.subr.mxu0 0.0
    %3461 = vmatpush1.msra.mxu0 %v64
    %3462 = vmatprep.subr.mxu0 0.0
    %3463 = vmatpush1.msra.mxu0 %v65
    %3464 = vmatprep.subr.mxu0 0.0
    %3465 = vmatpush1.msra.mxu0 %v66
    %3466 = vmatprep.subr.mxu0 0.0
    %3467 = vmatpush1.msra.mxu0 %v67
    %3468 = vmatprep.subr.mxu0 0.0
    %3469 = vmatpush1.msra.mxu0 %v68
    %3470 = vmatprep.subr.mxu0 0.0
    %3471 = vmatpush1.msra.mxu0 %v69
    %3472 = vmatprep.subr.mxu0 0.0
    %3473 = vmatpush1.msra.mxu0 %v70
    %3474 = vmatprep.subr.mxu0 0.0
    %3475 = vmatpush1.msra.mxu0 %v71
    %3476 = vmatprep.subr.mxu0 0.0
    %3477 = vmatpush1.msra.mxu0 %v72
    %3478 = vmatprep.subr.mxu0 0.0
    %3479 = vmatpush1.msra.mxu0 %v73
    %3480 = vmatprep.subr.mxu0 0.0
    %3481 = vmatpush1.msra.mxu0 %v74
    %3482 = vmatprep.subr.mxu0 0.0
    %3483 = vmatpush1.msra.mxu0 %v75
    %3484 = vmatprep.subr.mxu0 0.0
    %3485 = vmatpush1.msra.mxu0 %v76
    %3486 = vmatprep.subr.mxu0 0.0
    %3487 = vmatpush1.msra.mxu0 %v77
    %3488 = vmatprep.subr.mxu0 0.0
    %3489 = vmatpush1.msra.mxu0 %v78
    %3490 = vmatprep.mubr.f32.mxu0 %v3423
    %3491 = vmatmul.mubr.f32.gmra.mrb[0].mxu0 %v3422
    %v3492 = vpop.f32.mrb[0].mxu0
    %v3493 = vadd.f32 %v79, %v3492
    %v3494 = vpop.f32.mrb[0].mxu0
    %3495 = vdwg.mxu0
    %3497 = vrot.lane.b32.xlu0 %v3493, 120
    %v3498 = vpop.permute.xlu0 %3497
    %3500 = vst.msk [vmem:[%s9 + $0x4] sm:$0x1] %vm1045, %v3498
    %v3501 = vand.u32 2147483647, %v3493
    %vm3502 = vcmp.lt.f32.partialorder %v3493, 0.0
    %v3503 = vsel %vm3502, -1.0, 1.0
    %vm3504 = vcmp.gt.f32.partialorder %v3501, 2.4142137
    %vm3505 = vcmp.gt.f32.partialorder %v3501, 0.41421357
    %vm3506 = vmxor %vm3504, 1
    %vm3507 = vmand %vm3505, %vm3506
    %v3508 = vsel %vm3504, %v3501, 1.0
    %v3509 = vrcp.pop %v3508
    %v3510 = vmul.f32 %v3508, %v3509
    %v3511 = vsub.f32 2.0, %v3510
    %v3512 = vmul.f32 %v3509, %v3511
    %v3513 = vsub.f32 0.0, %v3512
    %v3514 = vsub.f32 %v3501, 1.0
    %v3515 = vadd.f32 %v3501, 1.0
    %v3516 = vrcp.pop %v3515
    %v3517 = vmul.f32 %v3515, %v3516
    %v3518 = vsub.f32 2.0, %v3517
    %v3519 = vmul.f32 %v3516, %v3518
    %v3520 = vmul.f32 %v3514, %v3519
    %v3521 = vsel %vm3507, %v3520, %v3501
    %v3522 = vsel %vm3504, %v3513, %v3521
    %v3523 = vsel %vm3507, 0.7853982, 0.0
    %v3524 = vsel %vm3504, 1.5707964, %v3523
    %v3525 = vmul.f32 %v3522, %v3522
    %v3526 = vmul.f32 %v3525, 0.080537446
    %v3527 = vsub.f32 %v3526, 0.13877685
    %v3528 = vmul.f32 %v3527, %v3525
    %v3529 = vadd.f32 %v3528, 0.19977711
    %v3530 = vmul.f32 %v3529, %v3525
    %v3531 = vsub.f32 %v3530, 0.3333295
    %v3532 = vmul.f32 %v3531, %v3525
    %v3533 = vmul.f32 %v3532, %v3522
    %v3534 = vadd.f32 %v3533, %v3522
    %v3535 = vadd.f32 %v3524, %v3534
    %v3536 = vmul.f32 %v3503, %v3535
    %v3538 = vsel %vm538, %v3536, 0
    %3540 = vmatprep.subr.mxu0 %v40
    %3541 = vmatpush1.msra.mxu0 %v39
    %3542 = vmatprep.subr.mxu0 0.0
    %3543 = vmatpush1.msra.mxu0 0.0
    %3544 = vmatprep.subr.mxu0 0.0
    %3545 = vmatpush1.msra.mxu0 0.0
    %3546 = vmatprep.subr.mxu0 0.0
    %3547 = vmatpush1.msra.mxu0 0.0
    %3548 = vmatprep.subr.mxu0 0.0
    %3549 = vmatpush1.msra.mxu0 0.0
    %3550 = vmatprep.subr.mxu0 0.0
    %3551 = vmatpush1.msra.mxu0 0.0
    %3552 = vmatprep.subr.mxu0 0.0
    %3553 = vmatpush1.msra.mxu0 0.0
    %3554 = vmatprep.subr.mxu0 0.0
    %3555 = vmatpush1.msra.mxu0 0.0
    %3556 = vmatprep.subr.mxu0 0.0
    %3557 = vmatpush1.msra.mxu0 0.0
    %3558 = vmatprep.subr.mxu0 0.0
    %3559 = vmatpush1.msra.mxu0 0.0
    %3560 = vmatprep.subr.mxu0 0.0
    %3561 = vmatpush1.msra.mxu0 0.0
    %3562 = vmatprep.subr.mxu0 0.0
    %3563 = vmatpush1.msra.mxu0 0.0
    %3564 = vmatprep.subr.mxu0 0.0
    %3565 = vmatpush1.msra.mxu0 0.0
    %3566 = vmatprep.subr.mxu0 0.0
    %3567 = vmatpush1.msra.mxu0 0.0
    %3568 = vmatprep.subr.mxu0 0.0
    %3569 = vmatpush1.msra.mxu0 0.0
    %3570 = vmatprep.subr.mxu0 0.0
    %3571 = vmatpush1.msra.mxu0 0.0
    %3572 = vmatprep.subr.mxu0 0.0
    %3573 = vmatpush1.msra.mxu0 0.0
    %3574 = vmatprep.subr.mxu0 0.0
    %3575 = vmatpush1.msra.mxu0 0.0
    %3576 = vmatprep.subr.mxu0 0.0
    %3577 = vmatpush1.msra.mxu0 0.0
    %3578 = vmatprep.subr.mxu0 0.0
    %3579 = vmatpush1.msra.mxu0 0.0
    %3580 = vmatprep.subr.mxu0 0.0
    %3581 = vmatpush1.msra.mxu0 0.0
    %3582 = vmatprep.subr.mxu0 0.0
    %3583 = vmatpush1.msra.mxu0 0.0
    %3584 = vmatprep.subr.mxu0 0.0
    %3585 = vmatpush1.msra.mxu0 0.0
    %3586 = vmatprep.subr.mxu0 0.0
    %3587 = vmatpush1.msra.mxu0 0.0
    %3588 = vmatprep.subr.mxu0 0.0
    %3589 = vmatpush1.msra.mxu0 0.0
    %3590 = vmatprep.subr.mxu0 0.0
    %3591 = vmatpush1.msra.mxu0 0.0
    %3592 = vmatprep.subr.mxu0 0.0
    %3593 = vmatpush1.msra.mxu0 0.0
    %3594 = vmatprep.subr.mxu0 0.0
    %3595 = vmatpush1.msra.mxu0 0.0
    %3596 = vmatprep.subr.mxu0 0.0
    %3597 = vmatpush1.msra.mxu0 0.0
    %3598 = vmatprep.subr.mxu0 0.0
    %3599 = vmatpush1.msra.mxu0 0.0
    %3600 = vmatprep.subr.mxu0 0.0
    %3601 = vmatpush1.msra.mxu0 0.0
    %3602 = vmatprep.subr.mxu0 0.0
    %3603 = vmatpush1.msra.mxu0 0.0
    %3604 = vmatprep.mubr.f32.mxu0 0.0
    %3605 = vmatmul.mubr.f32.gmra.mrb[0].mxu0 %v3538
    %v3606 = vpop.f32.mrb[0].mxu0
    %v3607 = vadd.f32 0.0, %v3606
    %v3608 = vpop.f32.mrb[0].mxu0
    %v3609 = vadd.f32 0.0, %v3608
    %3610 = vdwg.mxu0
    %3611 = vmatprep.subr.mxu0 %v42
    %3612 = vmatpush1.msra.mxu0 %v41
    %3613 = vmatprep.subr.mxu0 0.0
    %3614 = vmatpush1.msra.mxu0 0.0
    %3615 = vmatprep.subr.mxu0 0.0
    %3616 = vmatpush1.msra.mxu0 0.0
    %3617 = vmatprep.subr.mxu0 0.0
    %3618 = vmatpush1.msra.mxu0 0.0
    %3619 = vmatprep.subr.mxu0 0.0
    %3620 = vmatpush1.msra.mxu0 0.0
    %3621 = vmatprep.subr.mxu0 0.0
    %3622 = vmatpush1.msra.mxu0 0.0
    %3623 = vmatprep.subr.mxu0 0.0
    %3624 = vmatpush1.msra.mxu0 0.0
    %3625 = vmatprep.subr.mxu0 0.0
    %3626 = vmatpush1.msra.mxu0 0.0
    %3627 = vmatprep.subr.mxu0 0.0
    %3628 = vmatpush1.msra.mxu0 0.0
    %3629 = vmatprep.subr.mxu0 0.0
    %3630 = vmatpush1.msra.mxu0 0.0
    %3631 = vmatprep.subr.mxu0 0.0
    %3632 = vmatpush1.msra.mxu0 0.0
    %3633 = vmatprep.subr.mxu0 0.0
    %3634 = vmatpush1.msra.mxu0 0.0
    %3635 = vmatprep.subr.mxu0 0.0
    %3636 = vmatpush1.msra.mxu0 0.0
    %3637 = vmatprep.subr.mxu0 0.0
    %3638 = vmatpush1.msra.mxu0 0.0
    %3639 = vmatprep.subr.mxu0 0.0
    %3640 = vmatpush1.msra.mxu0 0.0
    %3641 = vmatprep.subr.mxu0 0.0
    %3642 = vmatpush1.msra.mxu0 0.0
    %3643 = vmatprep.subr.mxu0 0.0
    %3644 = vmatpush1.msra.mxu0 0.0
    %3645 = vmatprep.subr.mxu0 0.0
    %3646 = vmatpush1.msra.mxu0 0.0
    %3647 = vmatprep.subr.mxu0 0.0
    %3648 = vmatpush1.msra.mxu0 0.0
    %3649 = vmatprep.subr.mxu0 0.0
    %3650 = vmatpush1.msra.mxu0 0.0
    %3651 = vmatprep.subr.mxu0 0.0
    %3652 = vmatpush1.msra.mxu0 0.0
    %3653 = vmatprep.subr.mxu0 0.0
    %3654 = vmatpush1.msra.mxu0 0.0
    %3655 = vmatprep.subr.mxu0 0.0
    %3656 = vmatpush1.msra.mxu0 0.0
    %3657 = vmatprep.subr.mxu0 0.0
    %3658 = vmatpush1.msra.mxu0 0.0
    %3659 = vmatprep.subr.mxu0 0.0
    %3660 = vmatpush1.msra.mxu0 0.0
    %3661 = vmatprep.subr.mxu0 0.0
    %3662 = vmatpush1.msra.mxu0 0.0
    %3663 = vmatprep.subr.mxu0 0.0
    %3664 = vmatpush1.msra.mxu0 0.0
    %3665 = vmatprep.subr.mxu0 0.0
    %3666 = vmatpush1.msra.mxu0 0.0
    %3667 = vmatprep.subr.mxu0 0.0
    %3668 = vmatpush1.msra.mxu0 0.0
    %3669 = vmatprep.subr.mxu0 0.0
    %3670 = vmatpush1.msra.mxu0 0.0
    %3671 = vmatprep.subr.mxu0 0.0
    %3672 = vmatpush1.msra.mxu0 0.0
    %3673 = vmatprep.subr.mxu0 0.0
    %3674 = vmatpush1.msra.mxu0 0.0
    %3675 = vmatprep.mubr.f32.mxu0 0.0
    %3676 = vmatmul.mubr.f32.gmra.mrb[0].mxu0 %v3538
    %v3677 = vpop.f32.mrb[0].mxu0
    %v3678 = vadd.f32 0.0, %v3677
    %v3679 = vpop.f32.mrb[0].mxu0
    %v3680 = vadd.f32 0.0, %v3679
    %3681 = vdwg.mxu0
    %v3686 = vrot.slane %v3607, 3
    %v3687 = vrot.slane %v3609, 3
    %v3688 = vrot.slane %v3678, 3
    %v3689 = vrot.slane %v3680, 3
    %v3694 = vadd.f32 %v496, %v3686
    %v3695 = vadd.f32 %v497, %v3687
    %v3696 = vadd.f32 %v498, %v3688
    %v3697 = vadd.f32 %v499, %v3689
    %v3698 = vmul.f32 %v3493, %v3493
    %v3699 = vand.u32 2147483647, %v3698
    %vm3700 = vcmp.lt.f32.partialorder %v3698, 0.0
    %v3701 = vsel %vm3700, -1.0, 1.0
    %vm3702 = vcmp.gt.f32.partialorder %v3699, 2.4142137
    %vm3703 = vcmp.gt.f32.partialorder %v3699, 0.41421357
    %vm3704 = vmxor %vm3702, 1
    %vm3705 = vmand %vm3703, %vm3704
    %v3706 = vsel %vm3702, %v3699, 1.0
    %v3707 = vrcp.pop %v3706
    %v3708 = vmul.f32 %v3706, %v3707
    %v3709 = vsub.f32 2.0, %v3708
    %v3710 = vmul.f32 %v3707, %v3709
    %v3711 = vsub.f32 0.0, %v3710
    %v3712 = vsub.f32 %v3699, 1.0
    %v3713 = vadd.f32 %v3699, 1.0
    %v3714 = vrcp.pop %v3713
    %v3715 = vmul.f32 %v3713, %v3714
    %v3716 = vsub.f32 2.0, %v3715
    %v3717 = vmul.f32 %v3714, %v3716
    %v3718 = vmul.f32 %v3712, %v3717
    %v3719 = vsel %vm3705, %v3718, %v3699
    %v3720 = vsel %vm3702, %v3711, %v3719
    %v3721 = vsel %vm3705, 0.7853982, 0.0
    %v3722 = vsel %vm3702, 1.5707964, %v3721
    %v3723 = vmul.f32 %v3720, %v3720
    %v3724 = vmul.f32 %v3723, 0.080537446
    %v3725 = vsub.f32 %v3724, 0.13877685
    %v3726 = vmul.f32 %v3725, %v3723
    %v3727 = vadd.f32 %v3726, 0.19977711
    %v3728 = vmul.f32 %v3727, %v3723
    %v3729 = vsub.f32 %v3728, 0.3333295
    %v3730 = vmul.f32 %v3729, %v3723
    %v3731 = vmul.f32 %v3730, %v3720
    %v3732 = vadd.f32 %v3731, %v3720
    %v3733 = vadd.f32 %v3722, %v3732
    %v3734 = vmul.f32 %v3701, %v3733
    %v3736 = vsel %vm538, %v3734, 0
    %3738 = vmatprep.subr.mxu0 %v44
    %3739 = vmatpush1.msra.mxu0 %v43
    %3740 = vmatprep.subr.mxu0 0.0
    %3741 = vmatpush1.msra.mxu0 0.0
    %3742 = vmatprep.subr.mxu0 0.0
    %3743 = vmatpush1.msra.mxu0 0.0
    %3744 = vmatprep.subr.mxu0 0.0
    %3745 = vmatpush1.msra.mxu0 0.0
    %3746 = vmatprep.subr.mxu0 0.0
    %3747 = vmatpush1.msra.mxu0 0.0
    %3748 = vmatprep.subr.mxu0 0.0
    %3749 = vmatpush1.msra.mxu0 0.0
    %3750 = vmatprep.subr.mxu0 0.0
    %3751 = vmatpush1.msra.mxu0 0.0
    %3752 = vmatprep.subr.mxu0 0.0
    %3753 = vmatpush1.msra.mxu0 0.0
    %3754 = vmatprep.subr.mxu0 0.0
    %3755 = vmatpush1.msra.mxu0 0.0
    %3756 = vmatprep.subr.mxu0 0.0
    %3757 = vmatpush1.msra.mxu0 0.0
    %3758 = vmatprep.subr.mxu0 0.0
    %3759 = vmatpush1.msra.mxu0 0.0
    %3760 = vmatprep.subr.mxu0 0.0
    %3761 = vmatpush1.msra.mxu0 0.0
    %3762 = vmatprep.subr.mxu0 0.0
    %3763 = vmatpush1.msra.mxu0 0.0
    %3764 = vmatprep.subr.mxu0 0.0
    %3765 = vmatpush1.msra.mxu0 0.0
    %3766 = vmatprep.subr.mxu0 0.0
    %3767 = vmatpush1.msra.mxu0 0.0
    %3768 = vmatprep.subr.mxu0 0.0
    %3769 = vmatpush1.msra.mxu0 0.0
    %3770 = vmatprep.subr.mxu0 0.0
    %3771 = vmatpush1.msra.mxu0 0.0
    %3772 = vmatprep.subr.mxu0 0.0
    %3773 = vmatpush1.msra.mxu0 0.0
    %3774 = vmatprep.subr.mxu0 0.0
    %3775 = vmatpush1.msra.mxu0 0.0
    %3776 = vmatprep.subr.mxu0 0.0
    %3777 = vmatpush1.msra.mxu0 0.0
    %3778 = vmatprep.subr.mxu0 0.0
    %3779 = vmatpush1.msra.mxu0 0.0
    %3780 = vmatprep.subr.mxu0 0.0
    %3781 = vmatpush1.msra.mxu0 0.0
    %3782 = vmatprep.subr.mxu0 0.0
    %3783 = vmatpush1.msra.mxu0 0.0
    %3784 = vmatprep.subr.mxu0 0.0
    %3785 = vmatpush1.msra.mxu0 0.0
    %3786 = vmatprep.subr.mxu0 0.0
    %3787 = vmatpush1.msra.mxu0 0.0
    %3788 = vmatprep.subr.mxu0 0.0
    %3789 = vmatpush1.msra.mxu0 0.0
    %3790 = vmatprep.subr.mxu0 0.0
    %3791 = vmatpush1.msra.mxu0 0.0
    %3792 = vmatprep.subr.mxu0 0.0
    %3793 = vmatpush1.msra.mxu0 0.0
    %3794 = vmatprep.subr.mxu0 0.0
    %3795 = vmatpush1.msra.mxu0 0.0
    %3796 = vmatprep.subr.mxu0 0.0
    %3797 = vmatpush1.msra.mxu0 0.0
    %3798 = vmatprep.subr.mxu0 0.0
    %3799 = vmatpush1.msra.mxu0 0.0
    %3800 = vmatprep.subr.mxu0 0.0
    %3801 = vmatpush1.msra.mxu0 0.0
    %3802 = vmatprep.mubr.f32.mxu0 0.0
    %3803 = vmatmul.mubr.f32.gmra.mrb[0].mxu0 %v3736
    %v3804 = vpop.f32.mrb[0].mxu0
    %v3805 = vadd.f32 0.0, %v3804
    %v3806 = vpop.f32.mrb[0].mxu0
    %v3807 = vadd.f32 0.0, %v3806
    %3808 = vdwg.mxu0
    %3809 = vmatprep.subr.mxu0 %v46
    %3810 = vmatpush1.msra.mxu0 %v45
    %3811 = vmatprep.subr.mxu0 0.0
    %3812 = vmatpush1.msra.mxu0 0.0
    %3813 = vmatprep.subr.mxu0 0.0
    %3814 = vmatpush1.msra.mxu0 0.0
    %3815 = vmatprep.subr.mxu0 0.0
    %3816 = vmatpush1.msra.mxu0 0.0
    %3817 = vmatprep.subr.mxu0 0.0
    %3818 = vmatpush1.msra.mxu0 0.0
    %3819 = vmatprep.subr.mxu0 0.0
    %3820 = vmatpush1.msra.mxu0 0.0
    %3821 = vmatprep.subr.mxu0 0.0
    %3822 = vmatpush1.msra.mxu0 0.0
    %3823 = vmatprep.subr.mxu0 0.0
    %3824 = vmatpush1.msra.mxu0 0.0
    %3825 = vmatprep.subr.mxu0 0.0
    %3826 = vmatpush1.msra.mxu0 0.0
    %3827 = vmatprep.subr.mxu0 0.0
    %3828 = vmatpush1.msra.mxu0 0.0
    %3829 = vmatprep.subr.mxu0 0.0
    %3830 = vmatpush1.msra.mxu0 0.0
    %3831 = vmatprep.subr.mxu0 0.0
    %3832 = vmatpush1.msra.mxu0 0.0
    %3833 = vmatprep.subr.mxu0 0.0
    %3834 = vmatpush1.msra.mxu0 0.0
    %3835 = vmatprep.subr.mxu0 0.0
    %3836 = vmatpush1.msra.mxu0 0.0
    %3837 = vmatprep.subr.mxu0 0.0
    %3838 = vmatpush1.msra.mxu0 0.0
    %3839 = vmatprep.subr.mxu0 0.0
    %3840 = vmatpush1.msra.mxu0 0.0
    %3841 = vmatprep.subr.mxu0 0.0
    %3842 = vmatpush1.msra.mxu0 0.0
    %3843 = vmatprep.subr.mxu0 0.0
    %3844 = vmatpush1.msra.mxu0 0.0
    %3845 = vmatprep.subr.mxu0 0.0
    %3846 = vmatpush1.msra.mxu0 0.0
    %3847 = vmatprep.subr.mxu0 0.0
    %3848 = vmatpush1.msra.mxu0 0.0
    %3849 = vmatprep.subr.mxu0 0.0
    %3850 = vmatpush1.msra.mxu0 0.0
    %3851 = vmatprep.subr.mxu0 0.0
    %3852 = vmatpush1.msra.mxu0 0.0
    %3853 = vmatprep.subr.mxu0 0.0
    %3854 = vmatpush1.msra.mxu0 0.0
    %3855 = vmatprep.subr.mxu0 0.0
    %3856 = vmatpush1.msra.mxu0 0.0
    %3857 = vmatprep.subr.mxu0 0.0
    %3858 = vmatpush1.msra.mxu0 0.0
    %3859 = vmatprep.subr.mxu0 0.0
    %3860 = vmatpush1.msra.mxu0 0.0
    %3861 = vmatprep.subr.mxu0 0.0
    %3862 = vmatpush1.msra.mxu0 0.0
    %3863 = vmatprep.subr.mxu0 0.0
    %3864 = vmatpush1.msra.mxu0 0.0
    %3865 = vmatprep.subr.mxu0 0.0
    %3866 = vmatpush1.msra.mxu0 0.0
    %3867 = vmatprep.subr.mxu0 0.0
    %3868 = vmatpush1.msra.mxu0 0.0
    %3869 = vmatprep.subr.mxu0 0.0
    %3870 = vmatpush1.msra.mxu0 0.0
    %3871 = vmatprep.subr.mxu0 0.0
    %3872 = vmatpush1.msra.mxu0 0.0
    %3873 = vmatprep.mubr.f32.mxu0 0.0
    %3874 = vmatmul.mubr.f32.gmra.mrb[0].mxu0 %v3736
    %v3875 = vpop.f32.mrb[0].mxu0
    %v3876 = vadd.f32 0.0, %v3875
    %v3877 = vpop.f32.mrb[0].mxu0
    %v3878 = vadd.f32 0.0, %v3877
    %3879 = vdwg.mxu0
    %v3884 = vrot.slane %v3805, 3
    %v3885 = vrot.slane %v3807, 3
    %v3886 = vrot.slane %v3876, 3
    %v3887 = vrot.slane %v3878, 3
    %v3892 = vadd.f32 %v3694, %v3884
    %v3893 = vadd.f32 %v3695, %v3885
    %v3894 = vadd.f32 %v3696, %v3886
    %v3895 = vadd.f32 %v3697, %v3887
    %v3896 = vxor.u32 %v3892, 2147483648
    %v3897 = vmul.f32 %v3896, 1.442695
    %v3898 = vpow.pop %v3897
    %v3899 = vadd.f32 %v3898, 1.0
    %v3900 = vrcp.pop %v3899
    %v3901 = vmul.f32 1.0, %v3900
    %v3902 = vxor.u32 %v3893, 2147483648
    %v3903 = vmul.f32 %v3902, 1.442695
    %v3904 = vpow.pop %v3903
    %v3905 = vadd.f32 %v3904, 1.0
    %v3906 = vrcp.pop %v3905
    %v3907 = vmul.f32 1.0, %v3906
    %v3908 = vtanh.pop %v3894
    %v3909 = vxor.u32 %v3895, 2147483648
    %v3910 = vmul.f32 %v3909, 1.442695
    %v3911 = vpow.pop %v3910
    %v3912 = vadd.f32 %v3911, 1.0
    %v3913 = vrcp.pop %v3912
    %v3914 = vmul.f32 1.0, %v3913
    %v3916 = vcombine.high %v3901, %v3901
    %v3918 = vunpack.c.l.s4 1966171168
    %v3919 = vunpack.c.0.s8 %v3918
    %v3920 = vlaneseq
    %v3921 = vshrl.u32 %v3920, 7
    %v3922 = vsub.s32 %v3919, %v3921
    %v3923 = vrot.slane %v3916, %v3922
    %v3924 = vcombine.high %v3923, %v3923
    %v3926 = vunpack.c.l.s4 1966171168
    %v3927 = vunpack.c.0.s8 %v3926
    %v3928 = vlaneseq
    %v3929 = vshrl.u32 %v3928, 7
    %v3930 = vsub.s32 %v3927, %v3929
    %v3931 = vrot.slane %v3924, %v3930
    %v3933 = vmul.f32 %v3338, %v3931
    %v3934 = vmul.f32 %v3907, %v3908
    %v3936 = vcombine.high %v3934, %v3934
    %v3938 = vunpack.c.l.s4 1966171168
    %v3939 = vunpack.c.0.s8 %v3938
    %v3940 = vlaneseq
    %v3941 = vshrl.u32 %v3940, 7
    %v3942 = vsub.s32 %v3939, %v3941
    %v3943 = vrot.slane %v3936, %v3942
    %v3944 = vcombine.high %v3943, %v3943
    %v3946 = vunpack.c.l.s4 1966171168
    %v3947 = vunpack.c.0.s8 %v3946
    %v3948 = vlaneseq
    %v3949 = vshrl.u32 %v3948, 7
    %v3950 = vsub.s32 %v3947, %v3949
    %v3951 = vrot.slane %v3944, %v3950
    %v3953 = vadd.f32 %v3933, %v3951
    %v3954 = vtanh.pop %v3953
    %v3956 = vlaneseq
    %v3957 = vshrl.u32 %v3956, 7
    %v3958 = vsub.s32 0, %v3957
    %v3959 = vrot.slane %v3954, %v3958
    %v3961 = vmul.f32 %v3914, %v3959
    %v3962 = vand.u32 2147483647, %v3961
    %vm3963 = vcmp.lt.f32.partialorder %v3961, 0.0
    %v3964 = vsel %vm3963, -1.0, 1.0
    %vm3965 = vcmp.gt.f32.partialorder %v3962, 2.4142137
    %vm3966 = vcmp.gt.f32.partialorder %v3962, 0.41421357
    %vm3967 = vmxor %vm3965, 1
    %vm3968 = vmand %vm3966, %vm3967
    %v3969 = vsel %vm3965, %v3962, 1.0
    %v3970 = vrcp.pop %v3969
    %v3971 = vmul.f32 %v3969, %v3970
    %v3972 = vsub.f32 2.0, %v3971
    %v3973 = vmul.f32 %v3970, %v3972
    %v3974 = vsub.f32 0.0, %v3973
    %v3975 = vsub.f32 %v3962, 1.0
    %v3976 = vadd.f32 %v3962, 1.0
    %v3977 = vrcp.pop %v3976
    %v3978 = vmul.f32 %v3976, %v3977
    %v3979 = vsub.f32 2.0, %v3978
    %v3980 = vmul.f32 %v3977, %v3979
    %v3981 = vmul.f32 %v3975, %v3980
    %v3982 = vsel %vm3968, %v3981, %v3962
    %v3983 = vsel %vm3965, %v3974, %v3982
    %v3984 = vsel %vm3968, 0.7853982, 0.0
    %v3985 = vsel %vm3965, 1.5707964, %v3984
    %v3986 = vmul.f32 %v3983, %v3983
    %v3987 = vmul.f32 %v3986, 0.080537446
    %v3988 = vsub.f32 %v3987, 0.13877685
    %v3989 = vmul.f32 %v3988, %v3986
    %v3990 = vadd.f32 %v3989, 0.19977711
    %v3991 = vmul.f32 %v3990, %v3986
    %v3992 = vsub.f32 %v3991, 0.3333295
    %v3993 = vmul.f32 %v3992, %v3986
    %v3994 = vmul.f32 %v3993, %v3983
    %v3995 = vadd.f32 %v3994, %v3983
    %v3996 = vadd.f32 %v3985, %v3995
    %v3997 = vmul.f32 %v3964, %v3996
    %v3998 = vmul.f32 %v3961, %v3961
    %v3999 = vand.u32 2147483647, %v3998
    %vm4000 = vcmp.lt.f32.partialorder %v3998, 0.0
    %v4001 = vsel %vm4000, -1.0, 1.0
    %vm4002 = vcmp.gt.f32.partialorder %v3999, 2.4142137
    %vm4003 = vcmp.gt.f32.partialorder %v3999, 0.41421357
    %vm4004 = vmxor %vm4002, 1
    %vm4005 = vmand %vm4003, %vm4004
    %v4006 = vsel %vm4002, %v3999, 1.0
    %v4007 = vrcp.pop %v4006
    %v4008 = vmul.f32 %v4006, %v4007
    %v4009 = vsub.f32 2.0, %v4008
    %v4010 = vmul.f32 %v4007, %v4009
    %v4011 = vsub.f32 0.0, %v4010
    %v4012 = vsub.f32 %v3999, 1.0
    %v4013 = vadd.f32 %v3999, 1.0
    %v4014 = vrcp.pop %v4013
    %v4015 = vmul.f32 %v4013, %v4014
    %v4016 = vsub.f32 2.0, %v4015
    %v4017 = vmul.f32 %v4014, %v4016
    %v4018 = vmul.f32 %v4012, %v4017
    %v4019 = vsel %vm4005, %v4018, %v3999
    %v4020 = vsel %vm4002, %v4011, %v4019
    %v4021 = vsel %vm4005, 0.7853982, 0.0
    %v4022 = vsel %vm4002, 1.5707964, %v4021
    %v4023 = vmul.f32 %v4020, %v4020
    %v4024 = vmul.f32 %v4023, 0.080537446
    %v4025 = vsub.f32 %v4024, 0.13877685
    %v4026 = vmul.f32 %v4025, %v4023
    %v4027 = vadd.f32 %v4026, 0.19977711
    %v4028 = vmul.f32 %v4027, %v4023
    %v4029 = vsub.f32 %v4028, 0.3333295
    %v4030 = vmul.f32 %v4029, %v4023
    %v4031 = vmul.f32 %v4030, %v4020
    %v4032 = vadd.f32 %v4031, %v4020
    %v4033 = vadd.f32 %v4022, %v4032
    %v4034 = vmul.f32 %v4001, %v4033
    %v4037 = vrot.slane %v3997, 5
    %v4038 = vrot.slane %v4034, 5
    %4041 = vmatprep.subr.mxu0 0.0
    %4042 = vmatpush1.msra.mxu0 %v47
    %4043 = vmatprep.subr.mxu0 0.0
    %4044 = vmatpush1.msra.mxu0 %v48
    %4045 = vmatprep.subr.mxu0 0.0
    %4046 = vmatpush1.msra.mxu0 %v49
    %4047 = vmatprep.subr.mxu0 0.0
    %4048 = vmatpush1.msra.mxu0 %v50
    %4049 = vmatprep.subr.mxu0 0.0
    %4050 = vmatpush1.msra.mxu0 %v51
    %4051 = vmatprep.subr.mxu0 0.0
    %4052 = vmatpush1.msra.mxu0 %v52
    %4053 = vmatprep.subr.mxu0 0.0
    %4054 = vmatpush1.msra.mxu0 %v53
    %4055 = vmatprep.subr.mxu0 0.0
    %4056 = vmatpush1.msra.mxu0 %v54
    %4057 = vmatprep.subr.mxu0 0.0
    %4058 = vmatpush1.msra.mxu0 %v55
    %4059 = vmatprep.subr.mxu0 0.0
    %4060 = vmatpush1.msra.mxu0 %v56
    %4061 = vmatprep.subr.mxu0 0.0
    %4062 = vmatpush1.msra.mxu0 %v57
    %4063 = vmatprep.subr.mxu0 0.0
    %4064 = vmatpush1.msra.mxu0 %v58
    %4065 = vmatprep.subr.mxu0 0.0
    %4066 = vmatpush1.msra.mxu0 %v59
    %4067 = vmatprep.subr.mxu0 0.0
    %4068 = vmatpush1.msra.mxu0 %v60
    %4069 = vmatprep.subr.mxu0 0.0
    %4070 = vmatpush1.msra.mxu0 %v61
    %4071 = vmatprep.subr.mxu0 0.0
    %4072 = vmatpush1.msra.mxu0 %v62
    %4073 = vmatprep.subr.mxu0 0.0
    %4074 = vmatpush1.msra.mxu0 %v63
    %4075 = vmatprep.subr.mxu0 0.0
    %4076 = vmatpush1.msra.mxu0 %v64
    %4077 = vmatprep.subr.mxu0 0.0
    %4078 = vmatpush1.msra.mxu0 %v65
    %4079 = vmatprep.subr.mxu0 0.0
    %4080 = vmatpush1.msra.mxu0 %v66
    %4081 = vmatprep.subr.mxu0 0.0
    %4082 = vmatpush1.msra.mxu0 %v67
    %4083 = vmatprep.subr.mxu0 0.0
    %4084 = vmatpush1.msra.mxu0 %v68
    %4085 = vmatprep.subr.mxu0 0.0
    %4086 = vmatpush1.msra.mxu0 %v69
    %4087 = vmatprep.subr.mxu0 0.0
    %4088 = vmatpush1.msra.mxu0 %v70
    %4089 = vmatprep.subr.mxu0 0.0
    %4090 = vmatpush1.msra.mxu0 %v71
    %4091 = vmatprep.subr.mxu0 0.0
    %4092 = vmatpush1.msra.mxu0 %v72
    %4093 = vmatprep.subr.mxu0 0.0
    %4094 = vmatpush1.msra.mxu0 %v73
    %4095 = vmatprep.subr.mxu0 0.0
    %4096 = vmatpush1.msra.mxu0 %v74
    %4097 = vmatprep.subr.mxu0 0.0
    %4098 = vmatpush1.msra.mxu0 %v75
    %4099 = vmatprep.subr.mxu0 0.0
    %4100 = vmatpush1.msra.mxu0 %v76
    %4101 = vmatprep.subr.mxu0 0.0
    %4102 = vmatpush1.msra.mxu0 %v77
    %4103 = vmatprep.subr.mxu0 0.0
    %4104 = vmatpush1.msra.mxu0 %v78
    %4105 = vmatprep.mubr.f32.mxu0 %v4038
    %4106 = vmatmul.mubr.f32.gmra.mrb[0].mxu0 %v4037
    %v4107 = vpop.f32.mrb[0].mxu0
    %v4108 = vadd.f32 %v79, %v4107
    %v4109 = vpop.f32.mrb[0].mxu0
    %4110 = vdwg.mxu0
    %4112 = vrot.lane.b32.xlu0 %v4108, 120
    %v4113 = vpop.permute.xlu0 %4112
    %4115 = vst.msk [vmem:[%s9 + $0x5] sm:$0x1] %vm1045, %v4113
    %v4116 = vand.u32 2147483647, %v4108
    %vm4117 = vcmp.lt.f32.partialorder %v4108, 0.0
    %v4118 = vsel %vm4117, -1.0, 1.0
    %vm4119 = vcmp.gt.f32.partialorder %v4116, 2.4142137
    %vm4120 = vcmp.gt.f32.partialorder %v4116, 0.41421357
    %vm4121 = vmxor %vm4119, 1
    %vm4122 = vmand %vm4120, %vm4121
    %v4123 = vsel %vm4119, %v4116, 1.0
    %v4124 = vrcp.pop %v4123
    %v4125 = vmul.f32 %v4123, %v4124
    %v4126 = vsub.f32 2.0, %v4125
    %v4127 = vmul.f32 %v4124, %v4126
    %v4128 = vsub.f32 0.0, %v4127
    %v4129 = vsub.f32 %v4116, 1.0
    %v4130 = vadd.f32 %v4116, 1.0
    %v4131 = vrcp.pop %v4130
    %v4132 = vmul.f32 %v4130, %v4131
    %v4133 = vsub.f32 2.0, %v4132
    %v4134 = vmul.f32 %v4131, %v4133
    %v4135 = vmul.f32 %v4129, %v4134
    %v4136 = vsel %vm4122, %v4135, %v4116
    %v4137 = vsel %vm4119, %v4128, %v4136
    %v4138 = vsel %vm4122, 0.7853982, 0.0
    %v4139 = vsel %vm4119, 1.5707964, %v4138
    %v4140 = vmul.f32 %v4137, %v4137
    %v4141 = vmul.f32 %v4140, 0.080537446
    %v4142 = vsub.f32 %v4141, 0.13877685
    %v4143 = vmul.f32 %v4142, %v4140
    %v4144 = vadd.f32 %v4143, 0.19977711
    %v4145 = vmul.f32 %v4144, %v4140
    %v4146 = vsub.f32 %v4145, 0.3333295
    %v4147 = vmul.f32 %v4146, %v4140
    %v4148 = vmul.f32 %v4147, %v4137
    %v4149 = vadd.f32 %v4148, %v4137
    %v4150 = vadd.f32 %v4139, %v4149
    %v4151 = vmul.f32 %v4118, %v4150
    %v4153 = vsel %vm538, %v4151, 0
    %4155 = vmatprep.subr.mxu0 %v40
    %4156 = vmatpush1.msra.mxu0 %v39
    %4157 = vmatprep.subr.mxu0 0.0
    %4158 = vmatpush1.msra.mxu0 0.0
    %4159 = vmatprep.subr.mxu0 0.0
    %4160 = vmatpush1.msra.mxu0 0.0
    %4161 = vmatprep.subr.mxu0 0.0
    %4162 = vmatpush1.msra.mxu0 0.0
    %4163 = vmatprep.subr.mxu0 0.0
    %4164 = vmatpush1.msra.mxu0 0.0
    %4165 = vmatprep.subr.mxu0 0.0
    %4166 = vmatpush1.msra.mxu0 0.0
    %4167 = vmatprep.subr.mxu0 0.0
    %4168 = vmatpush1.msra.mxu0 0.0
    %4169 = vmatprep.subr.mxu0 0.0
    %4170 = vmatpush1.msra.mxu0 0.0
    %4171 = vmatprep.subr.mxu0 0.0
    %4172 = vmatpush1.msra.mxu0 0.0
    %4173 = vmatprep.subr.mxu0 0.0
    %4174 = vmatpush1.msra.mxu0 0.0
    %4175 = vmatprep.subr.mxu0 0.0
    %4176 = vmatpush1.msra.mxu0 0.0
    %4177 = vmatprep.subr.mxu0 0.0
    %4178 = vmatpush1.msra.mxu0 0.0
    %4179 = vmatprep.subr.mxu0 0.0
    %4180 = vmatpush1.msra.mxu0 0.0
    %4181 = vmatprep.subr.mxu0 0.0
    %4182 = vmatpush1.msra.mxu0 0.0
    %4183 = vmatprep.subr.mxu0 0.0
    %4184 = vmatpush1.msra.mxu0 0.0
    %4185 = vmatprep.subr.mxu0 0.0
    %4186 = vmatpush1.msra.mxu0 0.0
    %4187 = vmatprep.subr.mxu0 0.0
    %4188 = vmatpush1.msra.mxu0 0.0
    %4189 = vmatprep.subr.mxu0 0.0
    %4190 = vmatpush1.msra.mxu0 0.0
    %4191 = vmatprep.subr.mxu0 0.0
    %4192 = vmatpush1.msra.mxu0 0.0
    %4193 = vmatprep.subr.mxu0 0.0
    %4194 = vmatpush1.msra.mxu0 0.0
    %4195 = vmatprep.subr.mxu0 0.0
    %4196 = vmatpush1.msra.mxu0 0.0
    %4197 = vmatprep.subr.mxu0 0.0
    %4198 = vmatpush1.msra.mxu0 0.0
    %4199 = vmatprep.subr.mxu0 0.0
    %4200 = vmatpush1.msra.mxu0 0.0
    %4201 = vmatprep.subr.mxu0 0.0
    %4202 = vmatpush1.msra.mxu0 0.0
    %4203 = vmatprep.subr.mxu0 0.0
    %4204 = vmatpush1.msra.mxu0 0.0
    %4205 = vmatprep.subr.mxu0 0.0
    %4206 = vmatpush1.msra.mxu0 0.0
    %4207 = vmatprep.subr.mxu0 0.0
    %4208 = vmatpush1.msra.mxu0 0.0
    %4209 = vmatprep.subr.mxu0 0.0
    %4210 = vmatpush1.msra.mxu0 0.0
    %4211 = vmatprep.subr.mxu0 0.0
    %4212 = vmatpush1.msra.mxu0 0.0
    %4213 = vmatprep.subr.mxu0 0.0
    %4214 = vmatpush1.msra.mxu0 0.0
    %4215 = vmatprep.subr.mxu0 0.0
    %4216 = vmatpush1.msra.mxu0 0.0
    %4217 = vmatprep.subr.mxu0 0.0
    %4218 = vmatpush1.msra.mxu0 0.0
    %4219 = vmatprep.mubr.f32.mxu0 0.0
    %4220 = vmatmul.mubr.f32.gmra.mrb[0].mxu0 %v4153
    %v4221 = vpop.f32.mrb[0].mxu0
    %v4222 = vadd.f32 0.0, %v4221
    %v4223 = vpop.f32.mrb[0].mxu0
    %v4224 = vadd.f32 0.0, %v4223
    %4225 = vdwg.mxu0
    %4226 = vmatprep.subr.mxu0 %v42
    %4227 = vmatpush1.msra.mxu0 %v41
    %4228 = vmatprep.subr.mxu0 0.0
    %4229 = vmatpush1.msra.mxu0 0.0
    %4230 = vmatprep.subr.mxu0 0.0
    %4231 = vmatpush1.msra.mxu0 0.0
    %4232 = vmatprep.subr.mxu0 0.0
    %4233 = vmatpush1.msra.mxu0 0.0
    %4234 = vmatprep.subr.mxu0 0.0
    %4235 = vmatpush1.msra.mxu0 0.0
    %4236 = vmatprep.subr.mxu0 0.0
    %4237 = vmatpush1.msra.mxu0 0.0
    %4238 = vmatprep.subr.mxu0 0.0
    %4239 = vmatpush1.msra.mxu0 0.0
    %4240 = vmatprep.subr.mxu0 0.0
    %4241 = vmatpush1.msra.mxu0 0.0
    %4242 = vmatprep.subr.mxu0 0.0
    %4243 = vmatpush1.msra.mxu0 0.0
    %4244 = vmatprep.subr.mxu0 0.0
    %4245 = vmatpush1.msra.mxu0 0.0
    %4246 = vmatprep.subr.mxu0 0.0
    %4247 = vmatpush1.msra.mxu0 0.0
    %4248 = vmatprep.subr.mxu0 0.0
    %4249 = vmatpush1.msra.mxu0 0.0
    %4250 = vmatprep.subr.mxu0 0.0
    %4251 = vmatpush1.msra.mxu0 0.0
    %4252 = vmatprep.subr.mxu0 0.0
    %4253 = vmatpush1.msra.mxu0 0.0
    %4254 = vmatprep.subr.mxu0 0.0
    %4255 = vmatpush1.msra.mxu0 0.0
    %4256 = vmatprep.subr.mxu0 0.0
    %4257 = vmatpush1.msra.mxu0 0.0
    %4258 = vmatprep.subr.mxu0 0.0
    %4259 = vmatpush1.msra.mxu0 0.0
    %4260 = vmatprep.subr.mxu0 0.0
    %4261 = vmatpush1.msra.mxu0 0.0
    %4262 = vmatprep.subr.mxu0 0.0
    %4263 = vmatpush1.msra.mxu0 0.0
    %4264 = vmatprep.subr.mxu0 0.0
    %4265 = vmatpush1.msra.mxu0 0.0
    %4266 = vmatprep.subr.mxu0 0.0
    %4267 = vmatpush1.msra.mxu0 0.0
    %4268 = vmatprep.subr.mxu0 0.0
    %4269 = vmatpush1.msra.mxu0 0.0
    %4270 = vmatprep.subr.mxu0 0.0
    %4271 = vmatpush1.msra.mxu0 0.0
    %4272 = vmatprep.subr.mxu0 0.0
    %4273 = vmatpush1.msra.mxu0 0.0
    %4274 = vmatprep.subr.mxu0 0.0
    %4275 = vmatpush1.msra.mxu0 0.0
    %4276 = vmatprep.subr.mxu0 0.0
    %4277 = vmatpush1.msra.mxu0 0.0
    %4278 = vmatprep.subr.mxu0 0.0
    %4279 = vmatpush1.msra.mxu0 0.0
    %4280 = vmatprep.subr.mxu0 0.0
    %4281 = vmatpush1.msra.mxu0 0.0
    %4282 = vmatprep.subr.mxu0 0.0
    %4283 = vmatpush1.msra.mxu0 0.0
    %4284 = vmatprep.subr.mxu0 0.0
    %4285 = vmatpush1.msra.mxu0 0.0
    %4286 = vmatprep.subr.mxu0 0.0
    %4287 = vmatpush1.msra.mxu0 0.0
    %4288 = vmatprep.subr.mxu0 0.0
    %4289 = vmatpush1.msra.mxu0 0.0
    %4290 = vmatprep.mubr.f32.mxu0 0.0
    %4291 = vmatmul.mubr.f32.gmra.mrb[0].mxu0 %v4153
    %v4292 = vpop.f32.mrb[0].mxu0
    %v4293 = vadd.f32 0.0, %v4292
    %v4294 = vpop.f32.mrb[0].mxu0
    %v4295 = vadd.f32 0.0, %v4294
    %4296 = vdwg.mxu0
    %v4301 = vrot.slane %v4222, 2
    %v4302 = vrot.slane %v4224, 2
    %v4303 = vrot.slane %v4293, 2
    %v4304 = vrot.slane %v4295, 2
    %v4309 = vadd.f32 %v496, %v4301
    %v4310 = vadd.f32 %v497, %v4302
    %v4311 = vadd.f32 %v498, %v4303
    %v4312 = vadd.f32 %v499, %v4304
    %v4313 = vmul.f32 %v4108, %v4108
    %v4314 = vand.u32 2147483647, %v4313
    %vm4315 = vcmp.lt.f32.partialorder %v4313, 0.0
    %v4316 = vsel %vm4315, -1.0, 1.0
    %vm4317 = vcmp.gt.f32.partialorder %v4314, 2.4142137
    %vm4318 = vcmp.gt.f32.partialorder %v4314, 0.41421357
    %vm4319 = vmxor %vm4317, 1
    %vm4320 = vmand %vm4318, %vm4319
    %v4321 = vsel %vm4317, %v4314, 1.0
    %v4322 = vrcp.pop %v4321
    %v4323 = vmul.f32 %v4321, %v4322
    %v4324 = vsub.f32 2.0, %v4323
    %v4325 = vmul.f32 %v4322, %v4324
    %v4326 = vsub.f32 0.0, %v4325
    %v4327 = vsub.f32 %v4314, 1.0
    %v4328 = vadd.f32 %v4314, 1.0
    %v4329 = vrcp.pop %v4328
    %v4330 = vmul.f32 %v4328, %v4329
    %v4331 = vsub.f32 2.0, %v4330
    %v4332 = vmul.f32 %v4329, %v4331
    %v4333 = vmul.f32 %v4327, %v4332
    %v4334 = vsel %vm4320, %v4333, %v4314
    %v4335 = vsel %vm4317, %v4326, %v4334
    %v4336 = vsel %vm4320, 0.7853982, 0.0
    %v4337 = vsel %vm4317, 1.5707964, %v4336
    %v4338 = vmul.f32 %v4335, %v4335
    %v4339 = vmul.f32 %v4338, 0.080537446
    %v4340 = vsub.f32 %v4339, 0.13877685
    %v4341 = vmul.f32 %v4340, %v4338
    %v4342 = vadd.f32 %v4341, 0.19977711
    %v4343 = vmul.f32 %v4342, %v4338
    %v4344 = vsub.f32 %v4343, 0.3333295
    %v4345 = vmul.f32 %v4344, %v4338
    %v4346 = vmul.f32 %v4345, %v4335
    %v4347 = vadd.f32 %v4346, %v4335
    %v4348 = vadd.f32 %v4337, %v4347
    %v4349 = vmul.f32 %v4316, %v4348
    %v4351 = vsel %vm538, %v4349, 0
    %4353 = vmatprep.subr.mxu0 %v44
    %4354 = vmatpush1.msra.mxu0 %v43
    %4355 = vmatprep.subr.mxu0 0.0
    %4356 = vmatpush1.msra.mxu0 0.0
    %4357 = vmatprep.subr.mxu0 0.0
    %4358 = vmatpush1.msra.mxu0 0.0
    %4359 = vmatprep.subr.mxu0 0.0
    %4360 = vmatpush1.msra.mxu0 0.0
    %4361 = vmatprep.subr.mxu0 0.0
    %4362 = vmatpush1.msra.mxu0 0.0
    %4363 = vmatprep.subr.mxu0 0.0
    %4364 = vmatpush1.msra.mxu0 0.0
    %4365 = vmatprep.subr.mxu0 0.0
    %4366 = vmatpush1.msra.mxu0 0.0
    %4367 = vmatprep.subr.mxu0 0.0
    %4368 = vmatpush1.msra.mxu0 0.0
    %4369 = vmatprep.subr.mxu0 0.0
    %4370 = vmatpush1.msra.mxu0 0.0
    %4371 = vmatprep.subr.mxu0 0.0
    %4372 = vmatpush1.msra.mxu0 0.0
    %4373 = vmatprep.subr.mxu0 0.0
    %4374 = vmatpush1.msra.mxu0 0.0
    %4375 = vmatprep.subr.mxu0 0.0
    %4376 = vmatpush1.msra.mxu0 0.0
    %4377 = vmatprep.subr.mxu0 0.0
    %4378 = vmatpush1.msra.mxu0 0.0
    %4379 = vmatprep.subr.mxu0 0.0
    %4380 = vmatpush1.msra.mxu0 0.0
    %4381 = vmatprep.subr.mxu0 0.0
    %4382 = vmatpush1.msra.mxu0 0.0
    %4383 = vmatprep.subr.mxu0 0.0
    %4384 = vmatpush1.msra.mxu0 0.0
    %4385 = vmatprep.subr.mxu0 0.0
    %4386 = vmatpush1.msra.mxu0 0.0
    %4387 = vmatprep.subr.mxu0 0.0
    %4388 = vmatpush1.msra.mxu0 0.0
    %4389 = vmatprep.subr.mxu0 0.0
    %4390 = vmatpush1.msra.mxu0 0.0
    %4391 = vmatprep.subr.mxu0 0.0
    %4392 = vmatpush1.msra.mxu0 0.0
    %4393 = vmatprep.subr.mxu0 0.0
    %4394 = vmatpush1.msra.mxu0 0.0
    %4395 = vmatprep.subr.mxu0 0.0
    %4396 = vmatpush1.msra.mxu0 0.0
    %4397 = vmatprep.subr.mxu0 0.0
    %4398 = vmatpush1.msra.mxu0 0.0
    %4399 = vmatprep.subr.mxu0 0.0
    %4400 = vmatpush1.msra.mxu0 0.0
    %4401 = vmatprep.subr.mxu0 0.0
    %4402 = vmatpush1.msra.mxu0 0.0
    %4403 = vmatprep.subr.mxu0 0.0
    %4404 = vmatpush1.msra.mxu0 0.0
    %4405 = vmatprep.subr.mxu0 0.0
    %4406 = vmatpush1.msra.mxu0 0.0
    %4407 = vmatprep.subr.mxu0 0.0
    %4408 = vmatpush1.msra.mxu0 0.0
    %4409 = vmatprep.subr.mxu0 0.0
    %4410 = vmatpush1.msra.mxu0 0.0
    %4411 = vmatprep.subr.mxu0 0.0
    %4412 = vmatpush1.msra.mxu0 0.0
    %4413 = vmatprep.subr.mxu0 0.0
    %4414 = vmatpush1.msra.mxu0 0.0
    %4415 = vmatprep.subr.mxu0 0.0
    %4416 = vmatpush1.msra.mxu0 0.0
    %4417 = vmatprep.mubr.f32.mxu0 0.0
    %4418 = vmatmul.mubr.f32.gmra.mrb[0].mxu0 %v4351
    %v4419 = vpop.f32.mrb[0].mxu0
    %v4420 = vadd.f32 0.0, %v4419
    %v4421 = vpop.f32.mrb[0].mxu0
    %v4422 = vadd.f32 0.0, %v4421
    %4423 = vdwg.mxu0
    %4424 = vmatprep.subr.mxu0 %v46
    %4425 = vmatpush1.msra.mxu0 %v45
    %4426 = vmatprep.subr.mxu0 0.0
    %4427 = vmatpush1.msra.mxu0 0.0
    %4428 = vmatprep.subr.mxu0 0.0
    %4429 = vmatpush1.msra.mxu0 0.0
    %4430 = vmatprep.subr.mxu0 0.0
    %4431 = vmatpush1.msra.mxu0 0.0
    %4432 = vmatprep.subr.mxu0 0.0
    %4433 = vmatpush1.msra.mxu0 0.0
    %4434 = vmatprep.subr.mxu0 0.0
    %4435 = vmatpush1.msra.mxu0 0.0
    %4436 = vmatprep.subr.mxu0 0.0
    %4437 = vmatpush1.msra.mxu0 0.0
    %4438 = vmatprep.subr.mxu0 0.0
    %4439 = vmatpush1.msra.mxu0 0.0
    %4440 = vmatprep.subr.mxu0 0.0
    %4441 = vmatpush1.msra.mxu0 0.0
    %4442 = vmatprep.subr.mxu0 0.0
    %4443 = vmatpush1.msra.mxu0 0.0
    %4444 = vmatprep.subr.mxu0 0.0
    %4445 = vmatpush1.msra.mxu0 0.0
    %4446 = vmatprep.subr.mxu0 0.0
    %4447 = vmatpush1.msra.mxu0 0.0
    %4448 = vmatprep.subr.mxu0 0.0
    %4449 = vmatpush1.msra.mxu0 0.0
    %4450 = vmatprep.subr.mxu0 0.0
    %4451 = vmatpush1.msra.mxu0 0.0
    %4452 = vmatprep.subr.mxu0 0.0
    %4453 = vmatpush1.msra.mxu0 0.0
    %4454 = vmatprep.subr.mxu0 0.0
    %4455 = vmatpush1.msra.mxu0 0.0
    %4456 = vmatprep.subr.mxu0 0.0
    %4457 = vmatpush1.msra.mxu0 0.0
    %4458 = vmatprep.subr.mxu0 0.0
    %4459 = vmatpush1.msra.mxu0 0.0
    %4460 = vmatprep.subr.mxu0 0.0
    %4461 = vmatpush1.msra.mxu0 0.0
    %4462 = vmatprep.subr.mxu0 0.0
    %4463 = vmatpush1.msra.mxu0 0.0
    %4464 = vmatprep.subr.mxu0 0.0
    %4465 = vmatpush1.msra.mxu0 0.0
    %4466 = vmatprep.subr.mxu0 0.0
    %4467 = vmatpush1.msra.mxu0 0.0
    %4468 = vmatprep.subr.mxu0 0.0
    %4469 = vmatpush1.msra.mxu0 0.0
    %4470 = vmatprep.subr.mxu0 0.0
    %4471 = vmatpush1.msra.mxu0 0.0
    %4472 = vmatprep.subr.mxu0 0.0
    %4473 = vmatpush1.msra.mxu0 0.0
    %4474 = vmatprep.subr.mxu0 0.0
    %4475 = vmatpush1.msra.mxu0 0.0
    %4476 = vmatprep.subr.mxu0 0.0
    %4477 = vmatpush1.msra.mxu0 0.0
    %4478 = vmatprep.subr.mxu0 0.0
    %4479 = vmatpush1.msra.mxu0 0.0
    %4480 = vmatprep.subr.mxu0 0.0
    %4481 = vmatpush1.msra.mxu0 0.0
    %4482 = vmatprep.subr.mxu0 0.0
    %4483 = vmatpush1.msra.mxu0 0.0
    %4484 = vmatprep.subr.mxu0 0.0
    %4485 = vmatpush1.msra.mxu0 0.0
    %4486 = vmatprep.subr.mxu0 0.0
    %4487 = vmatpush1.msra.mxu0 0.0
    %4488 = vmatprep.mubr.f32.mxu0 0.0
    %4489 = vmatmul.mubr.f32.gmra.mrb[0].mxu0 %v4351
    %v4490 = vpop.f32.mrb[0].mxu0
    %v4491 = vadd.f32 0.0, %v4490
    %v4492 = vpop.f32.mrb[0].mxu0
    %v4493 = vadd.f32 0.0, %v4492
    %4494 = vdwg.mxu0
    %v4499 = vrot.slane %v4420, 2
    %v4500 = vrot.slane %v4422, 2
    %v4501 = vrot.slane %v4491, 2
    %v4502 = vrot.slane %v4493, 2
    %v4507 = vadd.f32 %v4309, %v4499
    %v4508 = vadd.f32 %v4310, %v4500
    %v4509 = vadd.f32 %v4311, %v4501
    %v4510 = vadd.f32 %v4312, %v4502
    %v4511 = vxor.u32 %v4507, 2147483648
    %v4512 = vmul.f32 %v4511, 1.442695
    %v4513 = vpow.pop %v4512
    %v4514 = vadd.f32 %v4513, 1.0
    %v4515 = vrcp.pop %v4514
    %v4516 = vmul.f32 1.0, %v4515
    %v4517 = vxor.u32 %v4508, 2147483648
    %v4518 = vmul.f32 %v4517, 1.442695
    %v4519 = vpow.pop %v4518
    %v4520 = vadd.f32 %v4519, 1.0
    %v4521 = vrcp.pop %v4520
    %v4522 = vmul.f32 1.0, %v4521
    %v4523 = vtanh.pop %v4509
    %v4524 = vxor.u32 %v4510, 2147483648
    %v4525 = vmul.f32 %v4524, 1.442695
    %v4526 = vpow.pop %v4525
    %v4527 = vadd.f32 %v4526, 1.0
    %v4528 = vrcp.pop %v4527
    %v4529 = vmul.f32 1.0, %v4528
    %v4531 = vcombine.high %v4516, %v4516
    %v4533 = vunpack.c.l.s4 1966171168
    %v4534 = vunpack.c.0.s8 %v4533
    %v4535 = vlaneseq
    %v4536 = vshrl.u32 %v4535, 7
    %v4537 = vsub.s32 %v4534, %v4536
    %v4538 = vrot.slane %v4531, %v4537
    %v4540 = vunpack.c.l.s4 1966171168
    %v4541 = vunpack.c.0.s8 %v4540
    %v4542 = vlaneseq
    %v4543 = vshrl.u32 %v4542, 7
    %v4544 = vsub.s32 %v4541, %v4543
    %v4545 = vrot.slane %v4538, %v4544
    %v4546 = vcombine.high %v4545, %v4545
    %v4548 = vmul.f32 %v3953, %v4546
    %v4549 = vmul.f32 %v4522, %v4523
    %v4551 = vcombine.high %v4549, %v4549
    %v4553 = vunpack.c.l.s4 1966171168
    %v4554 = vunpack.c.0.s8 %v4553
    %v4555 = vlaneseq
    %v4556 = vshrl.u32 %v4555, 7
    %v4557 = vsub.s32 %v4554, %v4556
    %v4558 = vrot.slane %v4551, %v4557
    %v4560 = vunpack.c.l.s4 1966171168
    %v4561 = vunpack.c.0.s8 %v4560
    %v4562 = vlaneseq
    %v4563 = vshrl.u32 %v4562, 7
    %v4564 = vsub.s32 %v4561, %v4563
    %v4565 = vrot.slane %v4558, %v4564
    %v4566 = vcombine.high %v4565, %v4565
    %v4568 = vadd.f32 %v4548, %v4566
    %v4569 = vtanh.pop %v4568
    %v4571 = vlaneseq
    %v4572 = vshrl.u32 %v4571, 7
    %v4573 = vsub.s32 0, %v4572
    %v4574 = vrot.slane %v4569, %v4573
    %v4576 = vmul.f32 %v4529, %v4574
    %v4577 = vand.u32 2147483647, %v4576
    %vm4578 = vcmp.lt.f32.partialorder %v4576, 0.0
    %v4579 = vsel %vm4578, -1.0, 1.0
    %vm4580 = vcmp.gt.f32.partialorder %v4577, 2.4142137
    %vm4581 = vcmp.gt.f32.partialorder %v4577, 0.41421357
    %vm4582 = vmxor %vm4580, 1
    %vm4583 = vmand %vm4581, %vm4582
    %v4584 = vsel %vm4580, %v4577, 1.0
    %v4585 = vrcp.pop %v4584
    %v4586 = vmul.f32 %v4584, %v4585
    %v4587 = vsub.f32 2.0, %v4586
    %v4588 = vmul.f32 %v4585, %v4587
    %v4589 = vsub.f32 0.0, %v4588
    %v4590 = vsub.f32 %v4577, 1.0
    %v4591 = vadd.f32 %v4577, 1.0
    %v4592 = vrcp.pop %v4591
    %v4593 = vmul.f32 %v4591, %v4592
    %v4594 = vsub.f32 2.0, %v4593
    %v4595 = vmul.f32 %v4592, %v4594
    %v4596 = vmul.f32 %v4590, %v4595
    %v4597 = vsel %vm4583, %v4596, %v4577
    %v4598 = vsel %vm4580, %v4589, %v4597
    %v4599 = vsel %vm4583, 0.7853982, 0.0
    %v4600 = vsel %vm4580, 1.5707964, %v4599
    %v4601 = vmul.f32 %v4598, %v4598
    %v4602 = vmul.f32 %v4601, 0.080537446
    %v4603 = vsub.f32 %v4602, 0.13877685
    %v4604 = vmul.f32 %v4603, %v4601
    %v4605 = vadd.f32 %v4604, 0.19977711
    %v4606 = vmul.f32 %v4605, %v4601
    %v4607 = vsub.f32 %v4606, 0.3333295
    %v4608 = vmul.f32 %v4607, %v4601
    %v4609 = vmul.f32 %v4608, %v4598
    %v4610 = vadd.f32 %v4609, %v4598
    %v4611 = vadd.f32 %v4600, %v4610
    %v4612 = vmul.f32 %v4579, %v4611
    %v4613 = vmul.f32 %v4576, %v4576
    %v4614 = vand.u32 2147483647, %v4613
    %vm4615 = vcmp.lt.f32.partialorder %v4613, 0.0
    %v4616 = vsel %vm4615, -1.0, 1.0
    %vm4617 = vcmp.gt.f32.partialorder %v4614, 2.4142137
    %vm4618 = vcmp.gt.f32.partialorder %v4614, 0.41421357
    %vm4619 = vmxor %vm4617, 1
    %vm4620 = vmand %vm4618, %vm4619
    %v4621 = vsel %vm4617, %v4614, 1.0
    %v4622 = vrcp.pop %v4621
    %v4623 = vmul.f32 %v4621, %v4622
    %v4624 = vsub.f32 2.0, %v4623
    %v4625 = vmul.f32 %v4622, %v4624
    %v4626 = vsub.f32 0.0, %v4625
    %v4627 = vsub.f32 %v4614, 1.0
    %v4628 = vadd.f32 %v4614, 1.0
    %v4629 = vrcp.pop %v4628
    %v4630 = vmul.f32 %v4628, %v4629
    %v4631 = vsub.f32 2.0, %v4630
    %v4632 = vmul.f32 %v4629, %v4631
    %v4633 = vmul.f32 %v4627, %v4632
    %v4634 = vsel %vm4620, %v4633, %v4614
    %v4635 = vsel %vm4617, %v4626, %v4634
    %v4636 = vsel %vm4620, 0.7853982, 0.0
    %v4637 = vsel %vm4617, 1.5707964, %v4636
    %v4638 = vmul.f32 %v4635, %v4635
    %v4639 = vmul.f32 %v4638, 0.080537446
    %v4640 = vsub.f32 %v4639, 0.13877685
    %v4641 = vmul.f32 %v4640, %v4638
    %v4642 = vadd.f32 %v4641, 0.19977711
    %v4643 = vmul.f32 %v4642, %v4638
    %v4644 = vsub.f32 %v4643, 0.3333295
    %v4645 = vmul.f32 %v4644, %v4638
    %v4646 = vmul.f32 %v4645, %v4635
    %v4647 = vadd.f32 %v4646, %v4635
    %v4648 = vadd.f32 %v4637, %v4647
    %v4649 = vmul.f32 %v4616, %v4648
    %v4652 = vrot.slane %v4612, 6
    %v4653 = vrot.slane %v4649, 6
    %4656 = vmatprep.subr.mxu0 0.0
    %4657 = vmatpush1.msra.mxu0 %v47
    %4658 = vmatprep.subr.mxu0 0.0
    %4659 = vmatpush1.msra.mxu0 %v48
    %4660 = vmatprep.subr.mxu0 0.0
    %4661 = vmatpush1.msra.mxu0 %v49
    %4662 = vmatprep.subr.mxu0 0.0
    %4663 = vmatpush1.msra.mxu0 %v50
    %4664 = vmatprep.subr.mxu0 0.0
    %4665 = vmatpush1.msra.mxu0 %v51
    %4666 = vmatprep.subr.mxu0 0.0
    %4667 = vmatpush1.msra.mxu0 %v52
    %4668 = vmatprep.subr.mxu0 0.0
    %4669 = vmatpush1.msra.mxu0 %v53
    %4670 = vmatprep.subr.mxu0 0.0
    %4671 = vmatpush1.msra.mxu0 %v54
    %4672 = vmatprep.subr.mxu0 0.0
    %4673 = vmatpush1.msra.mxu0 %v55
    %4674 = vmatprep.subr.mxu0 0.0
    %4675 = vmatpush1.msra.mxu0 %v56
    %4676 = vmatprep.subr.mxu0 0.0
    %4677 = vmatpush1.msra.mxu0 %v57
    %4678 = vmatprep.subr.mxu0 0.0
    %4679 = vmatpush1.msra.mxu0 %v58
    %4680 = vmatprep.subr.mxu0 0.0
    %4681 = vmatpush1.msra.mxu0 %v59
    %4682 = vmatprep.subr.mxu0 0.0
    %4683 = vmatpush1.msra.mxu0 %v60
    %4684 = vmatprep.subr.mxu0 0.0
    %4685 = vmatpush1.msra.mxu0 %v61
    %4686 = vmatprep.subr.mxu0 0.0
    %4687 = vmatpush1.msra.mxu0 %v62
    %4688 = vmatprep.subr.mxu0 0.0
    %4689 = vmatpush1.msra.mxu0 %v63
    %4690 = vmatprep.subr.mxu0 0.0
    %4691 = vmatpush1.msra.mxu0 %v64
    %4692 = vmatprep.subr.mxu0 0.0
    %4693 = vmatpush1.msra.mxu0 %v65
    %4694 = vmatprep.subr.mxu0 0.0
    %4695 = vmatpush1.msra.mxu0 %v66
    %4696 = vmatprep.subr.mxu0 0.0
    %4697 = vmatpush1.msra.mxu0 %v67
    %4698 = vmatprep.subr.mxu0 0.0
    %4699 = vmatpush1.msra.mxu0 %v68
    %4700 = vmatprep.subr.mxu0 0.0
    %4701 = vmatpush1.msra.mxu0 %v69
    %4702 = vmatprep.subr.mxu0 0.0
    %4703 = vmatpush1.msra.mxu0 %v70
    %4704 = vmatprep.subr.mxu0 0.0
    %4705 = vmatpush1.msra.mxu0 %v71
    %4706 = vmatprep.subr.mxu0 0.0
    %4707 = vmatpush1.msra.mxu0 %v72
    %4708 = vmatprep.subr.mxu0 0.0
    %4709 = vmatpush1.msra.mxu0 %v73
    %4710 = vmatprep.subr.mxu0 0.0
    %4711 = vmatpush1.msra.mxu0 %v74
    %4712 = vmatprep.subr.mxu0 0.0
    %4713 = vmatpush1.msra.mxu0 %v75
    %4714 = vmatprep.subr.mxu0 0.0
    %4715 = vmatpush1.msra.mxu0 %v76
    %4716 = vmatprep.subr.mxu0 0.0
    %4717 = vmatpush1.msra.mxu0 %v77
    %4718 = vmatprep.subr.mxu0 0.0
    %4719 = vmatpush1.msra.mxu0 %v78
    %4720 = vmatprep.mubr.f32.mxu0 %v4653
    %4721 = vmatmul.mubr.f32.gmra.mrb[0].mxu0 %v4652
    %v4722 = vpop.f32.mrb[0].mxu0
    %v4723 = vadd.f32 %v79, %v4722
    %v4724 = vpop.f32.mrb[0].mxu0
    %4725 = vdwg.mxu0
    %4727 = vrot.lane.b32.xlu0 %v4723, 120
    %v4728 = vpop.permute.xlu0 %4727
    %4730 = vst.msk [vmem:[%s9 + $0x6] sm:$0x1] %vm1045, %v4728
    %v4731 = vand.u32 2147483647, %v4723
    %vm4732 = vcmp.lt.f32.partialorder %v4723, 0.0
    %v4733 = vsel %vm4732, -1.0, 1.0
    %vm4734 = vcmp.gt.f32.partialorder %v4731, 2.4142137
    %vm4735 = vcmp.gt.f32.partialorder %v4731, 0.41421357
    %vm4736 = vmxor %vm4734, 1
    %vm4737 = vmand %vm4735, %vm4736
    %v4738 = vsel %vm4734, %v4731, 1.0
    %v4739 = vrcp.pop %v4738
    %v4740 = vmul.f32 %v4738, %v4739
    %v4741 = vsub.f32 2.0, %v4740
    %v4742 = vmul.f32 %v4739, %v4741
    %v4743 = vsub.f32 0.0, %v4742
    %v4744 = vsub.f32 %v4731, 1.0
    %v4745 = vadd.f32 %v4731, 1.0
    %v4746 = vrcp.pop %v4745
    %v4747 = vmul.f32 %v4745, %v4746
    %v4748 = vsub.f32 2.0, %v4747
    %v4749 = vmul.f32 %v4746, %v4748
    %v4750 = vmul.f32 %v4744, %v4749
    %v4751 = vsel %vm4737, %v4750, %v4731
    %v4752 = vsel %vm4734, %v4743, %v4751
    %v4753 = vsel %vm4737, 0.7853982, 0.0
    %v4754 = vsel %vm4734, 1.5707964, %v4753
    %v4755 = vmul.f32 %v4752, %v4752
    %v4756 = vmul.f32 %v4755, 0.080537446
    %v4757 = vsub.f32 %v4756, 0.13877685
    %v4758 = vmul.f32 %v4757, %v4755
    %v4759 = vadd.f32 %v4758, 0.19977711
    %v4760 = vmul.f32 %v4759, %v4755
    %v4761 = vsub.f32 %v4760, 0.3333295
    %v4762 = vmul.f32 %v4761, %v4755
    %v4763 = vmul.f32 %v4762, %v4752
    %v4764 = vadd.f32 %v4763, %v4752
    %v4765 = vadd.f32 %v4754, %v4764
    %v4766 = vmul.f32 %v4733, %v4765
    %v4768 = vsel %vm538, %v4766, 0
    %4770 = vmatprep.subr.mxu0 %v40
    %4771 = vmatpush1.msra.mxu0 %v39
    %4772 = vmatprep.subr.mxu0 0.0
    %4773 = vmatpush1.msra.mxu0 0.0
    %4774 = vmatprep.subr.mxu0 0.0
    %4775 = vmatpush1.msra.mxu0 0.0
    %4776 = vmatprep.subr.mxu0 0.0
    %4777 = vmatpush1.msra.mxu0 0.0
    %4778 = vmatprep.subr.mxu0 0.0
    %4779 = vmatpush1.msra.mxu0 0.0
    %4780 = vmatprep.subr.mxu0 0.0
    %4781 = vmatpush1.msra.mxu0 0.0
    %4782 = vmatprep.subr.mxu0 0.0
    %4783 = vmatpush1.msra.mxu0 0.0
    %4784 = vmatprep.subr.mxu0 0.0
    %4785 = vmatpush1.msra.mxu0 0.0
    %4786 = vmatprep.subr.mxu0 0.0
    %4787 = vmatpush1.msra.mxu0 0.0
    %4788 = vmatprep.subr.mxu0 0.0
    %4789 = vmatpush1.msra.mxu0 0.0
    %4790 = vmatprep.subr.mxu0 0.0
    %4791 = vmatpush1.msra.mxu0 0.0
    %4792 = vmatprep.subr.mxu0 0.0
    %4793 = vmatpush1.msra.mxu0 0.0
    %4794 = vmatprep.subr.mxu0 0.0
    %4795 = vmatpush1.msra.mxu0 0.0
    %4796 = vmatprep.subr.mxu0 0.0
    %4797 = vmatpush1.msra.mxu0 0.0
    %4798 = vmatprep.subr.mxu0 0.0
    %4799 = vmatpush1.msra.mxu0 0.0
    %4800 = vmatprep.subr.mxu0 0.0
    %4801 = vmatpush1.msra.mxu0 0.0
    %4802 = vmatprep.subr.mxu0 0.0
    %4803 = vmatpush1.msra.mxu0 0.0
    %4804 = vmatprep.subr.mxu0 0.0
    %4805 = vmatpush1.msra.mxu0 0.0
    %4806 = vmatprep.subr.mxu0 0.0
    %4807 = vmatpush1.msra.mxu0 0.0
    %4808 = vmatprep.subr.mxu0 0.0
    %4809 = vmatpush1.msra.mxu0 0.0
    %4810 = vmatprep.subr.mxu0 0.0
    %4811 = vmatpush1.msra.mxu0 0.0
    %4812 = vmatprep.subr.mxu0 0.0
    %4813 = vmatpush1.msra.mxu0 0.0
    %4814 = vmatprep.subr.mxu0 0.0
    %4815 = vmatpush1.msra.mxu0 0.0
    %4816 = vmatprep.subr.mxu0 0.0
    %4817 = vmatpush1.msra.mxu0 0.0
    %4818 = vmatprep.subr.mxu0 0.0
    %4819 = vmatpush1.msra.mxu0 0.0
    %4820 = vmatprep.subr.mxu0 0.0
    %4821 = vmatpush1.msra.mxu0 0.0
    %4822 = vmatprep.subr.mxu0 0.0
    %4823 = vmatpush1.msra.mxu0 0.0
    %4824 = vmatprep.subr.mxu0 0.0
    %4825 = vmatpush1.msra.mxu0 0.0
    %4826 = vmatprep.subr.mxu0 0.0
    %4827 = vmatpush1.msra.mxu0 0.0
    %4828 = vmatprep.subr.mxu0 0.0
    %4829 = vmatpush1.msra.mxu0 0.0
    %4830 = vmatprep.subr.mxu0 0.0
    %4831 = vmatpush1.msra.mxu0 0.0
    %4832 = vmatprep.subr.mxu0 0.0
    %4833 = vmatpush1.msra.mxu0 0.0
    %4834 = vmatprep.mubr.f32.mxu0 0.0
    %4835 = vmatmul.mubr.f32.gmra.mrb[0].mxu0 %v4768
    %v4836 = vpop.f32.mrb[0].mxu0
    %v4837 = vadd.f32 0.0, %v4836
    %v4838 = vpop.f32.mrb[0].mxu0
    %v4839 = vadd.f32 0.0, %v4838
    %4840 = vdwg.mxu0
    %4841 = vmatprep.subr.mxu0 %v42
    %4842 = vmatpush1.msra.mxu0 %v41
    %4843 = vmatprep.subr.mxu0 0.0
    %4844 = vmatpush1.msra.mxu0 0.0
    %4845 = vmatprep.subr.mxu0 0.0
    %4846 = vmatpush1.msra.mxu0 0.0
    %4847 = vmatprep.subr.mxu0 0.0
    %4848 = vmatpush1.msra.mxu0 0.0
    %4849 = vmatprep.subr.mxu0 0.0
    %4850 = vmatpush1.msra.mxu0 0.0
    %4851 = vmatprep.subr.mxu0 0.0
    %4852 = vmatpush1.msra.mxu0 0.0
    %4853 = vmatprep.subr.mxu0 0.0
    %4854 = vmatpush1.msra.mxu0 0.0
    %4855 = vmatprep.subr.mxu0 0.0
    %4856 = vmatpush1.msra.mxu0 0.0
    %4857 = vmatprep.subr.mxu0 0.0
    %4858 = vmatpush1.msra.mxu0 0.0
    %4859 = vmatprep.subr.mxu0 0.0
    %4860 = vmatpush1.msra.mxu0 0.0
    %4861 = vmatprep.subr.mxu0 0.0
    %4862 = vmatpush1.msra.mxu0 0.0
    %4863 = vmatprep.subr.mxu0 0.0
    %4864 = vmatpush1.msra.mxu0 0.0
    %4865 = vmatprep.subr.mxu0 0.0
    %4866 = vmatpush1.msra.mxu0 0.0
    %4867 = vmatprep.subr.mxu0 0.0
    %4868 = vmatpush1.msra.mxu0 0.0
    %4869 = vmatprep.subr.mxu0 0.0
    %4870 = vmatpush1.msra.mxu0 0.0
    %4871 = vmatprep.subr.mxu0 0.0
    %4872 = vmatpush1.msra.mxu0 0.0
    %4873 = vmatprep.subr.mxu0 0.0
    %4874 = vmatpush1.msra.mxu0 0.0
    %4875 = vmatprep.subr.mxu0 0.0
    %4876 = vmatpush1.msra.mxu0 0.0
    %4877 = vmatprep.subr.mxu0 0.0
    %4878 = vmatpush1.msra.mxu0 0.0
    %4879 = vmatprep.subr.mxu0 0.0
    %4880 = vmatpush1.msra.mxu0 0.0
    %4881 = vmatprep.subr.mxu0 0.0
    %4882 = vmatpush1.msra.mxu0 0.0
    %4883 = vmatprep.subr.mxu0 0.0
    %4884 = vmatpush1.msra.mxu0 0.0
    %4885 = vmatprep.subr.mxu0 0.0
    %4886 = vmatpush1.msra.mxu0 0.0
    %4887 = vmatprep.subr.mxu0 0.0
    %4888 = vmatpush1.msra.mxu0 0.0
    %4889 = vmatprep.subr.mxu0 0.0
    %4890 = vmatpush1.msra.mxu0 0.0
    %4891 = vmatprep.subr.mxu0 0.0
    %4892 = vmatpush1.msra.mxu0 0.0
    %4893 = vmatprep.subr.mxu0 0.0
    %4894 = vmatpush1.msra.mxu0 0.0
    %4895 = vmatprep.subr.mxu0 0.0
    %4896 = vmatpush1.msra.mxu0 0.0
    %4897 = vmatprep.subr.mxu0 0.0
    %4898 = vmatpush1.msra.mxu0 0.0
    %4899 = vmatprep.subr.mxu0 0.0
    %4900 = vmatpush1.msra.mxu0 0.0
    %4901 = vmatprep.subr.mxu0 0.0
    %4902 = vmatpush1.msra.mxu0 0.0
    %4903 = vmatprep.subr.mxu0 0.0
    %4904 = vmatpush1.msra.mxu0 0.0
    %4905 = vmatprep.mubr.f32.mxu0 0.0
    %4906 = vmatmul.mubr.f32.gmra.mrb[0].mxu0 %v4768
    %v4907 = vpop.f32.mrb[0].mxu0
    %v4908 = vadd.f32 0.0, %v4907
    %v4909 = vpop.f32.mrb[0].mxu0
    %v4910 = vadd.f32 0.0, %v4909
    %4911 = vdwg.mxu0
    %v4916 = vrot.slane %v4837, 1
    %v4917 = vrot.slane %v4839, 1
    %v4918 = vrot.slane %v4908, 1
    %v4919 = vrot.slane %v4910, 1
    %v4924 = vadd.f32 %v496, %v4916
    %v4925 = vadd.f32 %v497, %v4917
    %v4926 = vadd.f32 %v498, %v4918
    %v4927 = vadd.f32 %v499, %v4919
    %v4928 = vmul.f32 %v4723, %v4723
    %v4929 = vand.u32 2147483647, %v4928
    %vm4930 = vcmp.lt.f32.partialorder %v4928, 0.0
    %v4931 = vsel %vm4930, -1.0, 1.0
    %vm4932 = vcmp.gt.f32.partialorder %v4929, 2.4142137
    %vm4933 = vcmp.gt.f32.partialorder %v4929, 0.41421357
    %vm4934 = vmxor %vm4932, 1
    %vm4935 = vmand %vm4933, %vm4934
    %v4936 = vsel %vm4932, %v4929, 1.0
    %v4937 = vrcp.pop %v4936
    %v4938 = vmul.f32 %v4936, %v4937
    %v4939 = vsub.f32 2.0, %v4938
    %v4940 = vmul.f32 %v4937, %v4939
    %v4941 = vsub.f32 0.0, %v4940
    %v4942 = vsub.f32 %v4929, 1.0
    %v4943 = vadd.f32 %v4929, 1.0
    %v4944 = vrcp.pop %v4943
    %v4945 = vmul.f32 %v4943, %v4944
    %v4946 = vsub.f32 2.0, %v4945
    %v4947 = vmul.f32 %v4944, %v4946
    %v4948 = vmul.f32 %v4942, %v4947
    %v4949 = vsel %vm4935, %v4948, %v4929
    %v4950 = vsel %vm4932, %v4941, %v4949
    %v4951 = vsel %vm4935, 0.7853982, 0.0
    %v4952 = vsel %vm4932, 1.5707964, %v4951
    %v4953 = vmul.f32 %v4950, %v4950
    %v4954 = vmul.f32 %v4953, 0.080537446
    %v4955 = vsub.f32 %v4954, 0.13877685
    %v4956 = vmul.f32 %v4955, %v4953
    %v4957 = vadd.f32 %v4956, 0.19977711
    %v4958 = vmul.f32 %v4957, %v4953
    %v4959 = vsub.f32 %v4958, 0.3333295
    %v4960 = vmul.f32 %v4959, %v4953
    %v4961 = vmul.f32 %v4960, %v4950
    %v4962 = vadd.f32 %v4961, %v4950
    %v4963 = vadd.f32 %v4952, %v4962
    %v4964 = vmul.f32 %v4931, %v4963
    %v4966 = vsel %vm538, %v4964, 0
    %4968 = vmatprep.subr.mxu0 %v44
    %4969 = vmatpush1.msra.mxu0 %v43
    %4970 = vmatprep.subr.mxu0 0.0
    %4971 = vmatpush1.msra.mxu0 0.0
    %4972 = vmatprep.subr.mxu0 0.0
    %4973 = vmatpush1.msra.mxu0 0.0
    %4974 = vmatprep.subr.mxu0 0.0
    %4975 = vmatpush1.msra.mxu0 0.0
    %4976 = vmatprep.subr.mxu0 0.0
    %4977 = vmatpush1.msra.mxu0 0.0
    %4978 = vmatprep.subr.mxu0 0.0
    %4979 = vmatpush1.msra.mxu0 0.0
    %4980 = vmatprep.subr.mxu0 0.0
    %4981 = vmatpush1.msra.mxu0 0.0
    %4982 = vmatprep.subr.mxu0 0.0
    %4983 = vmatpush1.msra.mxu0 0.0
    %4984 = vmatprep.subr.mxu0 0.0
    %4985 = vmatpush1.msra.mxu0 0.0
    %4986 = vmatprep.subr.mxu0 0.0
    %4987 = vmatpush1.msra.mxu0 0.0
    %4988 = vmatprep.subr.mxu0 0.0
    %4989 = vmatpush1.msra.mxu0 0.0
    %4990 = vmatprep.subr.mxu0 0.0
    %4991 = vmatpush1.msra.mxu0 0.0
    %4992 = vmatprep.subr.mxu0 0.0
    %4993 = vmatpush1.msra.mxu0 0.0
    %4994 = vmatprep.subr.mxu0 0.0
    %4995 = vmatpush1.msra.mxu0 0.0
    %4996 = vmatprep.subr.mxu0 0.0
    %4997 = vmatpush1.msra.mxu0 0.0
    %4998 = vmatprep.subr.mxu0 0.0
    %4999 = vmatpush1.msra.mxu0 0.0
    %5000 = vmatprep.subr.mxu0 0.0
    %5001 = vmatpush1.msra.mxu0 0.0
    %5002 = vmatprep.subr.mxu0 0.0
    %5003 = vmatpush1.msra.mxu0 0.0
    %5004 = vmatprep.subr.mxu0 0.0
    %5005 = vmatpush1.msra.mxu0 0.0
    %5006 = vmatprep.subr.mxu0 0.0
    %5007 = vmatpush1.msra.mxu0 0.0
    %5008 = vmatprep.subr.mxu0 0.0
    %5009 = vmatpush1.msra.mxu0 0.0
    %5010 = vmatprep.subr.mxu0 0.0
    %5011 = vmatpush1.msra.mxu0 0.0
    %5012 = vmatprep.subr.mxu0 0.0
    %5013 = vmatpush1.msra.mxu0 0.0
    %5014 = vmatprep.subr.mxu0 0.0
    %5015 = vmatpush1.msra.mxu0 0.0
    %5016 = vmatprep.subr.mxu0 0.0
    %5017 = vmatpush1.msra.mxu0 0.0
    %5018 = vmatprep.subr.mxu0 0.0
    %5019 = vmatpush1.msra.mxu0 0.0
    %5020 = vmatprep.subr.mxu0 0.0
    %5021 = vmatpush1.msra.mxu0 0.0
    %5022 = vmatprep.subr.mxu0 0.0
    %5023 = vmatpush1.msra.mxu0 0.0
    %5024 = vmatprep.subr.mxu0 0.0
    %5025 = vmatpush1.msra.mxu0 0.0
    %5026 = vmatprep.subr.mxu0 0.0
    %5027 = vmatpush1.msra.mxu0 0.0
    %5028 = vmatprep.subr.mxu0 0.0
    %5029 = vmatpush1.msra.mxu0 0.0
    %5030 = vmatprep.subr.mxu0 0.0
    %5031 = vmatpush1.msra.mxu0 0.0
    %5032 = vmatprep.mubr.f32.mxu0 0.0
    %5033 = vmatmul.mubr.f32.gmra.mrb[0].mxu0 %v4966
    %v5034 = vpop.f32.mrb[0].mxu0
    %v5035 = vadd.f32 0.0, %v5034
    %v5036 = vpop.f32.mrb[0].mxu0
    %v5037 = vadd.f32 0.0, %v5036
    %5038 = vdwg.mxu0
    %5039 = vmatprep.subr.mxu0 %v46
    %5040 = vmatpush1.msra.mxu0 %v45
    %5041 = vmatprep.subr.mxu0 0.0
    %5042 = vmatpush1.msra.mxu0 0.0
    %5043 = vmatprep.subr.mxu0 0.0
    %5044 = vmatpush1.msra.mxu0 0.0
    %5045 = vmatprep.subr.mxu0 0.0
    %5046 = vmatpush1.msra.mxu0 0.0
    %5047 = vmatprep.subr.mxu0 0.0
    %5048 = vmatpush1.msra.mxu0 0.0
    %5049 = vmatprep.subr.mxu0 0.0
    %5050 = vmatpush1.msra.mxu0 0.0
    %5051 = vmatprep.subr.mxu0 0.0
    %5052 = vmatpush1.msra.mxu0 0.0
    %5053 = vmatprep.subr.mxu0 0.0
    %5054 = vmatpush1.msra.mxu0 0.0
    %5055 = vmatprep.subr.mxu0 0.0
    %5056 = vmatpush1.msra.mxu0 0.0
    %5057 = vmatprep.subr.mxu0 0.0
    %5058 = vmatpush1.msra.mxu0 0.0
    %5059 = vmatprep.subr.mxu0 0.0
    %5060 = vmatpush1.msra.mxu0 0.0
    %5061 = vmatprep.subr.mxu0 0.0
    %5062 = vmatpush1.msra.mxu0 0.0
    %5063 = vmatprep.subr.mxu0 0.0
    %5064 = vmatpush1.msra.mxu0 0.0
    %5065 = vmatprep.subr.mxu0 0.0
    %5066 = vmatpush1.msra.mxu0 0.0
    %5067 = vmatprep.subr.mxu0 0.0
    %5068 = vmatpush1.msra.mxu0 0.0
    %5069 = vmatprep.subr.mxu0 0.0
    %5070 = vmatpush1.msra.mxu0 0.0
    %5071 = vmatprep.subr.mxu0 0.0
    %5072 = vmatpush1.msra.mxu0 0.0
    %5073 = vmatprep.subr.mxu0 0.0
    %5074 = vmatpush1.msra.mxu0 0.0
    %5075 = vmatprep.subr.mxu0 0.0
    %5076 = vmatpush1.msra.mxu0 0.0
    %5077 = vmatprep.subr.mxu0 0.0
    %5078 = vmatpush1.msra.mxu0 0.0
    %5079 = vmatprep.subr.mxu0 0.0
    %5080 = vmatpush1.msra.mxu0 0.0
    %5081 = vmatprep.subr.mxu0 0.0
    %5082 = vmatpush1.msra.mxu0 0.0
    %5083 = vmatprep.subr.mxu0 0.0
    %5084 = vmatpush1.msra.mxu0 0.0
    %5085 = vmatprep.subr.mxu0 0.0
    %5086 = vmatpush1.msra.mxu0 0.0
    %5087 = vmatprep.subr.mxu0 0.0
    %5088 = vmatpush1.msra.mxu0 0.0
    %5089 = vmatprep.subr.mxu0 0.0
    %5090 = vmatpush1.msra.mxu0 0.0
    %5091 = vmatprep.subr.mxu0 0.0
    %5092 = vmatpush1.msra.mxu0 0.0
    %5093 = vmatprep.subr.mxu0 0.0
    %5094 = vmatpush1.msra.mxu0 0.0
    %5095 = vmatprep.subr.mxu0 0.0
    %5096 = vmatpush1.msra.mxu0 0.0
    %5097 = vmatprep.subr.mxu0 0.0
    %5098 = vmatpush1.msra.mxu0 0.0
    %5099 = vmatprep.subr.mxu0 0.0
    %5100 = vmatpush1.msra.mxu0 0.0
    %5101 = vmatprep.subr.mxu0 0.0
    %5102 = vmatpush1.msra.mxu0 0.0
    %5103 = vmatprep.mubr.f32.mxu0 0.0
    %5104 = vmatmul.mubr.f32.gmra.mrb[0].mxu0 %v4966
    %v5105 = vpop.f32.mrb[0].mxu0
    %v5106 = vadd.f32 0.0, %v5105
    %v5107 = vpop.f32.mrb[0].mxu0
    %v5108 = vadd.f32 0.0, %v5107
    %5109 = vdwg.mxu0
    %v5114 = vrot.slane %v5035, 1
    %v5115 = vrot.slane %v5037, 1
    %v5116 = vrot.slane %v5106, 1
    %v5117 = vrot.slane %v5108, 1
    %v5122 = vadd.f32 %v4924, %v5114
    %v5123 = vadd.f32 %v4925, %v5115
    %v5124 = vadd.f32 %v4926, %v5116
    %v5125 = vadd.f32 %v4927, %v5117
    %v5126 = vxor.u32 %v5122, 2147483648
    %v5127 = vmul.f32 %v5126, 1.442695
    %v5128 = vpow.pop %v5127
    %v5129 = vadd.f32 %v5128, 1.0
    %v5130 = vrcp.pop %v5129
    %v5131 = vmul.f32 1.0, %v5130
    %v5132 = vxor.u32 %v5123, 2147483648
    %v5133 = vmul.f32 %v5132, 1.442695
    %v5134 = vpow.pop %v5133
    %v5135 = vadd.f32 %v5134, 1.0
    %v5136 = vrcp.pop %v5135
    %v5137 = vmul.f32 1.0, %v5136
    %v5138 = vtanh.pop %v5124
    %v5139 = vxor.u32 %v5125, 2147483648
    %v5140 = vmul.f32 %v5139, 1.442695
    %v5141 = vpow.pop %v5140
    %v5142 = vadd.f32 %v5141, 1.0
    %v5143 = vrcp.pop %v5142
    %v5144 = vmul.f32 1.0, %v5143
    %v5146 = vcombine.high %v5131, %v5131
    %v5148 = vunpack.c.l.s4 1966171168
    %v5149 = vunpack.c.0.s8 %v5148
    %v5150 = vlaneseq
    %v5151 = vshrl.u32 %v5150, 7
    %v5152 = vsub.s32 %v5149, %v5151
    %v5153 = vrot.slane %v5146, %v5152
    %v5154 = vcombine.high %v5153, %v5153
    %v5156 = vunpack.c.l.s4 1966171168
    %v5157 = vunpack.c.0.s8 %v5156
    %v5158 = vlaneseq
    %v5159 = vshrl.u32 %v5158, 7
    %v5160 = vsub.s32 %v5157, %v5159
    %v5161 = vrot.slane %v5154, %v5160
    %v5162 = vcombine.high %v5161, %v5161
    %v5164 = vmul.f32 %v4568, %v5162
    %v5165 = vmul.f32 %v5137, %v5138
    %v5167 = vcombine.high %v5165, %v5165
    %v5169 = vunpack.c.l.s4 1966171168
    %v5170 = vunpack.c.0.s8 %v5169
    %v5171 = vlaneseq
    %v5172 = vshrl.u32 %v5171, 7
    %v5173 = vsub.s32 %v5170, %v5172
    %v5174 = vrot.slane %v5167, %v5173
    %v5175 = vcombine.high %v5174, %v5174
    %v5177 = vunpack.c.l.s4 1966171168
    %v5178 = vunpack.c.0.s8 %v5177
    %v5179 = vlaneseq
    %v5180 = vshrl.u32 %v5179, 7
    %v5181 = vsub.s32 %v5178, %v5180
    %v5182 = vrot.slane %v5175, %v5181
    %v5183 = vcombine.high %v5182, %v5182
    %v5185 = vadd.f32 %v5164, %v5183
    %v5186 = vtanh.pop %v5185
    %v5188 = vlaneseq
    %v5189 = vshrl.u32 %v5188, 7
    %v5190 = vsub.s32 0, %v5189
    %v5191 = vrot.slane %v5186, %v5190
    %v5193 = vmul.f32 %v5144, %v5191
    %v5194 = vand.u32 2147483647, %v5193
    %vm5195 = vcmp.lt.f32.partialorder %v5193, 0.0
    %v5196 = vsel %vm5195, -1.0, 1.0
    %vm5197 = vcmp.gt.f32.partialorder %v5194, 2.4142137
    %vm5198 = vcmp.gt.f32.partialorder %v5194, 0.41421357
    %vm5199 = vmxor %vm5197, 1
    %vm5200 = vmand %vm5198, %vm5199
    %v5201 = vsel %vm5197, %v5194, 1.0
    %v5202 = vrcp.pop %v5201
    %v5203 = vmul.f32 %v5201, %v5202
    %v5204 = vsub.f32 2.0, %v5203
    %v5205 = vmul.f32 %v5202, %v5204
    %v5206 = vsub.f32 0.0, %v5205
    %v5207 = vsub.f32 %v5194, 1.0
    %v5208 = vadd.f32 %v5194, 1.0
    %v5209 = vrcp.pop %v5208
    %v5210 = vmul.f32 %v5208, %v5209
    %v5211 = vsub.f32 2.0, %v5210
    %v5212 = vmul.f32 %v5209, %v5211
    %v5213 = vmul.f32 %v5207, %v5212
    %v5214 = vsel %vm5200, %v5213, %v5194
    %v5215 = vsel %vm5197, %v5206, %v5214
    %v5216 = vsel %vm5200, 0.7853982, 0.0
    %v5217 = vsel %vm5197, 1.5707964, %v5216
    %v5218 = vmul.f32 %v5215, %v5215
    %v5219 = vmul.f32 %v5218, 0.080537446
    %v5220 = vsub.f32 %v5219, 0.13877685
    %v5221 = vmul.f32 %v5220, %v5218
    %v5222 = vadd.f32 %v5221, 0.19977711
    %v5223 = vmul.f32 %v5222, %v5218
    %v5224 = vsub.f32 %v5223, 0.3333295
    %v5225 = vmul.f32 %v5224, %v5218
    %v5226 = vmul.f32 %v5225, %v5215
    %v5227 = vadd.f32 %v5226, %v5215
    %v5228 = vadd.f32 %v5217, %v5227
    %v5229 = vmul.f32 %v5196, %v5228
    %v5230 = vmul.f32 %v5193, %v5193
    %v5231 = vand.u32 2147483647, %v5230
    %vm5232 = vcmp.lt.f32.partialorder %v5230, 0.0
    %v5233 = vsel %vm5232, -1.0, 1.0
    %vm5234 = vcmp.gt.f32.partialorder %v5231, 2.4142137
    %vm5235 = vcmp.gt.f32.partialorder %v5231, 0.41421357
    %vm5236 = vmxor %vm5234, 1
    %vm5237 = vmand %vm5235, %vm5236
    %v5238 = vsel %vm5234, %v5231, 1.0
    %v5239 = vrcp.pop %v5238
    %v5240 = vmul.f32 %v5238, %v5239
    %v5241 = vsub.f32 2.0, %v5240
    %v5242 = vmul.f32 %v5239, %v5241
    %v5243 = vsub.f32 0.0, %v5242
    %v5244 = vsub.f32 %v5231, 1.0
    %v5245 = vadd.f32 %v5231, 1.0
    %v5246 = vrcp.pop %v5245
    %v5247 = vmul.f32 %v5245, %v5246
    %v5248 = vsub.f32 2.0, %v5247
    %v5249 = vmul.f32 %v5246, %v5248
    %v5250 = vmul.f32 %v5244, %v5249
    %v5251 = vsel %vm5237, %v5250, %v5231
    %v5252 = vsel %vm5234, %v5243, %v5251
    %v5253 = vsel %vm5237, 0.7853982, 0.0
    %v5254 = vsel %vm5234, 1.5707964, %v5253
    %v5255 = vmul.f32 %v5252, %v5252
    %v5256 = vmul.f32 %v5255, 0.080537446
    %v5257 = vsub.f32 %v5256, 0.13877685
    %v5258 = vmul.f32 %v5257, %v5255
    %v5259 = vadd.f32 %v5258, 0.19977711
    %v5260 = vmul.f32 %v5259, %v5255
    %v5261 = vsub.f32 %v5260, 0.3333295
    %v5262 = vmul.f32 %v5261, %v5255
    %v5263 = vmul.f32 %v5262, %v5252
    %v5264 = vadd.f32 %v5263, %v5252
    %v5265 = vadd.f32 %v5254, %v5264
    %v5266 = vmul.f32 %v5233, %v5265
    %v5269 = vrot.slane %v5229, 7
    %v5270 = vrot.slane %v5266, 7
    %5273 = vmatprep.subr.mxu0 0.0
    %5274 = vmatpush1.msra.mxu0 %v47
    %5275 = vmatprep.subr.mxu0 0.0
    %5276 = vmatpush1.msra.mxu0 %v48
    %5277 = vmatprep.subr.mxu0 0.0
    %5278 = vmatpush1.msra.mxu0 %v49
    %5279 = vmatprep.subr.mxu0 0.0
    %5280 = vmatpush1.msra.mxu0 %v50
    %5281 = vmatprep.subr.mxu0 0.0
    %5282 = vmatpush1.msra.mxu0 %v51
    %5283 = vmatprep.subr.mxu0 0.0
    %5284 = vmatpush1.msra.mxu0 %v52
    %5285 = vmatprep.subr.mxu0 0.0
    %5286 = vmatpush1.msra.mxu0 %v53
    %5287 = vmatprep.subr.mxu0 0.0
    %5288 = vmatpush1.msra.mxu0 %v54
    %5289 = vmatprep.subr.mxu0 0.0
    %5290 = vmatpush1.msra.mxu0 %v55
    %5291 = vmatprep.subr.mxu0 0.0
    %5292 = vmatpush1.msra.mxu0 %v56
    %5293 = vmatprep.subr.mxu0 0.0
    %5294 = vmatpush1.msra.mxu0 %v57
    %5295 = vmatprep.subr.mxu0 0.0
    %5296 = vmatpush1.msra.mxu0 %v58
    %5297 = vmatprep.subr.mxu0 0.0
    %5298 = vmatpush1.msra.mxu0 %v59
    %5299 = vmatprep.subr.mxu0 0.0
    %5300 = vmatpush1.msra.mxu0 %v60
    %5301 = vmatprep.subr.mxu0 0.0
    %5302 = vmatpush1.msra.mxu0 %v61
    %5303 = vmatprep.subr.mxu0 0.0
    %5304 = vmatpush1.msra.mxu0 %v62
    %5305 = vmatprep.subr.mxu0 0.0
    %5306 = vmatpush1.msra.mxu0 %v63
    %5307 = vmatprep.subr.mxu0 0.0
    %5308 = vmatpush1.msra.mxu0 %v64
    %5309 = vmatprep.subr.mxu0 0.0
    %5310 = vmatpush1.msra.mxu0 %v65
    %5311 = vmatprep.subr.mxu0 0.0
    %5312 = vmatpush1.msra.mxu0 %v66
    %5313 = vmatprep.subr.mxu0 0.0
    %5314 = vmatpush1.msra.mxu0 %v67
    %5315 = vmatprep.subr.mxu0 0.0
    %5316 = vmatpush1.msra.mxu0 %v68
    %5317 = vmatprep.subr.mxu0 0.0
    %5318 = vmatpush1.msra.mxu0 %v69
    %5319 = vmatprep.subr.mxu0 0.0
    %5320 = vmatpush1.msra.mxu0 %v70
    %5321 = vmatprep.subr.mxu0 0.0
    %5322 = vmatpush1.msra.mxu0 %v71
    %5323 = vmatprep.subr.mxu0 0.0
    %5324 = vmatpush1.msra.mxu0 %v72
    %5325 = vmatprep.subr.mxu0 0.0
    %5326 = vmatpush1.msra.mxu0 %v73
    %5327 = vmatprep.subr.mxu0 0.0
    %5328 = vmatpush1.msra.mxu0 %v74
    %5329 = vmatprep.subr.mxu0 0.0
    %5330 = vmatpush1.msra.mxu0 %v75
    %5331 = vmatprep.subr.mxu0 0.0
    %5332 = vmatpush1.msra.mxu0 %v76
    %5333 = vmatprep.subr.mxu0 0.0
    %5334 = vmatpush1.msra.mxu0 %v77
    %5335 = vmatprep.subr.mxu0 0.0
    %5336 = vmatpush1.msra.mxu0 %v78
    %5337 = vmatprep.mubr.f32.mxu0 %v5270
    %5338 = vmatmul.mubr.f32.gmra.mrb[0].mxu0 %v5269
    %v5339 = vpop.f32.mrb[0].mxu0
    %v5340 = vadd.f32 %v79, %v5339
    %v5341 = vpop.f32.mrb[0].mxu0
    %5342 = vdwg.mxu0
    %5344 = vrot.lane.b32.xlu0 %v5340, 120
    %v5345 = vpop.permute.xlu0 %5344
    %5347 = vst.msk [vmem:[%s9 + $0x7] sm:$0x1] %vm1045, %v5345
    %vm5348 = vcmask 57344
    %5349 = vst.msk [vmem:[#allocation2] sm:$0x1] %vm5348, %v5340
    %5350 = vst [vmem:[#allocation4] sm:$0x1] %v5185
    // Predicated region
    $region30: #{tpu_custom_call.1} parent=1 // pred_check
      _
    $region31: #{tpu_custom_call.1} parent=1 // pred_check_branch
      %5352 = sbr.rel (0) target = $region33
    $region32: #{tpu_custom_call.1} parent=1 // pred_region
      %s5354 = ssub.s32 16, 16
      %5355 = vsyncadd [#allocation3], %s5354
      %s5357 = sshll.u32 [#allocation2], 4
      %s5358 = int_to_ptr.vmem [resolvable:$true] %s5357
      %5360 = dma.vmem_to_hbm [thread:$0]  %s5358, 16, %s7, [#allocation3]
    $region33: #{tpu_custom_call.1} parent=1 // pred_fallthru
      _
    // Predicated region
    $region34: #{tpu_custom_call.1} parent=1 // pred_check
      _
    $region35: #{tpu_custom_call.1} parent=1 // pred_check_branch
      %5362 = sbr.rel (0) target = $region37
    $region36: #{tpu_custom_call.1} parent=1 // pred_region
      %s5364 = ssub.s32 16, 16
      %5365 = vsyncadd [#allocation5], %s5364
      %s5367 = sshll.u32 [#allocation4], 4
      %s5368 = int_to_ptr.vmem [resolvable:$true] %s5367
      %5370 = dma.vmem_to_hbm [thread:$0]  %s5368, 16, %s8, [#allocation5]
    $region37: #{tpu_custom_call.1} parent=1 // pred_fallthru
      _
    // Predicated region
    $region38: #{tpu_custom_call.1} parent=1 // pred_check
      _
    $region39: #{tpu_custom_call.1} parent=1 // pred_check_branch
      %5372 = sbr.rel (0) target = $region41
    $region40: #{tpu_custom_call.1} parent=1 // pred_region
      _
    $region41: #{tpu_custom_call.1} parent=1 // pred_fallthru
      _
    // Predicated region
    $region42: #{tpu_custom_call.1} parent=1 // pred_check
      _
    $region43: #{tpu_custom_call.1} parent=1 // pred_check_branch
      %5374 = sbr.rel (0) target = $region45
    $region44: #{tpu_custom_call.1} parent=1 // pred_region
      %5375 = dma.done [#allocation3], 16
    $region45: #{tpu_custom_call.1} parent=1 // pred_fallthru
      _
    // Predicated region
    $region46: #{tpu_custom_call.1} parent=1 // pred_check
      _
    $region47: #{tpu_custom_call.1} parent=1 // pred_check_branch
      %5377 = sbr.rel (0) target = $region49
    $region48: #{tpu_custom_call.1} parent=1 // pred_region
      %5378 = dma.done [#allocation5], 16
    $region49: #{tpu_custom_call.1} parent=1 // pred_fallthru
      _
    // Predicated region
    $region50: #{tpu_custom_call.1} parent=1 // pred_check
      _
    $region51: #{tpu_custom_call.1} parent=1 // pred_check_branch
      %5380 = sbr.rel (0) target = $region53
    $region52: #{tpu_custom_call.1} parent=1 // pred_region
      _
    $region53: #{tpu_custom_call.1} parent=1 // pred_fallthru
      _
    %5381 = vsyncpa [#allocation3], 1
    %5382 = vsyncpa [#allocation5], 1

</llo_original>
